<compile_context>
chip_gen: v7x
topology: tpu7x:2x2x1
jax: 0.10.0
libtpu: 0.0.40
codegen_flags: <defaults>
</compile_context>

<pallas_src>
import functools

import jax
import jax.numpy as jnp
from jax.experimental import pallas as pl
from jax.experimental.pallas import tpu as pltpu

NUM_CLASSES = 16
BN_EPS = 1e-5


def _round_up(x, m):
    return ((x + m - 1) // m) * m


# ----------------------------------------------------------------------------
# Frontend kernel: fused Conv3d(+BN+ReLU) -> MaxPool3d -> spatial mean -> FC+ReLU
# One grid step per batch element; all To frames are processed from VMEM.
# ----------------------------------------------------------------------------
def _frontend_kernel(cols_ref, w_ref, sh_ref, wmask_ref, wfc_ref, bfc_ref,
                     out_ref, ybuf, zbuf, *, To, Ho, Wo, Hp, Wp):
    HoWo = Ho * Wo
    NG = Ho * Wp                                   # rows after the W-pool
    shift = sh_ref[...]                            # (1, 32) f32  (BN shift + bias)
    wmask = wmask_ref[...]                         # (NG, 32) f32 (0 at wp == 0)
    feats = []
    for t in range(To):                            # static unroll over frames
        # Conv3d as 5 accumulated K=64 matmuls over the temporal taps (BN scale
        # already folded into w_ref).
        acc = jnp.dot(cols_ref[0, t], w_ref[0],
                      preferred_element_type=jnp.float32)
        for dt in range(1, 5):
            acc = acc + jnp.dot(cols_ref[0, t + dt], w_ref[dt],
                                preferred_element_type=jnp.float32)
        y = jnp.maximum(acc + shift, 0.0)          # (HoWo, 32) f32, post-ReLU >= 0
        ybuf[...] = y

        # MaxPool over W (k=3, s=2, p=1) on the flat (ho*Wo + wo) row axis.
        # Zero padding == -inf padding because y >= 0 (post-ReLU).
        even_w = ybuf[pl.ds(0, NG, 2), :]          # y[ho, 2wp]
        odd_w = ybuf[pl.ds(1, NG, 2), :]           # y[ho, 2wp+1]
        pair = jnp.maximum(even_w, odd_w)
        left = jnp.concatenate(
            [jnp.zeros((1, 32), jnp.float32), odd_w[:NG - 1]], axis=0)
        left = left * wmask                        # kill cross-row leakage at wp==0
        zbuf[...] = jnp.maximum(pair, left)        # (Ho*Wp, 32): W-pooled rows

        # MaxPool over H (k=3, s=2, p=1) fused with the spatial sum.
        fsum = jnp.zeros((1, 32), jnp.float32)
        for hp in range(Hp):
            m = jnp.maximum(zbuf[pl.ds((2 * hp) * Wp, Wp), :],
                            zbuf[pl.ds((2 * hp + 1) * Wp, Wp), :])
            if hp > 0:
                m = jnp.maximum(m, zbuf[pl.ds((2 * hp - 1) * Wp, Wp), :])
            fsum = fsum + jnp.sum(m, axis=0, keepdims=True)
        feats.append(fsum)                         # 1/(Hp*Wp) folded into wfc

    F = jnp.concatenate(feats, axis=0)             # (To, 32) f32 spatial sums
    h = jnp.dot(F.astype(jnp.bfloat16), wfc_ref[...],
                preferred_element_type=jnp.float32) + bfc_ref[...]
    out_ref[0] = jnp.maximum(h, 0.0)               # (To, 64) f32


def frontend_fused(cols2d, w3, shift3, wmask, wfc, bfc, *, To, Ho, Wo, Hp, Wp):
    B, Tpad, HoWo, Kp = cols2d.shape
    kern = functools.partial(_frontend_kernel, To=To, Ho=Ho, Wo=Wo, Hp=Hp, Wp=Wp)
    flops = 2 * B * To * (5 * HoWo * Kp * 32 + 32 * 64)
    bytes_accessed = (cols2d.size * 2 + w3.size * 2 + wfc.size * 2
                      + wmask.size * 4 + B * To * 64 * 4)
    return pl.pallas_call(
        kern,
        out_shape=jax.ShapeDtypeStruct((B, To, 64), jnp.float32),
        grid=(B,),
        in_specs=[
            pl.BlockSpec((1, Tpad, HoWo, Kp), lambda b: (b, 0, 0, 0)),
            pl.BlockSpec((5, Kp, 32), lambda b: (0, 0, 0)),
            pl.BlockSpec((1, 32), lambda b: (0, 0)),
            pl.BlockSpec((Ho * Wp, 32), lambda b: (0, 0)),
            pl.BlockSpec((32, 64), lambda b: (0, 0)),
            pl.BlockSpec((1, 64), lambda b: (0, 0)),
        ],
        out_specs=pl.BlockSpec((1, To, 64), lambda b: (b, 0, 0)),
        scratch_shapes=[
            pltpu.VMEM((HoWo, 32), jnp.float32),       # post-ReLU conv plane
            pltpu.VMEM((Ho * Wp, 32), jnp.float32),    # W-pooled plane
        ],
        compiler_params=pltpu.CompilerParams(
            dimension_semantics=("parallel",),
            vmem_limit_bytes=64 * 1024 * 1024),
        cost_estimate=pl.CostEstimate(
            flops=flops, transcendentals=0, bytes_accessed=bytes_accessed),
    )(cols2d, w3, shift3, wmask, wfc, bfc)


# ----------------------------------------------------------------------------
# Backend kernel: fused Conv1d(64->128,k5,s2,p2)+BN+ReLU -> temporal mean -> cls
# Whole batch in a single grid step; temporal taps built in-kernel from the
# even/odd time phases (contiguous K=64 slices, no 320-wide im2col in HBM).
# ----------------------------------------------------------------------------
def _backend_kernel(fe_ref, fo_ref, w1_ref, sh1_ref, wc_ref, bc_ref, o_ref,
                    *, batch, to2):
    sh1 = sh1_ref[...]                                     # (1, 128) f32
    taps = ((fe_ref, 0), (fo_ref, 0), (fe_ref, 1), (fo_ref, 1), (fe_ref, 2))
    rows = []
    for b in range(batch):                                 # static unroll
        ref0, off0 = taps[0]
        acc = jnp.dot(ref0[b, pl.ds(off0, to2), :], w1_ref[0],
                      preferred_element_type=jnp.float32)
        for dk in range(1, 5):
            ref, off = taps[dk]
            acc = acc + jnp.dot(ref[b, pl.ds(off, to2), :], w1_ref[dk],
                                preferred_element_type=jnp.float32)
        g = jnp.maximum(acc + sh1, 0.0)                    # (to2, 128)
        rows.append(jnp.sum(g, axis=0, keepdims=True) * (1.0 / to2))
    gp = jnp.concatenate(rows, axis=0)                     # (B, 128)
    logits = jnp.dot(gp.astype(jnp.bfloat16), wc_ref[...],
                     preferred_element_type=jnp.float32) + bc_ref[...]
    o_ref[...] = logits                                    # (B, 128) lane-dense


def backend_fused(f_even, f_odd, w1, sh1, wc, bc, *, to2):
    B, Te, Cf = f_even.shape
    Tod = f_odd.shape[1]
    Ncp = wc.shape[1]
    kern = functools.partial(_backend_kernel, batch=B, to2=to2)
    return pl.pallas_call(
        kern,
        out_shape=jax.ShapeDtypeStruct((B, Ncp), jnp.float32),
        grid=(1,),
        in_specs=[
            pl.BlockSpec((B, Te, Cf), lambda i: (0, 0, 0)),
            pl.BlockSpec((B, Tod, Cf), lambda i: (0, 0, 0)),
            pl.BlockSpec((5, Cf, 128), lambda i: (0, 0, 0)),
            pl.BlockSpec((1, 128), lambda i: (0, 0)),
            pl.BlockSpec((128, Ncp), lambda i: (0, 0)),
            pl.BlockSpec((1, Ncp), lambda i: (0, 0)),
        ],
        out_specs=pl.BlockSpec((B, Ncp), lambda i: (0, 0)),
        compiler_params=pltpu.CompilerParams(dimension_semantics=("arbitrary",)),
    )(f_even, f_odd, w1, sh1, wc, bc)


# ----------------------------------------------------------------------------
# Glue (pure layout, fused by XLA): per-frame 2D patch extraction only.
# ----------------------------------------------------------------------------
def im2col_frames_2d(x, *, k_pad):
    """x:(B,1,T,H,W) f32 -> (B, T+4, Ho*Wo, k_pad) bf16 per-frame 7x7/stride-2
    patch rows of the temporally(+spatially) padded input."""
    B, C, T, H, W = x.shape
    Ho = (H + 2 * 3 - 7) // 2 + 1
    Wo = (W + 2 * 3 - 7) // 2 + 1
    xp = jnp.pad(x[:, 0], ((0, 0), (2, 2), (3, 3), (3, 3))).astype(jnp.bfloat16)
    cols = []
    for dh in range(7):
        for dw in range(7):
            cols.append(xp[:, :, dh:dh + 2 * Ho:2, dw:dw + 2 * Wo:2])
    c = jnp.stack(cols, axis=-1)                           # (B, T+4, Ho, Wo, 49)
    c = c.reshape(B, T + 4, Ho * Wo, 49)
    c = jnp.pad(c, ((0, 0), (0, 0), (0, 0), (0, k_pad - 49)))
    return c, Ho, Wo


# ----------------------------------------------------------------------------
# Parameters (per weights_init: conv ~ N(0, 0.02), BN gamma=1 / beta=0, Linear bias=0)
# ----------------------------------------------------------------------------
def init_params(key):
    ks = jax.random.split(key, 6)
    p = {}
    p["conv3d_w"] = 0.02 * jax.random.normal(ks[0], (32, 1, 5, 7, 7), jnp.float32)
    p["conv3d_b"] = 0.01 * jax.random.normal(ks[1], (32,), jnp.float32)
    p["bn3_gamma"] = jnp.ones((32,), jnp.float32)
    p["bn3_beta"] = jnp.zeros((32,), jnp.float32)
    p["bn3_mean"] = jnp.zeros((32,), jnp.float32)
    p["bn3_var"] = jnp.ones((32,), jnp.float32)
    p["fe_fc_w"] = 0.05 * jax.random.normal(ks[2], (64, 32), jnp.float32)
    p["fe_fc_b"] = jnp.zeros((64,), jnp.float32)
    p["conv1d_w"] = 0.02 * jax.random.normal(ks[3], (128, 64, 5), jnp.float32)
    p["conv1d_b"] = 0.01 * jax.random.normal(ks[4], (128,), jnp.float32)
    p["bn1_gamma"] = jnp.ones((128,), jnp.float32)
    p["bn1_beta"] = jnp.zeros((128,), jnp.float32)
    p["bn1_mean"] = jnp.zeros((128,), jnp.float32)
    p["bn1_var"] = jnp.ones((128,), jnp.float32)
    p["cls_w"] = 0.05 * jax.random.normal(ks[5], (NUM_CLASSES, 128), jnp.float32)
    p["cls_b"] = jnp.zeros((NUM_CLASSES,), jnp.float32)
    return p


# ----------------------------------------------------------------------------
# Forward pass
# ----------------------------------------------------------------------------
def lipreader_forward(x, p):
    # x: (B, C=1, T, H, W) -- PyTorch NCDHW
    B, C, T, H, W = x.shape
    To = T                                                 # temporal stride 1, pad 2, k 5
    Kp = 64                                                # 49 spatial taps padded

    # ---- Frontend (single fused Pallas kernel per batch element) ----
    cols2d, Ho, Wo = im2col_frames_2d(x, k_pad=Kp)         # (B, T+4, Ho*Wo, 64) bf16
    assert Ho % 2 == 0 and Wo % 2 == 0  # TODO(synk): odd conv output sizes unsupported
    Hp, Wp = Ho // 2, Wo // 2

    sc3 = p["bn3_gamma"] / jnp.sqrt(p["bn3_var"] + BN_EPS)
    sh3 = (p["bn3_beta"] + (p["conv3d_b"] - p["bn3_mean"]) * sc3).reshape(1, 32)
    w3 = jnp.transpose(p["conv3d_w"][:, 0].reshape(32, 5, 49), (1, 2, 0)) * sc3
    w3 = jnp.pad(w3, ((0, 0), (0, Kp - 49), (0, 0))).astype(jnp.bfloat16)  # (5,64,32)

    gidx = jnp.arange(Ho * Wp) % Wp                        # W-pool left-neighbor mask
    wmask = jnp.broadcast_to(
        jnp.where(gidx == 0, 0.0, 1.0).astype(jnp.float32)[:, None], (Ho * Wp, 32))

    inv_area = 1.0 / float(Hp * Wp)                        # spatial-mean scale folded
    wfc = (p["fe_fc_w"].T * inv_area).astype(jnp.bfloat16)           # (32, 64)
    bfc = p["fe_fc_b"].reshape(1, -1).astype(jnp.float32)

    feats = frontend_fused(cols2d, w3, sh3.astype(jnp.float32), wmask, wfc, bfc,
                           To=To, Ho=Ho, Wo=Wo, Hp=Hp, Wp=Wp)         # (B, To, 64) f32

    # ---- Backend (single fused Pallas kernel for the whole batch) ----
    To2 = (To - 1) // 2 + 1
    fpad = jnp.pad(feats, ((0, 0), (2, 2), (0, 0))).astype(jnp.bfloat16)
    f_even = fpad[:, 0::2, :]                              # (B, To2+2, 64)
    f_odd = fpad[:, 1::2, :]                               # (B, >=To2+1, 64)

    sc1 = p["bn1_gamma"] / jnp.sqrt(p["bn1_var"] + BN_EPS)
    sh1 = (p["bn1_beta"] + (p["conv1d_b"] - p["bn1_mean"]) * sc1).reshape(1, 128)
    w1 = (jnp.transpose(p["conv1d_w"], (2, 1, 0)) * sc1).astype(jnp.bfloat16)  # (5,64,128)

    Ncp = _round_up(NUM_CLASSES, 128)                      # 16 -> 128 lane-dense out
    wc = jnp.pad(p["cls_w"].T, ((0, 0), (0, Ncp - NUM_CLASSES))).astype(jnp.bfloat16)
    bc = jnp.pad(p["cls_b"], (0, Ncp - NUM_CLASSES)).reshape(1, -1).astype(jnp.float32)

    logits = backend_fused(f_even, f_odd, w1, sh1.astype(jnp.float32), wc, bc, to2=To2)
    return logits[:, :NUM_CLASSES]                         # (B, NUM_CLASSES)


# ----------------------------------------------------------------------------
if __name__ == "__main__":
    key = jax.random.PRNGKey(0)
    kx, kp = jax.random.split(key)
    # small video batch: B=2, C=1 (grayscale), T=8 frames, 16x16 pixels
    x = jax.random.normal(kx, (2, 1, 8, 16, 16), jnp.float32)
    params = init_params(kp)

    fwd = jax.jit(lipreader_forward)
    logits = jax.block_until_ready(fwd(x, params))

    assert logits.shape == (2, NUM_CLASSES), logits.shape
    assert bool(jnp.all(jnp.isfinite(logits)))
    print("KERNEL_OK")
</pallas_src>

<mosaic_0001>
module attributes {stable_mosaic.version = 11 : i64} {
  func.func @_frontend_kernel(%arg0: i32, %arg1: memref<1x12x64x64xbf16, #tpu.memory_space<vmem>>, %arg2: memref<5x64x32xbf16, #tpu.memory_space<vmem>>, %arg3: memref<1x32xf32, #tpu.memory_space<vmem>>, %arg4: memref<32x32xf32, #tpu.memory_space<vmem>>, %arg5: memref<32x64xbf16, #tpu.memory_space<vmem>>, %arg6: memref<1x64xf32, #tpu.memory_space<vmem>>, %arg7: memref<1x8x64xf32, #tpu.memory_space<vmem>>, %arg8: memref<64x32xf32, #tpu.memory_space<vmem>>, %arg9: memref<32x32xf32, #tpu.memory_space<vmem>>) attributes {dimension_semantics = [#tpu.dimension_semantics<parallel>], iteration_bounds = array<i64: 2>, scalar_prefetch = 0 : i64, scratch_operands = 2 : i64, tpu.core_type = #tpu.core_type<tc>, window_params = [{transform_indices = @transform_0, window_bounds = array<i64: 1, 12, 64, 64>}, {pipeline_mode = #tpu.pipeline_mode<synchronous>, transform_indices = @transform_1, window_bounds = array<i64: 5, 64, 32>}, {pipeline_mode = #tpu.pipeline_mode<synchronous>, transform_indices = @transform_2, window_bounds = array<i64: 1, 32>}, {pipeline_mode = #tpu.pipeline_mode<synchronous>, transform_indices = @transform_3, window_bounds = array<i64: 32, 32>}, {pipeline_mode = #tpu.pipeline_mode<synchronous>, transform_indices = @transform_4, window_bounds = array<i64: 32, 64>}, {pipeline_mode = #tpu.pipeline_mode<synchronous>, transform_indices = @transform_5, window_bounds = array<i64: 1, 64>}, {transform_indices = @transform_6, window_bounds = array<i64: 1, 8, 64>}]} {
    %c0 = arith.constant 0 : index
    %c0_0 = arith.constant 0 : index
    %0 = vector.load %arg3[%c0, %c0_0] : memref<1x32xf32, #tpu.memory_space<vmem>>, vector<1x32xf32>
    %c0_1 = arith.constant 0 : index
    %c0_2 = arith.constant 0 : index
    %1 = vector.load %arg4[%c0_1, %c0_2] : memref<32x32xf32, #tpu.memory_space<vmem>>, vector<32x32xf32>
    %c0_3 = arith.constant 0 : index
    %c0_4 = arith.constant 0 : index
    %c0_5 = arith.constant 0 : index
    %c0_6 = arith.constant 0 : index
    %2 = vector.load %arg1[%c0_3, %c0_4, %c0_5, %c0_6] : memref<1x12x64x64xbf16, #tpu.memory_space<vmem>>, vector<1x1x64x64xbf16>
    %3 = vector.shape_cast %2 : vector<1x1x64x64xbf16> to vector<64x64xbf16>
    %c0_7 = arith.constant 0 : index
    %c0_8 = arith.constant 0 : index
    %c0_9 = arith.constant 0 : index
    %4 = vector.load %arg2[%c0_7, %c0_8, %c0_9] : memref<5x64x32xbf16, #tpu.memory_space<vmem>>, vector<1x64x32xbf16>
    %5 = vector.shape_cast %4 : vector<1x64x32xbf16> to vector<64x32xbf16>
    %cst = arith.constant dense<0.000000e+00> : vector<64x32xf32>
    %6 = tpu.matmul %3, %5, %cst {dimension_numbers = #tpu.dot_dimension_numbers<[1], [0], [0], [1], [0, 0, 1, 1], [], []>} : vector<64x64xbf16>, vector<64x32xbf16>, vector<64x32xf32> -> vector<64x32xf32>
    %c0_10 = arith.constant 0 : index
    %c1 = arith.constant 1 : index
    %c0_11 = arith.constant 0 : index
    %c0_12 = arith.constant 0 : index
    %7 = vector.load %arg1[%c0_10, %c1, %c0_11, %c0_12] : memref<1x12x64x64xbf16, #tpu.memory_space<vmem>>, vector<1x1x64x64xbf16>
    %8 = vector.shape_cast %7 : vector<1x1x64x64xbf16> to vector<64x64xbf16>
    %c1_13 = arith.constant 1 : index
    %c0_14 = arith.constant 0 : index
    %c0_15 = arith.constant 0 : index
    %9 = vector.load %arg2[%c1_13, %c0_14, %c0_15] : memref<5x64x32xbf16, #tpu.memory_space<vmem>>, vector<1x64x32xbf16>
    %10 = vector.shape_cast %9 : vector<1x64x32xbf16> to vector<64x32xbf16>
    %cst_16 = arith.constant dense<0.000000e+00> : vector<64x32xf32>
    %11 = tpu.matmul %8, %10, %cst_16 {dimension_numbers = #tpu.dot_dimension_numbers<[1], [0], [0], [1], [0, 0, 1, 1], [], []>} : vector<64x64xbf16>, vector<64x32xbf16>, vector<64x32xf32> -> vector<64x32xf32>
    %12 = arith.addf %6, %11 : vector<64x32xf32>
    %c0_17 = arith.constant 0 : index
    %c2 = arith.constant 2 : index
    %c0_18 = arith.constant 0 : index
    %c0_19 = arith.constant 0 : index
    %13 = vector.load %arg1[%c0_17, %c2, %c0_18, %c0_19] : memref<1x12x64x64xbf16, #tpu.memory_space<vmem>>, vector<1x1x64x64xbf16>
    %14 = vector.shape_cast %13 : vector<1x1x64x64xbf16> to vector<64x64xbf16>
    %c2_20 = arith.constant 2 : index
    %c0_21 = arith.constant 0 : index
    %c0_22 = arith.constant 0 : index
    %15 = vector.load %arg2[%c2_20, %c0_21, %c0_22] : memref<5x64x32xbf16, #tpu.memory_space<vmem>>, vector<1x64x32xbf16>
    %16 = vector.shape_cast %15 : vector<1x64x32xbf16> to vector<64x32xbf16>
    %cst_23 = arith.constant dense<0.000000e+00> : vector<64x32xf32>
    %17 = tpu.matmul %14, %16, %cst_23 {dimension_numbers = #tpu.dot_dimension_numbers<[1], [0], [0], [1], [0, 0, 1, 1], [], []>} : vector<64x64xbf16>, vector<64x32xbf16>, vector<64x32xf32> -> vector<64x32xf32>
    %18 = arith.addf %12, %17 : vector<64x32xf32>
    %c0_24 = arith.constant 0 : index
    %c3 = arith.constant 3 : index
    %c0_25 = arith.constant 0 : index
    %c0_26 = arith.constant 0 : index
    %19 = vector.load %arg1[%c0_24, %c3, %c0_25, %c0_26] : memref<1x12x64x64xbf16, #tpu.memory_space<vmem>>, vector<1x1x64x64xbf16>
    %20 = vector.shape_cast %19 : vector<1x1x64x64xbf16> to vector<64x64xbf16>
    %c3_27 = arith.constant 3 : index
    %c0_28 = arith.constant 0 : index
    %c0_29 = arith.constant 0 : index
    %21 = vector.load %arg2[%c3_27, %c0_28, %c0_29] : memref<5x64x32xbf16, #tpu.memory_space<vmem>>, vector<1x64x32xbf16>
    %22 = vector.shape_cast %21 : vector<1x64x32xbf16> to vector<64x32xbf16>
    %cst_30 = arith.constant dense<0.000000e+00> : vector<64x32xf32>
    %23 = tpu.matmul %20, %22, %cst_30 {dimension_numbers = #tpu.dot_dimension_numbers<[1], [0], [0], [1], [0, 0, 1, 1], [], []>} : vector<64x64xbf16>, vector<64x32xbf16>, vector<64x32xf32> -> vector<64x32xf32>
    %24 = arith.addf %18, %23 : vector<64x32xf32>
    %c0_31 = arith.constant 0 : index
    %c4 = arith.constant 4 : index
    %c0_32 = arith.constant 0 : index
    %c0_33 = arith.constant 0 : index
    %25 = vector.load %arg1[%c0_31, %c4, %c0_32, %c0_33] : memref<1x12x64x64xbf16, #tpu.memory_space<vmem>>, vector<1x1x64x64xbf16>
    %26 = vector.shape_cast %25 : vector<1x1x64x64xbf16> to vector<64x64xbf16>
    %c4_34 = arith.constant 4 : index
    %c0_35 = arith.constant 0 : index
    %c0_36 = arith.constant 0 : index
    %27 = vector.load %arg2[%c4_34, %c0_35, %c0_36] : memref<5x64x32xbf16, #tpu.memory_space<vmem>>, vector<1x64x32xbf16>
    %28 = vector.shape_cast %27 : vector<1x64x32xbf16> to vector<64x32xbf16>
    %cst_37 = arith.constant dense<0.000000e+00> : vector<64x32xf32>
    %29 = tpu.matmul %26, %28, %cst_37 {dimension_numbers = #tpu.dot_dimension_numbers<[1], [0], [0], [1], [0, 0, 1, 1], [], []>} : vector<64x64xbf16>, vector<64x32xbf16>, vector<64x32xf32> -> vector<64x32xf32>
    %30 = arith.addf %24, %29 : vector<64x32xf32>
    %31 = vector.broadcast %0 : vector<1x32xf32> to vector<64x32xf32>
    %32 = arith.addf %30, %31 : vector<64x32xf32>
    %cst_38 = arith.constant 0.000000e+00 : f32
    %33 = vector.broadcast %cst_38 : f32 to vector<64x32xf32>
    %34 = arith.maximumf %32, %33 : vector<64x32xf32>
    %c0_39 = arith.constant 0 : index
    %c0_40 = arith.constant 0 : index
    %35 = vector.load %arg8[%c0_39, %c0_40] : memref<64x32xf32, #tpu.memory_space<vmem>>, vector<64x32xf32>
    tpu.vector_store %arg8[%c0_39, %c0_40], %34 {strides = array<i32>} : memref<64x32xf32, #tpu.memory_space<vmem>>, vector<64x32xf32>,
    %c0_41 = arith.constant 0 : index
    %c0_42 = arith.constant 0 : index
    %36 = tpu.strided_load %arg8[%c0_41, %c0_42] {strides = array<i32: 2, 1>} : memref<64x32xf32, #tpu.memory_space<vmem>>, vector<32x32xf32>
    %c1_43 = arith.constant 1 : index
    %c0_44 = arith.constant 0 : index
    %37 = tpu.strided_load %arg8[%c1_43, %c0_44] {strides = array<i32: 2, 1>} : memref<64x32xf32, #tpu.memory_space<vmem>>, vector<32x32xf32>
    %38 = arith.maximumf %36, %37 : vector<32x32xf32>
    %cst_45 = arith.constant 0.000000e+00 : f32
    %39 = vector.broadcast %cst_45 : f32 to vector<1x32xf32>
    %40 = vector.extract_strided_slice %37 {offsets = [0, 0], sizes = [31, 32], strides = [1, 1]} : vector<32x32xf32> to vector<31x32xf32>
    %41 = tpu.concatenate %39, %40 in 0 : vector<1x32xf32>, vector<31x32xf32> -> vector<32x32xf32>
    %42 = arith.mulf %41, %1 : vector<32x32xf32>
    %43 = arith.maximumf %38, %42 : vector<32x32xf32>
    %c0_46 = arith.constant 0 : index
    %c0_47 = arith.constant 0 : index
    %44 = vector.load %arg9[%c0_46, %c0_47] : memref<32x32xf32, #tpu.memory_space<vmem>>, vector<32x32xf32>
    tpu.vector_store %arg9[%c0_46, %c0_47], %43 {strides = array<i32>} : memref<32x32xf32, #tpu.memory_space<vmem>>, vector<32x32xf32>,
    %cst_48 = arith.constant 0.000000e+00 : f32
    %45 = vector.broadcast %cst_48 : f32 to vector<1x32xf32>
    %c0_49 = arith.constant 0 : index
    %c0_50 = arith.constant 0 : index
    %46 = vector.load %arg9[%c0_49, %c0_50] : memref<32x32xf32, #tpu.memory_space<vmem>>, vector<4x32xf32>
    %c4_51 = arith.constant 4 : index
    %c0_52 = arith.constant 0 : index
    %47 = vector.load %arg9[%c4_51, %c0_52] : memref<32x32xf32, #tpu.memory_space<vmem>>, vector<4x32xf32>
    %48 = arith.maximumf %46, %47 : vector<4x32xf32>
    %cst_53 = arith.constant dense<0.000000e+00> : vector<32xf32>
    %49 = vector.multi_reduction <add>, %48, %cst_53 [0] : vector<4x32xf32> to vector<32xf32>
    %50 = vector.shape_cast %49 : vector<32xf32> to vector<1x32xf32>
    %51 = arith.addf %45, %50 : vector<1x32xf32>
    %c8 = arith.constant 8 : index
    %c0_54 = arith.constant 0 : index
    %52 = vector.load %arg9[%c8, %c0_54] : memref<32x32xf32, #tpu.memory_space<vmem>>, vector<4x32xf32>
    %c12 = arith.constant 12 : index
    %c0_55 = arith.constant 0 : index
    %53 = vector.load %arg9[%c12, %c0_55] : memref<32x32xf32, #tpu.memory_space<vmem>>, vector<4x32xf32>
    %54 = arith.maximumf %52, %53 : vector<4x32xf32>
    %c4_56 = arith.constant 4 : index
    %c0_57 = arith.constant 0 : index
    %55 = vector.load %arg9[%c4_56, %c0_57] : memref<32x32xf32, #tpu.memory_space<vmem>>, vector<4x32xf32>
    %56 = arith.maximumf %54, %55 : vector<4x32xf32>
    %cst_58 = arith.constant dense<0.000000e+00> : vector<32xf32>
    %57 = vector.multi_reduction <add>, %56, %cst_58 [0] : vector<4x32xf32> to vector<32xf32>
    %58 = vector.shape_cast %57 : vector<32xf32> to vector<1x32xf32>
    %59 = arith.addf %51, %58 : vector<1x32xf32>
    %c16 = arith.constant 16 : index
    %c0_59 = arith.constant 0 : index
    %60 = vector.load %arg9[%c16, %c0_59] : memref<32x32xf32, #tpu.memory_space<vmem>>, vector<4x32xf32>
    %c20 = arith.constant 20 : index
    %c0_60 = arith.constant 0 : index
    %61 = vector.load %arg9[%c20, %c0_60] : memref<32x32xf32, #tpu.memory_space<vmem>>, vector<4x32xf32>
    %62 = arith.maximumf %60, %61 : vector<4x32xf32>
    %c12_61 = arith.constant 12 : index
    %c0_62 = arith.constant 0 : index
    %63 = vector.load %arg9[%c12_61, %c0_62] : memref<32x32xf32, #tpu.memory_space<vmem>>, vector<4x32xf32>
    %64 = arith.maximumf %62, %63 : vector<4x32xf32>
    %cst_63 = arith.constant dense<0.000000e+00> : vector<32xf32>
    %65 = vector.multi_reduction <add>, %64, %cst_63 [0] : vector<4x32xf32> to vector<32xf32>
    %66 = vector.shape_cast %65 : vector<32xf32> to vector<1x32xf32>
    %67 = arith.addf %59, %66 : vector<1x32xf32>
    %c24 = arith.constant 24 : index
    %c0_64 = arith.constant 0 : index
    %68 = vector.load %arg9[%c24, %c0_64] : memref<32x32xf32, #tpu.memory_space<vmem>>, vector<4x32xf32>
    %c28 = arith.constant 28 : index
    %c0_65 = arith.constant 0 : index
    %69 = vector.load %arg9[%c28, %c0_65] : memref<32x32xf32, #tpu.memory_space<vmem>>, vector<4x32xf32>
    %70 = arith.maximumf %68, %69 : vector<4x32xf32>
    %c20_66 = arith.constant 20 : index
    %c0_67 = arith.constant 0 : index
    %71 = vector.load %arg9[%c20_66, %c0_67] : memref<32x32xf32, #tpu.memory_space<vmem>>, vector<4x32xf32>
    %72 = arith.maximumf %70, %71 : vector<4x32xf32>
    %cst_68 = arith.constant dense<0.000000e+00> : vector<32xf32>
    %73 = vector.multi_reduction <add>, %72, %cst_68 [0] : vector<4x32xf32> to vector<32xf32>
    %74 = vector.shape_cast %73 : vector<32xf32> to vector<1x32xf32>
    %75 = arith.addf %67, %74 : vector<1x32xf32>
    %c0_69 = arith.constant 0 : index
    %c1_70 = arith.constant 1 : index
    %c0_71 = arith.constant 0 : index
    %c0_72 = arith.constant 0 : index
    %76 = vector.load %arg1[%c0_69, %c1_70, %c0_71, %c0_72] : memref<1x12x64x64xbf16, #tpu.memory_space<vmem>>, vector<1x1x64x64xbf16>
    %77 = vector.shape_cast %76 : vector<1x1x64x64xbf16> to vector<64x64xbf16>
    %c0_73 = arith.constant 0 : index
    %c0_74 = arith.constant 0 : index
    %c0_75 = arith.constant 0 : index
    %78 = vector.load %arg2[%c0_73, %c0_74, %c0_75] : memref<5x64x32xbf16, #tpu.memory_space<vmem>>, vector<1x64x32xbf16>
    %79 = vector.shape_cast %78 : vector<1x64x32xbf16> to vector<64x32xbf16>
    %cst_76 = arith.constant dense<0.000000e+00> : vector<64x32xf32>
    %80 = tpu.matmul %77, %79, %cst_76 {dimension_numbers = #tpu.dot_dimension_numbers<[1], [0], [0], [1], [0, 0, 1, 1], [], []>} : vector<64x64xbf16>, vector<64x32xbf16>, vector<64x32xf32> -> vector<64x32xf32>
    %c0_77 = arith.constant 0 : index
    %c2_78 = arith.constant 2 : index
    %c0_79 = arith.constant 0 : index
    %c0_80 = arith.constant 0 : index
    %81 = vector.load %arg1[%c0_77, %c2_78, %c0_79, %c0_80] : memref<1x12x64x64xbf16, #tpu.memory_space<vmem>>, vector<1x1x64x64xbf16>
    %82 = vector.shape_cast %81 : vector<1x1x64x64xbf16> to vector<64x64xbf16>
    %c1_81 = arith.constant 1 : index
    %c0_82 = arith.constant 0 : index
    %c0_83 = arith.constant 0 : index
    %83 = vector.load %arg2[%c1_81, %c0_82, %c0_83] : memref<5x64x32xbf16, #tpu.memory_space<vmem>>, vector<1x64x32xbf16>
    %84 = vector.shape_cast %83 : vector<1x64x32xbf16> to vector<64x32xbf16>
    %cst_84 = arith.constant dense<0.000000e+00> : vector<64x32xf32>
    %85 = tpu.matmul %82, %84, %cst_84 {dimension_numbers = #tpu.dot_dimension_numbers<[1], [0], [0], [1], [0, 0, 1, 1], [], []>} : vector<64x64xbf16>, vector<64x32xbf16>, vector<64x32xf32> -> vector<64x32xf32>
    %86 = arith.addf %80, %85 : vector<64x32xf32>
    %c0_85 = arith.constant 0 : index
    %c3_86 = arith.constant 3 : index
    %c0_87 = arith.constant 0 : index
    %c0_88 = arith.constant 0 : index
    %87 = vector.load %arg1[%c0_85, %c3_86, %c0_87, %c0_88] : memref<1x12x64x64xbf16, #tpu.memory_space<vmem>>, vector<1x1x64x64xbf16>
    %88 = vector.shape_cast %87 : vector<1x1x64x64xbf16> to vector<64x64xbf16>
    %c2_89 = arith.constant 2 : index
    %c0_90 = arith.constant 0 : index
    %c0_91 = arith.constant 0 : index
    %89 = vector.load %arg2[%c2_89, %c0_90, %c0_91] : memref<5x64x32xbf16, #tpu.memory_space<vmem>>, vector<1x64x32xbf16>
    %90 = vector.shape_cast %89 : vector<1x64x32xbf16> to vector<64x32xbf16>
    %cst_92 = arith.constant dense<0.000000e+00> : vector<64x32xf32>
    %91 = tpu.matmul %88, %90, %cst_92 {dimension_numbers = #tpu.dot_dimension_numbers<[1], [0], [0], [1], [0, 0, 1, 1], [], []>} : vector<64x64xbf16>, vector<64x32xbf16>, vector<64x32xf32> -> vector<64x32xf32>
    %92 = arith.addf %86, %91 : vector<64x32xf32>
    %c0_93 = arith.constant 0 : index
    %c4_94 = arith.constant 4 : index
    %c0_95 = arith.constant 0 : index
    %c0_96 = arith.constant 0 : index
    %93 = vector.load %arg1[%c0_93, %c4_94, %c0_95, %c0_96] : memref<1x12x64x64xbf16, #tpu.memory_space<vmem>>, vector<1x1x64x64xbf16>
    %94 = vector.shape_cast %93 : vector<1x1x64x64xbf16> to vector<64x64xbf16>
    %c3_97 = arith.constant 3 : index
    %c0_98 = arith.constant 0 : index
    %c0_99 = arith.constant 0 : index
    %95 = vector.load %arg2[%c3_97, %c0_98, %c0_99] : memref<5x64x32xbf16, #tpu.memory_space<vmem>>, vector<1x64x32xbf16>
    %96 = vector.shape_cast %95 : vector<1x64x32xbf16> to vector<64x32xbf16>
    %cst_100 = arith.constant dense<0.000000e+00> : vector<64x32xf32>
    %97 = tpu.matmul %94, %96, %cst_100 {dimension_numbers = #tpu.dot_dimension_numbers<[1], [0], [0], [1], [0, 0, 1, 1], [], []>} : vector<64x64xbf16>, vector<64x32xbf16>, vector<64x32xf32> -> vector<64x32xf32>
    %98 = arith.addf %92, %97 : vector<64x32xf32>
    %c0_101 = arith.constant 0 : index
    %c5 = arith.constant 5 : index
    %c0_102 = arith.constant 0 : index
    %c0_103 = arith.constant 0 : index
    %99 = vector.load %arg1[%c0_101, %c5, %c0_102, %c0_103] : memref<1x12x64x64xbf16, #tpu.memory_space<vmem>>, vector<1x1x64x64xbf16>
    %100 = vector.shape_cast %99 : vector<1x1x64x64xbf16> to vector<64x64xbf16>
    %c4_104 = arith.constant 4 : index
    %c0_105 = arith.constant 0 : index
    %c0_106 = arith.constant 0 : index
    %101 = vector.load %arg2[%c4_104, %c0_105, %c0_106] : memref<5x64x32xbf16, #tpu.memory_space<vmem>>, vector<1x64x32xbf16>
    %102 = vector.shape_cast %101 : vector<1x64x32xbf16> to vector<64x32xbf16>
    %cst_107 = arith.constant dense<0.000000e+00> : vector<64x32xf32>
    %103 = tpu.matmul %100, %102, %cst_107 {dimension_numbers = #tpu.dot_dimension_numbers<[1], [0], [0], [1], [0, 0, 1, 1], [], []>} : vector<64x64xbf16>, vector<64x32xbf16>, vector<64x32xf32> -> vector<64x32xf32>
    %104 = arith.addf %98, %103 : vector<64x32xf32>
    %105 = vector.broadcast %0 : vector<1x32xf32> to vector<64x32xf32>
    %106 = arith.addf %104, %105 : vector<64x32xf32>
    %cst_108 = arith.constant 0.000000e+00 : f32
    %107 = vector.broadcast %cst_108 : f32 to vector<64x32xf32>
    %108 = arith.maximumf %106, %107 : vector<64x32xf32>
    %c0_109 = arith.constant 0 : index
    %c0_110 = arith.constant 0 : index
    %109 = vector.load %arg8[%c0_109, %c0_110] : memref<64x32xf32, #tpu.memory_space<vmem>>, vector<64x32xf32>
    tpu.vector_store %arg8[%c0_109, %c0_110], %108 {strides = array<i32>} : memref<64x32xf32, #tpu.memory_space<vmem>>, vector<64x32xf32>,
    %c0_111 = arith.constant 0 : index
    %c0_112 = arith.constant 0 : index
    %110 = tpu.strided_load %arg8[%c0_111, %c0_112] {strides = array<i32: 2, 1>} : memref<64x32xf32, #tpu.memory_space<vmem>>, vector<32x32xf32>
    %c1_113 = arith.constant 1 : index
    %c0_114 = arith.constant 0 : index
    %111 = tpu.strided_load %arg8[%c1_113, %c0_114] {strides = array<i32: 2, 1>} : memref<64x32xf32, #tpu.memory_space<vmem>>, vector<32x32xf32>
    %112 = arith.maximumf %110, %111 : vector<32x32xf32>
    %cst_115 = arith.constant 0.000000e+00 : f32
    %113 = vector.broadcast %cst_115 : f32 to vector<1x32xf32>
    %114 = vector.extract_strided_slice %111 {offsets = [0, 0], sizes = [31, 32], strides = [1, 1]} : vector<32x32xf32> to vector<31x32xf32>
    %115 = tpu.concatenate %113, %114 in 0 : vector<1x32xf32>, vector<31x32xf32> -> vector<32x32xf32>
    %116 = arith.mulf %115, %1 : vector<32x32xf32>
    %117 = arith.maximumf %112, %116 : vector<32x32xf32>
    %c0_116 = arith.constant 0 : index
    %c0_117 = arith.constant 0 : index
    %118 = vector.load %arg9[%c0_116, %c0_117] : memref<32x32xf32, #tpu.memory_space<vmem>>, vector<32x32xf32>
    tpu.vector_store %arg9[%c0_116, %c0_117], %117 {strides = array<i32>} : memref<32x32xf32, #tpu.memory_space<vmem>>, vector<32x32xf32>,
    %cst_118 = arith.constant 0.000000e+00 : f32
    %119 = vector.broadcast %cst_118 : f32 to vector<1x32xf32>
    %c0_119 = arith.constant 0 : index
    %c0_120 = arith.constant 0 : index
    %120 = vector.load %arg9[%c0_119, %c0_120] : memref<32x32xf32, #tpu.memory_space<vmem>>, vector<4x32xf32>
    %c4_121 = arith.constant 4 : index
    %c0_122 = arith.constant 0 : index
    %121 = vector.load %arg9[%c4_121, %c0_122] : memref<32x32xf32, #tpu.memory_space<vmem>>, vector<4x32xf32>
    %122 = arith.maximumf %120, %121 : vector<4x32xf32>
    %cst_123 = arith.constant dense<0.000000e+00> : vector<32xf32>
    %123 = vector.multi_reduction <add>, %122, %cst_123 [0] : vector<4x32xf32> to vector<32xf32>
    %124 = vector.shape_cast %123 : vector<32xf32> to vector<1x32xf32>
    %125 = arith.addf %119, %124 : vector<1x32xf32>
    %c8_124 = arith.constant 8 : index
    %c0_125 = arith.constant 0 : index
    %126 = vector.load %arg9[%c8_124, %c0_125] : memref<32x32xf32, #tpu.memory_space<vmem>>, vector<4x32xf32>
    %c12_126 = arith.constant 12 : index
    %c0_127 = arith.constant 0 : index
    %127 = vector.load %arg9[%c12_126, %c0_127] : memref<32x32xf32, #tpu.memory_space<vmem>>, vector<4x32xf32>
    %128 = arith.maximumf %126, %127 : vector<4x32xf32>
    %c4_128 = arith.constant 4 : index
    %c0_129 = arith.constant 0 : index
    %129 = vector.load %arg9[%c4_128, %c0_129] : memref<32x32xf32, #tpu.memory_space<vmem>>, vector<4x32xf32>
    %130 = arith.maximumf %128, %129 : vector<4x32xf32>
    %cst_130 = arith.constant dense<0.000000e+00> : vector<32xf32>
    %131 = vector.multi_reduction <add>, %130, %cst_130 [0] : vector<4x32xf32> to vector<32xf32>
    %132 = vector.shape_cast %131 : vector<32xf32> to vector<1x32xf32>
    %133 = arith.addf %125, %132 : vector<1x32xf32>
    %c16_131 = arith.constant 16 : index
    %c0_132 = arith.constant 0 : index
    %134 = vector.load %arg9[%c16_131, %c0_132] : memref<32x32xf32, #tpu.memory_space<vmem>>, vector<4x32xf32>
    %c20_133 = arith.constant 20 : index
    %c0_134 = arith.constant 0 : index
    %135 = vector.load %arg9[%c20_133, %c0_134] : memref<32x32xf32, #tpu.memory_space<vmem>>, vector<4x32xf32>
    %136 = arith.maximumf %134, %135 : vector<4x32xf32>
    %c12_135 = arith.constant 12 : index
    %c0_136 = arith.constant 0 : index
    %137 = vector.load %arg9[%c12_135, %c0_136] : memref<32x32xf32, #tpu.memory_space<vmem>>, vector<4x32xf32>
    %138 = arith.maximumf %136, %137 : vector<4x32xf32>
    %cst_137 = arith.constant dense<0.000000e+00> : vector<32xf32>
    %139 = vector.multi_reduction <add>, %138, %cst_137 [0] : vector<4x32xf32> to vector<32xf32>
    %140 = vector.shape_cast %139 : vector<32xf32> to vector<1x32xf32>
    %141 = arith.addf %133, %140 : vector<1x32xf32>
    %c24_138 = arith.constant 24 : index
    %c0_139 = arith.constant 0 : index
    %142 = vector.load %arg9[%c24_138, %c0_139] : memref<32x32xf32, #tpu.memory_space<vmem>>, vector<4x32xf32>
    %c28_140 = arith.constant 28 : index
    %c0_141 = arith.constant 0 : index
    %143 = vector.load %arg9[%c28_140, %c0_141] : memref<32x32xf32, #tpu.memory_space<vmem>>, vector<4x32xf32>
    %144 = arith.maximumf %142, %143 : vector<4x32xf32>
    %c20_142 = arith.constant 20 : index
    %c0_143 = arith.constant 0 : index
    %145 = vector.load %arg9[%c20_142, %c0_143] : memref<32x32xf32, #tpu.memory_space<vmem>>, vector<4x32xf32>
    %146 = arith.maximumf %144, %145 : vector<4x32xf32>
    %cst_144 = arith.constant dense<0.000000e+00> : vector<32xf32>
    %147 = vector.multi_reduction <add>, %146, %cst_144 [0] : vector<4x32xf32> to vector<32xf32>
    %148 = vector.shape_cast %147 : vector<32xf32> to vector<1x32xf32>
    %149 = arith.addf %141, %148 : vector<1x32xf32>
    %c0_145 = arith.constant 0 : index
    %c2_146 = arith.constant 2 : index
    %c0_147 = arith.constant 0 : index
    %c0_148 = arith.constant 0 : index
    %150 = vector.load %arg1[%c0_145, %c2_146, %c0_147, %c0_148] : memref<1x12x64x64xbf16, #tpu.memory_space<vmem>>, vector<1x1x64x64xbf16>
    %151 = vector.shape_cast %150 : vector<1x1x64x64xbf16> to vector<64x64xbf16>
    %c0_149 = arith.constant 0 : index
    %c0_150 = arith.constant 0 : index
    %c0_151 = arith.constant 0 : index
    %152 = vector.load %arg2[%c0_149, %c0_150, %c0_151] : memref<5x64x32xbf16, #tpu.memory_space<vmem>>, vector<1x64x32xbf16>
    %153 = vector.shape_cast %152 : vector<1x64x32xbf16> to vector<64x32xbf16>
    %cst_152 = arith.constant dense<0.000000e+00> : vector<64x32xf32>
    %154 = tpu.matmul %151, %153, %cst_152 {dimension_numbers = #tpu.dot_dimension_numbers<[1], [0], [0], [1], [0, 0, 1, 1], [], []>} : vector<64x64xbf16>, vector<64x32xbf16>, vector<64x32xf32> -> vector<64x32xf32>
    %c0_153 = arith.constant 0 : index
    %c3_154 = arith.constant 3 : index
    %c0_155 = arith.constant 0 : index
    %c0_156 = arith.constant 0 : index
    %155 = vector.load %arg1[%c0_153, %c3_154, %c0_155, %c0_156] : memref<1x12x64x64xbf16, #tpu.memory_space<vmem>>, vector<1x1x64x64xbf16>
    %156 = vector.shape_cast %155 : vector<1x1x64x64xbf16> to vector<64x64xbf16>
    %c1_157 = arith.constant 1 : index
    %c0_158 = arith.constant 0 : index
    %c0_159 = arith.constant 0 : index
    %157 = vector.load %arg2[%c1_157, %c0_158, %c0_159] : memref<5x64x32xbf16, #tpu.memory_space<vmem>>, vector<1x64x32xbf16>
    %158 = vector.shape_cast %157 : vector<1x64x32xbf16> to vector<64x32xbf16>
    %cst_160 = arith.constant dense<0.000000e+00> : vector<64x32xf32>
    %159 = tpu.matmul %156, %158, %cst_160 {dimension_numbers = #tpu.dot_dimension_numbers<[1], [0], [0], [1], [0, 0, 1, 1], [], []>} : vector<64x64xbf16>, vector<64x32xbf16>, vector<64x32xf32> -> vector<64x32xf32>
    %160 = arith.addf %154, %159 : vector<64x32xf32>
    %c0_161 = arith.constant 0 : index
    %c4_162 = arith.constant 4 : index
    %c0_163 = arith.constant 0 : index
    %c0_164 = arith.constant 0 : index
    %161 = vector.load %arg1[%c0_161, %c4_162, %c0_163, %c0_164] : memref<1x12x64x64xbf16, #tpu.memory_space<vmem>>, vector<1x1x64x64xbf16>
    %162 = vector.shape_cast %161 : vector<1x1x64x64xbf16> to vector<64x64xbf16>
    %c2_165 = arith.constant 2 : index
    %c0_166 = arith.constant 0 : index
    %c0_167 = arith.constant 0 : index
    %163 = vector.load %arg2[%c2_165, %c0_166, %c0_167] : memref<5x64x32xbf16, #tpu.memory_space<vmem>>, vector<1x64x32xbf16>
    %164 = vector.shape_cast %163 : vector<1x64x32xbf16> to vector<64x32xbf16>
    %cst_168 = arith.constant dense<0.000000e+00> : vector<64x32xf32>
    %165 = tpu.matmul %162, %164, %cst_168 {dimension_numbers = #tpu.dot_dimension_numbers<[1], [0], [0], [1], [0, 0, 1, 1], [], []>} : vector<64x64xbf16>, vector<64x32xbf16>, vector<64x32xf32> -> vector<64x32xf32>
    %166 = arith.addf %160, %165 : vector<64x32xf32>
    %c0_169 = arith.constant 0 : index
    %c5_170 = arith.constant 5 : index
    %c0_171 = arith.constant 0 : index
    %c0_172 = arith.constant 0 : index
    %167 = vector.load %arg1[%c0_169, %c5_170, %c0_171, %c0_172] : memref<1x12x64x64xbf16, #tpu.memory_space<vmem>>, vector<1x1x64x64xbf16>
    %168 = vector.shape_cast %167 : vector<1x1x64x64xbf16> to vector<64x64xbf16>
    %c3_173 = arith.constant 3 : index
    %c0_174 = arith.constant 0 : index
    %c0_175 = arith.constant 0 : index
    %169 = vector.load %arg2[%c3_173, %c0_174, %c0_175] : memref<5x64x32xbf16, #tpu.memory_space<vmem>>, vector<1x64x32xbf16>
    %170 = vector.shape_cast %169 : vector<1x64x32xbf16> to vector<64x32xbf16>
    %cst_176 = arith.constant dense<0.000000e+00> : vector<64x32xf32>
    %171 = tpu.matmul %168, %170, %cst_176 {dimension_numbers = #tpu.dot_dimension_numbers<[1], [0], [0], [1], [0, 0, 1, 1], [], []>} : vector<64x64xbf16>, vector<64x32xbf16>, vector<64x32xf32> -> vector<64x32xf32>
    %172 = arith.addf %166, %171 : vector<64x32xf32>
    %c0_177 = arith.constant 0 : index
    %c6 = arith.constant 6 : index
    %c0_178 = arith.constant 0 : index
    %c0_179 = arith.constant 0 : index
    %173 = vector.load %arg1[%c0_177, %c6, %c0_178, %c0_179] : memref<1x12x64x64xbf16, #tpu.memory_space<vmem>>, vector<1x1x64x64xbf16>
    %174 = vector.shape_cast %173 : vector<1x1x64x64xbf16> to vector<64x64xbf16>
    %c4_180 = arith.constant 4 : index
    %c0_181 = arith.constant 0 : index
    %c0_182 = arith.constant 0 : index
    %175 = vector.load %arg2[%c4_180, %c0_181, %c0_182] : memref<5x64x32xbf16, #tpu.memory_space<vmem>>, vector<1x64x32xbf16>
    %176 = vector.shape_cast %175 : vector<1x64x32xbf16> to vector<64x32xbf16>
    %cst_183 = arith.constant dense<0.000000e+00> : vector<64x32xf32>
    %177 = tpu.matmul %174, %176, %cst_183 {dimension_numbers = #tpu.dot_dimension_numbers<[1], [0], [0], [1], [0, 0, 1, 1], [], []>} : vector<64x64xbf16>, vector<64x32xbf16>, vector<64x32xf32> -> vector<64x32xf32>
    %178 = arith.addf %172, %177 : vector<64x32xf32>
    %179 = vector.broadcast %0 : vector<1x32xf32> to vector<64x32xf32>
    %180 = arith.addf %178, %179 : vector<64x32xf32>
    %cst_184 = arith.constant 0.000000e+00 : f32
    %181 = vector.broadcast %cst_184 : f32 to vector<64x32xf32>
    %182 = arith.maximumf %180, %181 : vector<64x32xf32>
    %c0_185 = arith.constant 0 : index
    %c0_186 = arith.constant 0 : index
    %183 = vector.load %arg8[%c0_185, %c0_186] : memref<64x32xf32, #tpu.memory_space<vmem>>, vector<64x32xf32>
    tpu.vector_store %arg8[%c0_185, %c0_186], %182 {strides = array<i32>} : memref<64x32xf32, #tpu.memory_space<vmem>>, vector<64x32xf32>,
    %c0_187 = arith.constant 0 : index
    %c0_188 = arith.constant 0 : index
    %184 = tpu.strided_load %arg8[%c0_187, %c0_188] {strides = array<i32: 2, 1>} : memref<64x32xf32, #tpu.memory_space<vmem>>, vector<32x32xf32>
    %c1_189 = arith.constant 1 : index
    %c0_190 = arith.constant 0 : index
    %185 = tpu.strided_load %arg8[%c1_189, %c0_190] {strides = array<i32: 2, 1>} : memref<64x32xf32, #tpu.memory_space<vmem>>, vector<32x32xf32>
    %186 = arith.maximumf %184, %185 : vector<32x32xf32>
    %cst_191 = arith.constant 0.000000e+00 : f32
    %187 = vector.broadcast %cst_191 : f32 to vector<1x32xf32>
    %188 = vector.extract_strided_slice %185 {offsets = [0, 0], sizes = [31, 32], strides = [1, 1]} : vector<32x32xf32> to vector<31x32xf32>
    %189 = tpu.concatenate %187, %188 in 0 : vector<1x32xf32>, vector<31x32xf32> -> vector<32x32xf32>
    %190 = arith.mulf %189, %1 : vector<32x32xf32>
    %191 = arith.maximumf %186, %190 : vector<32x32xf32>
    %c0_192 = arith.constant 0 : index
    %c0_193 = arith.constant 0 : index
    %192 = vector.load %arg9[%c0_192, %c0_193] : memref<32x32xf32, #tpu.memory_space<vmem>>, vector<32x32xf32>
    tpu.vector_store %arg9[%c0_192, %c0_193], %191 {strides = array<i32>} : memref<32x32xf32, #tpu.memory_space<vmem>>, vector<32x32xf32>,
    %cst_194 = arith.constant 0.000000e+00 : f32
    %193 = vector.broadcast %cst_194 : f32 to vector<1x32xf32>
    %c0_195 = arith.constant 0 : index
    %c0_196 = arith.constant 0 : index
    %194 = vector.load %arg9[%c0_195, %c0_196] : memref<32x32xf32, #tpu.memory_space<vmem>>, vector<4x32xf32>
    %c4_197 = arith.constant 4 : index
    %c0_198 = arith.constant 0 : index
    %195 = vector.load %arg9[%c4_197, %c0_198] : memref<32x32xf32, #tpu.memory_space<vmem>>, vector<4x32xf32>
    %196 = arith.maximumf %194, %195 : vector<4x32xf32>
    %cst_199 = arith.constant dense<0.000000e+00> : vector<32xf32>
    %197 = vector.multi_reduction <add>, %196, %cst_199 [0] : vector<4x32xf32> to vector<32xf32>
    %198 = vector.shape_cast %197 : vector<32xf32> to vector<1x32xf32>
    %199 = arith.addf %193, %198 : vector<1x32xf32>
    %c8_200 = arith.constant 8 : index
    %c0_201 = arith.constant 0 : index
    %200 = vector.load %arg9[%c8_200, %c0_201] : memref<32x32xf32, #tpu.memory_space<vmem>>, vector<4x32xf32>
    %c12_202 = arith.constant 12 : index
    %c0_203 = arith.constant 0 : index
    %201 = vector.load %arg9[%c12_202, %c0_203] : memref<32x32xf32, #tpu.memory_space<vmem>>, vector<4x32xf32>
    %202 = arith.maximumf %200, %201 : vector<4x32xf32>
    %c4_204 = arith.constant 4 : index
    %c0_205 = arith.constant 0 : index
    %203 = vector.load %arg9[%c4_204, %c0_205] : memref<32x32xf32, #tpu.memory_space<vmem>>, vector<4x32xf32>
    %204 = arith.maximumf %202, %203 : vector<4x32xf32>
    %cst_206 = arith.constant dense<0.000000e+00> : vector<32xf32>
    %205 = vector.multi_reduction <add>, %204, %cst_206 [0] : vector<4x32xf32> to vector<32xf32>
    %206 = vector.shape_cast %205 : vector<32xf32> to vector<1x32xf32>
    %207 = arith.addf %199, %206 : vector<1x32xf32>
    %c16_207 = arith.constant 16 : index
    %c0_208 = arith.constant 0 : index
    %208 = vector.load %arg9[%c16_207, %c0_208] : memref<32x32xf32, #tpu.memory_space<vmem>>, vector<4x32xf32>
    %c20_209 = arith.constant 20 : index
    %c0_210 = arith.constant 0 : index
    %209 = vector.load %arg9[%c20_209, %c0_210] : memref<32x32xf32, #tpu.memory_space<vmem>>, vector<4x32xf32>
    %210 = arith.maximumf %208, %209 : vector<4x32xf32>
    %c12_211 = arith.constant 12 : index
    %c0_212 = arith.constant 0 : index
    %211 = vector.load %arg9[%c12_211, %c0_212] : memref<32x32xf32, #tpu.memory_space<vmem>>, vector<4x32xf32>
    %212 = arith.maximumf %210, %211 : vector<4x32xf32>
    %cst_213 = arith.constant dense<0.000000e+00> : vector<32xf32>
    %213 = vector.multi_reduction <add>, %212, %cst_213 [0] : vector<4x32xf32> to vector<32xf32>
    %214 = vector.shape_cast %213 : vector<32xf32> to vector<1x32xf32>
    %215 = arith.addf %207, %214 : vector<1x32xf32>
    %c24_214 = arith.constant 24 : index
    %c0_215 = arith.constant 0 : index
    %216 = vector.load %arg9[%c24_214, %c0_215] : memref<32x32xf32, #tpu.memory_space<vmem>>, vector<4x32xf32>
    %c28_216 = arith.constant 28 : index
    %c0_217 = arith.constant 0 : index
    %217 = vector.load %arg9[%c28_216, %c0_217] : memref<32x32xf32, #tpu.memory_space<vmem>>, vector<4x32xf32>
    %218 = arith.maximumf %216, %217 : vector<4x32xf32>
    %c20_218 = arith.constant 20 : index
    %c0_219 = arith.constant 0 : index
    %219 = vector.load %arg9[%c20_218, %c0_219] : memref<32x32xf32, #tpu.memory_space<vmem>>, vector<4x32xf32>
    %220 = arith.maximumf %218, %219 : vector<4x32xf32>
    %cst_220 = arith.constant dense<0.000000e+00> : vector<32xf32>
    %221 = vector.multi_reduction <add>, %220, %cst_220 [0] : vector<4x32xf32> to vector<32xf32>
    %222 = vector.shape_cast %221 : vector<32xf32> to vector<1x32xf32>
    %223 = arith.addf %215, %222 : vector<1x32xf32>
    %c0_221 = arith.constant 0 : index
    %c3_222 = arith.constant 3 : index
    %c0_223 = arith.constant 0 : index
    %c0_224 = arith.constant 0 : index
    %224 = vector.load %arg1[%c0_221, %c3_222, %c0_223, %c0_224] : memref<1x12x64x64xbf16, #tpu.memory_space<vmem>>, vector<1x1x64x64xbf16>
    %225 = vector.shape_cast %224 : vector<1x1x64x64xbf16> to vector<64x64xbf16>
    %c0_225 = arith.constant 0 : index
    %c0_226 = arith.constant 0 : index
    %c0_227 = arith.constant 0 : index
    %226 = vector.load %arg2[%c0_225, %c0_226, %c0_227] : memref<5x64x32xbf16, #tpu.memory_space<vmem>>, vector<1x64x32xbf16>
    %227 = vector.shape_cast %226 : vector<1x64x32xbf16> to vector<64x32xbf16>
    %cst_228 = arith.constant dense<0.000000e+00> : vector<64x32xf32>
    %228 = tpu.matmul %225, %227, %cst_228 {dimension_numbers = #tpu.dot_dimension_numbers<[1], [0], [0], [1], [0, 0, 1, 1], [], []>} : vector<64x64xbf16>, vector<64x32xbf16>, vector<64x32xf32> -> vector<64x32xf32>
    %c0_229 = arith.constant 0 : index
    %c4_230 = arith.constant 4 : index
    %c0_231 = arith.constant 0 : index
    %c0_232 = arith.constant 0 : index
    %229 = vector.load %arg1[%c0_229, %c4_230, %c0_231, %c0_232] : memref<1x12x64x64xbf16, #tpu.memory_space<vmem>>, vector<1x1x64x64xbf16>
    %230 = vector.shape_cast %229 : vector<1x1x64x64xbf16> to vector<64x64xbf16>
    %c1_233 = arith.constant 1 : index
    %c0_234 = arith.constant 0 : index
    %c0_235 = arith.constant 0 : index
    %231 = vector.load %arg2[%c1_233, %c0_234, %c0_235] : memref<5x64x32xbf16, #tpu.memory_space<vmem>>, vector<1x64x32xbf16>
    %232 = vector.shape_cast %231 : vector<1x64x32xbf16> to vector<64x32xbf16>
    %cst_236 = arith.constant dense<0.000000e+00> : vector<64x32xf32>
    %233 = tpu.matmul %230, %232, %cst_236 {dimension_numbers = #tpu.dot_dimension_numbers<[1], [0], [0], [1], [0, 0, 1, 1], [], []>} : vector<64x64xbf16>, vector<64x32xbf16>, vector<64x32xf32> -> vector<64x32xf32>
    %234 = arith.addf %228, %233 : vector<64x32xf32>
    %c0_237 = arith.constant 0 : index
    %c5_238 = arith.constant 5 : index
    %c0_239 = arith.constant 0 : index
    %c0_240 = arith.constant 0 : index
    %235 = vector.load %arg1[%c0_237, %c5_238, %c0_239, %c0_240] : memref<1x12x64x64xbf16, #tpu.memory_space<vmem>>, vector<1x1x64x64xbf16>
    %236 = vector.shape_cast %235 : vector<1x1x64x64xbf16> to vector<64x64xbf16>
    %c2_241 = arith.constant 2 : index
    %c0_242 = arith.constant 0 : index
    %c0_243 = arith.constant 0 : index
    %237 = vector.load %arg2[%c2_241, %c0_242, %c0_243] : memref<5x64x32xbf16, #tpu.memory_space<vmem>>, vector<1x64x32xbf16>
    %238 = vector.shape_cast %237 : vector<1x64x32xbf16> to vector<64x32xbf16>
    %cst_244 = arith.constant dense<0.000000e+00> : vector<64x32xf32>
    %239 = tpu.matmul %236, %238, %cst_244 {dimension_numbers = #tpu.dot_dimension_numbers<[1], [0], [0], [1], [0, 0, 1, 1], [], []>} : vector<64x64xbf16>, vector<64x32xbf16>, vector<64x32xf32> -> vector<64x32xf32>
    %240 = arith.addf %234, %239 : vector<64x32xf32>
    %c0_245 = arith.constant 0 : index
    %c6_246 = arith.constant 6 : index
    %c0_247 = arith.constant 0 : index
    %c0_248 = arith.constant 0 : index
    %241 = vector.load %arg1[%c0_245, %c6_246, %c0_247, %c0_248] : memref<1x12x64x64xbf16, #tpu.memory_space<vmem>>, vector<1x1x64x64xbf16>
    %242 = vector.shape_cast %241 : vector<1x1x64x64xbf16> to vector<64x64xbf16>
    %c3_249 = arith.constant 3 : index
    %c0_250 = arith.constant 0 : index
    %c0_251 = arith.constant 0 : index
    %243 = vector.load %arg2[%c3_249, %c0_250, %c0_251] : memref<5x64x32xbf16, #tpu.memory_space<vmem>>, vector<1x64x32xbf16>
    %244 = vector.shape_cast %243 : vector<1x64x32xbf16> to vector<64x32xbf16>
    %cst_252 = arith.constant dense<0.000000e+00> : vector<64x32xf32>
    %245 = tpu.matmul %242, %244, %cst_252 {dimension_numbers = #tpu.dot_dimension_numbers<[1], [0], [0], [1], [0, 0, 1, 1], [], []>} : vector<64x64xbf16>, vector<64x32xbf16>, vector<64x32xf32> -> vector<64x32xf32>
    %246 = arith.addf %240, %245 : vector<64x32xf32>
    %c0_253 = arith.constant 0 : index
    %c7 = arith.constant 7 : index
    %c0_254 = arith.constant 0 : index
    %c0_255 = arith.constant 0 : index
    %247 = vector.load %arg1[%c0_253, %c7, %c0_254, %c0_255] : memref<1x12x64x64xbf16, #tpu.memory_space<vmem>>, vector<1x1x64x64xbf16>
    %248 = vector.shape_cast %247 : vector<1x1x64x64xbf16> to vector<64x64xbf16>
    %c4_256 = arith.constant 4 : index
    %c0_257 = arith.constant 0 : index
    %c0_258 = arith.constant 0 : index
    %249 = vector.load %arg2[%c4_256, %c0_257, %c0_258] : memref<5x64x32xbf16, #tpu.memory_space<vmem>>, vector<1x64x32xbf16>
    %250 = vector.shape_cast %249 : vector<1x64x32xbf16> to vector<64x32xbf16>
    %cst_259 = arith.constant dense<0.000000e+00> : vector<64x32xf32>
    %251 = tpu.matmul %248, %250, %cst_259 {dimension_numbers = #tpu.dot_dimension_numbers<[1], [0], [0], [1], [0, 0, 1, 1], [], []>} : vector<64x64xbf16>, vector<64x32xbf16>, vector<64x32xf32> -> vector<64x32xf32>
    %252 = arith.addf %246, %251 : vector<64x32xf32>
    %253 = vector.broadcast %0 : vector<1x32xf32> to vector<64x32xf32>
    %254 = arith.addf %252, %253 : vector<64x32xf32>
    %cst_260 = arith.constant 0.000000e+00 : f32
    %255 = vector.broadcast %cst_260 : f32 to vector<64x32xf32>
    %256 = arith.maximumf %254, %255 : vector<64x32xf32>
    %c0_261 = arith.constant 0 : index
    %c0_262 = arith.constant 0 : index
    %257 = vector.load %arg8[%c0_261, %c0_262] : memref<64x32xf32, #tpu.memory_space<vmem>>, vector<64x32xf32>
    tpu.vector_store %arg8[%c0_261, %c0_262], %256 {strides = array<i32>} : memref<64x32xf32, #tpu.memory_space<vmem>>, vector<64x32xf32>,
    %c0_263 = arith.constant 0 : index
    %c0_264 = arith.constant 0 : index
    %258 = tpu.strided_load %arg8[%c0_263, %c0_264] {strides = array<i32: 2, 1>} : memref<64x32xf32, #tpu.memory_space<vmem>>, vector<32x32xf32>
    %c1_265 = arith.constant 1 : index
    %c0_266 = arith.constant 0 : index
    %259 = tpu.strided_load %arg8[%c1_265, %c0_266] {strides = array<i32: 2, 1>} : memref<64x32xf32, #tpu.memory_space<vmem>>, vector<32x32xf32>
    %260 = arith.maximumf %258, %259 : vector<32x32xf32>
    %cst_267 = arith.constant 0.000000e+00 : f32
    %261 = vector.broadcast %cst_267 : f32 to vector<1x32xf32>
    %262 = vector.extract_strided_slice %259 {offsets = [0, 0], sizes = [31, 32], strides = [1, 1]} : vector<32x32xf32> to vector<31x32xf32>
    %263 = tpu.concatenate %261, %262 in 0 : vector<1x32xf32>, vector<31x32xf32> -> vector<32x32xf32>
    %264 = arith.mulf %263, %1 : vector<32x32xf32>
    %265 = arith.maximumf %260, %264 : vector<32x32xf32>
    %c0_268 = arith.constant 0 : index
    %c0_269 = arith.constant 0 : index
    %266 = vector.load %arg9[%c0_268, %c0_269] : memref<32x32xf32, #tpu.memory_space<vmem>>, vector<32x32xf32>
    tpu.vector_store %arg9[%c0_268, %c0_269], %265 {strides = array<i32>} : memref<32x32xf32, #tpu.memory_space<vmem>>, vector<32x32xf32>,
    %cst_270 = arith.constant 0.000000e+00 : f32
    %267 = vector.broadcast %cst_270 : f32 to vector<1x32xf32>
    %c0_271 = arith.constant 0 : index
    %c0_272 = arith.constant 0 : index
    %268 = vector.load %arg9[%c0_271, %c0_272] : memref<32x32xf32, #tpu.memory_space<vmem>>, vector<4x32xf32>
    %c4_273 = arith.constant 4 : index
    %c0_274 = arith.constant 0 : index
    %269 = vector.load %arg9[%c4_273, %c0_274] : memref<32x32xf32, #tpu.memory_space<vmem>>, vector<4x32xf32>
    %270 = arith.maximumf %268, %269 : vector<4x32xf32>
    %cst_275 = arith.constant dense<0.000000e+00> : vector<32xf32>
    %271 = vector.multi_reduction <add>, %270, %cst_275 [0] : vector<4x32xf32> to vector<32xf32>
    %272 = vector.shape_cast %271 : vector<32xf32> to vector<1x32xf32>
    %273 = arith.addf %267, %272 : vector<1x32xf32>
    %c8_276 = arith.constant 8 : index
    %c0_277 = arith.constant 0 : index
    %274 = vector.load %arg9[%c8_276, %c0_277] : memref<32x32xf32, #tpu.memory_space<vmem>>, vector<4x32xf32>
    %c12_278 = arith.constant 12 : index
    %c0_279 = arith.constant 0 : index
    %275 = vector.load %arg9[%c12_278, %c0_279] : memref<32x32xf32, #tpu.memory_space<vmem>>, vector<4x32xf32>
    %276 = arith.maximumf %274, %275 : vector<4x32xf32>
    %c4_280 = arith.constant 4 : index
    %c0_281 = arith.constant 0 : index
    %277 = vector.load %arg9[%c4_280, %c0_281] : memref<32x32xf32, #tpu.memory_space<vmem>>, vector<4x32xf32>
    %278 = arith.maximumf %276, %277 : vector<4x32xf32>
    %cst_282 = arith.constant dense<0.000000e+00> : vector<32xf32>
    %279 = vector.multi_reduction <add>, %278, %cst_282 [0] : vector<4x32xf32> to vector<32xf32>
    %280 = vector.shape_cast %279 : vector<32xf32> to vector<1x32xf32>
    %281 = arith.addf %273, %280 : vector<1x32xf32>
    %c16_283 = arith.constant 16 : index
    %c0_284 = arith.constant 0 : index
    %282 = vector.load %arg9[%c16_283, %c0_284] : memref<32x32xf32, #tpu.memory_space<vmem>>, vector<4x32xf32>
    %c20_285 = arith.constant 20 : index
    %c0_286 = arith.constant 0 : index
    %283 = vector.load %arg9[%c20_285, %c0_286] : memref<32x32xf32, #tpu.memory_space<vmem>>, vector<4x32xf32>
    %284 = arith.maximumf %282, %283 : vector<4x32xf32>
    %c12_287 = arith.constant 12 : index
    %c0_288 = arith.constant 0 : index
    %285 = vector.load %arg9[%c12_287, %c0_288] : memref<32x32xf32, #tpu.memory_space<vmem>>, vector<4x32xf32>
    %286 = arith.maximumf %284, %285 : vector<4x32xf32>
    %cst_289 = arith.constant dense<0.000000e+00> : vector<32xf32>
    %287 = vector.multi_reduction <add>, %286, %cst_289 [0] : vector<4x32xf32> to vector<32xf32>
    %288 = vector.shape_cast %287 : vector<32xf32> to vector<1x32xf32>
    %289 = arith.addf %281, %288 : vector<1x32xf32>
    %c24_290 = arith.constant 24 : index
    %c0_291 = arith.constant 0 : index
    %290 = vector.load %arg9[%c24_290, %c0_291] : memref<32x32xf32, #tpu.memory_space<vmem>>, vector<4x32xf32>
    %c28_292 = arith.constant 28 : index
    %c0_293 = arith.constant 0 : index
    %291 = vector.load %arg9[%c28_292, %c0_293] : memref<32x32xf32, #tpu.memory_space<vmem>>, vector<4x32xf32>
    %292 = arith.maximumf %290, %291 : vector<4x32xf32>
    %c20_294 = arith.constant 20 : index
    %c0_295 = arith.constant 0 : index
    %293 = vector.load %arg9[%c20_294, %c0_295] : memref<32x32xf32, #tpu.memory_space<vmem>>, vector<4x32xf32>
    %294 = arith.maximumf %292, %293 : vector<4x32xf32>
    %cst_296 = arith.constant dense<0.000000e+00> : vector<32xf32>
    %295 = vector.multi_reduction <add>, %294, %cst_296 [0] : vector<4x32xf32> to vector<32xf32>
    %296 = vector.shape_cast %295 : vector<32xf32> to vector<1x32xf32>
    %297 = arith.addf %289, %296 : vector<1x32xf32>
    %c0_297 = arith.constant 0 : index
    %c4_298 = arith.constant 4 : index
    %c0_299 = arith.constant 0 : index
    %c0_300 = arith.constant 0 : index
    %298 = vector.load %arg1[%c0_297, %c4_298, %c0_299, %c0_300] : memref<1x12x64x64xbf16, #tpu.memory_space<vmem>>, vector<1x1x64x64xbf16>
    %299 = vector.shape_cast %298 : vector<1x1x64x64xbf16> to vector<64x64xbf16>
    %c0_301 = arith.constant 0 : index
    %c0_302 = arith.constant 0 : index
    %c0_303 = arith.constant 0 : index
    %300 = vector.load %arg2[%c0_301, %c0_302, %c0_303] : memref<5x64x32xbf16, #tpu.memory_space<vmem>>, vector<1x64x32xbf16>
    %301 = vector.shape_cast %300 : vector<1x64x32xbf16> to vector<64x32xbf16>
    %cst_304 = arith.constant dense<0.000000e+00> : vector<64x32xf32>
    %302 = tpu.matmul %299, %301, %cst_304 {dimension_numbers = #tpu.dot_dimension_numbers<[1], [0], [0], [1], [0, 0, 1, 1], [], []>} : vector<64x64xbf16>, vector<64x32xbf16>, vector<64x32xf32> -> vector<64x32xf32>
    %c0_305 = arith.constant 0 : index
    %c5_306 = arith.constant 5 : index
    %c0_307 = arith.constant 0 : index
    %c0_308 = arith.constant 0 : index
    %303 = vector.load %arg1[%c0_305, %c5_306, %c0_307, %c0_308] : memref<1x12x64x64xbf16, #tpu.memory_space<vmem>>, vector<1x1x64x64xbf16>
    %304 = vector.shape_cast %303 : vector<1x1x64x64xbf16> to vector<64x64xbf16>
    %c1_309 = arith.constant 1 : index
    %c0_310 = arith.constant 0 : index
    %c0_311 = arith.constant 0 : index
    %305 = vector.load %arg2[%c1_309, %c0_310, %c0_311] : memref<5x64x32xbf16, #tpu.memory_space<vmem>>, vector<1x64x32xbf16>
    %306 = vector.shape_cast %305 : vector<1x64x32xbf16> to vector<64x32xbf16>
    %cst_312 = arith.constant dense<0.000000e+00> : vector<64x32xf32>
    %307 = tpu.matmul %304, %306, %cst_312 {dimension_numbers = #tpu.dot_dimension_numbers<[1], [0], [0], [1], [0, 0, 1, 1], [], []>} : vector<64x64xbf16>, vector<64x32xbf16>, vector<64x32xf32> -> vector<64x32xf32>
    %308 = arith.addf %302, %307 : vector<64x32xf32>
    %c0_313 = arith.constant 0 : index
    %c6_314 = arith.constant 6 : index
    %c0_315 = arith.constant 0 : index
    %c0_316 = arith.constant 0 : index
    %309 = vector.load %arg1[%c0_313, %c6_314, %c0_315, %c0_316] : memref<1x12x64x64xbf16, #tpu.memory_space<vmem>>, vector<1x1x64x64xbf16>
    %310 = vector.shape_cast %309 : vector<1x1x64x64xbf16> to vector<64x64xbf16>
    %c2_317 = arith.constant 2 : index
    %c0_318 = arith.constant 0 : index
    %c0_319 = arith.constant 0 : index
    %311 = vector.load %arg2[%c2_317, %c0_318, %c0_319] : memref<5x64x32xbf16, #tpu.memory_space<vmem>>, vector<1x64x32xbf16>
    %312 = vector.shape_cast %311 : vector<1x64x32xbf16> to vector<64x32xbf16>
    %cst_320 = arith.constant dense<0.000000e+00> : vector<64x32xf32>
    %313 = tpu.matmul %310, %312, %cst_320 {dimension_numbers = #tpu.dot_dimension_numbers<[1], [0], [0], [1], [0, 0, 1, 1], [], []>} : vector<64x64xbf16>, vector<64x32xbf16>, vector<64x32xf32> -> vector<64x32xf32>
    %314 = arith.addf %308, %313 : vector<64x32xf32>
    %c0_321 = arith.constant 0 : index
    %c7_322 = arith.constant 7 : index
    %c0_323 = arith.constant 0 : index
    %c0_324 = arith.constant 0 : index
    %315 = vector.load %arg1[%c0_321, %c7_322, %c0_323, %c0_324] : memref<1x12x64x64xbf16, #tpu.memory_space<vmem>>, vector<1x1x64x64xbf16>
    %316 = vector.shape_cast %315 : vector<1x1x64x64xbf16> to vector<64x64xbf16>
    %c3_325 = arith.constant 3 : index
    %c0_326 = arith.constant 0 : index
    %c0_327 = arith.constant 0 : index
    %317 = vector.load %arg2[%c3_325, %c0_326, %c0_327] : memref<5x64x32xbf16, #tpu.memory_space<vmem>>, vector<1x64x32xbf16>
    %318 = vector.shape_cast %317 : vector<1x64x32xbf16> to vector<64x32xbf16>
    %cst_328 = arith.constant dense<0.000000e+00> : vector<64x32xf32>
    %319 = tpu.matmul %316, %318, %cst_328 {dimension_numbers = #tpu.dot_dimension_numbers<[1], [0], [0], [1], [0, 0, 1, 1], [], []>} : vector<64x64xbf16>, vector<64x32xbf16>, vector<64x32xf32> -> vector<64x32xf32>
    %320 = arith.addf %314, %319 : vector<64x32xf32>
    %c0_329 = arith.constant 0 : index
    %c8_330 = arith.constant 8 : index
    %c0_331 = arith.constant 0 : index
    %c0_332 = arith.constant 0 : index
    %321 = vector.load %arg1[%c0_329, %c8_330, %c0_331, %c0_332] : memref<1x12x64x64xbf16, #tpu.memory_space<vmem>>, vector<1x1x64x64xbf16>
    %322 = vector.shape_cast %321 : vector<1x1x64x64xbf16> to vector<64x64xbf16>
    %c4_333 = arith.constant 4 : index
    %c0_334 = arith.constant 0 : index
    %c0_335 = arith.constant 0 : index
    %323 = vector.load %arg2[%c4_333, %c0_334, %c0_335] : memref<5x64x32xbf16, #tpu.memory_space<vmem>>, vector<1x64x32xbf16>
    %324 = vector.shape_cast %323 : vector<1x64x32xbf16> to vector<64x32xbf16>
    %cst_336 = arith.constant dense<0.000000e+00> : vector<64x32xf32>
    %325 = tpu.matmul %322, %324, %cst_336 {dimension_numbers = #tpu.dot_dimension_numbers<[1], [0], [0], [1], [0, 0, 1, 1], [], []>} : vector<64x64xbf16>, vector<64x32xbf16>, vector<64x32xf32> -> vector<64x32xf32>
    %326 = arith.addf %320, %325 : vector<64x32xf32>
    %327 = vector.broadcast %0 : vector<1x32xf32> to vector<64x32xf32>
    %328 = arith.addf %326, %327 : vector<64x32xf32>
    %cst_337 = arith.constant 0.000000e+00 : f32
    %329 = vector.broadcast %cst_337 : f32 to vector<64x32xf32>
    %330 = arith.maximumf %328, %329 : vector<64x32xf32>
    %c0_338 = arith.constant 0 : index
    %c0_339 = arith.constant 0 : index
    %331 = vector.load %arg8[%c0_338, %c0_339] : memref<64x32xf32, #tpu.memory_space<vmem>>, vector<64x32xf32>
    tpu.vector_store %arg8[%c0_338, %c0_339], %330 {strides = array<i32>} : memref<64x32xf32, #tpu.memory_space<vmem>>, vector<64x32xf32>,
    %c0_340 = arith.constant 0 : index
    %c0_341 = arith.constant 0 : index
    %332 = tpu.strided_load %arg8[%c0_340, %c0_341] {strides = array<i32: 2, 1>} : memref<64x32xf32, #tpu.memory_space<vmem>>, vector<32x32xf32>
    %c1_342 = arith.constant 1 : index
    %c0_343 = arith.constant 0 : index
    %333 = tpu.strided_load %arg8[%c1_342, %c0_343] {strides = array<i32: 2, 1>} : memref<64x32xf32, #tpu.memory_space<vmem>>, vector<32x32xf32>
    %334 = arith.maximumf %332, %333 : vector<32x32xf32>
    %cst_344 = arith.constant 0.000000e+00 : f32
    %335 = vector.broadcast %cst_344 : f32 to vector<1x32xf32>
    %336 = vector.extract_strided_slice %333 {offsets = [0, 0], sizes = [31, 32], strides = [1, 1]} : vector<32x32xf32> to vector<31x32xf32>
    %337 = tpu.concatenate %335, %336 in 0 : vector<1x32xf32>, vector<31x32xf32> -> vector<32x32xf32>
    %338 = arith.mulf %337, %1 : vector<32x32xf32>
    %339 = arith.maximumf %334, %338 : vector<32x32xf32>
    %c0_345 = arith.constant 0 : index
    %c0_346 = arith.constant 0 : index
    %340 = vector.load %arg9[%c0_345, %c0_346] : memref<32x32xf32, #tpu.memory_space<vmem>>, vector<32x32xf32>
    tpu.vector_store %arg9[%c0_345, %c0_346], %339 {strides = array<i32>} : memref<32x32xf32, #tpu.memory_space<vmem>>, vector<32x32xf32>,
    %cst_347 = arith.constant 0.000000e+00 : f32
    %341 = vector.broadcast %cst_347 : f32 to vector<1x32xf32>
    %c0_348 = arith.constant 0 : index
    %c0_349 = arith.constant 0 : index
    %342 = vector.load %arg9[%c0_348, %c0_349] : memref<32x32xf32, #tpu.memory_space<vmem>>, vector<4x32xf32>
    %c4_350 = arith.constant 4 : index
    %c0_351 = arith.constant 0 : index
    %343 = vector.load %arg9[%c4_350, %c0_351] : memref<32x32xf32, #tpu.memory_space<vmem>>, vector<4x32xf32>
    %344 = arith.maximumf %342, %343 : vector<4x32xf32>
    %cst_352 = arith.constant dense<0.000000e+00> : vector<32xf32>
    %345 = vector.multi_reduction <add>, %344, %cst_352 [0] : vector<4x32xf32> to vector<32xf32>
    %346 = vector.shape_cast %345 : vector<32xf32> to vector<1x32xf32>
    %347 = arith.addf %341, %346 : vector<1x32xf32>
    %c8_353 = arith.constant 8 : index
    %c0_354 = arith.constant 0 : index
    %348 = vector.load %arg9[%c8_353, %c0_354] : memref<32x32xf32, #tpu.memory_space<vmem>>, vector<4x32xf32>
    %c12_355 = arith.constant 12 : index
    %c0_356 = arith.constant 0 : index
    %349 = vector.load %arg9[%c12_355, %c0_356] : memref<32x32xf32, #tpu.memory_space<vmem>>, vector<4x32xf32>
    %350 = arith.maximumf %348, %349 : vector<4x32xf32>
    %c4_357 = arith.constant 4 : index
    %c0_358 = arith.constant 0 : index
    %351 = vector.load %arg9[%c4_357, %c0_358] : memref<32x32xf32, #tpu.memory_space<vmem>>, vector<4x32xf32>
    %352 = arith.maximumf %350, %351 : vector<4x32xf32>
    %cst_359 = arith.constant dense<0.000000e+00> : vector<32xf32>
    %353 = vector.multi_reduction <add>, %352, %cst_359 [0] : vector<4x32xf32> to vector<32xf32>
    %354 = vector.shape_cast %353 : vector<32xf32> to vector<1x32xf32>
    %355 = arith.addf %347, %354 : vector<1x32xf32>
    %c16_360 = arith.constant 16 : index
    %c0_361 = arith.constant 0 : index
    %356 = vector.load %arg9[%c16_360, %c0_361] : memref<32x32xf32, #tpu.memory_space<vmem>>, vector<4x32xf32>
    %c20_362 = arith.constant 20 : index
    %c0_363 = arith.constant 0 : index
    %357 = vector.load %arg9[%c20_362, %c0_363] : memref<32x32xf32, #tpu.memory_space<vmem>>, vector<4x32xf32>
    %358 = arith.maximumf %356, %357 : vector<4x32xf32>
    %c12_364 = arith.constant 12 : index
    %c0_365 = arith.constant 0 : index
    %359 = vector.load %arg9[%c12_364, %c0_365] : memref<32x32xf32, #tpu.memory_space<vmem>>, vector<4x32xf32>
    %360 = arith.maximumf %358, %359 : vector<4x32xf32>
    %cst_366 = arith.constant dense<0.000000e+00> : vector<32xf32>
    %361 = vector.multi_reduction <add>, %360, %cst_366 [0] : vector<4x32xf32> to vector<32xf32>
    %362 = vector.shape_cast %361 : vector<32xf32> to vector<1x32xf32>
    %363 = arith.addf %355, %362 : vector<1x32xf32>
    %c24_367 = arith.constant 24 : index
    %c0_368 = arith.constant 0 : index
    %364 = vector.load %arg9[%c24_367, %c0_368] : memref<32x32xf32, #tpu.memory_space<vmem>>, vector<4x32xf32>
    %c28_369 = arith.constant 28 : index
    %c0_370 = arith.constant 0 : index
    %365 = vector.load %arg9[%c28_369, %c0_370] : memref<32x32xf32, #tpu.memory_space<vmem>>, vector<4x32xf32>
    %366 = arith.maximumf %364, %365 : vector<4x32xf32>
    %c20_371 = arith.constant 20 : index
    %c0_372 = arith.constant 0 : index
    %367 = vector.load %arg9[%c20_371, %c0_372] : memref<32x32xf32, #tpu.memory_space<vmem>>, vector<4x32xf32>
    %368 = arith.maximumf %366, %367 : vector<4x32xf32>
    %cst_373 = arith.constant dense<0.000000e+00> : vector<32xf32>
    %369 = vector.multi_reduction <add>, %368, %cst_373 [0] : vector<4x32xf32> to vector<32xf32>
    %370 = vector.shape_cast %369 : vector<32xf32> to vector<1x32xf32>
    %371 = arith.addf %363, %370 : vector<1x32xf32>
    %c0_374 = arith.constant 0 : index
    %c5_375 = arith.constant 5 : index
    %c0_376 = arith.constant 0 : index
    %c0_377 = arith.constant 0 : index
    %372 = vector.load %arg1[%c0_374, %c5_375, %c0_376, %c0_377] : memref<1x12x64x64xbf16, #tpu.memory_space<vmem>>, vector<1x1x64x64xbf16>
    %373 = vector.shape_cast %372 : vector<1x1x64x64xbf16> to vector<64x64xbf16>
    %c0_378 = arith.constant 0 : index
    %c0_379 = arith.constant 0 : index
    %c0_380 = arith.constant 0 : index
    %374 = vector.load %arg2[%c0_378, %c0_379, %c0_380] : memref<5x64x32xbf16, #tpu.memory_space<vmem>>, vector<1x64x32xbf16>
    %375 = vector.shape_cast %374 : vector<1x64x32xbf16> to vector<64x32xbf16>
    %cst_381 = arith.constant dense<0.000000e+00> : vector<64x32xf32>
    %376 = tpu.matmul %373, %375, %cst_381 {dimension_numbers = #tpu.dot_dimension_numbers<[1], [0], [0], [1], [0, 0, 1, 1], [], []>} : vector<64x64xbf16>, vector<64x32xbf16>, vector<64x32xf32> -> vector<64x32xf32>
    %c0_382 = arith.constant 0 : index
    %c6_383 = arith.constant 6 : index
    %c0_384 = arith.constant 0 : index
    %c0_385 = arith.constant 0 : index
    %377 = vector.load %arg1[%c0_382, %c6_383, %c0_384, %c0_385] : memref<1x12x64x64xbf16, #tpu.memory_space<vmem>>, vector<1x1x64x64xbf16>
    %378 = vector.shape_cast %377 : vector<1x1x64x64xbf16> to vector<64x64xbf16>
    %c1_386 = arith.constant 1 : index
    %c0_387 = arith.constant 0 : index
    %c0_388 = arith.constant 0 : index
    %379 = vector.load %arg2[%c1_386, %c0_387, %c0_388] : memref<5x64x32xbf16, #tpu.memory_space<vmem>>, vector<1x64x32xbf16>
    %380 = vector.shape_cast %379 : vector<1x64x32xbf16> to vector<64x32xbf16>
    %cst_389 = arith.constant dense<0.000000e+00> : vector<64x32xf32>
    %381 = tpu.matmul %378, %380, %cst_389 {dimension_numbers = #tpu.dot_dimension_numbers<[1], [0], [0], [1], [0, 0, 1, 1], [], []>} : vector<64x64xbf16>, vector<64x32xbf16>, vector<64x32xf32> -> vector<64x32xf32>
    %382 = arith.addf %376, %381 : vector<64x32xf32>
    %c0_390 = arith.constant 0 : index
    %c7_391 = arith.constant 7 : index
    %c0_392 = arith.constant 0 : index
    %c0_393 = arith.constant 0 : index
    %383 = vector.load %arg1[%c0_390, %c7_391, %c0_392, %c0_393] : memref<1x12x64x64xbf16, #tpu.memory_space<vmem>>, vector<1x1x64x64xbf16>
    %384 = vector.shape_cast %383 : vector<1x1x64x64xbf16> to vector<64x64xbf16>
    %c2_394 = arith.constant 2 : index
    %c0_395 = arith.constant 0 : index
    %c0_396 = arith.constant 0 : index
    %385 = vector.load %arg2[%c2_394, %c0_395, %c0_396] : memref<5x64x32xbf16, #tpu.memory_space<vmem>>, vector<1x64x32xbf16>
    %386 = vector.shape_cast %385 : vector<1x64x32xbf16> to vector<64x32xbf16>
    %cst_397 = arith.constant dense<0.000000e+00> : vector<64x32xf32>
    %387 = tpu.matmul %384, %386, %cst_397 {dimension_numbers = #tpu.dot_dimension_numbers<[1], [0], [0], [1], [0, 0, 1, 1], [], []>} : vector<64x64xbf16>, vector<64x32xbf16>, vector<64x32xf32> -> vector<64x32xf32>
    %388 = arith.addf %382, %387 : vector<64x32xf32>
    %c0_398 = arith.constant 0 : index
    %c8_399 = arith.constant 8 : index
    %c0_400 = arith.constant 0 : index
    %c0_401 = arith.constant 0 : index
    %389 = vector.load %arg1[%c0_398, %c8_399, %c0_400, %c0_401] : memref<1x12x64x64xbf16, #tpu.memory_space<vmem>>, vector<1x1x64x64xbf16>
    %390 = vector.shape_cast %389 : vector<1x1x64x64xbf16> to vector<64x64xbf16>
    %c3_402 = arith.constant 3 : index
    %c0_403 = arith.constant 0 : index
    %c0_404 = arith.constant 0 : index
    %391 = vector.load %arg2[%c3_402, %c0_403, %c0_404] : memref<5x64x32xbf16, #tpu.memory_space<vmem>>, vector<1x64x32xbf16>
    %392 = vector.shape_cast %391 : vector<1x64x32xbf16> to vector<64x32xbf16>
    %cst_405 = arith.constant dense<0.000000e+00> : vector<64x32xf32>
    %393 = tpu.matmul %390, %392, %cst_405 {dimension_numbers = #tpu.dot_dimension_numbers<[1], [0], [0], [1], [0, 0, 1, 1], [], []>} : vector<64x64xbf16>, vector<64x32xbf16>, vector<64x32xf32> -> vector<64x32xf32>
    %394 = arith.addf %388, %393 : vector<64x32xf32>
    %c0_406 = arith.constant 0 : index
    %c9 = arith.constant 9 : index
    %c0_407 = arith.constant 0 : index
    %c0_408 = arith.constant 0 : index
    %395 = vector.load %arg1[%c0_406, %c9, %c0_407, %c0_408] : memref<1x12x64x64xbf16, #tpu.memory_space<vmem>>, vector<1x1x64x64xbf16>
    %396 = vector.shape_cast %395 : vector<1x1x64x64xbf16> to vector<64x64xbf16>
    %c4_409 = arith.constant 4 : index
    %c0_410 = arith.constant 0 : index
    %c0_411 = arith.constant 0 : index
    %397 = vector.load %arg2[%c4_409, %c0_410, %c0_411] : memref<5x64x32xbf16, #tpu.memory_space<vmem>>, vector<1x64x32xbf16>
    %398 = vector.shape_cast %397 : vector<1x64x32xbf16> to vector<64x32xbf16>
    %cst_412 = arith.constant dense<0.000000e+00> : vector<64x32xf32>
    %399 = tpu.matmul %396, %398, %cst_412 {dimension_numbers = #tpu.dot_dimension_numbers<[1], [0], [0], [1], [0, 0, 1, 1], [], []>} : vector<64x64xbf16>, vector<64x32xbf16>, vector<64x32xf32> -> vector<64x32xf32>
    %400 = arith.addf %394, %399 : vector<64x32xf32>
    %401 = vector.broadcast %0 : vector<1x32xf32> to vector<64x32xf32>
    %402 = arith.addf %400, %401 : vector<64x32xf32>
    %cst_413 = arith.constant 0.000000e+00 : f32
    %403 = vector.broadcast %cst_413 : f32 to vector<64x32xf32>
    %404 = arith.maximumf %402, %403 : vector<64x32xf32>
    %c0_414 = arith.constant 0 : index
    %c0_415 = arith.constant 0 : index
    %405 = vector.load %arg8[%c0_414, %c0_415] : memref<64x32xf32, #tpu.memory_space<vmem>>, vector<64x32xf32>
    tpu.vector_store %arg8[%c0_414, %c0_415], %404 {strides = array<i32>} : memref<64x32xf32, #tpu.memory_space<vmem>>, vector<64x32xf32>,
    %c0_416 = arith.constant 0 : index
    %c0_417 = arith.constant 0 : index
    %406 = tpu.strided_load %arg8[%c0_416, %c0_417] {strides = array<i32: 2, 1>} : memref<64x32xf32, #tpu.memory_space<vmem>>, vector<32x32xf32>
    %c1_418 = arith.constant 1 : index
    %c0_419 = arith.constant 0 : index
    %407 = tpu.strided_load %arg8[%c1_418, %c0_419] {strides = array<i32: 2, 1>} : memref<64x32xf32, #tpu.memory_space<vmem>>, vector<32x32xf32>
    %408 = arith.maximumf %406, %407 : vector<32x32xf32>
    %cst_420 = arith.constant 0.000000e+00 : f32
    %409 = vector.broadcast %cst_420 : f32 to vector<1x32xf32>
    %410 = vector.extract_strided_slice %407 {offsets = [0, 0], sizes = [31, 32], strides = [1, 1]} : vector<32x32xf32> to vector<31x32xf32>
    %411 = tpu.concatenate %409, %410 in 0 : vector<1x32xf32>, vector<31x32xf32> -> vector<32x32xf32>
    %412 = arith.mulf %411, %1 : vector<32x32xf32>
    %413 = arith.maximumf %408, %412 : vector<32x32xf32>
    %c0_421 = arith.constant 0 : index
    %c0_422 = arith.constant 0 : index
    %414 = vector.load %arg9[%c0_421, %c0_422] : memref<32x32xf32, #tpu.memory_space<vmem>>, vector<32x32xf32>
    tpu.vector_store %arg9[%c0_421, %c0_422], %413 {strides = array<i32>} : memref<32x32xf32, #tpu.memory_space<vmem>>, vector<32x32xf32>,
    %cst_423 = arith.constant 0.000000e+00 : f32
    %415 = vector.broadcast %cst_423 : f32 to vector<1x32xf32>
    %c0_424 = arith.constant 0 : index
    %c0_425 = arith.constant 0 : index
    %416 = vector.load %arg9[%c0_424, %c0_425] : memref<32x32xf32, #tpu.memory_space<vmem>>, vector<4x32xf32>
    %c4_426 = arith.constant 4 : index
    %c0_427 = arith.constant 0 : index
    %417 = vector.load %arg9[%c4_426, %c0_427] : memref<32x32xf32, #tpu.memory_space<vmem>>, vector<4x32xf32>
    %418 = arith.maximumf %416, %417 : vector<4x32xf32>
    %cst_428 = arith.constant dense<0.000000e+00> : vector<32xf32>
    %419 = vector.multi_reduction <add>, %418, %cst_428 [0] : vector<4x32xf32> to vector<32xf32>
    %420 = vector.shape_cast %419 : vector<32xf32> to vector<1x32xf32>
    %421 = arith.addf %415, %420 : vector<1x32xf32>
    %c8_429 = arith.constant 8 : index
    %c0_430 = arith.constant 0 : index
    %422 = vector.load %arg9[%c8_429, %c0_430] : memref<32x32xf32, #tpu.memory_space<vmem>>, vector<4x32xf32>
    %c12_431 = arith.constant 12 : index
    %c0_432 = arith.constant 0 : index
    %423 = vector.load %arg9[%c12_431, %c0_432] : memref<32x32xf32, #tpu.memory_space<vmem>>, vector<4x32xf32>
    %424 = arith.maximumf %422, %423 : vector<4x32xf32>
    %c4_433 = arith.constant 4 : index
    %c0_434 = arith.constant 0 : index
    %425 = vector.load %arg9[%c4_433, %c0_434] : memref<32x32xf32, #tpu.memory_space<vmem>>, vector<4x32xf32>
    %426 = arith.maximumf %424, %425 : vector<4x32xf32>
    %cst_435 = arith.constant dense<0.000000e+00> : vector<32xf32>
    %427 = vector.multi_reduction <add>, %426, %cst_435 [0] : vector<4x32xf32> to vector<32xf32>
    %428 = vector.shape_cast %427 : vector<32xf32> to vector<1x32xf32>
    %429 = arith.addf %421, %428 : vector<1x32xf32>
    %c16_436 = arith.constant 16 : index
    %c0_437 = arith.constant 0 : index
    %430 = vector.load %arg9[%c16_436, %c0_437] : memref<32x32xf32, #tpu.memory_space<vmem>>, vector<4x32xf32>
    %c20_438 = arith.constant 20 : index
    %c0_439 = arith.constant 0 : index
    %431 = vector.load %arg9[%c20_438, %c0_439] : memref<32x32xf32, #tpu.memory_space<vmem>>, vector<4x32xf32>
    %432 = arith.maximumf %430, %431 : vector<4x32xf32>
    %c12_440 = arith.constant 12 : index
    %c0_441 = arith.constant 0 : index
    %433 = vector.load %arg9[%c12_440, %c0_441] : memref<32x32xf32, #tpu.memory_space<vmem>>, vector<4x32xf32>
    %434 = arith.maximumf %432, %433 : vector<4x32xf32>
    %cst_442 = arith.constant dense<0.000000e+00> : vector<32xf32>
    %435 = vector.multi_reduction <add>, %434, %cst_442 [0] : vector<4x32xf32> to vector<32xf32>
    %436 = vector.shape_cast %435 : vector<32xf32> to vector<1x32xf32>
    %437 = arith.addf %429, %436 : vector<1x32xf32>
    %c24_443 = arith.constant 24 : index
    %c0_444 = arith.constant 0 : index
    %438 = vector.load %arg9[%c24_443, %c0_444] : memref<32x32xf32, #tpu.memory_space<vmem>>, vector<4x32xf32>
    %c28_445 = arith.constant 28 : index
    %c0_446 = arith.constant 0 : index
    %439 = vector.load %arg9[%c28_445, %c0_446] : memref<32x32xf32, #tpu.memory_space<vmem>>, vector<4x32xf32>
    %440 = arith.maximumf %438, %439 : vector<4x32xf32>
    %c20_447 = arith.constant 20 : index
    %c0_448 = arith.constant 0 : index
    %441 = vector.load %arg9[%c20_447, %c0_448] : memref<32x32xf32, #tpu.memory_space<vmem>>, vector<4x32xf32>
    %442 = arith.maximumf %440, %441 : vector<4x32xf32>
    %cst_449 = arith.constant dense<0.000000e+00> : vector<32xf32>
    %443 = vector.multi_reduction <add>, %442, %cst_449 [0] : vector<4x32xf32> to vector<32xf32>
    %444 = vector.shape_cast %443 : vector<32xf32> to vector<1x32xf32>
    %445 = arith.addf %437, %444 : vector<1x32xf32>
    %c0_450 = arith.constant 0 : index
    %c6_451 = arith.constant 6 : index
    %c0_452 = arith.constant 0 : index
    %c0_453 = arith.constant 0 : index
    %446 = vector.load %arg1[%c0_450, %c6_451, %c0_452, %c0_453] : memref<1x12x64x64xbf16, #tpu.memory_space<vmem>>, vector<1x1x64x64xbf16>
    %447 = vector.shape_cast %446 : vector<1x1x64x64xbf16> to vector<64x64xbf16>
    %c0_454 = arith.constant 0 : index
    %c0_455 = arith.constant 0 : index
    %c0_456 = arith.constant 0 : index
    %448 = vector.load %arg2[%c0_454, %c0_455, %c0_456] : memref<5x64x32xbf16, #tpu.memory_space<vmem>>, vector<1x64x32xbf16>
    %449 = vector.shape_cast %448 : vector<1x64x32xbf16> to vector<64x32xbf16>
    %cst_457 = arith.constant dense<0.000000e+00> : vector<64x32xf32>
    %450 = tpu.matmul %447, %449, %cst_457 {dimension_numbers = #tpu.dot_dimension_numbers<[1], [0], [0], [1], [0, 0, 1, 1], [], []>} : vector<64x64xbf16>, vector<64x32xbf16>, vector<64x32xf32> -> vector<64x32xf32>
    %c0_458 = arith.constant 0 : index
    %c7_459 = arith.constant 7 : index
    %c0_460 = arith.constant 0 : index
    %c0_461 = arith.constant 0 : index
    %451 = vector.load %arg1[%c0_458, %c7_459, %c0_460, %c0_461] : memref<1x12x64x64xbf16, #tpu.memory_space<vmem>>, vector<1x1x64x64xbf16>
    %452 = vector.shape_cast %451 : vector<1x1x64x64xbf16> to vector<64x64xbf16>
    %c1_462 = arith.constant 1 : index
    %c0_463 = arith.constant 0 : index
    %c0_464 = arith.constant 0 : index
    %453 = vector.load %arg2[%c1_462, %c0_463, %c0_464] : memref<5x64x32xbf16, #tpu.memory_space<vmem>>, vector<1x64x32xbf16>
    %454 = vector.shape_cast %453 : vector<1x64x32xbf16> to vector<64x32xbf16>
    %cst_465 = arith.constant dense<0.000000e+00> : vector<64x32xf32>
    %455 = tpu.matmul %452, %454, %cst_465 {dimension_numbers = #tpu.dot_dimension_numbers<[1], [0], [0], [1], [0, 0, 1, 1], [], []>} : vector<64x64xbf16>, vector<64x32xbf16>, vector<64x32xf32> -> vector<64x32xf32>
    %456 = arith.addf %450, %455 : vector<64x32xf32>
    %c0_466 = arith.constant 0 : index
    %c8_467 = arith.constant 8 : index
    %c0_468 = arith.constant 0 : index
    %c0_469 = arith.constant 0 : index
    %457 = vector.load %arg1[%c0_466, %c8_467, %c0_468, %c0_469] : memref<1x12x64x64xbf16, #tpu.memory_space<vmem>>, vector<1x1x64x64xbf16>
    %458 = vector.shape_cast %457 : vector<1x1x64x64xbf16> to vector<64x64xbf16>
    %c2_470 = arith.constant 2 : index
    %c0_471 = arith.constant 0 : index
    %c0_472 = arith.constant 0 : index
    %459 = vector.load %arg2[%c2_470, %c0_471, %c0_472] : memref<5x64x32xbf16, #tpu.memory_space<vmem>>, vector<1x64x32xbf16>
    %460 = vector.shape_cast %459 : vector<1x64x32xbf16> to vector<64x32xbf16>
    %cst_473 = arith.constant dense<0.000000e+00> : vector<64x32xf32>
    %461 = tpu.matmul %458, %460, %cst_473 {dimension_numbers = #tpu.dot_dimension_numbers<[1], [0], [0], [1], [0, 0, 1, 1], [], []>} : vector<64x64xbf16>, vector<64x32xbf16>, vector<64x32xf32> -> vector<64x32xf32>
    %462 = arith.addf %456, %461 : vector<64x32xf32>
    %c0_474 = arith.constant 0 : index
    %c9_475 = arith.constant 9 : index
    %c0_476 = arith.constant 0 : index
    %c0_477 = arith.constant 0 : index
    %463 = vector.load %arg1[%c0_474, %c9_475, %c0_476, %c0_477] : memref<1x12x64x64xbf16, #tpu.memory_space<vmem>>, vector<1x1x64x64xbf16>
    %464 = vector.shape_cast %463 : vector<1x1x64x64xbf16> to vector<64x64xbf16>
    %c3_478 = arith.constant 3 : index
    %c0_479 = arith.constant 0 : index
    %c0_480 = arith.constant 0 : index
    %465 = vector.load %arg2[%c3_478, %c0_479, %c0_480] : memref<5x64x32xbf16, #tpu.memory_space<vmem>>, vector<1x64x32xbf16>
    %466 = vector.shape_cast %465 : vector<1x64x32xbf16> to vector<64x32xbf16>
    %cst_481 = arith.constant dense<0.000000e+00> : vector<64x32xf32>
    %467 = tpu.matmul %464, %466, %cst_481 {dimension_numbers = #tpu.dot_dimension_numbers<[1], [0], [0], [1], [0, 0, 1, 1], [], []>} : vector<64x64xbf16>, vector<64x32xbf16>, vector<64x32xf32> -> vector<64x32xf32>
    %468 = arith.addf %462, %467 : vector<64x32xf32>
    %c0_482 = arith.constant 0 : index
    %c10 = arith.constant 10 : index
    %c0_483 = arith.constant 0 : index
    %c0_484 = arith.constant 0 : index
    %469 = vector.load %arg1[%c0_482, %c10, %c0_483, %c0_484] : memref<1x12x64x64xbf16, #tpu.memory_space<vmem>>, vector<1x1x64x64xbf16>
    %470 = vector.shape_cast %469 : vector<1x1x64x64xbf16> to vector<64x64xbf16>
    %c4_485 = arith.constant 4 : index
    %c0_486 = arith.constant 0 : index
    %c0_487 = arith.constant 0 : index
    %471 = vector.load %arg2[%c4_485, %c0_486, %c0_487] : memref<5x64x32xbf16, #tpu.memory_space<vmem>>, vector<1x64x32xbf16>
    %472 = vector.shape_cast %471 : vector<1x64x32xbf16> to vector<64x32xbf16>
    %cst_488 = arith.constant dense<0.000000e+00> : vector<64x32xf32>
    %473 = tpu.matmul %470, %472, %cst_488 {dimension_numbers = #tpu.dot_dimension_numbers<[1], [0], [0], [1], [0, 0, 1, 1], [], []>} : vector<64x64xbf16>, vector<64x32xbf16>, vector<64x32xf32> -> vector<64x32xf32>
    %474 = arith.addf %468, %473 : vector<64x32xf32>
    %475 = vector.broadcast %0 : vector<1x32xf32> to vector<64x32xf32>
    %476 = arith.addf %474, %475 : vector<64x32xf32>
    %cst_489 = arith.constant 0.000000e+00 : f32
    %477 = vector.broadcast %cst_489 : f32 to vector<64x32xf32>
    %478 = arith.maximumf %476, %477 : vector<64x32xf32>
    %c0_490 = arith.constant 0 : index
    %c0_491 = arith.constant 0 : index
    %479 = vector.load %arg8[%c0_490, %c0_491] : memref<64x32xf32, #tpu.memory_space<vmem>>, vector<64x32xf32>
    tpu.vector_store %arg8[%c0_490, %c0_491], %478 {strides = array<i32>} : memref<64x32xf32, #tpu.memory_space<vmem>>, vector<64x32xf32>,
    %c0_492 = arith.constant 0 : index
    %c0_493 = arith.constant 0 : index
    %480 = tpu.strided_load %arg8[%c0_492, %c0_493] {strides = array<i32: 2, 1>} : memref<64x32xf32, #tpu.memory_space<vmem>>, vector<32x32xf32>
    %c1_494 = arith.constant 1 : index
    %c0_495 = arith.constant 0 : index
    %481 = tpu.strided_load %arg8[%c1_494, %c0_495] {strides = array<i32: 2, 1>} : memref<64x32xf32, #tpu.memory_space<vmem>>, vector<32x32xf32>
    %482 = arith.maximumf %480, %481 : vector<32x32xf32>
    %cst_496 = arith.constant 0.000000e+00 : f32
    %483 = vector.broadcast %cst_496 : f32 to vector<1x32xf32>
    %484 = vector.extract_strided_slice %481 {offsets = [0, 0], sizes = [31, 32], strides = [1, 1]} : vector<32x32xf32> to vector<31x32xf32>
    %485 = tpu.concatenate %483, %484 in 0 : vector<1x32xf32>, vector<31x32xf32> -> vector<32x32xf32>
    %486 = arith.mulf %485, %1 : vector<32x32xf32>
    %487 = arith.maximumf %482, %486 : vector<32x32xf32>
    %c0_497 = arith.constant 0 : index
    %c0_498 = arith.constant 0 : index
    %488 = vector.load %arg9[%c0_497, %c0_498] : memref<32x32xf32, #tpu.memory_space<vmem>>, vector<32x32xf32>
    tpu.vector_store %arg9[%c0_497, %c0_498], %487 {strides = array<i32>} : memref<32x32xf32, #tpu.memory_space<vmem>>, vector<32x32xf32>,
    %cst_499 = arith.constant 0.000000e+00 : f32
    %489 = vector.broadcast %cst_499 : f32 to vector<1x32xf32>
    %c0_500 = arith.constant 0 : index
    %c0_501 = arith.constant 0 : index
    %490 = vector.load %arg9[%c0_500, %c0_501] : memref<32x32xf32, #tpu.memory_space<vmem>>, vector<4x32xf32>
    %c4_502 = arith.constant 4 : index
    %c0_503 = arith.constant 0 : index
    %491 = vector.load %arg9[%c4_502, %c0_503] : memref<32x32xf32, #tpu.memory_space<vmem>>, vector<4x32xf32>
    %492 = arith.maximumf %490, %491 : vector<4x32xf32>
    %cst_504 = arith.constant dense<0.000000e+00> : vector<32xf32>
    %493 = vector.multi_reduction <add>, %492, %cst_504 [0] : vector<4x32xf32> to vector<32xf32>
    %494 = vector.shape_cast %493 : vector<32xf32> to vector<1x32xf32>
    %495 = arith.addf %489, %494 : vector<1x32xf32>
    %c8_505 = arith.constant 8 : index
    %c0_506 = arith.constant 0 : index
    %496 = vector.load %arg9[%c8_505, %c0_506] : memref<32x32xf32, #tpu.memory_space<vmem>>, vector<4x32xf32>
    %c12_507 = arith.constant 12 : index
    %c0_508 = arith.constant 0 : index
    %497 = vector.load %arg9[%c12_507, %c0_508] : memref<32x32xf32, #tpu.memory_space<vmem>>, vector<4x32xf32>
    %498 = arith.maximumf %496, %497 : vector<4x32xf32>
    %c4_509 = arith.constant 4 : index
    %c0_510 = arith.constant 0 : index
    %499 = vector.load %arg9[%c4_509, %c0_510] : memref<32x32xf32, #tpu.memory_space<vmem>>, vector<4x32xf32>
    %500 = arith.maximumf %498, %499 : vector<4x32xf32>
    %cst_511 = arith.constant dense<0.000000e+00> : vector<32xf32>
    %501 = vector.multi_reduction <add>, %500, %cst_511 [0] : vector<4x32xf32> to vector<32xf32>
    %502 = vector.shape_cast %501 : vector<32xf32> to vector<1x32xf32>
    %503 = arith.addf %495, %502 : vector<1x32xf32>
    %c16_512 = arith.constant 16 : index
    %c0_513 = arith.constant 0 : index
    %504 = vector.load %arg9[%c16_512, %c0_513] : memref<32x32xf32, #tpu.memory_space<vmem>>, vector<4x32xf32>
    %c20_514 = arith.constant 20 : index
    %c0_515 = arith.constant 0 : index
    %505 = vector.load %arg9[%c20_514, %c0_515] : memref<32x32xf32, #tpu.memory_space<vmem>>, vector<4x32xf32>
    %506 = arith.maximumf %504, %505 : vector<4x32xf32>
    %c12_516 = arith.constant 12 : index
    %c0_517 = arith.constant 0 : index
    %507 = vector.load %arg9[%c12_516, %c0_517] : memref<32x32xf32, #tpu.memory_space<vmem>>, vector<4x32xf32>
    %508 = arith.maximumf %506, %507 : vector<4x32xf32>
    %cst_518 = arith.constant dense<0.000000e+00> : vector<32xf32>
    %509 = vector.multi_reduction <add>, %508, %cst_518 [0] : vector<4x32xf32> to vector<32xf32>
    %510 = vector.shape_cast %509 : vector<32xf32> to vector<1x32xf32>
    %511 = arith.addf %503, %510 : vector<1x32xf32>
    %c24_519 = arith.constant 24 : index
    %c0_520 = arith.constant 0 : index
    %512 = vector.load %arg9[%c24_519, %c0_520] : memref<32x32xf32, #tpu.memory_space<vmem>>, vector<4x32xf32>
    %c28_521 = arith.constant 28 : index
    %c0_522 = arith.constant 0 : index
    %513 = vector.load %arg9[%c28_521, %c0_522] : memref<32x32xf32, #tpu.memory_space<vmem>>, vector<4x32xf32>
    %514 = arith.maximumf %512, %513 : vector<4x32xf32>
    %c20_523 = arith.constant 20 : index
    %c0_524 = arith.constant 0 : index
    %515 = vector.load %arg9[%c20_523, %c0_524] : memref<32x32xf32, #tpu.memory_space<vmem>>, vector<4x32xf32>
    %516 = arith.maximumf %514, %515 : vector<4x32xf32>
    %cst_525 = arith.constant dense<0.000000e+00> : vector<32xf32>
    %517 = vector.multi_reduction <add>, %516, %cst_525 [0] : vector<4x32xf32> to vector<32xf32>
    %518 = vector.shape_cast %517 : vector<32xf32> to vector<1x32xf32>
    %519 = arith.addf %511, %518 : vector<1x32xf32>
    %c0_526 = arith.constant 0 : index
    %c7_527 = arith.constant 7 : index
    %c0_528 = arith.constant 0 : index
    %c0_529 = arith.constant 0 : index
    %520 = vector.load %arg1[%c0_526, %c7_527, %c0_528, %c0_529] : memref<1x12x64x64xbf16, #tpu.memory_space<vmem>>, vector<1x1x64x64xbf16>
    %521 = vector.shape_cast %520 : vector<1x1x64x64xbf16> to vector<64x64xbf16>
    %c0_530 = arith.constant 0 : index
    %c0_531 = arith.constant 0 : index
    %c0_532 = arith.constant 0 : index
    %522 = vector.load %arg2[%c0_530, %c0_531, %c0_532] : memref<5x64x32xbf16, #tpu.memory_space<vmem>>, vector<1x64x32xbf16>
    %523 = vector.shape_cast %522 : vector<1x64x32xbf16> to vector<64x32xbf16>
    %cst_533 = arith.constant dense<0.000000e+00> : vector<64x32xf32>
    %524 = tpu.matmul %521, %523, %cst_533 {dimension_numbers = #tpu.dot_dimension_numbers<[1], [0], [0], [1], [0, 0, 1, 1], [], []>} : vector<64x64xbf16>, vector<64x32xbf16>, vector<64x32xf32> -> vector<64x32xf32>
    %c0_534 = arith.constant 0 : index
    %c8_535 = arith.constant 8 : index
    %c0_536 = arith.constant 0 : index
    %c0_537 = arith.constant 0 : index
    %525 = vector.load %arg1[%c0_534, %c8_535, %c0_536, %c0_537] : memref<1x12x64x64xbf16, #tpu.memory_space<vmem>>, vector<1x1x64x64xbf16>
    %526 = vector.shape_cast %525 : vector<1x1x64x64xbf16> to vector<64x64xbf16>
    %c1_538 = arith.constant 1 : index
    %c0_539 = arith.constant 0 : index
    %c0_540 = arith.constant 0 : index
    %527 = vector.load %arg2[%c1_538, %c0_539, %c0_540] : memref<5x64x32xbf16, #tpu.memory_space<vmem>>, vector<1x64x32xbf16>
    %528 = vector.shape_cast %527 : vector<1x64x32xbf16> to vector<64x32xbf16>
    %cst_541 = arith.constant dense<0.000000e+00> : vector<64x32xf32>
    %529 = tpu.matmul %526, %528, %cst_541 {dimension_numbers = #tpu.dot_dimension_numbers<[1], [0], [0], [1], [0, 0, 1, 1], [], []>} : vector<64x64xbf16>, vector<64x32xbf16>, vector<64x32xf32> -> vector<64x32xf32>
    %530 = arith.addf %524, %529 : vector<64x32xf32>
    %c0_542 = arith.constant 0 : index
    %c9_543 = arith.constant 9 : index
    %c0_544 = arith.constant 0 : index
    %c0_545 = arith.constant 0 : index
    %531 = vector.load %arg1[%c0_542, %c9_543, %c0_544, %c0_545] : memref<1x12x64x64xbf16, #tpu.memory_space<vmem>>, vector<1x1x64x64xbf16>
    %532 = vector.shape_cast %531 : vector<1x1x64x64xbf16> to vector<64x64xbf16>
    %c2_546 = arith.constant 2 : index
    %c0_547 = arith.constant 0 : index
    %c0_548 = arith.constant 0 : index
    %533 = vector.load %arg2[%c2_546, %c0_547, %c0_548] : memref<5x64x32xbf16, #tpu.memory_space<vmem>>, vector<1x64x32xbf16>
    %534 = vector.shape_cast %533 : vector<1x64x32xbf16> to vector<64x32xbf16>
    %cst_549 = arith.constant dense<0.000000e+00> : vector<64x32xf32>
    %535 = tpu.matmul %532, %534, %cst_549 {dimension_numbers = #tpu.dot_dimension_numbers<[1], [0], [0], [1], [0, 0, 1, 1], [], []>} : vector<64x64xbf16>, vector<64x32xbf16>, vector<64x32xf32> -> vector<64x32xf32>
    %536 = arith.addf %530, %535 : vector<64x32xf32>
    %c0_550 = arith.constant 0 : index
    %c10_551 = arith.constant 10 : index
    %c0_552 = arith.constant 0 : index
    %c0_553 = arith.constant 0 : index
    %537 = vector.load %arg1[%c0_550, %c10_551, %c0_552, %c0_553] : memref<1x12x64x64xbf16, #tpu.memory_space<vmem>>, vector<1x1x64x64xbf16>
    %538 = vector.shape_cast %537 : vector<1x1x64x64xbf16> to vector<64x64xbf16>
    %c3_554 = arith.constant 3 : index
    %c0_555 = arith.constant 0 : index
    %c0_556 = arith.constant 0 : index
    %539 = vector.load %arg2[%c3_554, %c0_555, %c0_556] : memref<5x64x32xbf16, #tpu.memory_space<vmem>>, vector<1x64x32xbf16>
    %540 = vector.shape_cast %539 : vector<1x64x32xbf16> to vector<64x32xbf16>
    %cst_557 = arith.constant dense<0.000000e+00> : vector<64x32xf32>
    %541 = tpu.matmul %538, %540, %cst_557 {dimension_numbers = #tpu.dot_dimension_numbers<[1], [0], [0], [1], [0, 0, 1, 1], [], []>} : vector<64x64xbf16>, vector<64x32xbf16>, vector<64x32xf32> -> vector<64x32xf32>
    %542 = arith.addf %536, %541 : vector<64x32xf32>
    %c0_558 = arith.constant 0 : index
    %c11 = arith.constant 11 : index
    %c0_559 = arith.constant 0 : index
    %c0_560 = arith.constant 0 : index
    %543 = vector.load %arg1[%c0_558, %c11, %c0_559, %c0_560] : memref<1x12x64x64xbf16, #tpu.memory_space<vmem>>, vector<1x1x64x64xbf16>
    %544 = vector.shape_cast %543 : vector<1x1x64x64xbf16> to vector<64x64xbf16>
    %c4_561 = arith.constant 4 : index
    %c0_562 = arith.constant 0 : index
    %c0_563 = arith.constant 0 : index
    %545 = vector.load %arg2[%c4_561, %c0_562, %c0_563] : memref<5x64x32xbf16, #tpu.memory_space<vmem>>, vector<1x64x32xbf16>
    %546 = vector.shape_cast %545 : vector<1x64x32xbf16> to vector<64x32xbf16>
    %cst_564 = arith.constant dense<0.000000e+00> : vector<64x32xf32>
    %547 = tpu.matmul %544, %546, %cst_564 {dimension_numbers = #tpu.dot_dimension_numbers<[1], [0], [0], [1], [0, 0, 1, 1], [], []>} : vector<64x64xbf16>, vector<64x32xbf16>, vector<64x32xf32> -> vector<64x32xf32>
    %548 = arith.addf %542, %547 : vector<64x32xf32>
    %549 = vector.broadcast %0 : vector<1x32xf32> to vector<64x32xf32>
    %550 = arith.addf %548, %549 : vector<64x32xf32>
    %cst_565 = arith.constant 0.000000e+00 : f32
    %551 = vector.broadcast %cst_565 : f32 to vector<64x32xf32>
    %552 = arith.maximumf %550, %551 : vector<64x32xf32>
    %c0_566 = arith.constant 0 : index
    %c0_567 = arith.constant 0 : index
    %553 = vector.load %arg8[%c0_566, %c0_567] : memref<64x32xf32, #tpu.memory_space<vmem>>, vector<64x32xf32>
    tpu.vector_store %arg8[%c0_566, %c0_567], %552 {strides = array<i32>} : memref<64x32xf32, #tpu.memory_space<vmem>>, vector<64x32xf32>,
    %c0_568 = arith.constant 0 : index
    %c0_569 = arith.constant 0 : index
    %554 = tpu.strided_load %arg8[%c0_568, %c0_569] {strides = array<i32: 2, 1>} : memref<64x32xf32, #tpu.memory_space<vmem>>, vector<32x32xf32>
    %c1_570 = arith.constant 1 : index
    %c0_571 = arith.constant 0 : index
    %555 = tpu.strided_load %arg8[%c1_570, %c0_571] {strides = array<i32: 2, 1>} : memref<64x32xf32, #tpu.memory_space<vmem>>, vector<32x32xf32>
    %556 = arith.maximumf %554, %555 : vector<32x32xf32>
    %cst_572 = arith.constant 0.000000e+00 : f32
    %557 = vector.broadcast %cst_572 : f32 to vector<1x32xf32>
    %558 = vector.extract_strided_slice %555 {offsets = [0, 0], sizes = [31, 32], strides = [1, 1]} : vector<32x32xf32> to vector<31x32xf32>
    %559 = tpu.concatenate %557, %558 in 0 : vector<1x32xf32>, vector<31x32xf32> -> vector<32x32xf32>
    %560 = arith.mulf %559, %1 : vector<32x32xf32>
    %561 = arith.maximumf %556, %560 : vector<32x32xf32>
    %c0_573 = arith.constant 0 : index
    %c0_574 = arith.constant 0 : index
    %562 = vector.load %arg9[%c0_573, %c0_574] : memref<32x32xf32, #tpu.memory_space<vmem>>, vector<32x32xf32>
    tpu.vector_store %arg9[%c0_573, %c0_574], %561 {strides = array<i32>} : memref<32x32xf32, #tpu.memory_space<vmem>>, vector<32x32xf32>,
    %cst_575 = arith.constant 0.000000e+00 : f32
    %563 = vector.broadcast %cst_575 : f32 to vector<1x32xf32>
    %c0_576 = arith.constant 0 : index
    %c0_577 = arith.constant 0 : index
    %564 = vector.load %arg9[%c0_576, %c0_577] : memref<32x32xf32, #tpu.memory_space<vmem>>, vector<4x32xf32>
    %c4_578 = arith.constant 4 : index
    %c0_579 = arith.constant 0 : index
    %565 = vector.load %arg9[%c4_578, %c0_579] : memref<32x32xf32, #tpu.memory_space<vmem>>, vector<4x32xf32>
    %566 = arith.maximumf %564, %565 : vector<4x32xf32>
    %cst_580 = arith.constant dense<0.000000e+00> : vector<32xf32>
    %567 = vector.multi_reduction <add>, %566, %cst_580 [0] : vector<4x32xf32> to vector<32xf32>
    %568 = vector.shape_cast %567 : vector<32xf32> to vector<1x32xf32>
    %569 = arith.addf %563, %568 : vector<1x32xf32>
    %c8_581 = arith.constant 8 : index
    %c0_582 = arith.constant 0 : index
    %570 = vector.load %arg9[%c8_581, %c0_582] : memref<32x32xf32, #tpu.memory_space<vmem>>, vector<4x32xf32>
    %c12_583 = arith.constant 12 : index
    %c0_584 = arith.constant 0 : index
    %571 = vector.load %arg9[%c12_583, %c0_584] : memref<32x32xf32, #tpu.memory_space<vmem>>, vector<4x32xf32>
    %572 = arith.maximumf %570, %571 : vector<4x32xf32>
    %c4_585 = arith.constant 4 : index
    %c0_586 = arith.constant 0 : index
    %573 = vector.load %arg9[%c4_585, %c0_586] : memref<32x32xf32, #tpu.memory_space<vmem>>, vector<4x32xf32>
    %574 = arith.maximumf %572, %573 : vector<4x32xf32>
    %cst_587 = arith.constant dense<0.000000e+00> : vector<32xf32>
    %575 = vector.multi_reduction <add>, %574, %cst_587 [0] : vector<4x32xf32> to vector<32xf32>
    %576 = vector.shape_cast %575 : vector<32xf32> to vector<1x32xf32>
    %577 = arith.addf %569, %576 : vector<1x32xf32>
    %c16_588 = arith.constant 16 : index
    %c0_589 = arith.constant 0 : index
    %578 = vector.load %arg9[%c16_588, %c0_589] : memref<32x32xf32, #tpu.memory_space<vmem>>, vector<4x32xf32>
    %c20_590 = arith.constant 20 : index
    %c0_591 = arith.constant 0 : index
    %579 = vector.load %arg9[%c20_590, %c0_591] : memref<32x32xf32, #tpu.memory_space<vmem>>, vector<4x32xf32>
    %580 = arith.maximumf %578, %579 : vector<4x32xf32>
    %c12_592 = arith.constant 12 : index
    %c0_593 = arith.constant 0 : index
    %581 = vector.load %arg9[%c12_592, %c0_593] : memref<32x32xf32, #tpu.memory_space<vmem>>, vector<4x32xf32>
    %582 = arith.maximumf %580, %581 : vector<4x32xf32>
    %cst_594 = arith.constant dense<0.000000e+00> : vector<32xf32>
    %583 = vector.multi_reduction <add>, %582, %cst_594 [0] : vector<4x32xf32> to vector<32xf32>
    %584 = vector.shape_cast %583 : vector<32xf32> to vector<1x32xf32>
    %585 = arith.addf %577, %584 : vector<1x32xf32>
    %c24_595 = arith.constant 24 : index
    %c0_596 = arith.constant 0 : index
    %586 = vector.load %arg9[%c24_595, %c0_596] : memref<32x32xf32, #tpu.memory_space<vmem>>, vector<4x32xf32>
    %c28_597 = arith.constant 28 : index
    %c0_598 = arith.constant 0 : index
    %587 = vector.load %arg9[%c28_597, %c0_598] : memref<32x32xf32, #tpu.memory_space<vmem>>, vector<4x32xf32>
    %588 = arith.maximumf %586, %587 : vector<4x32xf32>
    %c20_599 = arith.constant 20 : index
    %c0_600 = arith.constant 0 : index
    %589 = vector.load %arg9[%c20_599, %c0_600] : memref<32x32xf32, #tpu.memory_space<vmem>>, vector<4x32xf32>
    %590 = arith.maximumf %588, %589 : vector<4x32xf32>
    %cst_601 = arith.constant dense<0.000000e+00> : vector<32xf32>
    %591 = vector.multi_reduction <add>, %590, %cst_601 [0] : vector<4x32xf32> to vector<32xf32>
    %592 = vector.shape_cast %591 : vector<32xf32> to vector<1x32xf32>
    %593 = arith.addf %585, %592 : vector<1x32xf32>
    %594 = tpu.concatenate %75, %149, %223, %297, %371, %445, %519, %593 in 0 : vector<1x32xf32>, vector<1x32xf32>, vector<1x32xf32>, vector<1x32xf32>, vector<1x32xf32>, vector<1x32xf32>, vector<1x32xf32>, vector<1x32xf32> -> vector<8x32xf32>
    %595 = arith.truncf %594 : vector<8x32xf32> to vector<8x32xbf16>
    %c0_602 = arith.constant 0 : index
    %c0_603 = arith.constant 0 : index
    %596 = vector.load %arg5[%c0_602, %c0_603] : memref<32x64xbf16, #tpu.memory_space<vmem>>, vector<32x64xbf16>
    %cst_604 = arith.constant dense<0.000000e+00> : vector<8x64xf32>
    %597 = tpu.matmul %595, %596, %cst_604 {dimension_numbers = #tpu.dot_dimension_numbers<[1], [0], [0], [1], [0, 0, 1, 1], [], []>} : vector<8x32xbf16>, vector<32x64xbf16>, vector<8x64xf32> -> vector<8x64xf32>
    %c0_605 = arith.constant 0 : index
    %c0_606 = arith.constant 0 : index
    %598 = vector.load %arg6[%c0_605, %c0_606] : memref<1x64xf32, #tpu.memory_space<vmem>>, vector<1x64xf32>
    %599 = vector.broadcast %598 : vector<1x64xf32> to vector<8x64xf32>
    %600 = arith.addf %597, %599 : vector<8x64xf32>
    %cst_607 = arith.constant 0.000000e+00 : f32
    %601 = vector.broadcast %cst_607 : f32 to vector<8x64xf32>
    %602 = arith.maximumf %600, %601 : vector<8x64xf32>
    %c0_608 = arith.constant 0 : index
    %c0_609 = arith.constant 0 : index
    %c0_610 = arith.constant 0 : index
    %603 = vector.load %arg7[%c0_608, %c0_609, %c0_610] : memref<1x8x64xf32, #tpu.memory_space<vmem>>, vector<1x8x64xf32>
    %604 = vector.shape_cast %603 : vector<1x8x64xf32> to vector<8x64xf32>
    %605 = vector.shape_cast %602 : vector<8x64xf32> to vector<1x8x64xf32>
    tpu.vector_store %arg7[%c0_608, %c0_609, %c0_610], %605 {strides = array<i32>} : memref<1x8x64xf32, #tpu.memory_space<vmem>>, vector<1x8x64xf32>,
    return
  }
  func.func @transform_0(%arg0: i32) -> (i32, i32, i32, i32) {
    %c0_i32 = arith.constant 0 : i32
    %c0_i32_0 = arith.constant 0 : i32
    %c0_i32_1 = arith.constant 0 : i32
    %c0_i32_2 = arith.constant 0 : i32
    return %arg0, %c0_i32, %c0_i32_0, %c0_i32_1 : i32, i32, i32, i32
  }
  func.func @transform_1(%arg0: i32) -> (i32, i32, i32) {
    %c0_i32 = arith.constant 0 : i32
    %c0_i32_0 = arith.constant 0 : i32
    %c0_i32_1 = arith.constant 0 : i32
    %c0_i32_2 = arith.constant 0 : i32
    return %c0_i32, %c0_i32_0, %c0_i32_1 : i32, i32, i32
  }
  func.func @transform_2(%arg0: i32) -> (i32, i32) {
    %c0_i32 = arith.constant 0 : i32
    %c0_i32_0 = arith.constant 0 : i32
    %c0_i32_1 = arith.constant 0 : i32
    return %c0_i32, %c0_i32_0 : i32, i32
  }
  func.func @transform_3(%arg0: i32) -> (i32, i32) {
    %c0_i32 = arith.constant 0 : i32
    %c0_i32_0 = arith.constant 0 : i32
    %c0_i32_1 = arith.constant 0 : i32
    return %c0_i32, %c0_i32_0 : i32, i32
  }
  func.func @transform_4(%arg0: i32) -> (i32, i32) {
    %c0_i32 = arith.constant 0 : i32
    %c0_i32_0 = arith.constant 0 : i32
    %c0_i32_1 = arith.constant 0 : i32
    return %c0_i32, %c0_i32_0 : i32, i32
  }
  func.func @transform_5(%arg0: i32) -> (i32, i32) {
    %c0_i32 = arith.constant 0 : i32
    %c0_i32_0 = arith.constant 0 : i32
    %c0_i32_1 = arith.constant 0 : i32
    return %c0_i32, %c0_i32_0 : i32, i32
  }
  func.func @transform_6(%arg0: i32) -> (i32, i32, i32) {
    %c0_i32 = arith.constant 0 : i32
    %c0_i32_0 = arith.constant 0 : i32
    %c0_i32_1 = arith.constant 0 : i32
    return %arg0, %c0_i32, %c0_i32_0 : i32, i32, i32
  }
}

module attributes {stable_mosaic.version = 11 : i64} {
  func.func @_backend_kernel(%arg0: i32, %arg1: memref<2x6x64xbf16, #tpu.memory_space<vmem>>, %arg2: memref<2x6x64xbf16, #tpu.memory_space<vmem>>, %arg3: memref<5x64x128xbf16, #tpu.memory_space<vmem>>, %arg4: memref<1x128xf32, #tpu.memory_space<vmem>>, %arg5: memref<128x128xbf16, #tpu.memory_space<vmem>>, %arg6: memref<1x128xf32, #tpu.memory_space<vmem>>, %arg7: memref<2x128xf32, #tpu.memory_space<vmem>>) attributes {dimension_semantics = [#tpu.dimension_semantics<arbitrary>], iteration_bounds = array<i64: 1>, scalar_prefetch = 0 : i64, scratch_operands = 0 : i64, tpu.core_type = #tpu.core_type<tc>, window_params = [{pipeline_mode = #tpu.pipeline_mode<synchronous>, transform_indices = @transform_0, window_bounds = array<i64: 2, 6, 64>}, {pipeline_mode = #tpu.pipeline_mode<synchronous>, transform_indices = @transform_1, window_bounds = array<i64: 2, 6, 64>}, {pipeline_mode = #tpu.pipeline_mode<synchronous>, transform_indices = @transform_2, window_bounds = array<i64: 5, 64, 128>}, {pipeline_mode = #tpu.pipeline_mode<synchronous>, transform_indices = @transform_3, window_bounds = array<i64: 1, 128>}, {pipeline_mode = #tpu.pipeline_mode<synchronous>, transform_indices = @transform_4, window_bounds = array<i64: 128, 128>}, {pipeline_mode = #tpu.pipeline_mode<synchronous>, transform_indices = @transform_5, window_bounds = array<i64: 1, 128>}, {pipeline_mode = #tpu.pipeline_mode<synchronous>, transform_indices = @transform_6, window_bounds = array<i64: 2, 128>}]} {
    %c0 = arith.constant 0 : index
    %c0_0 = arith.constant 0 : index
    %0 = vector.load %arg4[%c0, %c0_0] : memref<1x128xf32, #tpu.memory_space<vmem>>, vector<1x128xf32>
    %c0_1 = arith.constant 0 : index
    %c0_2 = arith.constant 0 : index
    %c0_3 = arith.constant 0 : index
    %1 = vector.load %arg1[%c0_1, %c0_2, %c0_3] : memref<2x6x64xbf16, #tpu.memory_space<vmem>>, vector<1x4x64xbf16>
    %2 = vector.shape_cast %1 : vector<1x4x64xbf16> to vector<4x64xbf16>
    %c0_4 = arith.constant 0 : index
    %c0_5 = arith.constant 0 : index
    %c0_6 = arith.constant 0 : index
    %3 = vector.load %arg3[%c0_4, %c0_5, %c0_6] : memref<5x64x128xbf16, #tpu.memory_space<vmem>>, vector<1x64x128xbf16>
    %4 = vector.shape_cast %3 : vector<1x64x128xbf16> to vector<64x128xbf16>
    %cst = arith.constant dense<0.000000e+00> : vector<4x128xf32>
    %5 = tpu.matmul %2, %4, %cst {dimension_numbers = #tpu.dot_dimension_numbers<[1], [0], [0], [1], [0, 0, 1, 1], [], []>} : vector<4x64xbf16>, vector<64x128xbf16>, vector<4x128xf32> -> vector<4x128xf32>
    %c0_7 = arith.constant 0 : index
    %c0_8 = arith.constant 0 : index
    %c0_9 = arith.constant 0 : index
    %6 = vector.load %arg2[%c0_7, %c0_8, %c0_9] : memref<2x6x64xbf16, #tpu.memory_space<vmem>>, vector<1x4x64xbf16>
    %7 = vector.shape_cast %6 : vector<1x4x64xbf16> to vector<4x64xbf16>
    %c1 = arith.constant 1 : index
    %c0_10 = arith.constant 0 : index
    %c0_11 = arith.constant 0 : index
    %8 = vector.load %arg3[%c1, %c0_10, %c0_11] : memref<5x64x128xbf16, #tpu.memory_space<vmem>>, vector<1x64x128xbf16>
    %9 = vector.shape_cast %8 : vector<1x64x128xbf16> to vector<64x128xbf16>
    %cst_12 = arith.constant dense<0.000000e+00> : vector<4x128xf32>
    %10 = tpu.matmul %7, %9, %cst_12 {dimension_numbers = #tpu.dot_dimension_numbers<[1], [0], [0], [1], [0, 0, 1, 1], [], []>} : vector<4x64xbf16>, vector<64x128xbf16>, vector<4x128xf32> -> vector<4x128xf32>
    %11 = arith.addf %5, %10 : vector<4x128xf32>
    %c0_13 = arith.constant 0 : index
    %c1_14 = arith.constant 1 : index
    %c0_15 = arith.constant 0 : index
    %12 = vector.load %arg1[%c0_13, %c1_14, %c0_15] : memref<2x6x64xbf16, #tpu.memory_space<vmem>>, vector<1x4x64xbf16>
    %13 = vector.shape_cast %12 : vector<1x4x64xbf16> to vector<4x64xbf16>
    %c2 = arith.constant 2 : index
    %c0_16 = arith.constant 0 : index
    %c0_17 = arith.constant 0 : index
    %14 = vector.load %arg3[%c2, %c0_16, %c0_17] : memref<5x64x128xbf16, #tpu.memory_space<vmem>>, vector<1x64x128xbf16>
    %15 = vector.shape_cast %14 : vector<1x64x128xbf16> to vector<64x128xbf16>
    %cst_18 = arith.constant dense<0.000000e+00> : vector<4x128xf32>
    %16 = tpu.matmul %13, %15, %cst_18 {dimension_numbers = #tpu.dot_dimension_numbers<[1], [0], [0], [1], [0, 0, 1, 1], [], []>} : vector<4x64xbf16>, vector<64x128xbf16>, vector<4x128xf32> -> vector<4x128xf32>
    %17 = arith.addf %11, %16 : vector<4x128xf32>
    %c0_19 = arith.constant 0 : index
    %c1_20 = arith.constant 1 : index
    %c0_21 = arith.constant 0 : index
    %18 = vector.load %arg2[%c0_19, %c1_20, %c0_21] : memref<2x6x64xbf16, #tpu.memory_space<vmem>>, vector<1x4x64xbf16>
    %19 = vector.shape_cast %18 : vector<1x4x64xbf16> to vector<4x64xbf16>
    %c3 = arith.constant 3 : index
    %c0_22 = arith.constant 0 : index
    %c0_23 = arith.constant 0 : index
    %20 = vector.load %arg3[%c3, %c0_22, %c0_23] : memref<5x64x128xbf16, #tpu.memory_space<vmem>>, vector<1x64x128xbf16>
    %21 = vector.shape_cast %20 : vector<1x64x128xbf16> to vector<64x128xbf16>
    %cst_24 = arith.constant dense<0.000000e+00> : vector<4x128xf32>
    %22 = tpu.matmul %19, %21, %cst_24 {dimension_numbers = #tpu.dot_dimension_numbers<[1], [0], [0], [1], [0, 0, 1, 1], [], []>} : vector<4x64xbf16>, vector<64x128xbf16>, vector<4x128xf32> -> vector<4x128xf32>
    %23 = arith.addf %17, %22 : vector<4x128xf32>
    %c0_25 = arith.constant 0 : index
    %c2_26 = arith.constant 2 : index
    %c0_27 = arith.constant 0 : index
    %24 = vector.load %arg1[%c0_25, %c2_26, %c0_27] : memref<2x6x64xbf16, #tpu.memory_space<vmem>>, vector<1x4x64xbf16>
    %25 = vector.shape_cast %24 : vector<1x4x64xbf16> to vector<4x64xbf16>
    %c4 = arith.constant 4 : index
    %c0_28 = arith.constant 0 : index
    %c0_29 = arith.constant 0 : index
    %26 = vector.load %arg3[%c4, %c0_28, %c0_29] : memref<5x64x128xbf16, #tpu.memory_space<vmem>>, vector<1x64x128xbf16>
    %27 = vector.shape_cast %26 : vector<1x64x128xbf16> to vector<64x128xbf16>
    %cst_30 = arith.constant dense<0.000000e+00> : vector<4x128xf32>
    %28 = tpu.matmul %25, %27, %cst_30 {dimension_numbers = #tpu.dot_dimension_numbers<[1], [0], [0], [1], [0, 0, 1, 1], [], []>} : vector<4x64xbf16>, vector<64x128xbf16>, vector<4x128xf32> -> vector<4x128xf32>
    %29 = arith.addf %23, %28 : vector<4x128xf32>
    %30 = vector.broadcast %0 : vector<1x128xf32> to vector<4x128xf32>
    %31 = arith.addf %29, %30 : vector<4x128xf32>
    %cst_31 = arith.constant 0.000000e+00 : f32
    %32 = vector.broadcast %cst_31 : f32 to vector<4x128xf32>
    %33 = arith.maximumf %31, %32 : vector<4x128xf32>
    %cst_32 = arith.constant dense<0.000000e+00> : vector<128xf32>
    %34 = vector.multi_reduction <add>, %33, %cst_32 [0] : vector<4x128xf32> to vector<128xf32>
    %35 = vector.shape_cast %34 : vector<128xf32> to vector<1x128xf32>
    %cst_33 = arith.constant 2.500000e-01 : f32
    %36 = vector.broadcast %cst_33 : f32 to vector<1x128xf32>
    %37 = arith.mulf %35, %36 : vector<1x128xf32>
    %c1_34 = arith.constant 1 : index
    %c0_35 = arith.constant 0 : index
    %c0_36 = arith.constant 0 : index
    %38 = vector.load %arg1[%c1_34, %c0_35, %c0_36] : memref<2x6x64xbf16, #tpu.memory_space<vmem>>, vector<1x4x64xbf16>
    %39 = vector.shape_cast %38 : vector<1x4x64xbf16> to vector<4x64xbf16>
    %c0_37 = arith.constant 0 : index
    %c0_38 = arith.constant 0 : index
    %c0_39 = arith.constant 0 : index
    %40 = vector.load %arg3[%c0_37, %c0_38, %c0_39] : memref<5x64x128xbf16, #tpu.memory_space<vmem>>, vector<1x64x128xbf16>
    %41 = vector.shape_cast %40 : vector<1x64x128xbf16> to vector<64x128xbf16>
    %cst_40 = arith.constant dense<0.000000e+00> : vector<4x128xf32>
    %42 = tpu.matmul %39, %41, %cst_40 {dimension_numbers = #tpu.dot_dimension_numbers<[1], [0], [0], [1], [0, 0, 1, 1], [], []>} : vector<4x64xbf16>, vector<64x128xbf16>, vector<4x128xf32> -> vector<4x128xf32>
    %c1_41 = arith.constant 1 : index
    %c0_42 = arith.constant 0 : index
    %c0_43 = arith.constant 0 : index
    %43 = vector.load %arg2[%c1_41, %c0_42, %c0_43] : memref<2x6x64xbf16, #tpu.memory_space<vmem>>, vector<1x4x64xbf16>
    %44 = vector.shape_cast %43 : vector<1x4x64xbf16> to vector<4x64xbf16>
    %c1_44 = arith.constant 1 : index
    %c0_45 = arith.constant 0 : index
    %c0_46 = arith.constant 0 : index
    %45 = vector.load %arg3[%c1_44, %c0_45, %c0_46] : memref<5x64x128xbf16, #tpu.memory_space<vmem>>, vector<1x64x128xbf16>
    %46 = vector.shape_cast %45 : vector<1x64x128xbf16> to vector<64x128xbf16>
    %cst_47 = arith.constant dense<0.000000e+00> : vector<4x128xf32>
    %47 = tpu.matmul %44, %46, %cst_47 {dimension_numbers = #tpu.dot_dimension_numbers<[1], [0], [0], [1], [0, 0, 1, 1], [], []>} : vector<4x64xbf16>, vector<64x128xbf16>, vector<4x128xf32> -> vector<4x128xf32>
    %48 = arith.addf %42, %47 : vector<4x128xf32>
    %c1_48 = arith.constant 1 : index
    %c1_49 = arith.constant 1 : index
    %c0_50 = arith.constant 0 : index
    %49 = vector.load %arg1[%c1_48, %c1_49, %c0_50] : memref<2x6x64xbf16, #tpu.memory_space<vmem>>, vector<1x4x64xbf16>
    %50 = vector.shape_cast %49 : vector<1x4x64xbf16> to vector<4x64xbf16>
    %c2_51 = arith.constant 2 : index
    %c0_52 = arith.constant 0 : index
    %c0_53 = arith.constant 0 : index
    %51 = vector.load %arg3[%c2_51, %c0_52, %c0_53] : memref<5x64x128xbf16, #tpu.memory_space<vmem>>, vector<1x64x128xbf16>
    %52 = vector.shape_cast %51 : vector<1x64x128xbf16> to vector<64x128xbf16>
    %cst_54 = arith.constant dense<0.000000e+00> : vector<4x128xf32>
    %53 = tpu.matmul %50, %52, %cst_54 {dimension_numbers = #tpu.dot_dimension_numbers<[1], [0], [0], [1], [0, 0, 1, 1], [], []>} : vector<4x64xbf16>, vector<64x128xbf16>, vector<4x128xf32> -> vector<4x128xf32>
    %54 = arith.addf %48, %53 : vector<4x128xf32>
    %c1_55 = arith.constant 1 : index
    %c1_56 = arith.constant 1 : index
    %c0_57 = arith.constant 0 : index
    %55 = vector.load %arg2[%c1_55, %c1_56, %c0_57] : memref<2x6x64xbf16, #tpu.memory_space<vmem>>, vector<1x4x64xbf16>
    %56 = vector.shape_cast %55 : vector<1x4x64xbf16> to vector<4x64xbf16>
    %c3_58 = arith.constant 3 : index
    %c0_59 = arith.constant 0 : index
    %c0_60 = arith.constant 0 : index
    %57 = vector.load %arg3[%c3_58, %c0_59, %c0_60] : memref<5x64x128xbf16, #tpu.memory_space<vmem>>, vector<1x64x128xbf16>
    %58 = vector.shape_cast %57 : vector<1x64x128xbf16> to vector<64x128xbf16>
    %cst_61 = arith.constant dense<0.000000e+00> : vector<4x128xf32>
    %59 = tpu.matmul %56, %58, %cst_61 {dimension_numbers = #tpu.dot_dimension_numbers<[1], [0], [0], [1], [0, 0, 1, 1], [], []>} : vector<4x64xbf16>, vector<64x128xbf16>, vector<4x128xf32> -> vector<4x128xf32>
    %60 = arith.addf %54, %59 : vector<4x128xf32>
    %c1_62 = arith.constant 1 : index
    %c2_63 = arith.constant 2 : index
    %c0_64 = arith.constant 0 : index
    %61 = vector.load %arg1[%c1_62, %c2_63, %c0_64] : memref<2x6x64xbf16, #tpu.memory_space<vmem>>, vector<1x4x64xbf16>
    %62 = vector.shape_cast %61 : vector<1x4x64xbf16> to vector<4x64xbf16>
    %c4_65 = arith.constant 4 : index
    %c0_66 = arith.constant 0 : index
    %c0_67 = arith.constant 0 : index
    %63 = vector.load %arg3[%c4_65, %c0_66, %c0_67] : memref<5x64x128xbf16, #tpu.memory_space<vmem>>, vector<1x64x128xbf16>
    %64 = vector.shape_cast %63 : vector<1x64x128xbf16> to vector<64x128xbf16>
    %cst_68 = arith.constant dense<0.000000e+00> : vector<4x128xf32>
    %65 = tpu.matmul %62, %64, %cst_68 {dimension_numbers = #tpu.dot_dimension_numbers<[1], [0], [0], [1], [0, 0, 1, 1], [], []>} : vector<4x64xbf16>, vector<64x128xbf16>, vector<4x128xf32> -> vector<4x128xf32>
    %66 = arith.addf %60, %65 : vector<4x128xf32>
    %67 = vector.broadcast %0 : vector<1x128xf32> to vector<4x128xf32>
    %68 = arith.addf %66, %67 : vector<4x128xf32>
    %cst_69 = arith.constant 0.000000e+00 : f32
    %69 = vector.broadcast %cst_69 : f32 to vector<4x128xf32>
    %70 = arith.maximumf %68, %69 : vector<4x128xf32>
    %cst_70 = arith.constant dense<0.000000e+00> : vector<128xf32>
    %71 = vector.multi_reduction <add>, %70, %cst_70 [0] : vector<4x128xf32> to vector<128xf32>
    %72 = vector.shape_cast %71 : vector<128xf32> to vector<1x128xf32>
    %cst_71 = arith.constant 2.500000e-01 : f32
    %73 = vector.broadcast %cst_71 : f32 to vector<1x128xf32>
    %74 = arith.mulf %72, %73 : vector<1x128xf32>
    %75 = tpu.concatenate %37, %74 in 0 : vector<1x128xf32>, vector<1x128xf32> -> vector<2x128xf32>
    %76 = arith.truncf %75 : vector<2x128xf32> to vector<2x128xbf16>
    %c0_72 = arith.constant 0 : index
    %c0_73 = arith.constant 0 : index
    %77 = vector.load %arg5[%c0_72, %c0_73] : memref<128x128xbf16, #tpu.memory_space<vmem>>, vector<128x128xbf16>
    %cst_74 = arith.constant dense<0.000000e+00> : vector<2x128xf32>
    %78 = tpu.matmul %76, %77, %cst_74 {dimension_numbers = #tpu.dot_dimension_numbers<[1], [0], [0], [1], [0, 0, 1, 1], [], []>} : vector<2x128xbf16>, vector<128x128xbf16>, vector<2x128xf32> -> vector<2x128xf32>
    %c0_75 = arith.constant 0 : index
    %c0_76 = arith.constant 0 : index
    %79 = vector.load %arg6[%c0_75, %c0_76] : memref<1x128xf32, #tpu.memory_space<vmem>>, vector<1x128xf32>
    %80 = vector.broadcast %79 : vector<1x128xf32> to vector<2x128xf32>
    %81 = arith.addf %78, %80 : vector<2x128xf32>
    %c0_77 = arith.constant 0 : index
    %c0_78 = arith.constant 0 : index
    %82 = vector.load %arg7[%c0_77, %c0_78] : memref<2x128xf32, #tpu.memory_space<vmem>>, vector<2x128xf32>
    tpu.vector_store %arg7[%c0_77, %c0_78], %81 {strides = array<i32>} : memref<2x128xf32, #tpu.memory_space<vmem>>, vector<2x128xf32>,
    return
  }
  func.func @transform_0(%arg0: i32) -> (i32, i32, i32) {
    %c0_i32 = arith.constant 0 : i32
    %c0_i32_0 = arith.constant 0 : i32
    %c0_i32_1 = arith.constant 0 : i32
    %c0_i32_2 = arith.constant 0 : i32
    return %c0_i32, %c0_i32_0, %c0_i32_1 : i32, i32, i32
  }
  func.func @transform_1(%arg0: i32) -> (i32, i32, i32) {
    %c0_i32 = arith.constant 0 : i32
    %c0_i32_0 = arith.constant 0 : i32
    %c0_i32_1 = arith.constant 0 : i32
    %c0_i32_2 = arith.constant 0 : i32
    return %c0_i32, %c0_i32_0, %c0_i32_1 : i32, i32, i32
  }
  func.func @transform_2(%arg0: i32) -> (i32, i32, i32) {
    %c0_i32 = arith.constant 0 : i32
    %c0_i32_0 = arith.constant 0 : i32
    %c0_i32_1 = arith.constant 0 : i32
    %c0_i32_2 = arith.constant 0 : i32
    return %c0_i32, %c0_i32_0, %c0_i32_1 : i32, i32, i32
  }
  func.func @transform_3(%arg0: i32) -> (i32, i32) {
    %c0_i32 = arith.constant 0 : i32
    %c0_i32_0 = arith.constant 0 : i32
    %c0_i32_1 = arith.constant 0 : i32
    return %c0_i32, %c0_i32_0 : i32, i32
  }
  func.func @transform_4(%arg0: i32) -> (i32, i32) {
    %c0_i32 = arith.constant 0 : i32
    %c0_i32_0 = arith.constant 0 : i32
    %c0_i32_1 = arith.constant 0 : i32
    return %c0_i32, %c0_i32_0 : i32, i32
  }
  func.func @transform_5(%arg0: i32) -> (i32, i32) {
    %c0_i32 = arith.constant 0 : i32
    %c0_i32_0 = arith.constant 0 : i32
    %c0_i32_1 = arith.constant 0 : i32
    return %c0_i32, %c0_i32_0 : i32, i32
  }
  func.func @transform_6(%arg0: i32) -> (i32, i32) {
    %c0_i32 = arith.constant 0 : i32
    %c0_i32_0 = arith.constant 0 : i32
    %c0_i32_1 = arith.constant 0 : i32
    return %c0_i32, %c0_i32_0 : i32, i32
  }
}

</mosaic_0001>

<llo_original>
// kernel: squeeze.3
$region0: #{squeeze.3}
  %s0 = inlined_call_operand.vmem [shape: f32[32,5,7,7], index: 0, kind: input, shape index: {}]
  %s1 = inlined_call_operand.vmem [shape: f32[32,5,49], index: 1, kind: output, shape index: {}]
  %v2 = vld [vmem:[%s0] sm:$0x7f]
  %vm3 = vcmask 261120
  %4 = vst.msk [vmem:[%s1] sm:$0x7f] %vm3, %v2
  %s5 = scalar_lea.vmem %s0, 8
  %v6 = vld [vmem:[%s5] sm:$0x7f]
  %vm7 = vcmask 261120
  %s8 = scalar_lea.vmem %s1, 7
  %9 = vst.msk [vmem:[%s8] sm:$0x7f] %vm7, %v6
  %s10 = scalar_lea.vmem %s0, 16
  %v11 = vld [vmem:[%s10] sm:$0x7f]
  %vm12 = vcmask 261120
  %s13 = scalar_lea.vmem %s1, 14
  %14 = vst.msk [vmem:[%s13] sm:$0x7f] %vm12, %v11
  %s15 = scalar_lea.vmem %s0, 24
  %v16 = vld [vmem:[%s15] sm:$0x7f]
  %vm17 = vcmask 261120
  %s18 = scalar_lea.vmem %s1, 21
  %19 = vst.msk [vmem:[%s18] sm:$0x7f] %vm17, %v16
  %s20 = scalar_lea.vmem %s0, 32
  %v21 = vld [vmem:[%s20] sm:$0x7f]
  %vm22 = vcmask 261120
  %s23 = scalar_lea.vmem %s1, 28
  %24 = vst.msk [vmem:[%s23] sm:$0x7f] %vm22, %v21
  %s25 = scalar_lea.vmem %s0, 40
  %v26 = vld [vmem:[%s25] sm:$0x7f]
  %vm27 = vcmask 261120
  %s28 = scalar_lea.vmem %s1, 35
  %29 = vst.msk [vmem:[%s28] sm:$0x7f] %vm27, %v26
  %s30 = scalar_lea.vmem %s0, 48
  %v31 = vld [vmem:[%s30] sm:$0x7f]
  %vm32 = vcmask 261120
  %s33 = scalar_lea.vmem %s1, 42
  %34 = vst.msk [vmem:[%s33] sm:$0x7f] %vm32, %v31
  %s35 = scalar_lea.vmem %s0, 56
  %v36 = vld [vmem:[%s35] sm:$0x7f]
  %vm37 = vcmask 261120
  %s38 = scalar_lea.vmem %s1, 56
  %39 = vst.msk [vmem:[%s38] sm:$0x7f] %vm37, %v36
  %s40 = scalar_lea.vmem %s0, 64
  %v41 = vld [vmem:[%s40] sm:$0x7f]
  %vm42 = vcmask 261120
  %s43 = scalar_lea.vmem %s1, 63
  %44 = vst.msk [vmem:[%s43] sm:$0x7f] %vm42, %v41
  %s45 = scalar_lea.vmem %s0, 72
  %v46 = vld [vmem:[%s45] sm:$0x7f]
  %vm47 = vcmask 261120
  %s48 = scalar_lea.vmem %s1, 70
  %49 = vst.msk [vmem:[%s48] sm:$0x7f] %vm47, %v46
  %s50 = scalar_lea.vmem %s0, 80
  %v51 = vld [vmem:[%s50] sm:$0x7f]
  %vm52 = vcmask 261120
  %s53 = scalar_lea.vmem %s1, 77
  %54 = vst.msk [vmem:[%s53] sm:$0x7f] %vm52, %v51
  %s55 = scalar_lea.vmem %s0, 88
  %v56 = vld [vmem:[%s55] sm:$0x7f]
  %vm57 = vcmask 261120
  %s58 = scalar_lea.vmem %s1, 84
  %59 = vst.msk [vmem:[%s58] sm:$0x7f] %vm57, %v56
  %s60 = scalar_lea.vmem %s0, 96
  %v61 = vld [vmem:[%s60] sm:$0x7f]
  %vm62 = vcmask 261120
  %s63 = scalar_lea.vmem %s1, 91
  %64 = vst.msk [vmem:[%s63] sm:$0x7f] %vm62, %v61
  %s65 = scalar_lea.vmem %s0, 104
  %v66 = vld [vmem:[%s65] sm:$0x7f]
  %vm67 = vcmask 261120
  %s68 = scalar_lea.vmem %s1, 98
  %69 = vst.msk [vmem:[%s68] sm:$0x7f] %vm67, %v66
  %s70 = scalar_lea.vmem %s0, 112
  %v71 = vld [vmem:[%s70] sm:$0x7f]
  %vm72 = vcmask 261120
  %s73 = scalar_lea.vmem %s1, 112
  %74 = vst.msk [vmem:[%s73] sm:$0x7f] %vm72, %v71
  %s75 = scalar_lea.vmem %s0, 120
  %v76 = vld [vmem:[%s75] sm:$0x7f]
  %vm77 = vcmask 261120
  %s78 = scalar_lea.vmem %s1, 119
  %79 = vst.msk [vmem:[%s78] sm:$0x7f] %vm77, %v76
  %s80 = scalar_lea.vmem %s0, 128
  %v81 = vld [vmem:[%s80] sm:$0x7f]
  %vm82 = vcmask 261120
  %s83 = scalar_lea.vmem %s1, 126
  %84 = vst.msk [vmem:[%s83] sm:$0x7f] %vm82, %v81
  %s85 = scalar_lea.vmem %s0, 136
  %v86 = vld [vmem:[%s85] sm:$0x7f]
  %vm87 = vcmask 261120
  %s88 = scalar_lea.vmem %s1, 133
  %89 = vst.msk [vmem:[%s88] sm:$0x7f] %vm87, %v86
  %s90 = scalar_lea.vmem %s0, 144
  %v91 = vld [vmem:[%s90] sm:$0x7f]
  %vm92 = vcmask 261120
  %s93 = scalar_lea.vmem %s1, 140
  %94 = vst.msk [vmem:[%s93] sm:$0x7f] %vm92, %v91
  %s95 = scalar_lea.vmem %s0, 152
  %v96 = vld [vmem:[%s95] sm:$0x7f]
  %vm97 = vcmask 261120
  %s98 = scalar_lea.vmem %s1, 147
  %99 = vst.msk [vmem:[%s98] sm:$0x7f] %vm97, %v96
  %s100 = scalar_lea.vmem %s0, 160
  %v101 = vld [vmem:[%s100] sm:$0x7f]
  %vm102 = vcmask 261120
  %s103 = scalar_lea.vmem %s1, 154
  %104 = vst.msk [vmem:[%s103] sm:$0x7f] %vm102, %v101
  %s105 = scalar_lea.vmem %s0, 168
  %v106 = vld [vmem:[%s105] sm:$0x7f]
  %vm107 = vcmask 261120
  %s108 = scalar_lea.vmem %s1, 168
  %109 = vst.msk [vmem:[%s108] sm:$0x7f] %vm107, %v106
  %s110 = scalar_lea.vmem %s0, 176
  %v111 = vld [vmem:[%s110] sm:$0x7f]
  %vm112 = vcmask 261120
  %s113 = scalar_lea.vmem %s1, 175
  %114 = vst.msk [vmem:[%s113] sm:$0x7f] %vm112, %v111
  %s115 = scalar_lea.vmem %s0, 184
  %v116 = vld [vmem:[%s115] sm:$0x7f]
  %vm117 = vcmask 261120
  %s118 = scalar_lea.vmem %s1, 182
  %119 = vst.msk [vmem:[%s118] sm:$0x7f] %vm117, %v116
  %s120 = scalar_lea.vmem %s0, 192
  %v121 = vld [vmem:[%s120] sm:$0x7f]
  %vm122 = vcmask 261120
  %s123 = scalar_lea.vmem %s1, 189
  %124 = vst.msk [vmem:[%s123] sm:$0x7f] %vm122, %v121
  %s125 = scalar_lea.vmem %s0, 200
  %v126 = vld [vmem:[%s125] sm:$0x7f]
  %vm127 = vcmask 261120
  %s128 = scalar_lea.vmem %s1, 196
  %129 = vst.msk [vmem:[%s128] sm:$0x7f] %vm127, %v126
  %s130 = scalar_lea.vmem %s0, 208
  %v131 = vld [vmem:[%s130] sm:$0x7f]
  %vm132 = vcmask 261120
  %s133 = scalar_lea.vmem %s1, 203
  %134 = vst.msk [vmem:[%s133] sm:$0x7f] %vm132, %v131
  %s135 = scalar_lea.vmem %s0, 216
  %v136 = vld [vmem:[%s135] sm:$0x7f]
  %vm137 = vcmask 261120
  %s138 = scalar_lea.vmem %s1, 210
  %139 = vst.msk [vmem:[%s138] sm:$0x7f] %vm137, %v136
  %s140 = scalar_lea.vmem %s0, 224
  %v141 = vld [vmem:[%s140] sm:$0x7f]
  %vm142 = vcmask 261120
  %s143 = scalar_lea.vmem %s1, 224
  %144 = vst.msk [vmem:[%s143] sm:$0x7f] %vm142, %v141
  %s145 = scalar_lea.vmem %s0, 232
  %v146 = vld [vmem:[%s145] sm:$0x7f]
  %vm147 = vcmask 261120
  %s148 = scalar_lea.vmem %s1, 231
  %149 = vst.msk [vmem:[%s148] sm:$0x7f] %vm147, %v146
  %s150 = scalar_lea.vmem %s0, 240
  %v151 = vld [vmem:[%s150] sm:$0x7f]
  %vm152 = vcmask 261120
  %s153 = scalar_lea.vmem %s1, 238
  %154 = vst.msk [vmem:[%s153] sm:$0x7f] %vm152, %v151
  %s155 = scalar_lea.vmem %s0, 248
  %v156 = vld [vmem:[%s155] sm:$0x7f]
  %vm157 = vcmask 261120
  %s158 = scalar_lea.vmem %s1, 245
  %159 = vst.msk [vmem:[%s158] sm:$0x7f] %vm157, %v156
  %s160 = scalar_lea.vmem %s0, 256
  %v161 = vld [vmem:[%s160] sm:$0x7f]
  %vm162 = vcmask 261120
  %s163 = scalar_lea.vmem %s1, 252
  %164 = vst.msk [vmem:[%s163] sm:$0x7f] %vm162, %v161
  %s165 = scalar_lea.vmem %s0, 264
  %v166 = vld [vmem:[%s165] sm:$0x7f]
  %vm167 = vcmask 261120
  %s168 = scalar_lea.vmem %s1, 259
  %169 = vst.msk [vmem:[%s168] sm:$0x7f] %vm167, %v166
  %s170 = scalar_lea.vmem %s0, 272
  %v171 = vld [vmem:[%s170] sm:$0x7f]
  %vm172 = vcmask 261120
  %s173 = scalar_lea.vmem %s1, 266
  %174 = vst.msk [vmem:[%s173] sm:$0x7f] %vm172, %v171

// kernel: lipreader_forward.3
$region0: #{lipreader_forward.3}
  #allocation0 [shape = 'u32[]', space=smem, size = 0x4, offset = 0x4, fixed_abs, tag = 'smem constant byte address 0x4 - core index']
  #allocation1 [shape = 'u32[144,128]{1,0:T(1,128)}', space=vmem, size = 0x12000, scoped, tag = 'internal scratch']
  %s0 = inlined_call_operand.vmem [shape: bf16[2,6,64], index: 0, kind: input, shape index: {}]
  %s1 = inlined_call_operand.vmem [shape: bf16[2,6,64], index: 1, kind: input, shape index: {}]
  %s2 = inlined_call_operand.vmem [shape: bf16[5,64,128], index: 2, kind: input, shape index: {}]
  %s3 = inlined_call_operand.vmem [shape: f32[1,128], index: 3, kind: input, shape index: {}]
  %s4 = inlined_call_operand.vmem [shape: bf16[128,128], index: 4, kind: input, shape index: {}]
  %s5 = inlined_call_operand.vmem [shape: f32[1,128], index: 5, kind: input, shape index: {}]
  %s6 = inlined_call_operand.hbm [shape: f32[2,128], index: 6, kind: output, shape index: {}]
  %s7 = sld [smem:[#allocation0]]
  $region34: #{lipreader_forward.3} parent=0
    _
  %s9 = ssub.s32 1, %s7
  %s10 = scalar_select 0, %s9, %s7
  $region1: #{lipreader_forward.3} parent=0
    #allocation2 [shape = 'u8[1024]{0}', space=vmem, size = 0x400, scoped, tag = 'output window, operand 0, single buffered']
    #allocation3 [shape = 's32[1]{0}', space=sflag, size = 0x4, scoped, tag = 'scoped memory for lipreader_forward.3']
    %11 = vsyncpa [#allocation3], 0
    // Predicated region
    $region2: #{lipreader_forward.3} parent=1 // pred_check
      _
    $region3: #{lipreader_forward.3} parent=1 // pred_check_branch
      %13 = sbr.rel (0) target = $region5
    $region4: #{lipreader_forward.3} parent=1 // pred_region
      _
    $region5: #{lipreader_forward.3} parent=1 // pred_fallthru
      _
    // Predicated region
    $region6: #{lipreader_forward.3} parent=1 // pred_check
      _
    $region7: #{lipreader_forward.3} parent=1 // pred_check_branch
      %15 = sbr.rel (0) target = $region9
    $region8: #{lipreader_forward.3} parent=1 // pred_region
      _
    $region9: #{lipreader_forward.3} parent=1 // pred_fallthru
      _
    // Predicated region
    $region10: #{lipreader_forward.3} parent=1 // pred_check
      _
    $region11: #{lipreader_forward.3} parent=1 // pred_check_branch
      %17 = sbr.rel (0) target = $region13
    $region12: #{lipreader_forward.3} parent=1 // pred_region
      _
    $region13: #{lipreader_forward.3} parent=1 // pred_fallthru
      _
    // Predicated region
    $region14: #{lipreader_forward.3} parent=1 // pred_check
      _
    $region15: #{lipreader_forward.3} parent=1 // pred_check_branch
      %19 = sbr.rel (0) target = $region17
    $region16: #{lipreader_forward.3} parent=1 // pred_region
      _
    $region17: #{lipreader_forward.3} parent=1 // pred_fallthru
      _
    // Predicated region
    $region18: #{lipreader_forward.3} parent=1 // pred_check
      _
    $region19: #{lipreader_forward.3} parent=1 // pred_check_branch
      %21 = sbr.rel (0) target = $region21
    $region20: #{lipreader_forward.3} parent=1 // pred_region
      _
    $region21: #{lipreader_forward.3} parent=1 // pred_fallthru
      _
    // Predicated region
    $region22: #{lipreader_forward.3} parent=1 // pred_check
      _
    $region23: #{lipreader_forward.3} parent=1 // pred_check_branch
      %23 = sbr.rel (0) target = $region25
    $region24: #{lipreader_forward.3} parent=1 // pred_region
      _
    $region25: #{lipreader_forward.3} parent=1 // pred_fallthru
      _
    %v25 = vld [vmem:[%s3] sm:$0x1]
    %v26 = vld [vmem:[%s0] sm:$0x3]
    %v27 = vld [vmem:[%s2] sm:$0xf]
    %v28 = vld [vmem:[%s2 + $0x4] sm:$0xf]
    %v29 = vld [vmem:[%s2 + $0x8] sm:$0xf]
    %v30 = vld [vmem:[%s2 + $0xc] sm:$0xf]
    %v31 = vld [vmem:[%s2 + $0x10] sm:$0xf]
    %v32 = vld [vmem:[%s2 + $0x14] sm:$0xf]
    %v33 = vld [vmem:[%s2 + $0x18] sm:$0xf]
    %v34 = vld [vmem:[%s2 + $0x1c] sm:$0xf]
    %v35 = vld [vmem:[%s1] sm:$0x3]
    %s36 = scalar_lea.vmem %s2, 32
    %v37 = vld [vmem:[%s36] sm:$0xf]
    %v38 = vld [vmem:[%s36 + $0x4] sm:$0xf]
    %v39 = vld [vmem:[%s36 + $0x8] sm:$0xf]
    %v40 = vld [vmem:[%s36 + $0xc] sm:$0xf]
    %v41 = vld [vmem:[%s36 + $0x10] sm:$0xf]
    %v42 = vld [vmem:[%s36 + $0x14] sm:$0xf]
    %v43 = vld [vmem:[%s36 + $0x18] sm:$0xf]
    %v44 = vld [vmem:[%s36 + $0x1c] sm:$0xf]
    %v53 = vunpack.c.l.b16 %v37
    %v54 = vunpack.c.l.b16 %v38
    %v55 = vunpack.c.l.b16 %v39
    %v56 = vunpack.c.l.b16 %v40
    %v57 = vunpack.c.l.b16 %v41
    %v58 = vunpack.c.l.b16 %v42
    %v59 = vunpack.c.l.b16 %v43
    %v60 = vunpack.c.l.b16 %v44
    %v61 = vpack.c.b16 %v54, %v53
    %v62 = vpack.c.b16 %v56, %v55
    %v63 = vpack.c.b16 %v58, %v57
    %v64 = vpack.c.b16 %v60, %v59
    %vm69 = vcmask 523264
    %v71 = vsel %vm69, %v35, 0
    %73 = vmatprep.subr.bf16.mxu0 0
    %74 = vmatpush1.bf16.msra.mxu0 %v61
    %75 = vmatprep.subr.bf16.mxu0 0
    %76 = vmatpush1.bf16.msra.mxu0 %v62
    %77 = vmatprep.subr.bf16.mxu0 0
    %78 = vmatpush1.bf16.msra.mxu0 %v63
    %79 = vmatprep.subr.bf16.mxu0 0
    %80 = vmatpush1.bf16.msra.mxu0 %v64
    %81 = vmatprep.subr.bf16.mxu0 0
    %82 = vmatpush1.bf16.msra.mxu0 0
    %83 = vmatprep.subr.bf16.mxu0 0
    %84 = vmatpush1.bf16.msra.mxu0 0
    %85 = vmatprep.subr.bf16.mxu0 0
    %86 = vmatpush1.bf16.msra.mxu0 0
    %87 = vmatprep.subr.bf16.mxu0 0
    %88 = vmatpush1.bf16.msra.mxu0 0
    %89 = vmatprep.subr.bf16.mxu0 0
    %90 = vmatpush1.bf16.msra.mxu0 0
    %91 = vmatprep.subr.bf16.mxu0 0
    %92 = vmatpush1.bf16.msra.mxu0 0
    %93 = vmatprep.subr.bf16.mxu0 0
    %94 = vmatpush1.bf16.msra.mxu0 0
    %95 = vmatprep.subr.bf16.mxu0 0
    %96 = vmatpush1.bf16.msra.mxu0 0
    %97 = vmatprep.subr.bf16.mxu0 0
    %98 = vmatpush1.bf16.msra.mxu0 0
    %99 = vmatprep.subr.bf16.mxu0 0
    %100 = vmatpush1.bf16.msra.mxu0 0
    %101 = vmatprep.subr.bf16.mxu0 0
    %102 = vmatpush1.bf16.msra.mxu0 0
    %103 = vmatprep.subr.bf16.mxu0 0
    %104 = vmatpush1.bf16.msra.mxu0 0
    %105 = vmatprep.mubr.bf16.mxu0 0
    %106 = vmatmul.mubr.bf16.gmra.mrb[0].mxu0 %v71
    %v107 = vpop.f32.mrb[0].mxu0
    %v108 = vadd.f32 0.0, %v107
    %v109 = vpop.f32.mrb[0].mxu0
    %v110 = vpop.f32.mrb[0].mxu0
    %v111 = vpop.f32.mrb[0].mxu0
    %112 = vdwg.mxu0
    %v121 = vunpack.c.l.b16 %v27
    %v122 = vunpack.c.l.b16 %v28
    %v123 = vunpack.c.l.b16 %v29
    %v124 = vunpack.c.l.b16 %v30
    %v125 = vunpack.c.l.b16 %v31
    %v126 = vunpack.c.l.b16 %v32
    %v127 = vunpack.c.l.b16 %v33
    %v128 = vunpack.c.l.b16 %v34
    %v129 = vpack.c.b16 %v122, %v121
    %v130 = vpack.c.b16 %v124, %v123
    %v131 = vpack.c.b16 %v126, %v125
    %v132 = vpack.c.b16 %v128, %v127
    %v138 = vsel %vm69, %v26, 0
    %140 = vmatprep.subr.bf16.mxu0 0
    %141 = vmatpush1.bf16.msra.mxu0 %v129
    %142 = vmatprep.subr.bf16.mxu0 0
    %143 = vmatpush1.bf16.msra.mxu0 %v130
    %144 = vmatprep.subr.bf16.mxu0 0
    %145 = vmatpush1.bf16.msra.mxu0 %v131
    %146 = vmatprep.subr.bf16.mxu0 0
    %147 = vmatpush1.bf16.msra.mxu0 %v132
    %148 = vmatprep.subr.bf16.mxu0 0
    %149 = vmatpush1.bf16.msra.mxu0 0
    %150 = vmatprep.subr.bf16.mxu0 0
    %151 = vmatpush1.bf16.msra.mxu0 0
    %152 = vmatprep.subr.bf16.mxu0 0
    %153 = vmatpush1.bf16.msra.mxu0 0
    %154 = vmatprep.subr.bf16.mxu0 0
    %155 = vmatpush1.bf16.msra.mxu0 0
    %156 = vmatprep.subr.bf16.mxu0 0
    %157 = vmatpush1.bf16.msra.mxu0 0
    %158 = vmatprep.subr.bf16.mxu0 0
    %159 = vmatpush1.bf16.msra.mxu0 0
    %160 = vmatprep.subr.bf16.mxu0 0
    %161 = vmatpush1.bf16.msra.mxu0 0
    %162 = vmatprep.subr.bf16.mxu0 0
    %163 = vmatpush1.bf16.msra.mxu0 0
    %164 = vmatprep.subr.bf16.mxu0 0
    %165 = vmatpush1.bf16.msra.mxu0 0
    %166 = vmatprep.subr.bf16.mxu0 0
    %167 = vmatpush1.bf16.msra.mxu0 0
    %168 = vmatprep.subr.bf16.mxu0 0
    %169 = vmatpush1.bf16.msra.mxu0 0
    %170 = vmatprep.subr.bf16.mxu0 0
    %171 = vmatpush1.bf16.msra.mxu0 0
    %172 = vmatprep.mubr.bf16.mxu0 0
    %173 = vmatmul.mubr.bf16.gmra.mrb[0].mxu0 %v138
    %v174 = vpop.f32.mrb[0].mxu0
    %v175 = vadd.f32 %v108, %v174
    %v176 = vpop.f32.mrb[0].mxu0
    %v177 = vpop.f32.mrb[0].mxu0
    %v178 = vpop.f32.mrb[0].mxu0
    %179 = vdwg.mxu0
    %v180 = vld [vmem:[%s0] sm:$0x7]
    %s181 = scalar_lea.vmem %s2, 64
    %v182 = vld [vmem:[%s181] sm:$0xf]
    %v183 = vld [vmem:[%s181 + $0x4] sm:$0xf]
    %v184 = vld [vmem:[%s181 + $0x8] sm:$0xf]
    %v185 = vld [vmem:[%s181 + $0xc] sm:$0xf]
    %v186 = vld [vmem:[%s181 + $0x10] sm:$0xf]
    %v187 = vld [vmem:[%s181 + $0x14] sm:$0xf]
    %v188 = vld [vmem:[%s181 + $0x18] sm:$0xf]
    %v189 = vld [vmem:[%s181 + $0x1c] sm:$0xf]
    %v191 = vunpack.c.l.b16 %v180
    %v192 = vpack.c.b16 %v191, %v191
    %v194 = vshrl.u32 %v192, 16
    %v196 = vshll.u32 %v192, 16
    %v198 = vrot.slane %v196, 1
    %v199 = vor.u32 %v194, %v198
    %v208 = vunpack.c.l.b16 %v182
    %v209 = vunpack.c.l.b16 %v183
    %v210 = vunpack.c.l.b16 %v184
    %v211 = vunpack.c.l.b16 %v185
    %v212 = vunpack.c.l.b16 %v186
    %v213 = vunpack.c.l.b16 %v187
    %v214 = vunpack.c.l.b16 %v188
    %v215 = vunpack.c.l.b16 %v189
    %v216 = vpack.c.b16 %v209, %v208
    %v217 = vpack.c.b16 %v211, %v210
    %v218 = vpack.c.b16 %v213, %v212
    %v219 = vpack.c.b16 %v215, %v214
    %v225 = vsel %vm69, %v199, 0
    %227 = vmatprep.subr.bf16.mxu0 0
    %228 = vmatpush1.bf16.msra.mxu0 %v216
    %229 = vmatprep.subr.bf16.mxu0 0
    %230 = vmatpush1.bf16.msra.mxu0 %v217
    %231 = vmatprep.subr.bf16.mxu0 0
    %232 = vmatpush1.bf16.msra.mxu0 %v218
    %233 = vmatprep.subr.bf16.mxu0 0
    %234 = vmatpush1.bf16.msra.mxu0 %v219
    %235 = vmatprep.subr.bf16.mxu0 0
    %236 = vmatpush1.bf16.msra.mxu0 0
    %237 = vmatprep.subr.bf16.mxu0 0
    %238 = vmatpush1.bf16.msra.mxu0 0
    %239 = vmatprep.subr.bf16.mxu0 0
    %240 = vmatpush1.bf16.msra.mxu0 0
    %241 = vmatprep.subr.bf16.mxu0 0
    %242 = vmatpush1.bf16.msra.mxu0 0
    %243 = vmatprep.subr.bf16.mxu0 0
    %244 = vmatpush1.bf16.msra.mxu0 0
    %245 = vmatprep.subr.bf16.mxu0 0
    %246 = vmatpush1.bf16.msra.mxu0 0
    %247 = vmatprep.subr.bf16.mxu0 0
    %248 = vmatpush1.bf16.msra.mxu0 0
    %249 = vmatprep.subr.bf16.mxu0 0
    %250 = vmatpush1.bf16.msra.mxu0 0
    %251 = vmatprep.subr.bf16.mxu0 0
    %252 = vmatpush1.bf16.msra.mxu0 0
    %253 = vmatprep.subr.bf16.mxu0 0
    %254 = vmatpush1.bf16.msra.mxu0 0
    %255 = vmatprep.subr.bf16.mxu0 0
    %256 = vmatpush1.bf16.msra.mxu0 0
    %257 = vmatprep.subr.bf16.mxu0 0
    %258 = vmatpush1.bf16.msra.mxu0 0
    %259 = vmatprep.mubr.bf16.mxu0 0
    %260 = vmatmul.mubr.bf16.gmra.mrb[0].mxu0 %v225
    %v261 = vpop.f32.mrb[0].mxu0
    %v262 = vadd.f32 0.0, %v261
    %v263 = vpop.f32.mrb[0].mxu0
    %v264 = vpop.f32.mrb[0].mxu0
    %v265 = vpop.f32.mrb[0].mxu0
    %266 = vdwg.mxu0
    %v267 = vadd.f32 %v175, %v262
    %v268 = vld [vmem:[%s1] sm:$0x7]
    %s269 = scalar_lea.vmem %s2, 96
    %v270 = vld [vmem:[%s269] sm:$0xf]
    %v271 = vld [vmem:[%s269 + $0x4] sm:$0xf]
    %v272 = vld [vmem:[%s269 + $0x8] sm:$0xf]
    %v273 = vld [vmem:[%s269 + $0xc] sm:$0xf]
    %v274 = vld [vmem:[%s269 + $0x10] sm:$0xf]
    %v275 = vld [vmem:[%s269 + $0x14] sm:$0xf]
    %v276 = vld [vmem:[%s269 + $0x18] sm:$0xf]
    %v277 = vld [vmem:[%s269 + $0x1c] sm:$0xf]
    %v279 = vunpack.c.l.b16 %v268
    %v280 = vpack.c.b16 %v279, %v279
    %v282 = vshrl.u32 %v280, 16
    %v284 = vshll.u32 %v280, 16
    %v286 = vrot.slane %v284, 1
    %v287 = vor.u32 %v282, %v286
    %v296 = vunpack.c.l.b16 %v270
    %v297 = vunpack.c.l.b16 %v271
    %v298 = vunpack.c.l.b16 %v272
    %v299 = vunpack.c.l.b16 %v273
    %v300 = vunpack.c.l.b16 %v274
    %v301 = vunpack.c.l.b16 %v275
    %v302 = vunpack.c.l.b16 %v276
    %v303 = vunpack.c.l.b16 %v277
    %v304 = vpack.c.b16 %v297, %v296
    %v305 = vpack.c.b16 %v299, %v298
    %v306 = vpack.c.b16 %v301, %v300
    %v307 = vpack.c.b16 %v303, %v302
    %v313 = vsel %vm69, %v287, 0
    %315 = vmatprep.subr.bf16.mxu0 0
    %316 = vmatpush1.bf16.msra.mxu0 %v304
    %317 = vmatprep.subr.bf16.mxu0 0
    %318 = vmatpush1.bf16.msra.mxu0 %v305
    %319 = vmatprep.subr.bf16.mxu0 0
    %320 = vmatpush1.bf16.msra.mxu0 %v306
    %321 = vmatprep.subr.bf16.mxu0 0
    %322 = vmatpush1.bf16.msra.mxu0 %v307
    %323 = vmatprep.subr.bf16.mxu0 0
    %324 = vmatpush1.bf16.msra.mxu0 0
    %325 = vmatprep.subr.bf16.mxu0 0
    %326 = vmatpush1.bf16.msra.mxu0 0
    %327 = vmatprep.subr.bf16.mxu0 0
    %328 = vmatpush1.bf16.msra.mxu0 0
    %329 = vmatprep.subr.bf16.mxu0 0
    %330 = vmatpush1.bf16.msra.mxu0 0
    %331 = vmatprep.subr.bf16.mxu0 0
    %332 = vmatpush1.bf16.msra.mxu0 0
    %333 = vmatprep.subr.bf16.mxu0 0
    %334 = vmatpush1.bf16.msra.mxu0 0
    %335 = vmatprep.subr.bf16.mxu0 0
    %336 = vmatpush1.bf16.msra.mxu0 0
    %337 = vmatprep.subr.bf16.mxu0 0
    %338 = vmatpush1.bf16.msra.mxu0 0
    %339 = vmatprep.subr.bf16.mxu0 0
    %340 = vmatpush1.bf16.msra.mxu0 0
    %341 = vmatprep.subr.bf16.mxu0 0
    %342 = vmatpush1.bf16.msra.mxu0 0
    %343 = vmatprep.subr.bf16.mxu0 0
    %344 = vmatpush1.bf16.msra.mxu0 0
    %345 = vmatprep.subr.bf16.mxu0 0
    %346 = vmatpush1.bf16.msra.mxu0 0
    %347 = vmatprep.mubr.bf16.mxu0 0
    %348 = vmatmul.mubr.bf16.gmra.mrb[0].mxu0 %v313
    %v349 = vpop.f32.mrb[0].mxu0
    %v350 = vadd.f32 0.0, %v349
    %v351 = vpop.f32.mrb[0].mxu0
    %v352 = vpop.f32.mrb[0].mxu0
    %v353 = vpop.f32.mrb[0].mxu0
    %354 = vdwg.mxu0
    %v355 = vadd.f32 %v267, %v350
    %v356 = vld [vmem:[%s0] sm:$0x6]
    %s357 = scalar_lea.vmem %s2, 128
    %v358 = vld [vmem:[%s357] sm:$0xf]
    %v359 = vld [vmem:[%s357 + $0x4] sm:$0xf]
    %v360 = vld [vmem:[%s357 + $0x8] sm:$0xf]
    %v361 = vld [vmem:[%s357 + $0xc] sm:$0xf]
    %v362 = vld [vmem:[%s357 + $0x10] sm:$0xf]
    %v363 = vld [vmem:[%s357 + $0x14] sm:$0xf]
    %v364 = vld [vmem:[%s357 + $0x18] sm:$0xf]
    %v365 = vld [vmem:[%s357 + $0x1c] sm:$0xf]
    %v367 = vunpack.c.l.b16 %v356
    %v368 = vpack.c.b16 %v367, %v367
    %v369 = vrot.slane %v368, 1
    %v378 = vunpack.c.l.b16 %v358
    %v379 = vunpack.c.l.b16 %v359
    %v380 = vunpack.c.l.b16 %v360
    %v381 = vunpack.c.l.b16 %v361
    %v382 = vunpack.c.l.b16 %v362
    %v383 = vunpack.c.l.b16 %v363
    %v384 = vunpack.c.l.b16 %v364
    %v385 = vunpack.c.l.b16 %v365
    %v386 = vpack.c.b16 %v379, %v378
    %v387 = vpack.c.b16 %v381, %v380
    %v388 = vpack.c.b16 %v383, %v382
    %v389 = vpack.c.b16 %v385, %v384
    %v395 = vsel %vm69, %v369, 0
    %397 = vmatprep.subr.bf16.mxu0 0
    %398 = vmatpush1.bf16.msra.mxu0 %v386
    %399 = vmatprep.subr.bf16.mxu0 0
    %400 = vmatpush1.bf16.msra.mxu0 %v387
    %401 = vmatprep.subr.bf16.mxu0 0
    %402 = vmatpush1.bf16.msra.mxu0 %v388
    %403 = vmatprep.subr.bf16.mxu0 0
    %404 = vmatpush1.bf16.msra.mxu0 %v389
    %405 = vmatprep.subr.bf16.mxu0 0
    %406 = vmatpush1.bf16.msra.mxu0 0
    %407 = vmatprep.subr.bf16.mxu0 0
    %408 = vmatpush1.bf16.msra.mxu0 0
    %409 = vmatprep.subr.bf16.mxu0 0
    %410 = vmatpush1.bf16.msra.mxu0 0
    %411 = vmatprep.subr.bf16.mxu0 0
    %412 = vmatpush1.bf16.msra.mxu0 0
    %413 = vmatprep.subr.bf16.mxu0 0
    %414 = vmatpush1.bf16.msra.mxu0 0
    %415 = vmatprep.subr.bf16.mxu0 0
    %416 = vmatpush1.bf16.msra.mxu0 0
    %417 = vmatprep.subr.bf16.mxu0 0
    %418 = vmatpush1.bf16.msra.mxu0 0
    %419 = vmatprep.subr.bf16.mxu0 0
    %420 = vmatpush1.bf16.msra.mxu0 0
    %421 = vmatprep.subr.bf16.mxu0 0
    %422 = vmatpush1.bf16.msra.mxu0 0
    %423 = vmatprep.subr.bf16.mxu0 0
    %424 = vmatpush1.bf16.msra.mxu0 0
    %425 = vmatprep.subr.bf16.mxu0 0
    %426 = vmatpush1.bf16.msra.mxu0 0
    %427 = vmatprep.subr.bf16.mxu0 0
    %428 = vmatpush1.bf16.msra.mxu0 0
    %429 = vmatprep.mubr.bf16.mxu0 0
    %430 = vmatmul.mubr.bf16.gmra.mrb[0].mxu0 %v395
    %v431 = vpop.f32.mrb[0].mxu0
    %v432 = vadd.f32 0.0, %v431
    %v433 = vpop.f32.mrb[0].mxu0
    %v434 = vpop.f32.mrb[0].mxu0
    %v435 = vpop.f32.mrb[0].mxu0
    %436 = vdwg.mxu0
    %v437 = vadd.f32 %v355, %v432
    %v439 = vlaneseq
    %v440 = vshrl.u32 %v439, 7
    %v441 = vsub.s32 0, %v440
    %v442 = vrot.slane %v25, %v441
    %v444 = vadd.f32 %v437, %v442
    %v445 = vmax.f32 %v444, 0.0
    %vm446 = vcmask 1043456
    %v447 = vsel %vm446, %v445, 0.0
    %v448 = vrot.slane %v447, 4
    %v449 = vadd.f32 %v447, %v448
    %v450 = vrot.slane %v449, 2
    %v451 = vadd.f32 %v449, %v450
    %v452 = vrot.slane %v451, 1
    %v453 = vadd.f32 %v451, %v452
    %v454 = vmul.f32 %v453, 0.25
    %s455 = scalar_lea.vmem %s0, 4
    %v456 = vld [vmem:[%s455] sm:$0x3]
    %s457 = scalar_lea.vmem %s1, 4
    %v458 = vld [vmem:[%s457] sm:$0x3]
    %v460 = vsel %vm69, %v458, 0
    %462 = vmatprep.subr.bf16.mxu0 0
    %463 = vmatpush1.bf16.msra.mxu0 %v61
    %464 = vmatprep.subr.bf16.mxu0 0
    %465 = vmatpush1.bf16.msra.mxu0 %v62
    %466 = vmatprep.subr.bf16.mxu0 0
    %467 = vmatpush1.bf16.msra.mxu0 %v63
    %468 = vmatprep.subr.bf16.mxu0 0
    %469 = vmatpush1.bf16.msra.mxu0 %v64
    %470 = vmatprep.subr.bf16.mxu0 0
    %471 = vmatpush1.bf16.msra.mxu0 0
    %472 = vmatprep.subr.bf16.mxu0 0
    %473 = vmatpush1.bf16.msra.mxu0 0
    %474 = vmatprep.subr.bf16.mxu0 0
    %475 = vmatpush1.bf16.msra.mxu0 0
    %476 = vmatprep.subr.bf16.mxu0 0
    %477 = vmatpush1.bf16.msra.mxu0 0
    %478 = vmatprep.subr.bf16.mxu0 0
    %479 = vmatpush1.bf16.msra.mxu0 0
    %480 = vmatprep.subr.bf16.mxu0 0
    %481 = vmatpush1.bf16.msra.mxu0 0
    %482 = vmatprep.subr.bf16.mxu0 0
    %483 = vmatpush1.bf16.msra.mxu0 0
    %484 = vmatprep.subr.bf16.mxu0 0
    %485 = vmatpush1.bf16.msra.mxu0 0
    %486 = vmatprep.subr.bf16.mxu0 0
    %487 = vmatpush1.bf16.msra.mxu0 0
    %488 = vmatprep.subr.bf16.mxu0 0
    %489 = vmatpush1.bf16.msra.mxu0 0
    %490 = vmatprep.subr.bf16.mxu0 0
    %491 = vmatpush1.bf16.msra.mxu0 0
    %492 = vmatprep.subr.bf16.mxu0 0
    %493 = vmatpush1.bf16.msra.mxu0 0
    %494 = vmatprep.mubr.bf16.mxu0 0
    %495 = vmatmul.mubr.bf16.gmra.mrb[0].mxu0 %v460
    %v496 = vpop.f32.mrb[0].mxu0
    %v497 = vadd.f32 0.0, %v496
    %v498 = vpop.f32.mrb[0].mxu0
    %v499 = vpop.f32.mrb[0].mxu0
    %v500 = vpop.f32.mrb[0].mxu0
    %501 = vdwg.mxu0
    %v503 = vsel %vm69, %v456, 0
    %505 = vmatprep.subr.bf16.mxu0 0
    %506 = vmatpush1.bf16.msra.mxu0 %v129
    %507 = vmatprep.subr.bf16.mxu0 0
    %508 = vmatpush1.bf16.msra.mxu0 %v130
    %509 = vmatprep.subr.bf16.mxu0 0
    %510 = vmatpush1.bf16.msra.mxu0 %v131
    %511 = vmatprep.subr.bf16.mxu0 0
    %512 = vmatpush1.bf16.msra.mxu0 %v132
    %513 = vmatprep.subr.bf16.mxu0 0
    %514 = vmatpush1.bf16.msra.mxu0 0
    %515 = vmatprep.subr.bf16.mxu0 0
    %516 = vmatpush1.bf16.msra.mxu0 0
    %517 = vmatprep.subr.bf16.mxu0 0
    %518 = vmatpush1.bf16.msra.mxu0 0
    %519 = vmatprep.subr.bf16.mxu0 0
    %520 = vmatpush1.bf16.msra.mxu0 0
    %521 = vmatprep.subr.bf16.mxu0 0
    %522 = vmatpush1.bf16.msra.mxu0 0
    %523 = vmatprep.subr.bf16.mxu0 0
    %524 = vmatpush1.bf16.msra.mxu0 0
    %525 = vmatprep.subr.bf16.mxu0 0
    %526 = vmatpush1.bf16.msra.mxu0 0
    %527 = vmatprep.subr.bf16.mxu0 0
    %528 = vmatpush1.bf16.msra.mxu0 0
    %529 = vmatprep.subr.bf16.mxu0 0
    %530 = vmatpush1.bf16.msra.mxu0 0
    %531 = vmatprep.subr.bf16.mxu0 0
    %532 = vmatpush1.bf16.msra.mxu0 0
    %533 = vmatprep.subr.bf16.mxu0 0
    %534 = vmatpush1.bf16.msra.mxu0 0
    %535 = vmatprep.subr.bf16.mxu0 0
    %536 = vmatpush1.bf16.msra.mxu0 0
    %537 = vmatprep.mubr.bf16.mxu0 0
    %538 = vmatmul.mubr.bf16.gmra.mrb[0].mxu0 %v503
    %v539 = vpop.f32.mrb[0].mxu0
    %v540 = vadd.f32 %v497, %v539
    %v541 = vpop.f32.mrb[0].mxu0
    %v542 = vpop.f32.mrb[0].mxu0
    %v543 = vpop.f32.mrb[0].mxu0
    %544 = vdwg.mxu0
    %v545 = vld [vmem:[%s455] sm:$0x7]
    %v547 = vunpack.c.l.b16 %v545
    %v548 = vpack.c.b16 %v547, %v547
    %v550 = vshrl.u32 %v548, 16
    %v552 = vshll.u32 %v548, 16
    %v554 = vrot.slane %v552, 1
    %v555 = vor.u32 %v550, %v554
    %v557 = vsel %vm69, %v555, 0
    %559 = vmatprep.subr.bf16.mxu0 0
    %560 = vmatpush1.bf16.msra.mxu0 %v216
    %561 = vmatprep.subr.bf16.mxu0 0
    %562 = vmatpush1.bf16.msra.mxu0 %v217
    %563 = vmatprep.subr.bf16.mxu0 0
    %564 = vmatpush1.bf16.msra.mxu0 %v218
    %565 = vmatprep.subr.bf16.mxu0 0
    %566 = vmatpush1.bf16.msra.mxu0 %v219
    %567 = vmatprep.subr.bf16.mxu0 0
    %568 = vmatpush1.bf16.msra.mxu0 0
    %569 = vmatprep.subr.bf16.mxu0 0
    %570 = vmatpush1.bf16.msra.mxu0 0
    %571 = vmatprep.subr.bf16.mxu0 0
    %572 = vmatpush1.bf16.msra.mxu0 0
    %573 = vmatprep.subr.bf16.mxu0 0
    %574 = vmatpush1.bf16.msra.mxu0 0
    %575 = vmatprep.subr.bf16.mxu0 0
    %576 = vmatpush1.bf16.msra.mxu0 0
    %577 = vmatprep.subr.bf16.mxu0 0
    %578 = vmatpush1.bf16.msra.mxu0 0
    %579 = vmatprep.subr.bf16.mxu0 0
    %580 = vmatpush1.bf16.msra.mxu0 0
    %581 = vmatprep.subr.bf16.mxu0 0
    %582 = vmatpush1.bf16.msra.mxu0 0
    %583 = vmatprep.subr.bf16.mxu0 0
    %584 = vmatpush1.bf16.msra.mxu0 0
    %585 = vmatprep.subr.bf16.mxu0 0
    %586 = vmatpush1.bf16.msra.mxu0 0
    %587 = vmatprep.subr.bf16.mxu0 0
    %588 = vmatpush1.bf16.msra.mxu0 0
    %589 = vmatprep.subr.bf16.mxu0 0
    %590 = vmatpush1.bf16.msra.mxu0 0
    %591 = vmatprep.mubr.bf16.mxu0 0
    %592 = vmatmul.mubr.bf16.gmra.mrb[0].mxu0 %v557
    %v593 = vpop.f32.mrb[0].mxu0
    %v594 = vadd.f32 0.0, %v593
    %v595 = vpop.f32.mrb[0].mxu0
    %v596 = vpop.f32.mrb[0].mxu0
    %v597 = vpop.f32.mrb[0].mxu0
    %598 = vdwg.mxu0
    %v599 = vadd.f32 %v540, %v594
    %v600 = vld [vmem:[%s457] sm:$0x7]
    %v602 = vunpack.c.l.b16 %v600
    %v603 = vpack.c.b16 %v602, %v602
    %v605 = vshrl.u32 %v603, 16
    %v607 = vshll.u32 %v603, 16
    %v609 = vrot.slane %v607, 1
    %v610 = vor.u32 %v605, %v609
    %v612 = vsel %vm69, %v610, 0
    %614 = vmatprep.subr.bf16.mxu0 0
    %615 = vmatpush1.bf16.msra.mxu0 %v304
    %616 = vmatprep.subr.bf16.mxu0 0
    %617 = vmatpush1.bf16.msra.mxu0 %v305
    %618 = vmatprep.subr.bf16.mxu0 0
    %619 = vmatpush1.bf16.msra.mxu0 %v306
    %620 = vmatprep.subr.bf16.mxu0 0
    %621 = vmatpush1.bf16.msra.mxu0 %v307
    %622 = vmatprep.subr.bf16.mxu0 0
    %623 = vmatpush1.bf16.msra.mxu0 0
    %624 = vmatprep.subr.bf16.mxu0 0
    %625 = vmatpush1.bf16.msra.mxu0 0
    %626 = vmatprep.subr.bf16.mxu0 0
    %627 = vmatpush1.bf16.msra.mxu0 0
    %628 = vmatprep.subr.bf16.mxu0 0
    %629 = vmatpush1.bf16.msra.mxu0 0
    %630 = vmatprep.subr.bf16.mxu0 0
    %631 = vmatpush1.bf16.msra.mxu0 0
    %632 = vmatprep.subr.bf16.mxu0 0
    %633 = vmatpush1.bf16.msra.mxu0 0
    %634 = vmatprep.subr.bf16.mxu0 0
    %635 = vmatpush1.bf16.msra.mxu0 0
    %636 = vmatprep.subr.bf16.mxu0 0
    %637 = vmatpush1.bf16.msra.mxu0 0
    %638 = vmatprep.subr.bf16.mxu0 0
    %639 = vmatpush1.bf16.msra.mxu0 0
    %640 = vmatprep.subr.bf16.mxu0 0
    %641 = vmatpush1.bf16.msra.mxu0 0
    %642 = vmatprep.subr.bf16.mxu0 0
    %643 = vmatpush1.bf16.msra.mxu0 0
    %644 = vmatprep.subr.bf16.mxu0 0
    %645 = vmatpush1.bf16.msra.mxu0 0
    %646 = vmatprep.mubr.bf16.mxu0 0
    %647 = vmatmul.mubr.bf16.gmra.mrb[0].mxu0 %v612
    %v648 = vpop.f32.mrb[0].mxu0
    %v649 = vadd.f32 0.0, %v648
    %v650 = vpop.f32.mrb[0].mxu0
    %v651 = vpop.f32.mrb[0].mxu0
    %v652 = vpop.f32.mrb[0].mxu0
    %653 = vdwg.mxu0
    %v654 = vadd.f32 %v599, %v649
    %v655 = vld [vmem:[%s455] sm:$0x6]
    %v657 = vunpack.c.l.b16 %v655
    %v658 = vpack.c.b16 %v657, %v657
    %v659 = vrot.slane %v658, 1
    %v661 = vsel %vm69, %v659, 0
    %663 = vmatprep.subr.bf16.mxu0 0
    %664 = vmatpush1.bf16.msra.mxu0 %v386
    %665 = vmatprep.subr.bf16.mxu0 0
    %666 = vmatpush1.bf16.msra.mxu0 %v387
    %667 = vmatprep.subr.bf16.mxu0 0
    %668 = vmatpush1.bf16.msra.mxu0 %v388
    %669 = vmatprep.subr.bf16.mxu0 0
    %670 = vmatpush1.bf16.msra.mxu0 %v389
    %671 = vmatprep.subr.bf16.mxu0 0
    %672 = vmatpush1.bf16.msra.mxu0 0
    %673 = vmatprep.subr.bf16.mxu0 0
    %674 = vmatpush1.bf16.msra.mxu0 0
    %675 = vmatprep.subr.bf16.mxu0 0
    %676 = vmatpush1.bf16.msra.mxu0 0
    %677 = vmatprep.subr.bf16.mxu0 0
    %678 = vmatpush1.bf16.msra.mxu0 0
    %679 = vmatprep.subr.bf16.mxu0 0
    %680 = vmatpush1.bf16.msra.mxu0 0
    %681 = vmatprep.subr.bf16.mxu0 0
    %682 = vmatpush1.bf16.msra.mxu0 0
    %683 = vmatprep.subr.bf16.mxu0 0
    %684 = vmatpush1.bf16.msra.mxu0 0
    %685 = vmatprep.subr.bf16.mxu0 0
    %686 = vmatpush1.bf16.msra.mxu0 0
    %687 = vmatprep.subr.bf16.mxu0 0
    %688 = vmatpush1.bf16.msra.mxu0 0
    %689 = vmatprep.subr.bf16.mxu0 0
    %690 = vmatpush1.bf16.msra.mxu0 0
    %691 = vmatprep.subr.bf16.mxu0 0
    %692 = vmatpush1.bf16.msra.mxu0 0
    %693 = vmatprep.subr.bf16.mxu0 0
    %694 = vmatpush1.bf16.msra.mxu0 0
    %695 = vmatprep.mubr.bf16.mxu0 0
    %696 = vmatmul.mubr.bf16.gmra.mrb[0].mxu0 %v661
    %v697 = vpop.f32.mrb[0].mxu0
    %v698 = vadd.f32 0.0, %v697
    %v699 = vpop.f32.mrb[0].mxu0
    %v700 = vpop.f32.mrb[0].mxu0
    %v701 = vpop.f32.mrb[0].mxu0
    %702 = vdwg.mxu0
    %v703 = vadd.f32 %v654, %v698
    %v704 = vadd.f32 %v703, %v442
    %v705 = vmax.f32 %v704, 0.0
    %v706 = vsel %vm446, %v705, 0.0
    %v707 = vrot.slane %v706, 4
    %v708 = vadd.f32 %v706, %v707
    %v709 = vrot.slane %v708, 2
    %v710 = vadd.f32 %v708, %v709
    %v711 = vrot.slane %v710, 1
    %v712 = vadd.f32 %v710, %v711
    %v713 = vmul.f32 %v712, 0.25
    %vm714 = vcmask 1040384
    %v715 = vsel %vm714, %v454, %v713
    %v716 = vpack.c.bf16 %v715, %v715
    %v717 = vld [vmem:[%s4] sm:$0xf]
    %v718 = vld [vmem:[%s4 + $0x4] sm:$0xf]
    %v719 = vld [vmem:[%s4 + $0x8] sm:$0xf]
    %v720 = vld [vmem:[%s4 + $0xc] sm:$0xf]
    %v721 = vld [vmem:[%s4 + $0x10] sm:$0xf]
    %v722 = vld [vmem:[%s4 + $0x14] sm:$0xf]
    %v723 = vld [vmem:[%s4 + $0x18] sm:$0xf]
    %v724 = vld [vmem:[%s4 + $0x1c] sm:$0xf]
    %v725 = vld [vmem:[%s4 + $0x20] sm:$0xf]
    %v726 = vld [vmem:[%s4 + $0x24] sm:$0xf]
    %v727 = vld [vmem:[%s4 + $0x28] sm:$0xf]
    %v728 = vld [vmem:[%s4 + $0x2c] sm:$0xf]
    %v729 = vld [vmem:[%s4 + $0x30] sm:$0xf]
    %v730 = vld [vmem:[%s4 + $0x34] sm:$0xf]
    %v731 = vld [vmem:[%s4 + $0x38] sm:$0xf]
    %v732 = vld [vmem:[%s4 + $0x3c] sm:$0xf]
    %v733 = vld [vmem:[%s5] sm:$0x1]
    %v735 = vlaneseq
    %v736 = vshrl.u32 %v735, 7
    %v737 = vsub.s32 0, %v736
    %v738 = vrot.slane %v733, %v737
    %v756 = vunpack.c.l.b16 %v717
    %v757 = vunpack.c.l.b16 %v718
    %v758 = vunpack.c.l.b16 %v719
    %v759 = vunpack.c.l.b16 %v720
    %v760 = vunpack.c.l.b16 %v721
    %v761 = vunpack.c.l.b16 %v722
    %v762 = vunpack.c.l.b16 %v723
    %v763 = vunpack.c.l.b16 %v724
    %v764 = vunpack.c.l.b16 %v725
    %v765 = vunpack.c.l.b16 %v726
    %v766 = vunpack.c.l.b16 %v727
    %v767 = vunpack.c.l.b16 %v728
    %v768 = vunpack.c.l.b16 %v729
    %v769 = vunpack.c.l.b16 %v730
    %v770 = vunpack.c.l.b16 %v731
    %v771 = vunpack.c.l.b16 %v732
    %v772 = vpack.c.b16 %v757, %v756
    %v773 = vpack.c.b16 %v759, %v758
    %v774 = vpack.c.b16 %v761, %v760
    %v775 = vpack.c.b16 %v763, %v762
    %v776 = vpack.c.b16 %v765, %v764
    %v777 = vpack.c.b16 %v767, %v766
    %v778 = vpack.c.b16 %v769, %v768
    %v779 = vpack.c.b16 %v771, %v770
    %788 = vmatprep.subr.bf16.mxu0 0
    %789 = vmatpush1.bf16.msra.mxu0 %v772
    %790 = vmatprep.subr.bf16.mxu0 0
    %791 = vmatpush1.bf16.msra.mxu0 %v773
    %792 = vmatprep.subr.bf16.mxu0 0
    %793 = vmatpush1.bf16.msra.mxu0 %v774
    %794 = vmatprep.subr.bf16.mxu0 0
    %795 = vmatpush1.bf16.msra.mxu0 %v775
    %796 = vmatprep.subr.bf16.mxu0 0
    %797 = vmatpush1.bf16.msra.mxu0 %v776
    %798 = vmatprep.subr.bf16.mxu0 0
    %799 = vmatpush1.bf16.msra.mxu0 %v777
    %800 = vmatprep.subr.bf16.mxu0 0
    %801 = vmatpush1.bf16.msra.mxu0 %v778
    %802 = vmatprep.subr.bf16.mxu0 0
    %803 = vmatpush1.bf16.msra.mxu0 %v779
    %804 = vmatprep.subr.bf16.mxu0 0
    %805 = vmatpush1.bf16.msra.mxu0 0
    %806 = vmatprep.subr.bf16.mxu0 0
    %807 = vmatpush1.bf16.msra.mxu0 0
    %808 = vmatprep.subr.bf16.mxu0 0
    %809 = vmatpush1.bf16.msra.mxu0 0
    %810 = vmatprep.subr.bf16.mxu0 0
    %811 = vmatpush1.bf16.msra.mxu0 0
    %812 = vmatprep.subr.bf16.mxu0 0
    %813 = vmatpush1.bf16.msra.mxu0 0
    %814 = vmatprep.subr.bf16.mxu0 0
    %815 = vmatpush1.bf16.msra.mxu0 0
    %816 = vmatprep.subr.bf16.mxu0 0
    %817 = vmatpush1.bf16.msra.mxu0 0
    %818 = vmatprep.subr.bf16.mxu0 0
    %819 = vmatpush1.bf16.msra.mxu0 0
    %820 = vmatprep.mubr.bf16.mxu0 0
    %821 = vmatmul.mubr.bf16.gmra.mrb[0].mxu0 %v716
    %v822 = vpop.f32.mrb[0].mxu0
    %v823 = vadd.f32 %v738, %v822
    %v824 = vpop.f32.mrb[0].mxu0
    %v825 = vpop.f32.mrb[0].mxu0
    %v826 = vpop.f32.mrb[0].mxu0
    %827 = vdwg.mxu0
    %828 = vst [vmem:[#allocation2] sm:$0x3] %v823
    // Predicated region
    $region26: #{lipreader_forward.3} parent=1 // pred_check
      _
    $region27: #{lipreader_forward.3} parent=1 // pred_check_branch
      %830 = sbr.rel (0) target = $region29
    $region28: #{lipreader_forward.3} parent=1 // pred_region
      %s832 = ssub.s32 32, 32
      %833 = vsyncadd [#allocation3], %s832
      %s835 = sshll.u32 [#allocation2], 4
      %s836 = int_to_ptr.vmem [resolvable:$true] %s835
      %838 = dma.vmem_to_hbm [thread:$0]  %s836, 32, %s6, [#allocation3]
    $region29: #{lipreader_forward.3} parent=1 // pred_fallthru
      _
    // Predicated region
    $region30: #{lipreader_forward.3} parent=1 // pred_check
      _
    $region31: #{lipreader_forward.3} parent=1 // pred_check_branch
      %840 = sbr.rel (0) target = $region33
    $region32: #{lipreader_forward.3} parent=1 // pred_region
      %841 = dma.done [#allocation3], 32
    $region33: #{lipreader_forward.3} parent=1 // pred_fallthru
      _
    %842 = vsyncpa [#allocation3], 1

// kernel: lipreader_forward.2
$region0: #{lipreader_forward.2}
  #allocation0 [shape = 'u32[]', space=smem, size = 0x4, offset = 0x4, fixed_abs, tag = 'smem constant byte address 0x4 - core index']
  #allocation1 [shape = 'u32[144,128]{1,0:T(1,128)}', space=vmem, size = 0x12000, scoped, tag = 'internal scratch']
  #allocation2 [shape = 'f32[64,32]{1,0:T(8,128)}', space=vmem, size = 0x8000, scoped, tag = 'scratch operand']
  #allocation3 [shape = 'f32[32,32]{1,0:T(8,128)}', space=vmem, size = 0x4000, scoped, tag = 'scratch operand']
  %s0 = inlined_call_operand.hbm [shape: bf16[2,12,64,64], index: 0, kind: input, shape index: {}]
  %s1 = inlined_call_operand.hbm [shape: bf16[5,64,32], index: 1, kind: input, shape index: {}]
  %s2 = inlined_call_operand.hbm [shape: f32[1,32], index: 2, kind: input, shape index: {}]
  %s3 = inlined_call_operand.hbm [shape: f32[32,32], index: 3, kind: input, shape index: {}]
  %s4 = inlined_call_operand.hbm [shape: bf16[32,64], index: 4, kind: input, shape index: {}]
  %s5 = inlined_call_operand.hbm [shape: f32[1,64], index: 5, kind: input, shape index: {}]
  %s6 = inlined_call_operand.hbm [shape: f32[2,8,64], index: 6, kind: output, shape index: {}]
  %s7 = sld [smem:[#allocation0]]
  $region81: #{lipreader_forward.2} parent=0
    _
  %s9 = ssub.s32 1, %s7
  %s10 = scalar_select 0, %s9, %s7
  $region1: #{lipreader_forward.2} parent=0
    #allocation4 [shape = 'u8[393216]{0}', space=vmem, size = 0x60000, scoped, tag = 'input window, operand 0']
    #allocation5 [shape = 's32[2]{0}', space=sflag, size = 0x8, scoped, tag = 'scoped memory for lipreader_forward.2']
    #allocation6 [shape = 's32[2]{0}', space=sflag, size = 0x8, scoped, tag = 'scoped memory for lipreader_forward.2']
    #allocation7 [shape = 'u8[81920]{0}', space=vmem, size = 0x14000, scoped, tag = 'input window, operand 1, single buffered']
    #allocation8 [shape = 's32[1]{0}', space=sflag, size = 0x4, scoped, tag = 'scoped memory for lipreader_forward.2']
    #allocation9 [shape = 'u8[512]{0}', space=vmem, size = 0x400, scoped, tag = 'input window, operand 2, single buffered']
    #allocation10 [shape = 'u8[16384]{0}', space=vmem, size = 0x4000, scoped, tag = 'input window, operand 3, single buffered']
    #allocation11 [shape = 's32[1]{0}', space=sflag, size = 0x4, scoped, tag = 'scoped memory for lipreader_forward.2']
    #allocation12 [shape = 'u8[8192]{0}', space=vmem, size = 0x2000, scoped, tag = 'input window, operand 4, single buffered']
    #allocation13 [shape = 'u8[512]{0}', space=vmem, size = 0x400, scoped, tag = 'input window, operand 5, single buffered']
    #allocation14 [shape = 's32[1]{0}', space=sflag, size = 0x4, scoped, tag = 'scoped memory for lipreader_forward.2']
    #allocation15 [shape = 'u8[8192]{0}', space=vmem, size = 0x2000, scoped, tag = 'output window, operand 0']
    %11 = vsyncpa [#allocation5], 0
    %s12 = scalar_lea.sflag [#allocation5], 1
    %13 = vsyncpa %s12, 0
    %14 = vsyncpa [#allocation8], 0
    %15 = vsyncpa [#allocation11], 0
    %16 = vsyncpa [#allocation14], 0
    %17 = vsyncpa [#allocation6], 0
    %s18 = scalar_lea.sflag [#allocation6], 1
    %19 = vsyncpa %s18, 0
    loop: start=0, step=1, limit=4
    $region2: #{lipreader_forward.2} parent=1 // loop_pre_header
      _
    $region3: #{lipreader_forward.2} parent=1 // loop_header
      %s21 = sphi 0, %s25
      %p22 = scmp.ge.s32.totalorder %s21, 4
      %s31 = sphi 0, %s33
      %s34 = sphi 0, %s31
      %s35 = sphi 0, %s34
      %s51 = sphi 0, %s35
      %s55 = sphi 0, %s55
      %s57 = sphi 0, %s55
      %s58 = sphi 0, %s57
      %s72 = sphi 0, %s58
      %s76 = sphi 0, %s76
      %s78 = sphi 0, %s76
      %s79 = sphi 0, %s78
      %s93 = sphi 0, %s79
      %s97 = sphi 0, %s97
      %s99 = sphi 0, %s97
      %s100 = sphi 0, %s99
      %s114 = sphi 0, %s100
      %s118 = sphi 0, %s118
      %s120 = sphi 0, %s118
      %s121 = sphi 0, %s120
      %s135 = sphi 0, %s121
      %s139 = sphi 0, %s139
      %s141 = sphi 0, %s139
      %s142 = sphi 0, %s141
      %s156 = sphi 0, %s142
      %s162 = sphi 0, %s164
      %s165 = sphi 0, %s162
      %s166 = sphi 0, %s165
      %s182 = sphi 0, %s166
    $region4: #{lipreader_forward.2} parent=1 // loop_header_branch
      %24 = sbr.rel (%p22) target = $region8
    $region5: #{lipreader_forward.2} parent=1 // loop_body
      %s26 = ssub.s32 %s21, 1
      %s27 = ssub.s32 %s21, 2
      %s28 = sadd.s32 %s21, 1
      %s29 = ssub.s32 %s21, %s28
      %p30 = scmp.eq.s32.totalorder %s29, 0
      %s32 = sadd.s32 %s31, 1
      %s33 = scalar_select %p30, %s31, %s32
      %p36 = pneg %p30
      %p37 = scmp.eq.s32.totalorder %s21, 1
      %p38 = por %p36, %p37
      %p39 = scmp.ne.s32.totalorder %s31, %s34
      %p40 = scmp.eq.s32.totalorder %s21, 0
      %p41 = por %p39, %p40
      %p42 = scmp.ne.s32.totalorder %s31, %s34
      %p43 = scmp.eq.s32.totalorder %s26, 1
      %p44 = por %p42, %p43
      %p45 = scmp.ne.s32.totalorder %s34, %s35
      %p46 = scmp.eq.s32.totalorder %s26, 0
      %p47 = por %p45, %p46
      %p48 = scmp.ne.s32.totalorder %s34, %s35
      %p49 = scmp.eq.s32.totalorder %s27, 1
      %p50 = por %p48, %p49
      %p52 = scmp.ne.s32.totalorder %s35, %s51
      %p53 = scmp.eq.s32.totalorder %s27, 0
      %p54 = por %p52, %p53
      %s56 = sadd.s32 %s55, 1
      %p59 = scmp.eq.s32.totalorder %s21, 1
      %p60 = scmp.ne.s32.totalorder %s55, %s57
      %p61 = scmp.eq.s32.totalorder %s21, 0
      %p62 = por %p60, %p61
      %p63 = scmp.ne.s32.totalorder %s55, %s57
      %p64 = scmp.eq.s32.totalorder %s26, 1
      %p65 = por %p63, %p64
      %p66 = scmp.ne.s32.totalorder %s57, %s58
      %p67 = scmp.eq.s32.totalorder %s26, 0
      %p68 = por %p66, %p67
      %p69 = scmp.ne.s32.totalorder %s57, %s58
      %p70 = scmp.eq.s32.totalorder %s27, 1
      %p71 = por %p69, %p70
      %p73 = scmp.ne.s32.totalorder %s58, %s72
      %p74 = scmp.eq.s32.totalorder %s27, 0
      %p75 = por %p73, %p74
      %s77 = sadd.s32 %s76, 1
      %p80 = scmp.eq.s32.totalorder %s21, 1
      %p81 = scmp.ne.s32.totalorder %s76, %s78
      %p82 = scmp.eq.s32.totalorder %s21, 0
      %p83 = por %p81, %p82
      %p84 = scmp.ne.s32.totalorder %s76, %s78
      %p85 = scmp.eq.s32.totalorder %s26, 1
      %p86 = por %p84, %p85
      %p87 = scmp.ne.s32.totalorder %s78, %s79
      %p88 = scmp.eq.s32.totalorder %s26, 0
      %p89 = por %p87, %p88
      %p90 = scmp.ne.s32.totalorder %s78, %s79
      %p91 = scmp.eq.s32.totalorder %s27, 1
      %p92 = por %p90, %p91
      %p94 = scmp.ne.s32.totalorder %s79, %s93
      %p95 = scmp.eq.s32.totalorder %s27, 0
      %p96 = por %p94, %p95
      %s98 = sadd.s32 %s97, 1
      %p101 = scmp.eq.s32.totalorder %s21, 1
      %p102 = scmp.ne.s32.totalorder %s97, %s99
      %p103 = scmp.eq.s32.totalorder %s21, 0
      %p104 = por %p102, %p103
      %p105 = scmp.ne.s32.totalorder %s97, %s99
      %p106 = scmp.eq.s32.totalorder %s26, 1
      %p107 = por %p105, %p106
      %p108 = scmp.ne.s32.totalorder %s99, %s100
      %p109 = scmp.eq.s32.totalorder %s26, 0
      %p110 = por %p108, %p109
      %p111 = scmp.ne.s32.totalorder %s99, %s100
      %p112 = scmp.eq.s32.totalorder %s27, 1
      %p113 = por %p111, %p112
      %p115 = scmp.ne.s32.totalorder %s100, %s114
      %p116 = scmp.eq.s32.totalorder %s27, 0
      %p117 = por %p115, %p116
      %s119 = sadd.s32 %s118, 1
      %p122 = scmp.eq.s32.totalorder %s21, 1
      %p123 = scmp.ne.s32.totalorder %s118, %s120
      %p124 = scmp.eq.s32.totalorder %s21, 0
      %p125 = por %p123, %p124
      %p126 = scmp.ne.s32.totalorder %s118, %s120
      %p127 = scmp.eq.s32.totalorder %s26, 1
      %p128 = por %p126, %p127
      %p129 = scmp.ne.s32.totalorder %s120, %s121
      %p130 = scmp.eq.s32.totalorder %s26, 0
      %p131 = por %p129, %p130
      %p132 = scmp.ne.s32.totalorder %s120, %s121
      %p133 = scmp.eq.s32.totalorder %s27, 1
      %p134 = por %p132, %p133
      %p136 = scmp.ne.s32.totalorder %s121, %s135
      %p137 = scmp.eq.s32.totalorder %s27, 0
      %p138 = por %p136, %p137
      %s140 = sadd.s32 %s139, 1
      %p143 = scmp.eq.s32.totalorder %s21, 1
      %p144 = scmp.ne.s32.totalorder %s139, %s141
      %p145 = scmp.eq.s32.totalorder %s21, 0
      %p146 = por %p144, %p145
      %p147 = scmp.ne.s32.totalorder %s139, %s141
      %p148 = scmp.eq.s32.totalorder %s26, 1
      %p149 = por %p147, %p148
      %p150 = scmp.ne.s32.totalorder %s141, %s142
      %p151 = scmp.eq.s32.totalorder %s26, 0
      %p152 = por %p150, %p151
      %p153 = scmp.ne.s32.totalorder %s141, %s142
      %p154 = scmp.eq.s32.totalorder %s27, 1
      %p155 = por %p153, %p154
      %p157 = scmp.ne.s32.totalorder %s142, %s156
      %p158 = scmp.eq.s32.totalorder %s27, 0
      %p159 = por %p157, %p158
      %s160 = ssub.s32 %s21, %s28
      %p161 = scmp.eq.s32.totalorder %s160, 0
      %s163 = sadd.s32 %s162, 1
      %s164 = scalar_select %p161, %s162, %s163
      %p167 = pneg %p161
      %p168 = scmp.eq.s32.totalorder %s21, 1
      %p169 = por %p167, %p168
      %p170 = scmp.ne.s32.totalorder %s162, %s165
      %p171 = scmp.eq.s32.totalorder %s21, 0
      %p172 = por %p170, %p171
      %p173 = scmp.ne.s32.totalorder %s162, %s165
      %p174 = scmp.eq.s32.totalorder %s26, 1
      %p175 = por %p173, %p174
      %p176 = scmp.ne.s32.totalorder %s165, %s166
      %p177 = scmp.eq.s32.totalorder %s26, 0
      %p178 = por %p176, %p177
      %p179 = scmp.ne.s32.totalorder %s165, %s166
      %p180 = scmp.eq.s32.totalorder %s27, 1
      %p181 = por %p179, %p180
      %p183 = scmp.ne.s32.totalorder %s166, %s182
      %p184 = scmp.eq.s32.totalorder %s27, 0
      %p185 = por %p183, %p184
      %p186 = scmp.le.s32.totalorder 1, %s21
      %p187 = scmp.lt.s32.totalorder %s21, 3
      %p188 = pnand %p186, %p187
      %p189 = pneg %p188
      // Predicated region
      $region9: #{lipreader_forward.2} parent=5 // pred_check
        _
      $region10: #{lipreader_forward.2} parent=5 // pred_check_branch
        %191 = sbr.rel (%p188) target = $region12
      $region11: #{lipreader_forward.2} parent=5 // pred_region
        %s192 = ssub.s32 %s21, 1
        // Predicated region
        $region13: #{lipreader_forward.2} parent=11 // pred_check
          %p193 = pneg %p68
        $region14: #{lipreader_forward.2} parent=11 // pred_check_branch
          %195 = sbr.rel (%p193) target = $region16
        $region15: #{lipreader_forward.2} parent=11 // pred_region
          %s197 = ssub.s32 2560, 2560
          %198 = vsyncadd [#allocation8], %s197
          %s199 = sshll.u32 [#allocation7], 4
          %s200 = int_to_ptr.vmem [resolvable:$true] %s199
          %205 = dma.hbm_to_vmem [thread:$0]  %s1, 2560, %s200, [#allocation8], 64, 64, 4
        $region16: #{lipreader_forward.2} parent=11 // pred_fallthru
          _
        // Predicated region
        $region17: #{lipreader_forward.2} parent=11 // pred_check
          %p206 = pneg %p89
        $region18: #{lipreader_forward.2} parent=11 // pred_check_branch
          %208 = sbr.rel (%p206) target = $region20
        $region19: #{lipreader_forward.2} parent=11 // pred_region
          %s210 = ssub.s32 16, 16
          %211 = vsyncadd [#allocation8], %s210
          %s213 = sshll.u32 [#allocation9], 4
          %s214 = int_to_ptr.vmem [resolvable:$true] %s213
          %216 = dma.hbm_to_vmem [thread:$0]  %s2, 16, %s214, [#allocation8]
        $region20: #{lipreader_forward.2} parent=11 // pred_fallthru
          _
        // Predicated region
        $region21: #{lipreader_forward.2} parent=11 // pred_check
          %p217 = pneg %p110
        $region22: #{lipreader_forward.2} parent=11 // pred_check_branch
          %219 = sbr.rel (%p217) target = $region24
        $region23: #{lipreader_forward.2} parent=11 // pred_region
          %s221 = ssub.s32 512, 512
          %222 = vsyncadd [#allocation11], %s221
          %s223 = sshll.u32 [#allocation10], 4
          %s224 = int_to_ptr.vmem [resolvable:$true] %s223
          %229 = dma.hbm_to_vmem [thread:$0]  %s3, 512, %s224, [#allocation11], 128, 128, 8
        $region24: #{lipreader_forward.2} parent=11 // pred_fallthru
          _
        // Predicated region
        $region25: #{lipreader_forward.2} parent=11 // pred_check
          %p230 = pneg %p131
        $region26: #{lipreader_forward.2} parent=11 // pred_check_branch
          %232 = sbr.rel (%p230) target = $region28
        $region27: #{lipreader_forward.2} parent=11 // pred_region
          %s234 = ssub.s32 256, 256
          %235 = vsyncadd [#allocation11], %s234
          %s236 = sshll.u32 [#allocation12], 4
          %s237 = int_to_ptr.vmem [resolvable:$true] %s236
          %242 = dma.hbm_to_vmem [thread:$0]  %s4, 256, %s237, [#allocation11], 64, 64, 4
        $region28: #{lipreader_forward.2} parent=11 // pred_fallthru
          _
        // Predicated region
        $region29: #{lipreader_forward.2} parent=11 // pred_check
          %p243 = pneg %p152
        $region30: #{lipreader_forward.2} parent=11 // pred_check_branch
          %245 = sbr.rel (%p243) target = $region32
        $region31: #{lipreader_forward.2} parent=11 // pred_region
          %s247 = ssub.s32 16, 16
          %248 = vsyncadd [#allocation14], %s247
          %s250 = sshll.u32 [#allocation13], 4
          %s251 = int_to_ptr.vmem [resolvable:$true] %s250
          %253 = dma.hbm_to_vmem [thread:$0]  %s5, 16, %s251, [#allocation14]
        $region32: #{lipreader_forward.2} parent=11 // pred_fallthru
          _
      $region12: #{lipreader_forward.2} parent=5 // pred_fallthru
        _
      %p254 = scmp.lt.s32.totalorder %s21, 2
      // Predicated region
      $region33: #{lipreader_forward.2} parent=5 // pred_check
        %p255 = pneg %p254
      $region34: #{lipreader_forward.2} parent=5 // pred_check_branch
        %257 = sbr.rel (%p255) target = $region36
      $region35: #{lipreader_forward.2} parent=5 // pred_region
        // Predicated region
        $region37: #{lipreader_forward.2} parent=35 // pred_check
          %p258 = pneg %p41
        $region38: #{lipreader_forward.2} parent=35 // pred_check_branch
          %260 = sbr.rel (%p258) target = $region40
        $region39: #{lipreader_forward.2} parent=35 // pred_region
          %s261 = sand.u32 %s31, 1
          %s262 = scalar_lea.sflag [#allocation5], %s261
          %s263 = sand.u32 %s31, 1
          %s264 = smul.addr %s263, 384
          %s265 = scalar_lea.vmem [#allocation4], %s264
          %s267 = ssub.s32 6144, 6144
          %268 = vsyncadd %s262, %s267
          %s269 = smul.addr %s21, 96
          %s270 = smul.addr %s269, 64
          %s271 = scalar_lea.hbm %s0, %s270
          %s272 = sshll.u32 %s265, 4
          %s273 = int_to_ptr.vmem [resolvable:$true] %s272
          %278 = dma.hbm_to_vmem [thread:$0]  %s271, 6144, %s273, %s262, 64, 64, 4
        $region40: #{lipreader_forward.2} parent=35 // pred_fallthru
          _
      $region36: #{lipreader_forward.2} parent=5 // pred_fallthru
        _
      %p279 = scmp.le.s32.totalorder 1, %s21
      %p280 = scmp.lt.s32.totalorder %s21, 3
      %p281 = pnand %p279, %p280
      %p282 = pneg %p281
      // Predicated region
      $region41: #{lipreader_forward.2} parent=5 // pred_check
        _
      $region42: #{lipreader_forward.2} parent=5 // pred_check_branch
        %284 = sbr.rel (%p281) target = $region44
      $region43: #{lipreader_forward.2} parent=5 // pred_region
        %s285 = ssub.s32 %s21, 1
        %s286 = sand.u32 %s34, 1
        %s287 = scalar_lea.sflag [#allocation5], %s286
        %s288 = sand.u32 %s34, 1
        %s289 = smul.addr %s288, 384
        %s290 = scalar_lea.vmem [#allocation4], %s289
        // Predicated region
        $region45: #{lipreader_forward.2} parent=43 // pred_check
          %p291 = pneg %p47
        $region46: #{lipreader_forward.2} parent=43 // pred_check_branch
          %293 = sbr.rel (%p291) target = $region48
        $region47: #{lipreader_forward.2} parent=43 // pred_region
          %294 = dma.done %s287, 6144
        $region48: #{lipreader_forward.2} parent=43 // pred_fallthru
          _
        // Predicated region
        $region49: #{lipreader_forward.2} parent=43 // pred_check
          %p295 = pneg %p68
        $region50: #{lipreader_forward.2} parent=43 // pred_check_branch
          %297 = sbr.rel (%p295) target = $region52
        $region51: #{lipreader_forward.2} parent=43 // pred_region
          %298 = dma.done [#allocation8], 2560
        $region52: #{lipreader_forward.2} parent=43 // pred_fallthru
          _
        // Predicated region
        $region53: #{lipreader_forward.2} parent=43 // pred_check
          %p299 = pneg %p89
        $region54: #{lipreader_forward.2} parent=43 // pred_check_branch
          %301 = sbr.rel (%p299) target = $region56
        $region55: #{lipreader_forward.2} parent=43 // pred_region
          %302 = dma.done [#allocation8], 16
        $region56: #{lipreader_forward.2} parent=43 // pred_fallthru
          _
        // Predicated region
        $region57: #{lipreader_forward.2} parent=43 // pred_check
          %p303 = pneg %p110
        $region58: #{lipreader_forward.2} parent=43 // pred_check_branch
          %305 = sbr.rel (%p303) target = $region60
        $region59: #{lipreader_forward.2} parent=43 // pred_region
          %306 = dma.done [#allocation11], 512
        $region60: #{lipreader_forward.2} parent=43 // pred_fallthru
          _
        // Predicated region
        $region61: #{lipreader_forward.2} parent=43 // pred_check
          %p307 = pneg %p131
        $region62: #{lipreader_forward.2} parent=43 // pred_check_branch
          %309 = sbr.rel (%p307) target = $region64
        $region63: #{lipreader_forward.2} parent=43 // pred_region
          %310 = dma.done [#allocation11], 256
        $region64: #{lipreader_forward.2} parent=43 // pred_fallthru
          _
        // Predicated region
        $region65: #{lipreader_forward.2} parent=43 // pred_check
          %p311 = pneg %p152
        $region66: #{lipreader_forward.2} parent=43 // pred_check_branch
          %313 = sbr.rel (%p311) target = $region68
        $region67: #{lipreader_forward.2} parent=43 // pred_region
          %314 = dma.done [#allocation14], 16
        $region68: #{lipreader_forward.2} parent=43 // pred_fallthru
          _
        %s315 = sand.u32 %s34, 1
        %s316 = scalar_lea.sflag [#allocation5], %s315
        %s317 = sand.u32 %s34, 1
        %s318 = smul.addr %s317, 384
        %s319 = scalar_lea.vmem [#allocation4], %s318
        %p320 = pneg %p47
        %p321 = pneg %p44
        %p322 = pneg %p68
        %p323 = pneg %p65
        %p324 = pneg %p89
        %p325 = pneg %p86
        %p326 = pneg %p110
        %p327 = pneg %p107
        %p328 = pneg %p131
        %p329 = pneg %p128
        %p330 = pneg %p152
        %p331 = pneg %p149
        %p332 = pneg %p178
        %p333 = pneg %p175
        %s334 = sand.u32 %s165, 1
        %s335 = scalar_lea.sflag [#allocation6], %s334
        %s336 = sand.u32 %s165, 1
        %s337 = smul.addr %s336, 8
        %s338 = scalar_lea.vmem [#allocation15], %s337
        %v340 = vld [vmem:[#allocation9] sm:$0x1]
        %v341 = vld [vmem:[#allocation10] sm:$0xff]
        %v342 = vld [vmem:[#allocation10 + $0x8] sm:$0xff]
        %v343 = vld [vmem:[#allocation10 + $0x10] sm:$0xff]
        %v344 = vld [vmem:[#allocation10 + $0x18] sm:$0xff]
        %v345 = vld [vmem:[%s290] sm:$0xf]
        %v346 = vld [vmem:[%s290 + $0x4] sm:$0xf]
        %v347 = vld [vmem:[%s290 + $0x8] sm:$0xf]
        %v348 = vld [vmem:[%s290 + $0xc] sm:$0xf]
        %v349 = vld [vmem:[%s290 + $0x10] sm:$0xf]
        %v350 = vld [vmem:[%s290 + $0x14] sm:$0xf]
        %v351 = vld [vmem:[%s290 + $0x18] sm:$0xf]
        %v352 = vld [vmem:[%s290 + $0x1c] sm:$0xf]
        %v353 = vld [vmem:[#allocation7] sm:$0xf]
        %v354 = vld [vmem:[#allocation7 + $0x4] sm:$0xf]
        %v355 = vld [vmem:[#allocation7 + $0x8] sm:$0xf]
        %v356 = vld [vmem:[#allocation7 + $0xc] sm:$0xf]
        %v357 = vld [vmem:[#allocation7 + $0x10] sm:$0xf]
        %v358 = vld [vmem:[#allocation7 + $0x14] sm:$0xf]
        %v359 = vld [vmem:[#allocation7 + $0x18] sm:$0xf]
        %v360 = vld [vmem:[#allocation7 + $0x1c] sm:$0xf]
        %s361 = scalar_lea.vmem %s290, 32 [#allocation4]
        %v362 = vld [vmem:[%s361] sm:$0xf]
        %v363 = vld [vmem:[%s361 + $0x4] sm:$0xf]
        %v364 = vld [vmem:[%s361 + $0x8] sm:$0xf]
        %v365 = vld [vmem:[%s361 + $0xc] sm:$0xf]
        %v366 = vld [vmem:[%s361 + $0x10] sm:$0xf]
        %v367 = vld [vmem:[%s361 + $0x14] sm:$0xf]
        %v368 = vld [vmem:[%s361 + $0x18] sm:$0xf]
        %v369 = vld [vmem:[%s361 + $0x1c] sm:$0xf]
        %s370 = scalar_lea.vmem [#allocation7], 32
        %v371 = vld [vmem:[%s370] sm:$0xf]
        %v372 = vld [vmem:[%s370 + $0x4] sm:$0xf]
        %v373 = vld [vmem:[%s370 + $0x8] sm:$0xf]
        %v374 = vld [vmem:[%s370 + $0xc] sm:$0xf]
        %v375 = vld [vmem:[%s370 + $0x10] sm:$0xf]
        %v376 = vld [vmem:[%s370 + $0x14] sm:$0xf]
        %v377 = vld [vmem:[%s370 + $0x18] sm:$0xf]
        %v378 = vld [vmem:[%s370 + $0x1c] sm:$0xf]
        %v387 = vunpack.c.l.b16 %v362
        %v388 = vunpack.c.l.b16 %v363
        %v389 = vunpack.c.l.b16 %v364
        %v390 = vunpack.c.l.b16 %v365
        %v391 = vunpack.c.l.b16 %v366
        %v392 = vunpack.c.l.b16 %v367
        %v393 = vunpack.c.l.b16 %v368
        %v394 = vunpack.c.l.b16 %v369
        %v395 = vpack.c.b16 %v388, %v387
        %v396 = vpack.c.b16 %v390, %v389
        %v397 = vpack.c.b16 %v392, %v391
        %v398 = vpack.c.b16 %v394, %v393
        %v407 = vunpack.c.l.b16 %v371
        %v408 = vunpack.c.l.b16 %v372
        %v409 = vunpack.c.l.b16 %v373
        %v410 = vunpack.c.l.b16 %v374
        %v411 = vunpack.c.l.b16 %v375
        %v412 = vunpack.c.l.b16 %v376
        %v413 = vunpack.c.l.b16 %v377
        %v414 = vunpack.c.l.b16 %v378
        %v415 = vpack.c.b16 %v408, %v407
        %v416 = vpack.c.b16 %v410, %v409
        %v417 = vpack.c.b16 %v412, %v411
        %v418 = vpack.c.b16 %v414, %v413
        %vm423 = vcmask 523264
        %v425 = vsel %vm423, %v395, 0
        %v428 = vsel %vm423, %v396, 0
        %v431 = vsel %vm423, %v397, 0
        %v434 = vsel %vm423, %v398, 0
        %436 = vmatprep.subr.bf16.mxu0 0
        %437 = vmatpush1.bf16.msra.mxu0 %v415
        %438 = vmatprep.subr.bf16.mxu0 0
        %439 = vmatpush1.bf16.msra.mxu0 %v416
        %440 = vmatprep.subr.bf16.mxu0 0
        %441 = vmatpush1.bf16.msra.mxu0 %v417
        %442 = vmatprep.subr.bf16.mxu0 0
        %443 = vmatpush1.bf16.msra.mxu0 %v418
        %444 = vmatprep.subr.bf16.mxu0 0
        %445 = vmatpush1.bf16.msra.mxu0 0
        %446 = vmatprep.subr.bf16.mxu0 0
        %447 = vmatpush1.bf16.msra.mxu0 0
        %448 = vmatprep.subr.bf16.mxu0 0
        %449 = vmatpush1.bf16.msra.mxu0 0
        %450 = vmatprep.subr.bf16.mxu0 0
        %451 = vmatpush1.bf16.msra.mxu0 0
        %452 = vmatprep.subr.bf16.mxu0 0
        %453 = vmatpush1.bf16.msra.mxu0 0
        %454 = vmatprep.subr.bf16.mxu0 0
        %455 = vmatpush1.bf16.msra.mxu0 0
        %456 = vmatprep.subr.bf16.mxu0 0
        %457 = vmatpush1.bf16.msra.mxu0 0
        %458 = vmatprep.subr.bf16.mxu0 0
        %459 = vmatpush1.bf16.msra.mxu0 0
        %460 = vmatprep.subr.bf16.mxu0 0
        %461 = vmatpush1.bf16.msra.mxu0 0
        %462 = vmatprep.subr.bf16.mxu0 0
        %463 = vmatpush1.bf16.msra.mxu0 0
        %464 = vmatprep.subr.bf16.mxu0 0
        %465 = vmatpush1.bf16.msra.mxu0 0
        %466 = vmatprep.subr.bf16.mxu0 0
        %467 = vmatpush1.bf16.msra.mxu0 0
        %468 = vmatprep.mubr.bf16.mxu0 0
        %469 = vmatmul.mubr.bf16.gmra.mrb[0].mxu0 %v425
        %v470 = vpop.f32.mrb[0].mxu0
        %v471 = vadd.f32 0.0, %v470
        %v472 = vpop.f32.mrb[0].mxu0
        %v473 = vpop.f32.mrb[0].mxu0
        %v474 = vadd.f32 0.0, %v473
        %v475 = vpop.f32.mrb[0].mxu0
        %476 = vmatprep.mubr.bf16.mxu0 0
        %477 = vmatmul.mubr.bf16.gmra.mrb[0].mxu0 %v428
        %v478 = vpop.f32.mrb[0].mxu0
        %v479 = vadd.f32 0.0, %v478
        %v480 = vpop.f32.mrb[0].mxu0
        %v481 = vpop.f32.mrb[0].mxu0
        %v482 = vadd.f32 0.0, %v481
        %v483 = vpop.f32.mrb[0].mxu0
        %484 = vmatprep.mubr.bf16.mxu0 0
        %485 = vmatmul.mubr.bf16.gmra.mrb[0].mxu0 %v431
        %v486 = vpop.f32.mrb[0].mxu0
        %v487 = vadd.f32 0.0, %v486
        %v488 = vpop.f32.mrb[0].mxu0
        %v489 = vpop.f32.mrb[0].mxu0
        %v490 = vadd.f32 0.0, %v489
        %v491 = vpop.f32.mrb[0].mxu0
        %492 = vmatprep.mubr.bf16.mxu0 0
        %493 = vmatmul.mubr.bf16.gmra.mrb[0].mxu0 %v434
        %v494 = vpop.f32.mrb[0].mxu0
        %v495 = vadd.f32 0.0, %v494
        %v496 = vpop.f32.mrb[0].mxu0
        %v497 = vpop.f32.mrb[0].mxu0
        %v498 = vadd.f32 0.0, %v497
        %v499 = vpop.f32.mrb[0].mxu0
        %500 = vdwg.mxu0
        %v509 = vunpack.c.l.b16 %v345
        %v510 = vunpack.c.l.b16 %v346
        %v511 = vunpack.c.l.b16 %v347
        %v512 = vunpack.c.l.b16 %v348
        %v513 = vunpack.c.l.b16 %v349
        %v514 = vunpack.c.l.b16 %v350
        %v515 = vunpack.c.l.b16 %v351
        %v516 = vunpack.c.l.b16 %v352
        %v517 = vpack.c.b16 %v510, %v509
        %v518 = vpack.c.b16 %v512, %v511
        %v519 = vpack.c.b16 %v514, %v513
        %v520 = vpack.c.b16 %v516, %v515
        %v529 = vunpack.c.l.b16 %v353
        %v530 = vunpack.c.l.b16 %v354
        %v531 = vunpack.c.l.b16 %v355
        %v532 = vunpack.c.l.b16 %v356
        %v533 = vunpack.c.l.b16 %v357
        %v534 = vunpack.c.l.b16 %v358
        %v535 = vunpack.c.l.b16 %v359
        %v536 = vunpack.c.l.b16 %v360
        %v537 = vpack.c.b16 %v530, %v529
        %v538 = vpack.c.b16 %v532, %v531
        %v539 = vpack.c.b16 %v534, %v533
        %v540 = vpack.c.b16 %v536, %v535
        %v546 = vsel %vm423, %v517, 0
        %v549 = vsel %vm423, %v518, 0
        %v552 = vsel %vm423, %v519, 0
        %v555 = vsel %vm423, %v520, 0
        %557 = vmatprep.subr.bf16.mxu0 0
        %558 = vmatpush1.bf16.msra.mxu0 %v537
        %559 = vmatprep.subr.bf16.mxu0 0
        %560 = vmatpush1.bf16.msra.mxu0 %v538
        %561 = vmatprep.subr.bf16.mxu0 0
        %562 = vmatpush1.bf16.msra.mxu0 %v539
        %563 = vmatprep.subr.bf16.mxu0 0
        %564 = vmatpush1.bf16.msra.mxu0 %v540
        %565 = vmatprep.subr.bf16.mxu0 0
        %566 = vmatpush1.bf16.msra.mxu0 0
        %567 = vmatprep.subr.bf16.mxu0 0
        %568 = vmatpush1.bf16.msra.mxu0 0
        %569 = vmatprep.subr.bf16.mxu0 0
        %570 = vmatpush1.bf16.msra.mxu0 0
        %571 = vmatprep.subr.bf16.mxu0 0
        %572 = vmatpush1.bf16.msra.mxu0 0
        %573 = vmatprep.subr.bf16.mxu0 0
        %574 = vmatpush1.bf16.msra.mxu0 0
        %575 = vmatprep.subr.bf16.mxu0 0
        %576 = vmatpush1.bf16.msra.mxu0 0
        %577 = vmatprep.subr.bf16.mxu0 0
        %578 = vmatpush1.bf16.msra.mxu0 0
        %579 = vmatprep.subr.bf16.mxu0 0
        %580 = vmatpush1.bf16.msra.mxu0 0
        %581 = vmatprep.subr.bf16.mxu0 0
        %582 = vmatpush1.bf16.msra.mxu0 0
        %583 = vmatprep.subr.bf16.mxu0 0
        %584 = vmatpush1.bf16.msra.mxu0 0
        %585 = vmatprep.subr.bf16.mxu0 0
        %586 = vmatpush1.bf16.msra.mxu0 0
        %587 = vmatprep.subr.bf16.mxu0 0
        %588 = vmatpush1.bf16.msra.mxu0 0
        %589 = vmatprep.mubr.bf16.mxu0 0
        %590 = vmatmul.mubr.bf16.gmra.mrb[0].mxu0 %v546
        %v591 = vpop.f32.mrb[0].mxu0
        %v592 = vadd.f32 %v471, %v591
        %v593 = vpop.f32.mrb[0].mxu0
        %v594 = vpop.f32.mrb[0].mxu0
        %v595 = vadd.f32 %v474, %v594
        %v596 = vpop.f32.mrb[0].mxu0
        %597 = vmatprep.mubr.bf16.mxu0 0
        %598 = vmatmul.mubr.bf16.gmra.mrb[0].mxu0 %v549
        %v599 = vpop.f32.mrb[0].mxu0
        %v600 = vadd.f32 %v479, %v599
        %v601 = vpop.f32.mrb[0].mxu0
        %v602 = vpop.f32.mrb[0].mxu0
        %v603 = vadd.f32 %v482, %v602
        %v604 = vpop.f32.mrb[0].mxu0
        %605 = vmatprep.mubr.bf16.mxu0 0
        %606 = vmatmul.mubr.bf16.gmra.mrb[0].mxu0 %v552
        %v607 = vpop.f32.mrb[0].mxu0
        %v608 = vadd.f32 %v487, %v607
        %v609 = vpop.f32.mrb[0].mxu0
        %v610 = vpop.f32.mrb[0].mxu0
        %v611 = vadd.f32 %v490, %v610
        %v612 = vpop.f32.mrb[0].mxu0
        %613 = vmatprep.mubr.bf16.mxu0 0
        %614 = vmatmul.mubr.bf16.gmra.mrb[0].mxu0 %v555
        %v615 = vpop.f32.mrb[0].mxu0
        %v616 = vadd.f32 %v495, %v615
        %v617 = vpop.f32.mrb[0].mxu0
        %v618 = vpop.f32.mrb[0].mxu0
        %v619 = vadd.f32 %v498, %v618
        %v620 = vpop.f32.mrb[0].mxu0
        %621 = vdwg.mxu0
        %s622 = scalar_lea.vmem %s290, 64 [#allocation4]
        %v623 = vld [vmem:[%s622] sm:$0xf]
        %v624 = vld [vmem:[%s622 + $0x4] sm:$0xf]
        %v625 = vld [vmem:[%s622 + $0x8] sm:$0xf]
        %v626 = vld [vmem:[%s622 + $0xc] sm:$0xf]
        %v627 = vld [vmem:[%s622 + $0x10] sm:$0xf]
        %v628 = vld [vmem:[%s622 + $0x14] sm:$0xf]
        %v629 = vld [vmem:[%s622 + $0x18] sm:$0xf]
        %v630 = vld [vmem:[%s622 + $0x1c] sm:$0xf]
        %s631 = scalar_lea.vmem [#allocation7], 64
        %v632 = vld [vmem:[%s631] sm:$0xf]
        %v633 = vld [vmem:[%s631 + $0x4] sm:$0xf]
        %v634 = vld [vmem:[%s631 + $0x8] sm:$0xf]
        %v635 = vld [vmem:[%s631 + $0xc] sm:$0xf]
        %v636 = vld [vmem:[%s631 + $0x10] sm:$0xf]
        %v637 = vld [vmem:[%s631 + $0x14] sm:$0xf]
        %v638 = vld [vmem:[%s631 + $0x18] sm:$0xf]
        %v639 = vld [vmem:[%s631 + $0x1c] sm:$0xf]
        %v648 = vunpack.c.l.b16 %v623
        %v649 = vunpack.c.l.b16 %v624
        %v650 = vunpack.c.l.b16 %v625
        %v651 = vunpack.c.l.b16 %v626
        %v652 = vunpack.c.l.b16 %v627
        %v653 = vunpack.c.l.b16 %v628
        %v654 = vunpack.c.l.b16 %v629
        %v655 = vunpack.c.l.b16 %v630
        %v656 = vpack.c.b16 %v649, %v648
        %v657 = vpack.c.b16 %v651, %v650
        %v658 = vpack.c.b16 %v653, %v652
        %v659 = vpack.c.b16 %v655, %v654
        %v668 = vunpack.c.l.b16 %v632
        %v669 = vunpack.c.l.b16 %v633
        %v670 = vunpack.c.l.b16 %v634
        %v671 = vunpack.c.l.b16 %v635
        %v672 = vunpack.c.l.b16 %v636
        %v673 = vunpack.c.l.b16 %v637
        %v674 = vunpack.c.l.b16 %v638
        %v675 = vunpack.c.l.b16 %v639
        %v676 = vpack.c.b16 %v669, %v668
        %v677 = vpack.c.b16 %v671, %v670
        %v678 = vpack.c.b16 %v673, %v672
        %v679 = vpack.c.b16 %v675, %v674
        %v685 = vsel %vm423, %v656, 0
        %v688 = vsel %vm423, %v657, 0
        %v691 = vsel %vm423, %v658, 0
        %v694 = vsel %vm423, %v659, 0
        %696 = vmatprep.subr.bf16.mxu0 0
        %697 = vmatpush1.bf16.msra.mxu0 %v676
        %698 = vmatprep.subr.bf16.mxu0 0
        %699 = vmatpush1.bf16.msra.mxu0 %v677
        %700 = vmatprep.subr.bf16.mxu0 0
        %701 = vmatpush1.bf16.msra.mxu0 %v678
        %702 = vmatprep.subr.bf16.mxu0 0
        %703 = vmatpush1.bf16.msra.mxu0 %v679
        %704 = vmatprep.subr.bf16.mxu0 0
        %705 = vmatpush1.bf16.msra.mxu0 0
        %706 = vmatprep.subr.bf16.mxu0 0
        %707 = vmatpush1.bf16.msra.mxu0 0
        %708 = vmatprep.subr.bf16.mxu0 0
        %709 = vmatpush1.bf16.msra.mxu0 0
        %710 = vmatprep.subr.bf16.mxu0 0
        %711 = vmatpush1.bf16.msra.mxu0 0
        %712 = vmatprep.subr.bf16.mxu0 0
        %713 = vmatpush1.bf16.msra.mxu0 0
        %714 = vmatprep.subr.bf16.mxu0 0
        %715 = vmatpush1.bf16.msra.mxu0 0
        %716 = vmatprep.subr.bf16.mxu0 0
        %717 = vmatpush1.bf16.msra.mxu0 0
        %718 = vmatprep.subr.bf16.mxu0 0
        %719 = vmatpush1.bf16.msra.mxu0 0
        %720 = vmatprep.subr.bf16.mxu0 0
        %721 = vmatpush1.bf16.msra.mxu0 0
        %722 = vmatprep.subr.bf16.mxu0 0
        %723 = vmatpush1.bf16.msra.mxu0 0
        %724 = vmatprep.subr.bf16.mxu0 0
        %725 = vmatpush1.bf16.msra.mxu0 0
        %726 = vmatprep.subr.bf16.mxu0 0
        %727 = vmatpush1.bf16.msra.mxu0 0
        %728 = vmatprep.mubr.bf16.mxu0 0
        %729 = vmatmul.mubr.bf16.gmra.mrb[0].mxu0 %v685
        %v730 = vpop.f32.mrb[0].mxu0
        %v731 = vadd.f32 0.0, %v730
        %v732 = vpop.f32.mrb[0].mxu0
        %v733 = vpop.f32.mrb[0].mxu0
        %v734 = vadd.f32 0.0, %v733
        %v735 = vpop.f32.mrb[0].mxu0
        %736 = vmatprep.mubr.bf16.mxu0 0
        %737 = vmatmul.mubr.bf16.gmra.mrb[0].mxu0 %v688
        %v738 = vpop.f32.mrb[0].mxu0
        %v739 = vadd.f32 0.0, %v738
        %v740 = vpop.f32.mrb[0].mxu0
        %v741 = vpop.f32.mrb[0].mxu0
        %v742 = vadd.f32 0.0, %v741
        %v743 = vpop.f32.mrb[0].mxu0
        %744 = vmatprep.mubr.bf16.mxu0 0
        %745 = vmatmul.mubr.bf16.gmra.mrb[0].mxu0 %v691
        %v746 = vpop.f32.mrb[0].mxu0
        %v747 = vadd.f32 0.0, %v746
        %v748 = vpop.f32.mrb[0].mxu0
        %v749 = vpop.f32.mrb[0].mxu0
        %v750 = vadd.f32 0.0, %v749
        %v751 = vpop.f32.mrb[0].mxu0
        %752 = vmatprep.mubr.bf16.mxu0 0
        %753 = vmatmul.mubr.bf16.gmra.mrb[0].mxu0 %v694
        %v754 = vpop.f32.mrb[0].mxu0
        %v755 = vadd.f32 0.0, %v754
        %v756 = vpop.f32.mrb[0].mxu0
        %v757 = vpop.f32.mrb[0].mxu0
        %v758 = vadd.f32 0.0, %v757
        %v759 = vpop.f32.mrb[0].mxu0
        %760 = vdwg.mxu0
        %v761 = vadd.f32 %v592, %v731
        %v762 = vadd.f32 %v595, %v734
        %v763 = vadd.f32 %v600, %v739
        %v764 = vadd.f32 %v603, %v742
        %v765 = vadd.f32 %v608, %v747
        %v766 = vadd.f32 %v611, %v750
        %v767 = vadd.f32 %v616, %v755
        %v768 = vadd.f32 %v619, %v758
        %s769 = scalar_lea.vmem %s290, 96 [#allocation4]
        %v770 = vld [vmem:[%s769] sm:$0xf]
        %v771 = vld [vmem:[%s769 + $0x4] sm:$0xf]
        %v772 = vld [vmem:[%s769 + $0x8] sm:$0xf]
        %v773 = vld [vmem:[%s769 + $0xc] sm:$0xf]
        %v774 = vld [vmem:[%s769 + $0x10] sm:$0xf]
        %v775 = vld [vmem:[%s769 + $0x14] sm:$0xf]
        %v776 = vld [vmem:[%s769 + $0x18] sm:$0xf]
        %v777 = vld [vmem:[%s769 + $0x1c] sm:$0xf]
        %s778 = scalar_lea.vmem [#allocation7], 96
        %v779 = vld [vmem:[%s778] sm:$0xf]
        %v780 = vld [vmem:[%s778 + $0x4] sm:$0xf]
        %v781 = vld [vmem:[%s778 + $0x8] sm:$0xf]
        %v782 = vld [vmem:[%s778 + $0xc] sm:$0xf]
        %v783 = vld [vmem:[%s778 + $0x10] sm:$0xf]
        %v784 = vld [vmem:[%s778 + $0x14] sm:$0xf]
        %v785 = vld [vmem:[%s778 + $0x18] sm:$0xf]
        %v786 = vld [vmem:[%s778 + $0x1c] sm:$0xf]
        %v795 = vunpack.c.l.b16 %v770
        %v796 = vunpack.c.l.b16 %v771
        %v797 = vunpack.c.l.b16 %v772
        %v798 = vunpack.c.l.b16 %v773
        %v799 = vunpack.c.l.b16 %v774
        %v800 = vunpack.c.l.b16 %v775
        %v801 = vunpack.c.l.b16 %v776
        %v802 = vunpack.c.l.b16 %v777
        %v803 = vpack.c.b16 %v796, %v795
        %v804 = vpack.c.b16 %v798, %v797
        %v805 = vpack.c.b16 %v800, %v799
        %v806 = vpack.c.b16 %v802, %v801
        %v815 = vunpack.c.l.b16 %v779
        %v816 = vunpack.c.l.b16 %v780
        %v817 = vunpack.c.l.b16 %v781
        %v818 = vunpack.c.l.b16 %v782
        %v819 = vunpack.c.l.b16 %v783
        %v820 = vunpack.c.l.b16 %v784
        %v821 = vunpack.c.l.b16 %v785
        %v822 = vunpack.c.l.b16 %v786
        %v823 = vpack.c.b16 %v816, %v815
        %v824 = vpack.c.b16 %v818, %v817
        %v825 = vpack.c.b16 %v820, %v819
        %v826 = vpack.c.b16 %v822, %v821
        %v832 = vsel %vm423, %v803, 0
        %v835 = vsel %vm423, %v804, 0
        %v838 = vsel %vm423, %v805, 0
        %v841 = vsel %vm423, %v806, 0
        %843 = vmatprep.subr.bf16.mxu0 0
        %844 = vmatpush1.bf16.msra.mxu0 %v823
        %845 = vmatprep.subr.bf16.mxu0 0
        %846 = vmatpush1.bf16.msra.mxu0 %v824
        %847 = vmatprep.subr.bf16.mxu0 0
        %848 = vmatpush1.bf16.msra.mxu0 %v825
        %849 = vmatprep.subr.bf16.mxu0 0
        %850 = vmatpush1.bf16.msra.mxu0 %v826
        %851 = vmatprep.subr.bf16.mxu0 0
        %852 = vmatpush1.bf16.msra.mxu0 0
        %853 = vmatprep.subr.bf16.mxu0 0
        %854 = vmatpush1.bf16.msra.mxu0 0
        %855 = vmatprep.subr.bf16.mxu0 0
        %856 = vmatpush1.bf16.msra.mxu0 0
        %857 = vmatprep.subr.bf16.mxu0 0
        %858 = vmatpush1.bf16.msra.mxu0 0
        %859 = vmatprep.subr.bf16.mxu0 0
        %860 = vmatpush1.bf16.msra.mxu0 0
        %861 = vmatprep.subr.bf16.mxu0 0
        %862 = vmatpush1.bf16.msra.mxu0 0
        %863 = vmatprep.subr.bf16.mxu0 0
        %864 = vmatpush1.bf16.msra.mxu0 0
        %865 = vmatprep.subr.bf16.mxu0 0
        %866 = vmatpush1.bf16.msra.mxu0 0
        %867 = vmatprep.subr.bf16.mxu0 0
        %868 = vmatpush1.bf16.msra.mxu0 0
        %869 = vmatprep.subr.bf16.mxu0 0
        %870 = vmatpush1.bf16.msra.mxu0 0
        %871 = vmatprep.subr.bf16.mxu0 0
        %872 = vmatpush1.bf16.msra.mxu0 0
        %873 = vmatprep.subr.bf16.mxu0 0
        %874 = vmatpush1.bf16.msra.mxu0 0
        %875 = vmatprep.mubr.bf16.mxu0 0
        %876 = vmatmul.mubr.bf16.gmra.mrb[0].mxu0 %v832
        %v877 = vpop.f32.mrb[0].mxu0
        %v878 = vadd.f32 0.0, %v877
        %v879 = vpop.f32.mrb[0].mxu0
        %v880 = vpop.f32.mrb[0].mxu0
        %v881 = vadd.f32 0.0, %v880
        %v882 = vpop.f32.mrb[0].mxu0
        %883 = vmatprep.mubr.bf16.mxu0 0
        %884 = vmatmul.mubr.bf16.gmra.mrb[0].mxu0 %v835
        %v885 = vpop.f32.mrb[0].mxu0
        %v886 = vadd.f32 0.0, %v885
        %v887 = vpop.f32.mrb[0].mxu0
        %v888 = vpop.f32.mrb[0].mxu0
        %v889 = vadd.f32 0.0, %v888
        %v890 = vpop.f32.mrb[0].mxu0
        %891 = vmatprep.mubr.bf16.mxu0 0
        %892 = vmatmul.mubr.bf16.gmra.mrb[0].mxu0 %v838
        %v893 = vpop.f32.mrb[0].mxu0
        %v894 = vadd.f32 0.0, %v893
        %v895 = vpop.f32.mrb[0].mxu0
        %v896 = vpop.f32.mrb[0].mxu0
        %v897 = vadd.f32 0.0, %v896
        %v898 = vpop.f32.mrb[0].mxu0
        %899 = vmatprep.mubr.bf16.mxu0 0
        %900 = vmatmul.mubr.bf16.gmra.mrb[0].mxu0 %v841
        %v901 = vpop.f32.mrb[0].mxu0
        %v902 = vadd.f32 0.0, %v901
        %v903 = vpop.f32.mrb[0].mxu0
        %v904 = vpop.f32.mrb[0].mxu0
        %v905 = vadd.f32 0.0, %v904
        %v906 = vpop.f32.mrb[0].mxu0
        %907 = vdwg.mxu0
        %v908 = vadd.f32 %v761, %v878
        %v909 = vadd.f32 %v762, %v881
        %v910 = vadd.f32 %v763, %v886
        %v911 = vadd.f32 %v764, %v889
        %v912 = vadd.f32 %v765, %v894
        %v913 = vadd.f32 %v766, %v897
        %v914 = vadd.f32 %v767, %v902
        %v915 = vadd.f32 %v768, %v905
        %s916 = scalar_lea.vmem %s290, 128 [#allocation4]
        %v917 = vld [vmem:[%s916] sm:$0xf]
        %v918 = vld [vmem:[%s916 + $0x4] sm:$0xf]
        %v919 = vld [vmem:[%s916 + $0x8] sm:$0xf]
        %v920 = vld [vmem:[%s916 + $0xc] sm:$0xf]
        %v921 = vld [vmem:[%s916 + $0x10] sm:$0xf]
        %v922 = vld [vmem:[%s916 + $0x14] sm:$0xf]
        %v923 = vld [vmem:[%s916 + $0x18] sm:$0xf]
        %v924 = vld [vmem:[%s916 + $0x1c] sm:$0xf]
        %s925 = scalar_lea.vmem [#allocation7], 128
        %v926 = vld [vmem:[%s925] sm:$0xf]
        %v927 = vld [vmem:[%s925 + $0x4] sm:$0xf]
        %v928 = vld [vmem:[%s925 + $0x8] sm:$0xf]
        %v929 = vld [vmem:[%s925 + $0xc] sm:$0xf]
        %v930 = vld [vmem:[%s925 + $0x10] sm:$0xf]
        %v931 = vld [vmem:[%s925 + $0x14] sm:$0xf]
        %v932 = vld [vmem:[%s925 + $0x18] sm:$0xf]
        %v933 = vld [vmem:[%s925 + $0x1c] sm:$0xf]
        %v942 = vunpack.c.l.b16 %v917
        %v943 = vunpack.c.l.b16 %v918
        %v944 = vunpack.c.l.b16 %v919
        %v945 = vunpack.c.l.b16 %v920
        %v946 = vunpack.c.l.b16 %v921
        %v947 = vunpack.c.l.b16 %v922
        %v948 = vunpack.c.l.b16 %v923
        %v949 = vunpack.c.l.b16 %v924
        %v950 = vpack.c.b16 %v943, %v942
        %v951 = vpack.c.b16 %v945, %v944
        %v952 = vpack.c.b16 %v947, %v946
        %v953 = vpack.c.b16 %v949, %v948
        %v962 = vunpack.c.l.b16 %v926
        %v963 = vunpack.c.l.b16 %v927
        %v964 = vunpack.c.l.b16 %v928
        %v965 = vunpack.c.l.b16 %v929
        %v966 = vunpack.c.l.b16 %v930
        %v967 = vunpack.c.l.b16 %v931
        %v968 = vunpack.c.l.b16 %v932
        %v969 = vunpack.c.l.b16 %v933
        %v970 = vpack.c.b16 %v963, %v962
        %v971 = vpack.c.b16 %v965, %v964
        %v972 = vpack.c.b16 %v967, %v966
        %v973 = vpack.c.b16 %v969, %v968
        %v979 = vsel %vm423, %v950, 0
        %v982 = vsel %vm423, %v951, 0
        %v985 = vsel %vm423, %v952, 0
        %v988 = vsel %vm423, %v953, 0
        %990 = vmatprep.subr.bf16.mxu0 0
        %991 = vmatpush1.bf16.msra.mxu0 %v970
        %992 = vmatprep.subr.bf16.mxu0 0
        %993 = vmatpush1.bf16.msra.mxu0 %v971
        %994 = vmatprep.subr.bf16.mxu0 0
        %995 = vmatpush1.bf16.msra.mxu0 %v972
        %996 = vmatprep.subr.bf16.mxu0 0
        %997 = vmatpush1.bf16.msra.mxu0 %v973
        %998 = vmatprep.subr.bf16.mxu0 0
        %999 = vmatpush1.bf16.msra.mxu0 0
        %1000 = vmatprep.subr.bf16.mxu0 0
        %1001 = vmatpush1.bf16.msra.mxu0 0
        %1002 = vmatprep.subr.bf16.mxu0 0
        %1003 = vmatpush1.bf16.msra.mxu0 0
        %1004 = vmatprep.subr.bf16.mxu0 0
        %1005 = vmatpush1.bf16.msra.mxu0 0
        %1006 = vmatprep.subr.bf16.mxu0 0
        %1007 = vmatpush1.bf16.msra.mxu0 0
        %1008 = vmatprep.subr.bf16.mxu0 0
        %1009 = vmatpush1.bf16.msra.mxu0 0
        %1010 = vmatprep.subr.bf16.mxu0 0
        %1011 = vmatpush1.bf16.msra.mxu0 0
        %1012 = vmatprep.subr.bf16.mxu0 0
        %1013 = vmatpush1.bf16.msra.mxu0 0
        %1014 = vmatprep.subr.bf16.mxu0 0
        %1015 = vmatpush1.bf16.msra.mxu0 0
        %1016 = vmatprep.subr.bf16.mxu0 0
        %1017 = vmatpush1.bf16.msra.mxu0 0
        %1018 = vmatprep.subr.bf16.mxu0 0
        %1019 = vmatpush1.bf16.msra.mxu0 0
        %1020 = vmatprep.subr.bf16.mxu0 0
        %1021 = vmatpush1.bf16.msra.mxu0 0
        %1022 = vmatprep.mubr.bf16.mxu0 0
        %1023 = vmatmul.mubr.bf16.gmra.mrb[0].mxu0 %v979
        %v1024 = vpop.f32.mrb[0].mxu0
        %v1025 = vadd.f32 0.0, %v1024
        %v1026 = vpop.f32.mrb[0].mxu0
        %v1027 = vpop.f32.mrb[0].mxu0
        %v1028 = vadd.f32 0.0, %v1027
        %v1029 = vpop.f32.mrb[0].mxu0
        %1030 = vmatprep.mubr.bf16.mxu0 0
        %1031 = vmatmul.mubr.bf16.gmra.mrb[0].mxu0 %v982
        %v1032 = vpop.f32.mrb[0].mxu0
        %v1033 = vadd.f32 0.0, %v1032
        %v1034 = vpop.f32.mrb[0].mxu0
        %v1035 = vpop.f32.mrb[0].mxu0
        %v1036 = vadd.f32 0.0, %v1035
        %v1037 = vpop.f32.mrb[0].mxu0
        %1038 = vmatprep.mubr.bf16.mxu0 0
        %1039 = vmatmul.mubr.bf16.gmra.mrb[0].mxu0 %v985
        %v1040 = vpop.f32.mrb[0].mxu0
        %v1041 = vadd.f32 0.0, %v1040
        %v1042 = vpop.f32.mrb[0].mxu0
        %v1043 = vpop.f32.mrb[0].mxu0
        %v1044 = vadd.f32 0.0, %v1043
        %v1045 = vpop.f32.mrb[0].mxu0
        %1046 = vmatprep.mubr.bf16.mxu0 0
        %1047 = vmatmul.mubr.bf16.gmra.mrb[0].mxu0 %v988
        %v1048 = vpop.f32.mrb[0].mxu0
        %v1049 = vadd.f32 0.0, %v1048
        %v1050 = vpop.f32.mrb[0].mxu0
        %v1051 = vpop.f32.mrb[0].mxu0
        %v1052 = vadd.f32 0.0, %v1051
        %v1053 = vpop.f32.mrb[0].mxu0
        %1054 = vdwg.mxu0
        %v1055 = vadd.f32 %v908, %v1025
        %v1056 = vadd.f32 %v909, %v1028
        %v1057 = vadd.f32 %v910, %v1033
        %v1058 = vadd.f32 %v911, %v1036
        %v1059 = vadd.f32 %v912, %v1041
        %v1060 = vadd.f32 %v913, %v1044
        %v1061 = vadd.f32 %v914, %v1049
        %v1062 = vadd.f32 %v915, %v1052
        %v1064 = vlaneseq
        %v1065 = vshrl.u32 %v1064, 7
        %v1066 = vsub.s32 0, %v1065
        %v1067 = vrot.slane %v340, %v1066
        %v1069 = vadd.f32 %v1055, %v1067
        %v1070 = vadd.f32 %v1056, %v1067
        %v1071 = vadd.f32 %v1057, %v1067
        %v1072 = vadd.f32 %v1058, %v1067
        %v1073 = vadd.f32 %v1059, %v1067
        %v1074 = vadd.f32 %v1060, %v1067
        %v1075 = vadd.f32 %v1061, %v1067
        %v1076 = vadd.f32 %v1062, %v1067
        %v1077 = vmax.f32 %v1069, 0.0
        %v1078 = vmax.f32 %v1070, 0.0
        %v1079 = vmax.f32 %v1071, 0.0
        %v1080 = vmax.f32 %v1072, 0.0
        %v1081 = vmax.f32 %v1073, 0.0
        %v1082 = vmax.f32 %v1074, 0.0
        %v1083 = vmax.f32 %v1075, 0.0
        %v1084 = vmax.f32 %v1076, 0.0
        %vm1085 = vcmask 261120
        %1086 = vst.msk [vmem:[#allocation2] sm:$0xff] %vm1085, %v1077
        %1087 = vst.msk [vmem:[#allocation2 + $0x8] sm:$0xff] %vm1085, %v1078
        %1088 = vst.msk [vmem:[#allocation2 + $0x10] sm:$0xff] %vm1085, %v1079
        %1089 = vst.msk [vmem:[#allocation2 + $0x18] sm:$0xff] %vm1085, %v1080
        %1090 = vst.msk [vmem:[#allocation2 + $0x20] sm:$0xff] %vm1085, %v1081
        %1091 = vst.msk [vmem:[#allocation2 + $0x28] sm:$0xff] %vm1085, %v1082
        %1092 = vst.msk [vmem:[#allocation2 + $0x30] sm:$0xff] %vm1085, %v1083
        %1093 = vst.msk [vmem:[#allocation2 + $0x38] sm:$0xff] %vm1085, %v1084
        %v1094 = vld [vmem:[#allocation2] ss:$2 sm:$0xff]
        %s1095 = scalar_lea.vmem [#allocation2], 16
        %v1096 = vld [vmem:[%s1095] ss:$2 sm:$0xff]
        %s1097 = scalar_lea.vmem [#allocation2], 32
        %v1098 = vld [vmem:[%s1097] ss:$2 sm:$0xff]
        %s1099 = scalar_lea.vmem [#allocation2], 48
        %v1100 = vld [vmem:[%s1099] ss:$2 sm:$0xff]
        %s1101 = scalar_lea.vmem [#allocation2], 1
        %v1102 = vld [vmem:[%s1101] ss:$2 sm:$0xff]
        %s1103 = scalar_lea.vmem [#allocation2], 17
        %v1104 = vld [vmem:[%s1103] ss:$2 sm:$0xff]
        %s1105 = scalar_lea.vmem [#allocation2], 33
        %v1106 = vld [vmem:[%s1105] ss:$2 sm:$0xff]
        %s1107 = scalar_lea.vmem [#allocation2], 49
        %v1108 = vld [vmem:[%s1107] ss:$2 sm:$0xff]
        %v1109 = vmax.f32 %v1094, %v1102
        %v1110 = vmax.f32 %v1096, %v1104
        %v1111 = vmax.f32 %v1098, %v1106
        %v1112 = vmax.f32 %v1100, %v1108
        %vm1117 = vcmask 1040384
        %v1118 = vrot.slane %v1102, 7
        %v1119 = vrot.slane %v1104, 7
        %v1120 = vsel %vm1117, %v1118, %v1119
        %v1121 = vrot.slane %v1106, 7
        %v1122 = vsel %vm1117, %v1119, %v1121
        %v1123 = vrot.slane %v1108, 7
        %v1124 = vsel %vm1117, %v1121, %v1123
        %v1129 = vsel %vm1117, 0.0, %v1118
        %v1130 = vmul.f32 %v1129, %v341
        %v1131 = vmul.f32 %v1120, %v342
        %v1132 = vmul.f32 %v1122, %v343
        %v1133 = vmul.f32 %v1124, %v344
        %v1134 = vmax.f32 %v1109, %v1130
        %v1135 = vmax.f32 %v1110, %v1131
        %v1136 = vmax.f32 %v1111, %v1132
        %v1137 = vmax.f32 %v1112, %v1133
        %1138 = vst.msk [vmem:[#allocation3] sm:$0xff] %vm1085, %v1134
        %1139 = vst.msk [vmem:[#allocation3 + $0x8] sm:$0xff] %vm1085, %v1135
        %1140 = vst.msk [vmem:[#allocation3 + $0x10] sm:$0xff] %vm1085, %v1136
        %1141 = vst.msk [vmem:[#allocation3 + $0x18] sm:$0xff] %vm1085, %v1137
        %v1142 = vld [vmem:[#allocation3] sm:$0xf]
        %v1143 = vld [vmem:[#allocation3 + $0x4] sm:$0xf]
        %v1144 = vmax.f32 %v1142, %v1143
        %vm1145 = vcmask 257024
        %v1146 = vsel %vm1145, %v1144, 0.0
        %v1147 = vrot.slane %v1146, 4
        %v1148 = vadd.f32 %v1146, %v1147
        %v1149 = vrot.slane %v1148, 2
        %v1150 = vadd.f32 %v1148, %v1149
        %v1151 = vrot.slane %v1150, 1
        %v1152 = vadd.f32 %v1150, %v1151
        %v1153 = vadd.f32 %v1152, 0.0
        %v1154 = vld [vmem:[#allocation3 + $0x8] sm:$0xf]
        %v1155 = vld [vmem:[#allocation3 + $0xc] sm:$0xf]
        %v1156 = vmax.f32 %v1154, %v1155
        %v1157 = vmax.f32 %v1156, %v1143
        %v1158 = vsel %vm1145, %v1157, 0.0
        %v1159 = vrot.slane %v1158, 4
        %v1160 = vadd.f32 %v1158, %v1159
        %v1161 = vrot.slane %v1160, 2
        %v1162 = vadd.f32 %v1160, %v1161
        %v1163 = vrot.slane %v1162, 1
        %v1164 = vadd.f32 %v1162, %v1163
        %v1165 = vadd.f32 %v1153, %v1164
        %v1166 = vld [vmem:[#allocation3 + $0x10] sm:$0xf]
        %v1167 = vld [vmem:[#allocation3 + $0x14] sm:$0xf]
        %v1168 = vmax.f32 %v1166, %v1167
        %v1169 = vmax.f32 %v1168, %v1155
        %v1170 = vsel %vm1145, %v1169, 0.0
        %v1171 = vrot.slane %v1170, 4
        %v1172 = vadd.f32 %v1170, %v1171
        %v1173 = vrot.slane %v1172, 2
        %v1174 = vadd.f32 %v1172, %v1173
        %v1175 = vrot.slane %v1174, 1
        %v1176 = vadd.f32 %v1174, %v1175
        %v1177 = vadd.f32 %v1165, %v1176
        %v1178 = vld [vmem:[#allocation3 + $0x18] sm:$0xf]
        %v1179 = vld [vmem:[#allocation3 + $0x1c] sm:$0xf]
        %v1180 = vmax.f32 %v1178, %v1179
        %v1181 = vmax.f32 %v1180, %v1167
        %v1182 = vsel %vm1145, %v1181, 0.0
        %v1183 = vrot.slane %v1182, 4
        %v1184 = vadd.f32 %v1182, %v1183
        %v1185 = vrot.slane %v1184, 2
        %v1186 = vadd.f32 %v1184, %v1185
        %v1187 = vrot.slane %v1186, 1
        %v1188 = vadd.f32 %v1186, %v1187
        %v1189 = vadd.f32 %v1177, %v1188
        %v1190 = vld [vmem:[%s361] sm:$0xf]
        %v1191 = vld [vmem:[%s361 + $0x4] sm:$0xf]
        %v1192 = vld [vmem:[%s361 + $0x8] sm:$0xf]
        %v1193 = vld [vmem:[%s361 + $0xc] sm:$0xf]
        %v1194 = vld [vmem:[%s361 + $0x10] sm:$0xf]
        %v1195 = vld [vmem:[%s361 + $0x14] sm:$0xf]
        %v1196 = vld [vmem:[%s361 + $0x18] sm:$0xf]
        %v1197 = vld [vmem:[%s361 + $0x1c] sm:$0xf]
        %v1198 = vld [vmem:[#allocation7] sm:$0xf]
        %v1199 = vld [vmem:[#allocation7 + $0x4] sm:$0xf]
        %v1200 = vld [vmem:[#allocation7 + $0x8] sm:$0xf]
        %v1201 = vld [vmem:[#allocation7 + $0xc] sm:$0xf]
        %v1202 = vld [vmem:[#allocation7 + $0x10] sm:$0xf]
        %v1203 = vld [vmem:[#allocation7 + $0x14] sm:$0xf]
        %v1204 = vld [vmem:[#allocation7 + $0x18] sm:$0xf]
        %v1205 = vld [vmem:[#allocation7 + $0x1c] sm:$0xf]
        %v1206 = vld [vmem:[%s622] sm:$0xf]
        %v1207 = vld [vmem:[%s622 + $0x4] sm:$0xf]
        %v1208 = vld [vmem:[%s622 + $0x8] sm:$0xf]
        %v1209 = vld [vmem:[%s622 + $0xc] sm:$0xf]
        %v1210 = vld [vmem:[%s622 + $0x10] sm:$0xf]
        %v1211 = vld [vmem:[%s622 + $0x14] sm:$0xf]
        %v1212 = vld [vmem:[%s622 + $0x18] sm:$0xf]
        %v1213 = vld [vmem:[%s622 + $0x1c] sm:$0xf]
        %v1214 = vld [vmem:[%s370] sm:$0xf]
        %v1215 = vld [vmem:[%s370 + $0x4] sm:$0xf]
        %v1216 = vld [vmem:[%s370 + $0x8] sm:$0xf]
        %v1217 = vld [vmem:[%s370 + $0xc] sm:$0xf]
        %v1218 = vld [vmem:[%s370 + $0x10] sm:$0xf]
        %v1219 = vld [vmem:[%s370 + $0x14] sm:$0xf]
        %v1220 = vld [vmem:[%s370 + $0x18] sm:$0xf]
        %v1221 = vld [vmem:[%s370 + $0x1c] sm:$0xf]
        %v1230 = vunpack.c.l.b16 %v1206
        %v1231 = vunpack.c.l.b16 %v1207
        %v1232 = vunpack.c.l.b16 %v1208
        %v1233 = vunpack.c.l.b16 %v1209
        %v1234 = vunpack.c.l.b16 %v1210
        %v1235 = vunpack.c.l.b16 %v1211
        %v1236 = vunpack.c.l.b16 %v1212
        %v1237 = vunpack.c.l.b16 %v1213
        %v1238 = vpack.c.b16 %v1231, %v1230
        %v1239 = vpack.c.b16 %v1233, %v1232
        %v1240 = vpack.c.b16 %v1235, %v1234
        %v1241 = vpack.c.b16 %v1237, %v1236
        %v1250 = vunpack.c.l.b16 %v1214
        %v1251 = vunpack.c.l.b16 %v1215
        %v1252 = vunpack.c.l.b16 %v1216
        %v1253 = vunpack.c.l.b16 %v1217
        %v1254 = vunpack.c.l.b16 %v1218
        %v1255 = vunpack.c.l.b16 %v1219
        %v1256 = vunpack.c.l.b16 %v1220
        %v1257 = vunpack.c.l.b16 %v1221
        %v1258 = vpack.c.b16 %v1251, %v1250
        %v1259 = vpack.c.b16 %v1253, %v1252
        %v1260 = vpack.c.b16 %v1255, %v1254
        %v1261 = vpack.c.b16 %v1257, %v1256
        %v1267 = vsel %vm423, %v1238, 0
        %v1270 = vsel %vm423, %v1239, 0
        %v1273 = vsel %vm423, %v1240, 0
        %v1276 = vsel %vm423, %v1241, 0
        %1278 = vmatprep.subr.bf16.mxu0 0
        %1279 = vmatpush1.bf16.msra.mxu0 %v1258
        %1280 = vmatprep.subr.bf16.mxu0 0
        %1281 = vmatpush1.bf16.msra.mxu0 %v1259
        %1282 = vmatprep.subr.bf16.mxu0 0
        %1283 = vmatpush1.bf16.msra.mxu0 %v1260
        %1284 = vmatprep.subr.bf16.mxu0 0
        %1285 = vmatpush1.bf16.msra.mxu0 %v1261
        %1286 = vmatprep.subr.bf16.mxu0 0
        %1287 = vmatpush1.bf16.msra.mxu0 0
        %1288 = vmatprep.subr.bf16.mxu0 0
        %1289 = vmatpush1.bf16.msra.mxu0 0
        %1290 = vmatprep.subr.bf16.mxu0 0
        %1291 = vmatpush1.bf16.msra.mxu0 0
        %1292 = vmatprep.subr.bf16.mxu0 0
        %1293 = vmatpush1.bf16.msra.mxu0 0
        %1294 = vmatprep.subr.bf16.mxu0 0
        %1295 = vmatpush1.bf16.msra.mxu0 0
        %1296 = vmatprep.subr.bf16.mxu0 0
        %1297 = vmatpush1.bf16.msra.mxu0 0
        %1298 = vmatprep.subr.bf16.mxu0 0
        %1299 = vmatpush1.bf16.msra.mxu0 0
        %1300 = vmatprep.subr.bf16.mxu0 0
        %1301 = vmatpush1.bf16.msra.mxu0 0
        %1302 = vmatprep.subr.bf16.mxu0 0
        %1303 = vmatpush1.bf16.msra.mxu0 0
        %1304 = vmatprep.subr.bf16.mxu0 0
        %1305 = vmatpush1.bf16.msra.mxu0 0
        %1306 = vmatprep.subr.bf16.mxu0 0
        %1307 = vmatpush1.bf16.msra.mxu0 0
        %1308 = vmatprep.subr.bf16.mxu0 0
        %1309 = vmatpush1.bf16.msra.mxu0 0
        %1310 = vmatprep.mubr.bf16.mxu0 0
        %1311 = vmatmul.mubr.bf16.gmra.mrb[0].mxu0 %v1267
        %v1312 = vpop.f32.mrb[0].mxu0
        %v1313 = vadd.f32 0.0, %v1312
        %v1314 = vpop.f32.mrb[0].mxu0
        %v1315 = vpop.f32.mrb[0].mxu0
        %v1316 = vadd.f32 0.0, %v1315
        %v1317 = vpop.f32.mrb[0].mxu0
        %1318 = vmatprep.mubr.bf16.mxu0 0
        %1319 = vmatmul.mubr.bf16.gmra.mrb[0].mxu0 %v1270
        %v1320 = vpop.f32.mrb[0].mxu0
        %v1321 = vadd.f32 0.0, %v1320
        %v1322 = vpop.f32.mrb[0].mxu0
        %v1323 = vpop.f32.mrb[0].mxu0
        %v1324 = vadd.f32 0.0, %v1323
        %v1325 = vpop.f32.mrb[0].mxu0
        %1326 = vmatprep.mubr.bf16.mxu0 0
        %1327 = vmatmul.mubr.bf16.gmra.mrb[0].mxu0 %v1273
        %v1328 = vpop.f32.mrb[0].mxu0
        %v1329 = vadd.f32 0.0, %v1328
        %v1330 = vpop.f32.mrb[0].mxu0
        %v1331 = vpop.f32.mrb[0].mxu0
        %v1332 = vadd.f32 0.0, %v1331
        %v1333 = vpop.f32.mrb[0].mxu0
        %1334 = vmatprep.mubr.bf16.mxu0 0
        %1335 = vmatmul.mubr.bf16.gmra.mrb[0].mxu0 %v1276
        %v1336 = vpop.f32.mrb[0].mxu0
        %v1337 = vadd.f32 0.0, %v1336
        %v1338 = vpop.f32.mrb[0].mxu0
        %v1339 = vpop.f32.mrb[0].mxu0
        %v1340 = vadd.f32 0.0, %v1339
        %v1341 = vpop.f32.mrb[0].mxu0
        %1342 = vdwg.mxu0
        %v1351 = vunpack.c.l.b16 %v1190
        %v1352 = vunpack.c.l.b16 %v1191
        %v1353 = vunpack.c.l.b16 %v1192
        %v1354 = vunpack.c.l.b16 %v1193
        %v1355 = vunpack.c.l.b16 %v1194
        %v1356 = vunpack.c.l.b16 %v1195
        %v1357 = vunpack.c.l.b16 %v1196
        %v1358 = vunpack.c.l.b16 %v1197
        %v1359 = vpack.c.b16 %v1352, %v1351
        %v1360 = vpack.c.b16 %v1354, %v1353
        %v1361 = vpack.c.b16 %v1356, %v1355
        %v1362 = vpack.c.b16 %v1358, %v1357
        %v1371 = vunpack.c.l.b16 %v1198
        %v1372 = vunpack.c.l.b16 %v1199
        %v1373 = vunpack.c.l.b16 %v1200
        %v1374 = vunpack.c.l.b16 %v1201
        %v1375 = vunpack.c.l.b16 %v1202
        %v1376 = vunpack.c.l.b16 %v1203
        %v1377 = vunpack.c.l.b16 %v1204
        %v1378 = vunpack.c.l.b16 %v1205
        %v1379 = vpack.c.b16 %v1372, %v1371
        %v1380 = vpack.c.b16 %v1374, %v1373
        %v1381 = vpack.c.b16 %v1376, %v1375
        %v1382 = vpack.c.b16 %v1378, %v1377
        %v1388 = vsel %vm423, %v1359, 0
        %v1391 = vsel %vm423, %v1360, 0
        %v1394 = vsel %vm423, %v1361, 0
        %v1397 = vsel %vm423, %v1362, 0
        %1399 = vmatprep.subr.bf16.mxu0 0
        %1400 = vmatpush1.bf16.msra.mxu0 %v1379
        %1401 = vmatprep.subr.bf16.mxu0 0
        %1402 = vmatpush1.bf16.msra.mxu0 %v1380
        %1403 = vmatprep.subr.bf16.mxu0 0
        %1404 = vmatpush1.bf16.msra.mxu0 %v1381
        %1405 = vmatprep.subr.bf16.mxu0 0
        %1406 = vmatpush1.bf16.msra.mxu0 %v1382
        %1407 = vmatprep.subr.bf16.mxu0 0
        %1408 = vmatpush1.bf16.msra.mxu0 0
        %1409 = vmatprep.subr.bf16.mxu0 0
        %1410 = vmatpush1.bf16.msra.mxu0 0
        %1411 = vmatprep.subr.bf16.mxu0 0
        %1412 = vmatpush1.bf16.msra.mxu0 0
        %1413 = vmatprep.subr.bf16.mxu0 0
        %1414 = vmatpush1.bf16.msra.mxu0 0
        %1415 = vmatprep.subr.bf16.mxu0 0
        %1416 = vmatpush1.bf16.msra.mxu0 0
        %1417 = vmatprep.subr.bf16.mxu0 0
        %1418 = vmatpush1.bf16.msra.mxu0 0
        %1419 = vmatprep.subr.bf16.mxu0 0
        %1420 = vmatpush1.bf16.msra.mxu0 0
        %1421 = vmatprep.subr.bf16.mxu0 0
        %1422 = vmatpush1.bf16.msra.mxu0 0
        %1423 = vmatprep.subr.bf16.mxu0 0
        %1424 = vmatpush1.bf16.msra.mxu0 0
        %1425 = vmatprep.subr.bf16.mxu0 0
        %1426 = vmatpush1.bf16.msra.mxu0 0
        %1427 = vmatprep.subr.bf16.mxu0 0
        %1428 = vmatpush1.bf16.msra.mxu0 0
        %1429 = vmatprep.subr.bf16.mxu0 0
        %1430 = vmatpush1.bf16.msra.mxu0 0
        %1431 = vmatprep.mubr.bf16.mxu0 0
        %1432 = vmatmul.mubr.bf16.gmra.mrb[0].mxu0 %v1388
        %v1433 = vpop.f32.mrb[0].mxu0
        %v1434 = vadd.f32 %v1313, %v1433
        %v1435 = vpop.f32.mrb[0].mxu0
        %v1436 = vpop.f32.mrb[0].mxu0
        %v1437 = vadd.f32 %v1316, %v1436
        %v1438 = vpop.f32.mrb[0].mxu0
        %1439 = vmatprep.mubr.bf16.mxu0 0
        %1440 = vmatmul.mubr.bf16.gmra.mrb[0].mxu0 %v1391
        %v1441 = vpop.f32.mrb[0].mxu0
        %v1442 = vadd.f32 %v1321, %v1441
        %v1443 = vpop.f32.mrb[0].mxu0
        %v1444 = vpop.f32.mrb[0].mxu0
        %v1445 = vadd.f32 %v1324, %v1444
        %v1446 = vpop.f32.mrb[0].mxu0
        %1447 = vmatprep.mubr.bf16.mxu0 0
        %1448 = vmatmul.mubr.bf16.gmra.mrb[0].mxu0 %v1394
        %v1449 = vpop.f32.mrb[0].mxu0
        %v1450 = vadd.f32 %v1329, %v1449
        %v1451 = vpop.f32.mrb[0].mxu0
        %v1452 = vpop.f32.mrb[0].mxu0
        %v1453 = vadd.f32 %v1332, %v1452
        %v1454 = vpop.f32.mrb[0].mxu0
        %1455 = vmatprep.mubr.bf16.mxu0 0
        %1456 = vmatmul.mubr.bf16.gmra.mrb[0].mxu0 %v1397
        %v1457 = vpop.f32.mrb[0].mxu0
        %v1458 = vadd.f32 %v1337, %v1457
        %v1459 = vpop.f32.mrb[0].mxu0
        %v1460 = vpop.f32.mrb[0].mxu0
        %v1461 = vadd.f32 %v1340, %v1460
        %v1462 = vpop.f32.mrb[0].mxu0
        %1463 = vdwg.mxu0
        %v1464 = vld [vmem:[%s769] sm:$0xf]
        %v1465 = vld [vmem:[%s769 + $0x4] sm:$0xf]
        %v1466 = vld [vmem:[%s769 + $0x8] sm:$0xf]
        %v1467 = vld [vmem:[%s769 + $0xc] sm:$0xf]
        %v1468 = vld [vmem:[%s769 + $0x10] sm:$0xf]
        %v1469 = vld [vmem:[%s769 + $0x14] sm:$0xf]
        %v1470 = vld [vmem:[%s769 + $0x18] sm:$0xf]
        %v1471 = vld [vmem:[%s769 + $0x1c] sm:$0xf]
        %v1472 = vld [vmem:[%s631] sm:$0xf]
        %v1473 = vld [vmem:[%s631 + $0x4] sm:$0xf]
        %v1474 = vld [vmem:[%s631 + $0x8] sm:$0xf]
        %v1475 = vld [vmem:[%s631 + $0xc] sm:$0xf]
        %v1476 = vld [vmem:[%s631 + $0x10] sm:$0xf]
        %v1477 = vld [vmem:[%s631 + $0x14] sm:$0xf]
        %v1478 = vld [vmem:[%s631 + $0x18] sm:$0xf]
        %v1479 = vld [vmem:[%s631 + $0x1c] sm:$0xf]
        %v1488 = vunpack.c.l.b16 %v1464
        %v1489 = vunpack.c.l.b16 %v1465
        %v1490 = vunpack.c.l.b16 %v1466
        %v1491 = vunpack.c.l.b16 %v1467
        %v1492 = vunpack.c.l.b16 %v1468
        %v1493 = vunpack.c.l.b16 %v1469
        %v1494 = vunpack.c.l.b16 %v1470
        %v1495 = vunpack.c.l.b16 %v1471
        %v1496 = vpack.c.b16 %v1489, %v1488
        %v1497 = vpack.c.b16 %v1491, %v1490
        %v1498 = vpack.c.b16 %v1493, %v1492
        %v1499 = vpack.c.b16 %v1495, %v1494
        %v1508 = vunpack.c.l.b16 %v1472
        %v1509 = vunpack.c.l.b16 %v1473
        %v1510 = vunpack.c.l.b16 %v1474
        %v1511 = vunpack.c.l.b16 %v1475
        %v1512 = vunpack.c.l.b16 %v1476
        %v1513 = vunpack.c.l.b16 %v1477
        %v1514 = vunpack.c.l.b16 %v1478
        %v1515 = vunpack.c.l.b16 %v1479
        %v1516 = vpack.c.b16 %v1509, %v1508
        %v1517 = vpack.c.b16 %v1511, %v1510
        %v1518 = vpack.c.b16 %v1513, %v1512
        %v1519 = vpack.c.b16 %v1515, %v1514
        %v1525 = vsel %vm423, %v1496, 0
        %v1528 = vsel %vm423, %v1497, 0
        %v1531 = vsel %vm423, %v1498, 0
        %v1534 = vsel %vm423, %v1499, 0
        %1536 = vmatprep.subr.bf16.mxu0 0
        %1537 = vmatpush1.bf16.msra.mxu0 %v1516
        %1538 = vmatprep.subr.bf16.mxu0 0
        %1539 = vmatpush1.bf16.msra.mxu0 %v1517
        %1540 = vmatprep.subr.bf16.mxu0 0
        %1541 = vmatpush1.bf16.msra.mxu0 %v1518
        %1542 = vmatprep.subr.bf16.mxu0 0
        %1543 = vmatpush1.bf16.msra.mxu0 %v1519
        %1544 = vmatprep.subr.bf16.mxu0 0
        %1545 = vmatpush1.bf16.msra.mxu0 0
        %1546 = vmatprep.subr.bf16.mxu0 0
        %1547 = vmatpush1.bf16.msra.mxu0 0
        %1548 = vmatprep.subr.bf16.mxu0 0
        %1549 = vmatpush1.bf16.msra.mxu0 0
        %1550 = vmatprep.subr.bf16.mxu0 0
        %1551 = vmatpush1.bf16.msra.mxu0 0
        %1552 = vmatprep.subr.bf16.mxu0 0
        %1553 = vmatpush1.bf16.msra.mxu0 0
        %1554 = vmatprep.subr.bf16.mxu0 0
        %1555 = vmatpush1.bf16.msra.mxu0 0
        %1556 = vmatprep.subr.bf16.mxu0 0
        %1557 = vmatpush1.bf16.msra.mxu0 0
        %1558 = vmatprep.subr.bf16.mxu0 0
        %1559 = vmatpush1.bf16.msra.mxu0 0
        %1560 = vmatprep.subr.bf16.mxu0 0
        %1561 = vmatpush1.bf16.msra.mxu0 0
        %1562 = vmatprep.subr.bf16.mxu0 0
        %1563 = vmatpush1.bf16.msra.mxu0 0
        %1564 = vmatprep.subr.bf16.mxu0 0
        %1565 = vmatpush1.bf16.msra.mxu0 0
        %1566 = vmatprep.subr.bf16.mxu0 0
        %1567 = vmatpush1.bf16.msra.mxu0 0
        %1568 = vmatprep.mubr.bf16.mxu0 0
        %1569 = vmatmul.mubr.bf16.gmra.mrb[0].mxu0 %v1525
        %v1570 = vpop.f32.mrb[0].mxu0
        %v1571 = vadd.f32 0.0, %v1570
        %v1572 = vpop.f32.mrb[0].mxu0
        %v1573 = vpop.f32.mrb[0].mxu0
        %v1574 = vadd.f32 0.0, %v1573
        %v1575 = vpop.f32.mrb[0].mxu0
        %1576 = vmatprep.mubr.bf16.mxu0 0
        %1577 = vmatmul.mubr.bf16.gmra.mrb[0].mxu0 %v1528
        %v1578 = vpop.f32.mrb[0].mxu0
        %v1579 = vadd.f32 0.0, %v1578
        %v1580 = vpop.f32.mrb[0].mxu0
        %v1581 = vpop.f32.mrb[0].mxu0
        %v1582 = vadd.f32 0.0, %v1581
        %v1583 = vpop.f32.mrb[0].mxu0
        %1584 = vmatprep.mubr.bf16.mxu0 0
        %1585 = vmatmul.mubr.bf16.gmra.mrb[0].mxu0 %v1531
        %v1586 = vpop.f32.mrb[0].mxu0
        %v1587 = vadd.f32 0.0, %v1586
        %v1588 = vpop.f32.mrb[0].mxu0
        %v1589 = vpop.f32.mrb[0].mxu0
        %v1590 = vadd.f32 0.0, %v1589
        %v1591 = vpop.f32.mrb[0].mxu0
        %1592 = vmatprep.mubr.bf16.mxu0 0
        %1593 = vmatmul.mubr.bf16.gmra.mrb[0].mxu0 %v1534
        %v1594 = vpop.f32.mrb[0].mxu0
        %v1595 = vadd.f32 0.0, %v1594
        %v1596 = vpop.f32.mrb[0].mxu0
        %v1597 = vpop.f32.mrb[0].mxu0
        %v1598 = vadd.f32 0.0, %v1597
        %v1599 = vpop.f32.mrb[0].mxu0
        %1600 = vdwg.mxu0
        %v1601 = vadd.f32 %v1434, %v1571
        %v1602 = vadd.f32 %v1437, %v1574
        %v1603 = vadd.f32 %v1442, %v1579
        %v1604 = vadd.f32 %v1445, %v1582
        %v1605 = vadd.f32 %v1450, %v1587
        %v1606 = vadd.f32 %v1453, %v1590
        %v1607 = vadd.f32 %v1458, %v1595
        %v1608 = vadd.f32 %v1461, %v1598
        %v1609 = vld [vmem:[%s916] sm:$0xf]
        %v1610 = vld [vmem:[%s916 + $0x4] sm:$0xf]
        %v1611 = vld [vmem:[%s916 + $0x8] sm:$0xf]
        %v1612 = vld [vmem:[%s916 + $0xc] sm:$0xf]
        %v1613 = vld [vmem:[%s916 + $0x10] sm:$0xf]
        %v1614 = vld [vmem:[%s916 + $0x14] sm:$0xf]
        %v1615 = vld [vmem:[%s916 + $0x18] sm:$0xf]
        %v1616 = vld [vmem:[%s916 + $0x1c] sm:$0xf]
        %v1617 = vld [vmem:[%s778] sm:$0xf]
        %v1618 = vld [vmem:[%s778 + $0x4] sm:$0xf]
        %v1619 = vld [vmem:[%s778 + $0x8] sm:$0xf]
        %v1620 = vld [vmem:[%s778 + $0xc] sm:$0xf]
        %v1621 = vld [vmem:[%s778 + $0x10] sm:$0xf]
        %v1622 = vld [vmem:[%s778 + $0x14] sm:$0xf]
        %v1623 = vld [vmem:[%s778 + $0x18] sm:$0xf]
        %v1624 = vld [vmem:[%s778 + $0x1c] sm:$0xf]
        %v1633 = vunpack.c.l.b16 %v1609
        %v1634 = vunpack.c.l.b16 %v1610
        %v1635 = vunpack.c.l.b16 %v1611
        %v1636 = vunpack.c.l.b16 %v1612
        %v1637 = vunpack.c.l.b16 %v1613
        %v1638 = vunpack.c.l.b16 %v1614
        %v1639 = vunpack.c.l.b16 %v1615
        %v1640 = vunpack.c.l.b16 %v1616
        %v1641 = vpack.c.b16 %v1634, %v1633
        %v1642 = vpack.c.b16 %v1636, %v1635
        %v1643 = vpack.c.b16 %v1638, %v1637
        %v1644 = vpack.c.b16 %v1640, %v1639
        %v1653 = vunpack.c.l.b16 %v1617
        %v1654 = vunpack.c.l.b16 %v1618
        %v1655 = vunpack.c.l.b16 %v1619
        %v1656 = vunpack.c.l.b16 %v1620
        %v1657 = vunpack.c.l.b16 %v1621
        %v1658 = vunpack.c.l.b16 %v1622
        %v1659 = vunpack.c.l.b16 %v1623
        %v1660 = vunpack.c.l.b16 %v1624
        %v1661 = vpack.c.b16 %v1654, %v1653
        %v1662 = vpack.c.b16 %v1656, %v1655
        %v1663 = vpack.c.b16 %v1658, %v1657
        %v1664 = vpack.c.b16 %v1660, %v1659
        %v1670 = vsel %vm423, %v1641, 0
        %v1673 = vsel %vm423, %v1642, 0
        %v1676 = vsel %vm423, %v1643, 0
        %v1679 = vsel %vm423, %v1644, 0
        %1681 = vmatprep.subr.bf16.mxu0 0
        %1682 = vmatpush1.bf16.msra.mxu0 %v1661
        %1683 = vmatprep.subr.bf16.mxu0 0
        %1684 = vmatpush1.bf16.msra.mxu0 %v1662
        %1685 = vmatprep.subr.bf16.mxu0 0
        %1686 = vmatpush1.bf16.msra.mxu0 %v1663
        %1687 = vmatprep.subr.bf16.mxu0 0
        %1688 = vmatpush1.bf16.msra.mxu0 %v1664
        %1689 = vmatprep.subr.bf16.mxu0 0
        %1690 = vmatpush1.bf16.msra.mxu0 0
        %1691 = vmatprep.subr.bf16.mxu0 0
        %1692 = vmatpush1.bf16.msra.mxu0 0
        %1693 = vmatprep.subr.bf16.mxu0 0
        %1694 = vmatpush1.bf16.msra.mxu0 0
        %1695 = vmatprep.subr.bf16.mxu0 0
        %1696 = vmatpush1.bf16.msra.mxu0 0
        %1697 = vmatprep.subr.bf16.mxu0 0
        %1698 = vmatpush1.bf16.msra.mxu0 0
        %1699 = vmatprep.subr.bf16.mxu0 0
        %1700 = vmatpush1.bf16.msra.mxu0 0
        %1701 = vmatprep.subr.bf16.mxu0 0
        %1702 = vmatpush1.bf16.msra.mxu0 0
        %1703 = vmatprep.subr.bf16.mxu0 0
        %1704 = vmatpush1.bf16.msra.mxu0 0
        %1705 = vmatprep.subr.bf16.mxu0 0
        %1706 = vmatpush1.bf16.msra.mxu0 0
        %1707 = vmatprep.subr.bf16.mxu0 0
        %1708 = vmatpush1.bf16.msra.mxu0 0
        %1709 = vmatprep.subr.bf16.mxu0 0
        %1710 = vmatpush1.bf16.msra.mxu0 0
        %1711 = vmatprep.subr.bf16.mxu0 0
        %1712 = vmatpush1.bf16.msra.mxu0 0
        %1713 = vmatprep.mubr.bf16.mxu0 0
        %1714 = vmatmul.mubr.bf16.gmra.mrb[0].mxu0 %v1670
        %v1715 = vpop.f32.mrb[0].mxu0
        %v1716 = vadd.f32 0.0, %v1715
        %v1717 = vpop.f32.mrb[0].mxu0
        %v1718 = vpop.f32.mrb[0].mxu0
        %v1719 = vadd.f32 0.0, %v1718
        %v1720 = vpop.f32.mrb[0].mxu0
        %1721 = vmatprep.mubr.bf16.mxu0 0
        %1722 = vmatmul.mubr.bf16.gmra.mrb[0].mxu0 %v1673
        %v1723 = vpop.f32.mrb[0].mxu0
        %v1724 = vadd.f32 0.0, %v1723
        %v1725 = vpop.f32.mrb[0].mxu0
        %v1726 = vpop.f32.mrb[0].mxu0
        %v1727 = vadd.f32 0.0, %v1726
        %v1728 = vpop.f32.mrb[0].mxu0
        %1729 = vmatprep.mubr.bf16.mxu0 0
        %1730 = vmatmul.mubr.bf16.gmra.mrb[0].mxu0 %v1676
        %v1731 = vpop.f32.mrb[0].mxu0
        %v1732 = vadd.f32 0.0, %v1731
        %v1733 = vpop.f32.mrb[0].mxu0
        %v1734 = vpop.f32.mrb[0].mxu0
        %v1735 = vadd.f32 0.0, %v1734
        %v1736 = vpop.f32.mrb[0].mxu0
        %1737 = vmatprep.mubr.bf16.mxu0 0
        %1738 = vmatmul.mubr.bf16.gmra.mrb[0].mxu0 %v1679
        %v1739 = vpop.f32.mrb[0].mxu0
        %v1740 = vadd.f32 0.0, %v1739
        %v1741 = vpop.f32.mrb[0].mxu0
        %v1742 = vpop.f32.mrb[0].mxu0
        %v1743 = vadd.f32 0.0, %v1742
        %v1744 = vpop.f32.mrb[0].mxu0
        %1745 = vdwg.mxu0
        %v1746 = vadd.f32 %v1601, %v1716
        %v1747 = vadd.f32 %v1602, %v1719
        %v1748 = vadd.f32 %v1603, %v1724
        %v1749 = vadd.f32 %v1604, %v1727
        %v1750 = vadd.f32 %v1605, %v1732
        %v1751 = vadd.f32 %v1606, %v1735
        %v1752 = vadd.f32 %v1607, %v1740
        %v1753 = vadd.f32 %v1608, %v1743
        %s1754 = scalar_lea.vmem %s290, 160 [#allocation4]
        %v1755 = vld [vmem:[%s1754] sm:$0xf]
        %v1756 = vld [vmem:[%s1754 + $0x4] sm:$0xf]
        %v1757 = vld [vmem:[%s1754 + $0x8] sm:$0xf]
        %v1758 = vld [vmem:[%s1754 + $0xc] sm:$0xf]
        %v1759 = vld [vmem:[%s1754 + $0x10] sm:$0xf]
        %v1760 = vld [vmem:[%s1754 + $0x14] sm:$0xf]
        %v1761 = vld [vmem:[%s1754 + $0x18] sm:$0xf]
        %v1762 = vld [vmem:[%s1754 + $0x1c] sm:$0xf]
        %v1763 = vld [vmem:[%s925] sm:$0xf]
        %v1764 = vld [vmem:[%s925 + $0x4] sm:$0xf]
        %v1765 = vld [vmem:[%s925 + $0x8] sm:$0xf]
        %v1766 = vld [vmem:[%s925 + $0xc] sm:$0xf]
        %v1767 = vld [vmem:[%s925 + $0x10] sm:$0xf]
        %v1768 = vld [vmem:[%s925 + $0x14] sm:$0xf]
        %v1769 = vld [vmem:[%s925 + $0x18] sm:$0xf]
        %v1770 = vld [vmem:[%s925 + $0x1c] sm:$0xf]
        %v1779 = vunpack.c.l.b16 %v1755
        %v1780 = vunpack.c.l.b16 %v1756
        %v1781 = vunpack.c.l.b16 %v1757
        %v1782 = vunpack.c.l.b16 %v1758
        %v1783 = vunpack.c.l.b16 %v1759
        %v1784 = vunpack.c.l.b16 %v1760
        %v1785 = vunpack.c.l.b16 %v1761
        %v1786 = vunpack.c.l.b16 %v1762
        %v1787 = vpack.c.b16 %v1780, %v1779
        %v1788 = vpack.c.b16 %v1782, %v1781
        %v1789 = vpack.c.b16 %v1784, %v1783
        %v1790 = vpack.c.b16 %v1786, %v1785
        %v1799 = vunpack.c.l.b16 %v1763
        %v1800 = vunpack.c.l.b16 %v1764
        %v1801 = vunpack.c.l.b16 %v1765
        %v1802 = vunpack.c.l.b16 %v1766
        %v1803 = vunpack.c.l.b16 %v1767
        %v1804 = vunpack.c.l.b16 %v1768
        %v1805 = vunpack.c.l.b16 %v1769
        %v1806 = vunpack.c.l.b16 %v1770
        %v1807 = vpack.c.b16 %v1800, %v1799
        %v1808 = vpack.c.b16 %v1802, %v1801
        %v1809 = vpack.c.b16 %v1804, %v1803
        %v1810 = vpack.c.b16 %v1806, %v1805
        %v1816 = vsel %vm423, %v1787, 0
        %v1819 = vsel %vm423, %v1788, 0
        %v1822 = vsel %vm423, %v1789, 0
        %v1825 = vsel %vm423, %v1790, 0
        %1827 = vmatprep.subr.bf16.mxu0 0
        %1828 = vmatpush1.bf16.msra.mxu0 %v1807
        %1829 = vmatprep.subr.bf16.mxu0 0
        %1830 = vmatpush1.bf16.msra.mxu0 %v1808
        %1831 = vmatprep.subr.bf16.mxu0 0
        %1832 = vmatpush1.bf16.msra.mxu0 %v1809
        %1833 = vmatprep.subr.bf16.mxu0 0
        %1834 = vmatpush1.bf16.msra.mxu0 %v1810
        %1835 = vmatprep.subr.bf16.mxu0 0
        %1836 = vmatpush1.bf16.msra.mxu0 0
        %1837 = vmatprep.subr.bf16.mxu0 0
        %1838 = vmatpush1.bf16.msra.mxu0 0
        %1839 = vmatprep.subr.bf16.mxu0 0
        %1840 = vmatpush1.bf16.msra.mxu0 0
        %1841 = vmatprep.subr.bf16.mxu0 0
        %1842 = vmatpush1.bf16.msra.mxu0 0
        %1843 = vmatprep.subr.bf16.mxu0 0
        %1844 = vmatpush1.bf16.msra.mxu0 0
        %1845 = vmatprep.subr.bf16.mxu0 0
        %1846 = vmatpush1.bf16.msra.mxu0 0
        %1847 = vmatprep.subr.bf16.mxu0 0
        %1848 = vmatpush1.bf16.msra.mxu0 0
        %1849 = vmatprep.subr.bf16.mxu0 0
        %1850 = vmatpush1.bf16.msra.mxu0 0
        %1851 = vmatprep.subr.bf16.mxu0 0
        %1852 = vmatpush1.bf16.msra.mxu0 0
        %1853 = vmatprep.subr.bf16.mxu0 0
        %1854 = vmatpush1.bf16.msra.mxu0 0
        %1855 = vmatprep.subr.bf16.mxu0 0
        %1856 = vmatpush1.bf16.msra.mxu0 0
        %1857 = vmatprep.subr.bf16.mxu0 0
        %1858 = vmatpush1.bf16.msra.mxu0 0
        %1859 = vmatprep.mubr.bf16.mxu0 0
        %1860 = vmatmul.mubr.bf16.gmra.mrb[0].mxu0 %v1816
        %v1861 = vpop.f32.mrb[0].mxu0
        %v1862 = vadd.f32 0.0, %v1861
        %v1863 = vpop.f32.mrb[0].mxu0
        %v1864 = vpop.f32.mrb[0].mxu0
        %v1865 = vadd.f32 0.0, %v1864
        %v1866 = vpop.f32.mrb[0].mxu0
        %1867 = vmatprep.mubr.bf16.mxu0 0
        %1868 = vmatmul.mubr.bf16.gmra.mrb[0].mxu0 %v1819
        %v1869 = vpop.f32.mrb[0].mxu0
        %v1870 = vadd.f32 0.0, %v1869
        %v1871 = vpop.f32.mrb[0].mxu0
        %v1872 = vpop.f32.mrb[0].mxu0
        %v1873 = vadd.f32 0.0, %v1872
        %v1874 = vpop.f32.mrb[0].mxu0
        %1875 = vmatprep.mubr.bf16.mxu0 0
        %1876 = vmatmul.mubr.bf16.gmra.mrb[0].mxu0 %v1822
        %v1877 = vpop.f32.mrb[0].mxu0
        %v1878 = vadd.f32 0.0, %v1877
        %v1879 = vpop.f32.mrb[0].mxu0
        %v1880 = vpop.f32.mrb[0].mxu0
        %v1881 = vadd.f32 0.0, %v1880
        %v1882 = vpop.f32.mrb[0].mxu0
        %1883 = vmatprep.mubr.bf16.mxu0 0
        %1884 = vmatmul.mubr.bf16.gmra.mrb[0].mxu0 %v1825
        %v1885 = vpop.f32.mrb[0].mxu0
        %v1886 = vadd.f32 0.0, %v1885
        %v1887 = vpop.f32.mrb[0].mxu0
        %v1888 = vpop.f32.mrb[0].mxu0
        %v1889 = vadd.f32 0.0, %v1888
        %v1890 = vpop.f32.mrb[0].mxu0
        %1891 = vdwg.mxu0
        %v1892 = vadd.f32 %v1746, %v1862
        %v1893 = vadd.f32 %v1747, %v1865
        %v1894 = vadd.f32 %v1748, %v1870
        %v1895 = vadd.f32 %v1749, %v1873
        %v1896 = vadd.f32 %v1750, %v1878
        %v1897 = vadd.f32 %v1751, %v1881
        %v1898 = vadd.f32 %v1752, %v1886
        %v1899 = vadd.f32 %v1753, %v1889
        %v1900 = vadd.f32 %v1892, %v1067
        %v1901 = vadd.f32 %v1893, %v1067
        %v1902 = vadd.f32 %v1894, %v1067
        %v1903 = vadd.f32 %v1895, %v1067
        %v1904 = vadd.f32 %v1896, %v1067
        %v1905 = vadd.f32 %v1897, %v1067
        %v1906 = vadd.f32 %v1898, %v1067
        %v1907 = vadd.f32 %v1899, %v1067
        %v1908 = vmax.f32 %v1900, 0.0
        %v1909 = vmax.f32 %v1901, 0.0
        %v1910 = vmax.f32 %v1902, 0.0
        %v1911 = vmax.f32 %v1903, 0.0
        %v1912 = vmax.f32 %v1904, 0.0
        %v1913 = vmax.f32 %v1905, 0.0
        %v1914 = vmax.f32 %v1906, 0.0
        %v1915 = vmax.f32 %v1907, 0.0
        %1916 = vst.msk [vmem:[#allocation2] sm:$0xff] %vm1085, %v1908
        %1917 = vst.msk [vmem:[#allocation2 + $0x8] sm:$0xff] %vm1085, %v1909
        %1918 = vst.msk [vmem:[#allocation2 + $0x10] sm:$0xff] %vm1085, %v1910
        %1919 = vst.msk [vmem:[#allocation2 + $0x18] sm:$0xff] %vm1085, %v1911
        %1920 = vst.msk [vmem:[#allocation2 + $0x20] sm:$0xff] %vm1085, %v1912
        %1921 = vst.msk [vmem:[#allocation2 + $0x28] sm:$0xff] %vm1085, %v1913
        %1922 = vst.msk [vmem:[#allocation2 + $0x30] sm:$0xff] %vm1085, %v1914
        %1923 = vst.msk [vmem:[#allocation2 + $0x38] sm:$0xff] %vm1085, %v1915
        %v1924 = vld [vmem:[#allocation2] ss:$2 sm:$0xff]
        %v1925 = vld [vmem:[%s1095] ss:$2 sm:$0xff]
        %v1926 = vld [vmem:[%s1097] ss:$2 sm:$0xff]
        %v1927 = vld [vmem:[%s1099] ss:$2 sm:$0xff]
        %v1928 = vld [vmem:[%s1101] ss:$2 sm:$0xff]
        %v1929 = vld [vmem:[%s1103] ss:$2 sm:$0xff]
        %v1930 = vld [vmem:[%s1105] ss:$2 sm:$0xff]
        %v1931 = vld [vmem:[%s1107] ss:$2 sm:$0xff]
        %v1932 = vmax.f32 %v1924, %v1928
        %v1933 = vmax.f32 %v1925, %v1929
        %v1934 = vmax.f32 %v1926, %v1930
        %v1935 = vmax.f32 %v1927, %v1931
        %v1940 = vrot.slane %v1928, 7
        %v1941 = vrot.slane %v1929, 7
        %v1942 = vsel %vm1117, %v1940, %v1941
        %v1943 = vrot.slane %v1930, 7
        %v1944 = vsel %vm1117, %v1941, %v1943
        %v1945 = vrot.slane %v1931, 7
        %v1946 = vsel %vm1117, %v1943, %v1945
        %v1951 = vsel %vm1117, 0.0, %v1940
        %v1952 = vmul.f32 %v1951, %v341
        %v1953 = vmul.f32 %v1942, %v342
        %v1954 = vmul.f32 %v1944, %v343
        %v1955 = vmul.f32 %v1946, %v344
        %v1956 = vmax.f32 %v1932, %v1952
        %v1957 = vmax.f32 %v1933, %v1953
        %v1958 = vmax.f32 %v1934, %v1954
        %v1959 = vmax.f32 %v1935, %v1955
        %1960 = vst.msk [vmem:[#allocation3] sm:$0xff] %vm1085, %v1956
        %1961 = vst.msk [vmem:[#allocation3 + $0x8] sm:$0xff] %vm1085, %v1957
        %1962 = vst.msk [vmem:[#allocation3 + $0x10] sm:$0xff] %vm1085, %v1958
        %1963 = vst.msk [vmem:[#allocation3 + $0x18] sm:$0xff] %vm1085, %v1959
        %v1964 = vld [vmem:[#allocation3] sm:$0xf]
        %v1965 = vld [vmem:[#allocation3 + $0x4] sm:$0xf]
        %v1966 = vmax.f32 %v1964, %v1965
        %v1967 = vsel %vm1145, %v1966, 0.0
        %v1968 = vrot.slane %v1967, 4
        %v1969 = vadd.f32 %v1967, %v1968
        %v1970 = vrot.slane %v1969, 2
        %v1971 = vadd.f32 %v1969, %v1970
        %v1972 = vrot.slane %v1971, 1
        %v1973 = vadd.f32 %v1971, %v1972
        %v1974 = vadd.f32 %v1973, 0.0
        %v1975 = vld [vmem:[#allocation3 + $0x8] sm:$0xf]
        %v1976 = vld [vmem:[#allocation3 + $0xc] sm:$0xf]
        %v1977 = vmax.f32 %v1975, %v1976
        %v1978 = vmax.f32 %v1977, %v1965
        %v1979 = vsel %vm1145, %v1978, 0.0
        %v1980 = vrot.slane %v1979, 4
        %v1981 = vadd.f32 %v1979, %v1980
        %v1982 = vrot.slane %v1981, 2
        %v1983 = vadd.f32 %v1981, %v1982
        %v1984 = vrot.slane %v1983, 1
        %v1985 = vadd.f32 %v1983, %v1984
        %v1986 = vadd.f32 %v1974, %v1985
        %v1987 = vld [vmem:[#allocation3 + $0x10] sm:$0xf]
        %v1988 = vld [vmem:[#allocation3 + $0x14] sm:$0xf]
        %v1989 = vmax.f32 %v1987, %v1988
        %v1990 = vmax.f32 %v1989, %v1976
        %v1991 = vsel %vm1145, %v1990, 0.0
        %v1992 = vrot.slane %v1991, 4
        %v1993 = vadd.f32 %v1991, %v1992
        %v1994 = vrot.slane %v1993, 2
        %v1995 = vadd.f32 %v1993, %v1994
        %v1996 = vrot.slane %v1995, 1
        %v1997 = vadd.f32 %v1995, %v1996
        %v1998 = vadd.f32 %v1986, %v1997
        %v1999 = vld [vmem:[#allocation3 + $0x18] sm:$0xf]
        %v2000 = vld [vmem:[#allocation3 + $0x1c] sm:$0xf]
        %v2001 = vmax.f32 %v1999, %v2000
        %v2002 = vmax.f32 %v2001, %v1988
        %v2003 = vsel %vm1145, %v2002, 0.0
        %v2004 = vrot.slane %v2003, 4
        %v2005 = vadd.f32 %v2003, %v2004
        %v2006 = vrot.slane %v2005, 2
        %v2007 = vadd.f32 %v2005, %v2006
        %v2008 = vrot.slane %v2007, 1
        %v2009 = vadd.f32 %v2007, %v2008
        %v2010 = vadd.f32 %v1998, %v2009
        %v2011 = vld [vmem:[%s622] sm:$0xf]
        %v2012 = vld [vmem:[%s622 + $0x4] sm:$0xf]
        %v2013 = vld [vmem:[%s622 + $0x8] sm:$0xf]
        %v2014 = vld [vmem:[%s622 + $0xc] sm:$0xf]
        %v2015 = vld [vmem:[%s622 + $0x10] sm:$0xf]
        %v2016 = vld [vmem:[%s622 + $0x14] sm:$0xf]
        %v2017 = vld [vmem:[%s622 + $0x18] sm:$0xf]
        %v2018 = vld [vmem:[%s622 + $0x1c] sm:$0xf]
        %v2019 = vld [vmem:[#allocation7] sm:$0xf]
        %v2020 = vld [vmem:[#allocation7 + $0x4] sm:$0xf]
        %v2021 = vld [vmem:[#allocation7 + $0x8] sm:$0xf]
        %v2022 = vld [vmem:[#allocation7 + $0xc] sm:$0xf]
        %v2023 = vld [vmem:[#allocation7 + $0x10] sm:$0xf]
        %v2024 = vld [vmem:[#allocation7 + $0x14] sm:$0xf]
        %v2025 = vld [vmem:[#allocation7 + $0x18] sm:$0xf]
        %v2026 = vld [vmem:[#allocation7 + $0x1c] sm:$0xf]
        %v2027 = vld [vmem:[%s769] sm:$0xf]
        %v2028 = vld [vmem:[%s769 + $0x4] sm:$0xf]
        %v2029 = vld [vmem:[%s769 + $0x8] sm:$0xf]
        %v2030 = vld [vmem:[%s769 + $0xc] sm:$0xf]
        %v2031 = vld [vmem:[%s769 + $0x10] sm:$0xf]
        %v2032 = vld [vmem:[%s769 + $0x14] sm:$0xf]
        %v2033 = vld [vmem:[%s769 + $0x18] sm:$0xf]
        %v2034 = vld [vmem:[%s769 + $0x1c] sm:$0xf]
        %v2035 = vld [vmem:[%s370] sm:$0xf]
        %v2036 = vld [vmem:[%s370 + $0x4] sm:$0xf]
        %v2037 = vld [vmem:[%s370 + $0x8] sm:$0xf]
        %v2038 = vld [vmem:[%s370 + $0xc] sm:$0xf]
        %v2039 = vld [vmem:[%s370 + $0x10] sm:$0xf]
        %v2040 = vld [vmem:[%s370 + $0x14] sm:$0xf]
        %v2041 = vld [vmem:[%s370 + $0x18] sm:$0xf]
        %v2042 = vld [vmem:[%s370 + $0x1c] sm:$0xf]
        %v2051 = vunpack.c.l.b16 %v2027
        %v2052 = vunpack.c.l.b16 %v2028
        %v2053 = vunpack.c.l.b16 %v2029
        %v2054 = vunpack.c.l.b16 %v2030
        %v2055 = vunpack.c.l.b16 %v2031
        %v2056 = vunpack.c.l.b16 %v2032
        %v2057 = vunpack.c.l.b16 %v2033
        %v2058 = vunpack.c.l.b16 %v2034
        %v2059 = vpack.c.b16 %v2052, %v2051
        %v2060 = vpack.c.b16 %v2054, %v2053
        %v2061 = vpack.c.b16 %v2056, %v2055
        %v2062 = vpack.c.b16 %v2058, %v2057
        %v2071 = vunpack.c.l.b16 %v2035
        %v2072 = vunpack.c.l.b16 %v2036
        %v2073 = vunpack.c.l.b16 %v2037
        %v2074 = vunpack.c.l.b16 %v2038
        %v2075 = vunpack.c.l.b16 %v2039
        %v2076 = vunpack.c.l.b16 %v2040
        %v2077 = vunpack.c.l.b16 %v2041
        %v2078 = vunpack.c.l.b16 %v2042
        %v2079 = vpack.c.b16 %v2072, %v2071
        %v2080 = vpack.c.b16 %v2074, %v2073
        %v2081 = vpack.c.b16 %v2076, %v2075
        %v2082 = vpack.c.b16 %v2078, %v2077
        %v2088 = vsel %vm423, %v2059, 0
        %v2091 = vsel %vm423, %v2060, 0
        %v2094 = vsel %vm423, %v2061, 0
        %v2097 = vsel %vm423, %v2062, 0
        %2099 = vmatprep.subr.bf16.mxu0 0
        %2100 = vmatpush1.bf16.msra.mxu0 %v2079
        %2101 = vmatprep.subr.bf16.mxu0 0
        %2102 = vmatpush1.bf16.msra.mxu0 %v2080
        %2103 = vmatprep.subr.bf16.mxu0 0
        %2104 = vmatpush1.bf16.msra.mxu0 %v2081
        %2105 = vmatprep.subr.bf16.mxu0 0
        %2106 = vmatpush1.bf16.msra.mxu0 %v2082
        %2107 = vmatprep.subr.bf16.mxu0 0
        %2108 = vmatpush1.bf16.msra.mxu0 0
        %2109 = vmatprep.subr.bf16.mxu0 0
        %2110 = vmatpush1.bf16.msra.mxu0 0
        %2111 = vmatprep.subr.bf16.mxu0 0
        %2112 = vmatpush1.bf16.msra.mxu0 0
        %2113 = vmatprep.subr.bf16.mxu0 0
        %2114 = vmatpush1.bf16.msra.mxu0 0
        %2115 = vmatprep.subr.bf16.mxu0 0
        %2116 = vmatpush1.bf16.msra.mxu0 0
        %2117 = vmatprep.subr.bf16.mxu0 0
        %2118 = vmatpush1.bf16.msra.mxu0 0
        %2119 = vmatprep.subr.bf16.mxu0 0
        %2120 = vmatpush1.bf16.msra.mxu0 0
        %2121 = vmatprep.subr.bf16.mxu0 0
        %2122 = vmatpush1.bf16.msra.mxu0 0
        %2123 = vmatprep.subr.bf16.mxu0 0
        %2124 = vmatpush1.bf16.msra.mxu0 0
        %2125 = vmatprep.subr.bf16.mxu0 0
        %2126 = vmatpush1.bf16.msra.mxu0 0
        %2127 = vmatprep.subr.bf16.mxu0 0
        %2128 = vmatpush1.bf16.msra.mxu0 0
        %2129 = vmatprep.subr.bf16.mxu0 0
        %2130 = vmatpush1.bf16.msra.mxu0 0
        %2131 = vmatprep.mubr.bf16.mxu0 0
        %2132 = vmatmul.mubr.bf16.gmra.mrb[0].mxu0 %v2088
        %v2133 = vpop.f32.mrb[0].mxu0
        %v2134 = vadd.f32 0.0, %v2133
        %v2135 = vpop.f32.mrb[0].mxu0
        %v2136 = vpop.f32.mrb[0].mxu0
        %v2137 = vadd.f32 0.0, %v2136
        %v2138 = vpop.f32.mrb[0].mxu0
        %2139 = vmatprep.mubr.bf16.mxu0 0
        %2140 = vmatmul.mubr.bf16.gmra.mrb[0].mxu0 %v2091
        %v2141 = vpop.f32.mrb[0].mxu0
        %v2142 = vadd.f32 0.0, %v2141
        %v2143 = vpop.f32.mrb[0].mxu0
        %v2144 = vpop.f32.mrb[0].mxu0
        %v2145 = vadd.f32 0.0, %v2144
        %v2146 = vpop.f32.mrb[0].mxu0
        %2147 = vmatprep.mubr.bf16.mxu0 0
        %2148 = vmatmul.mubr.bf16.gmra.mrb[0].mxu0 %v2094
        %v2149 = vpop.f32.mrb[0].mxu0
        %v2150 = vadd.f32 0.0, %v2149
        %v2151 = vpop.f32.mrb[0].mxu0
        %v2152 = vpop.f32.mrb[0].mxu0
        %v2153 = vadd.f32 0.0, %v2152
        %v2154 = vpop.f32.mrb[0].mxu0
        %2155 = vmatprep.mubr.bf16.mxu0 0
        %2156 = vmatmul.mubr.bf16.gmra.mrb[0].mxu0 %v2097
        %v2157 = vpop.f32.mrb[0].mxu0
        %v2158 = vadd.f32 0.0, %v2157
        %v2159 = vpop.f32.mrb[0].mxu0
        %v2160 = vpop.f32.mrb[0].mxu0
        %v2161 = vadd.f32 0.0, %v2160
        %v2162 = vpop.f32.mrb[0].mxu0
        %2163 = vdwg.mxu0
        %v2172 = vunpack.c.l.b16 %v2011
        %v2173 = vunpack.c.l.b16 %v2012
        %v2174 = vunpack.c.l.b16 %v2013
        %v2175 = vunpack.c.l.b16 %v2014
        %v2176 = vunpack.c.l.b16 %v2015
        %v2177 = vunpack.c.l.b16 %v2016
        %v2178 = vunpack.c.l.b16 %v2017
        %v2179 = vunpack.c.l.b16 %v2018
        %v2180 = vpack.c.b16 %v2173, %v2172
        %v2181 = vpack.c.b16 %v2175, %v2174
        %v2182 = vpack.c.b16 %v2177, %v2176
        %v2183 = vpack.c.b16 %v2179, %v2178
        %v2192 = vunpack.c.l.b16 %v2019
        %v2193 = vunpack.c.l.b16 %v2020
        %v2194 = vunpack.c.l.b16 %v2021
        %v2195 = vunpack.c.l.b16 %v2022
        %v2196 = vunpack.c.l.b16 %v2023
        %v2197 = vunpack.c.l.b16 %v2024
        %v2198 = vunpack.c.l.b16 %v2025
        %v2199 = vunpack.c.l.b16 %v2026
        %v2200 = vpack.c.b16 %v2193, %v2192
        %v2201 = vpack.c.b16 %v2195, %v2194
        %v2202 = vpack.c.b16 %v2197, %v2196
        %v2203 = vpack.c.b16 %v2199, %v2198
        %v2209 = vsel %vm423, %v2180, 0
        %v2212 = vsel %vm423, %v2181, 0
        %v2215 = vsel %vm423, %v2182, 0
        %v2218 = vsel %vm423, %v2183, 0
        %2220 = vmatprep.subr.bf16.mxu0 0
        %2221 = vmatpush1.bf16.msra.mxu0 %v2200
        %2222 = vmatprep.subr.bf16.mxu0 0
        %2223 = vmatpush1.bf16.msra.mxu0 %v2201
        %2224 = vmatprep.subr.bf16.mxu0 0
        %2225 = vmatpush1.bf16.msra.mxu0 %v2202
        %2226 = vmatprep.subr.bf16.mxu0 0
        %2227 = vmatpush1.bf16.msra.mxu0 %v2203
        %2228 = vmatprep.subr.bf16.mxu0 0
        %2229 = vmatpush1.bf16.msra.mxu0 0
        %2230 = vmatprep.subr.bf16.mxu0 0
        %2231 = vmatpush1.bf16.msra.mxu0 0
        %2232 = vmatprep.subr.bf16.mxu0 0
        %2233 = vmatpush1.bf16.msra.mxu0 0
        %2234 = vmatprep.subr.bf16.mxu0 0
        %2235 = vmatpush1.bf16.msra.mxu0 0
        %2236 = vmatprep.subr.bf16.mxu0 0
        %2237 = vmatpush1.bf16.msra.mxu0 0
        %2238 = vmatprep.subr.bf16.mxu0 0
        %2239 = vmatpush1.bf16.msra.mxu0 0
        %2240 = vmatprep.subr.bf16.mxu0 0
        %2241 = vmatpush1.bf16.msra.mxu0 0
        %2242 = vmatprep.subr.bf16.mxu0 0
        %2243 = vmatpush1.bf16.msra.mxu0 0
        %2244 = vmatprep.subr.bf16.mxu0 0
        %2245 = vmatpush1.bf16.msra.mxu0 0
        %2246 = vmatprep.subr.bf16.mxu0 0
        %2247 = vmatpush1.bf16.msra.mxu0 0
        %2248 = vmatprep.subr.bf16.mxu0 0
        %2249 = vmatpush1.bf16.msra.mxu0 0
        %2250 = vmatprep.subr.bf16.mxu0 0
        %2251 = vmatpush1.bf16.msra.mxu0 0
        %2252 = vmatprep.mubr.bf16.mxu0 0
        %2253 = vmatmul.mubr.bf16.gmra.mrb[0].mxu0 %v2209
        %v2254 = vpop.f32.mrb[0].mxu0
        %v2255 = vadd.f32 %v2134, %v2254
        %v2256 = vpop.f32.mrb[0].mxu0
        %v2257 = vpop.f32.mrb[0].mxu0
        %v2258 = vadd.f32 %v2137, %v2257
        %v2259 = vpop.f32.mrb[0].mxu0
        %2260 = vmatprep.mubr.bf16.mxu0 0
        %2261 = vmatmul.mubr.bf16.gmra.mrb[0].mxu0 %v2212
        %v2262 = vpop.f32.mrb[0].mxu0
        %v2263 = vadd.f32 %v2142, %v2262
        %v2264 = vpop.f32.mrb[0].mxu0
        %v2265 = vpop.f32.mrb[0].mxu0
        %v2266 = vadd.f32 %v2145, %v2265
        %v2267 = vpop.f32.mrb[0].mxu0
        %2268 = vmatprep.mubr.bf16.mxu0 0
        %2269 = vmatmul.mubr.bf16.gmra.mrb[0].mxu0 %v2215
        %v2270 = vpop.f32.mrb[0].mxu0
        %v2271 = vadd.f32 %v2150, %v2270
        %v2272 = vpop.f32.mrb[0].mxu0
        %v2273 = vpop.f32.mrb[0].mxu0
        %v2274 = vadd.f32 %v2153, %v2273
        %v2275 = vpop.f32.mrb[0].mxu0
        %2276 = vmatprep.mubr.bf16.mxu0 0
        %2277 = vmatmul.mubr.bf16.gmra.mrb[0].mxu0 %v2218
        %v2278 = vpop.f32.mrb[0].mxu0
        %v2279 = vadd.f32 %v2158, %v2278
        %v2280 = vpop.f32.mrb[0].mxu0
        %v2281 = vpop.f32.mrb[0].mxu0
        %v2282 = vadd.f32 %v2161, %v2281
        %v2283 = vpop.f32.mrb[0].mxu0
        %2284 = vdwg.mxu0
        %v2285 = vld [vmem:[%s916] sm:$0xf]
        %v2286 = vld [vmem:[%s916 + $0x4] sm:$0xf]
        %v2287 = vld [vmem:[%s916 + $0x8] sm:$0xf]
        %v2288 = vld [vmem:[%s916 + $0xc] sm:$0xf]
        %v2289 = vld [vmem:[%s916 + $0x10] sm:$0xf]
        %v2290 = vld [vmem:[%s916 + $0x14] sm:$0xf]
        %v2291 = vld [vmem:[%s916 + $0x18] sm:$0xf]
        %v2292 = vld [vmem:[%s916 + $0x1c] sm:$0xf]
        %v2293 = vld [vmem:[%s631] sm:$0xf]
        %v2294 = vld [vmem:[%s631 + $0x4] sm:$0xf]
        %v2295 = vld [vmem:[%s631 + $0x8] sm:$0xf]
        %v2296 = vld [vmem:[%s631 + $0xc] sm:$0xf]
        %v2297 = vld [vmem:[%s631 + $0x10] sm:$0xf]
        %v2298 = vld [vmem:[%s631 + $0x14] sm:$0xf]
        %v2299 = vld [vmem:[%s631 + $0x18] sm:$0xf]
        %v2300 = vld [vmem:[%s631 + $0x1c] sm:$0xf]
        %v2309 = vunpack.c.l.b16 %v2285
        %v2310 = vunpack.c.l.b16 %v2286
        %v2311 = vunpack.c.l.b16 %v2287
        %v2312 = vunpack.c.l.b16 %v2288
        %v2313 = vunpack.c.l.b16 %v2289
        %v2314 = vunpack.c.l.b16 %v2290
        %v2315 = vunpack.c.l.b16 %v2291
        %v2316 = vunpack.c.l.b16 %v2292
        %v2317 = vpack.c.b16 %v2310, %v2309
        %v2318 = vpack.c.b16 %v2312, %v2311
        %v2319 = vpack.c.b16 %v2314, %v2313
        %v2320 = vpack.c.b16 %v2316, %v2315
        %v2329 = vunpack.c.l.b16 %v2293
        %v2330 = vunpack.c.l.b16 %v2294
        %v2331 = vunpack.c.l.b16 %v2295
        %v2332 = vunpack.c.l.b16 %v2296
        %v2333 = vunpack.c.l.b16 %v2297
        %v2334 = vunpack.c.l.b16 %v2298
        %v2335 = vunpack.c.l.b16 %v2299
        %v2336 = vunpack.c.l.b16 %v2300
        %v2337 = vpack.c.b16 %v2330, %v2329
        %v2338 = vpack.c.b16 %v2332, %v2331
        %v2339 = vpack.c.b16 %v2334, %v2333
        %v2340 = vpack.c.b16 %v2336, %v2335
        %v2346 = vsel %vm423, %v2317, 0
        %v2349 = vsel %vm423, %v2318, 0
        %v2352 = vsel %vm423, %v2319, 0
        %v2355 = vsel %vm423, %v2320, 0
        %2357 = vmatprep.subr.bf16.mxu0 0
        %2358 = vmatpush1.bf16.msra.mxu0 %v2337
        %2359 = vmatprep.subr.bf16.mxu0 0
        %2360 = vmatpush1.bf16.msra.mxu0 %v2338
        %2361 = vmatprep.subr.bf16.mxu0 0
        %2362 = vmatpush1.bf16.msra.mxu0 %v2339
        %2363 = vmatprep.subr.bf16.mxu0 0
        %2364 = vmatpush1.bf16.msra.mxu0 %v2340
        %2365 = vmatprep.subr.bf16.mxu0 0
        %2366 = vmatpush1.bf16.msra.mxu0 0
        %2367 = vmatprep.subr.bf16.mxu0 0
        %2368 = vmatpush1.bf16.msra.mxu0 0
        %2369 = vmatprep.subr.bf16.mxu0 0
        %2370 = vmatpush1.bf16.msra.mxu0 0
        %2371 = vmatprep.subr.bf16.mxu0 0
        %2372 = vmatpush1.bf16.msra.mxu0 0
        %2373 = vmatprep.subr.bf16.mxu0 0
        %2374 = vmatpush1.bf16.msra.mxu0 0
        %2375 = vmatprep.subr.bf16.mxu0 0
        %2376 = vmatpush1.bf16.msra.mxu0 0
        %2377 = vmatprep.subr.bf16.mxu0 0
        %2378 = vmatpush1.bf16.msra.mxu0 0
        %2379 = vmatprep.subr.bf16.mxu0 0
        %2380 = vmatpush1.bf16.msra.mxu0 0
        %2381 = vmatprep.subr.bf16.mxu0 0
        %2382 = vmatpush1.bf16.msra.mxu0 0
        %2383 = vmatprep.subr.bf16.mxu0 0
        %2384 = vmatpush1.bf16.msra.mxu0 0
        %2385 = vmatprep.subr.bf16.mxu0 0
        %2386 = vmatpush1.bf16.msra.mxu0 0
        %2387 = vmatprep.subr.bf16.mxu0 0
        %2388 = vmatpush1.bf16.msra.mxu0 0
        %2389 = vmatprep.mubr.bf16.mxu0 0
        %2390 = vmatmul.mubr.bf16.gmra.mrb[0].mxu0 %v2346
        %v2391 = vpop.f32.mrb[0].mxu0
        %v2392 = vadd.f32 0.0, %v2391
        %v2393 = vpop.f32.mrb[0].mxu0
        %v2394 = vpop.f32.mrb[0].mxu0
        %v2395 = vadd.f32 0.0, %v2394
        %v2396 = vpop.f32.mrb[0].mxu0
        %2397 = vmatprep.mubr.bf16.mxu0 0
        %2398 = vmatmul.mubr.bf16.gmra.mrb[0].mxu0 %v2349
        %v2399 = vpop.f32.mrb[0].mxu0
        %v2400 = vadd.f32 0.0, %v2399
        %v2401 = vpop.f32.mrb[0].mxu0
        %v2402 = vpop.f32.mrb[0].mxu0
        %v2403 = vadd.f32 0.0, %v2402
        %v2404 = vpop.f32.mrb[0].mxu0
        %2405 = vmatprep.mubr.bf16.mxu0 0
        %2406 = vmatmul.mubr.bf16.gmra.mrb[0].mxu0 %v2352
        %v2407 = vpop.f32.mrb[0].mxu0
        %v2408 = vadd.f32 0.0, %v2407
        %v2409 = vpop.f32.mrb[0].mxu0
        %v2410 = vpop.f32.mrb[0].mxu0
        %v2411 = vadd.f32 0.0, %v2410
        %v2412 = vpop.f32.mrb[0].mxu0
        %2413 = vmatprep.mubr.bf16.mxu0 0
        %2414 = vmatmul.mubr.bf16.gmra.mrb[0].mxu0 %v2355
        %v2415 = vpop.f32.mrb[0].mxu0
        %v2416 = vadd.f32 0.0, %v2415
        %v2417 = vpop.f32.mrb[0].mxu0
        %v2418 = vpop.f32.mrb[0].mxu0
        %v2419 = vadd.f32 0.0, %v2418
        %v2420 = vpop.f32.mrb[0].mxu0
        %2421 = vdwg.mxu0
        %v2422 = vadd.f32 %v2255, %v2392
        %v2423 = vadd.f32 %v2258, %v2395
        %v2424 = vadd.f32 %v2263, %v2400
        %v2425 = vadd.f32 %v2266, %v2403
        %v2426 = vadd.f32 %v2271, %v2408
        %v2427 = vadd.f32 %v2274, %v2411
        %v2428 = vadd.f32 %v2279, %v2416
        %v2429 = vadd.f32 %v2282, %v2419
        %v2430 = vld [vmem:[%s1754] sm:$0xf]
        %v2431 = vld [vmem:[%s1754 + $0x4] sm:$0xf]
        %v2432 = vld [vmem:[%s1754 + $0x8] sm:$0xf]
        %v2433 = vld [vmem:[%s1754 + $0xc] sm:$0xf]
        %v2434 = vld [vmem:[%s1754 + $0x10] sm:$0xf]
        %v2435 = vld [vmem:[%s1754 + $0x14] sm:$0xf]
        %v2436 = vld [vmem:[%s1754 + $0x18] sm:$0xf]
        %v2437 = vld [vmem:[%s1754 + $0x1c] sm:$0xf]
        %v2438 = vld [vmem:[%s778] sm:$0xf]
        %v2439 = vld [vmem:[%s778 + $0x4] sm:$0xf]
        %v2440 = vld [vmem:[%s778 + $0x8] sm:$0xf]
        %v2441 = vld [vmem:[%s778 + $0xc] sm:$0xf]
        %v2442 = vld [vmem:[%s778 + $0x10] sm:$0xf]
        %v2443 = vld [vmem:[%s778 + $0x14] sm:$0xf]
        %v2444 = vld [vmem:[%s778 + $0x18] sm:$0xf]
        %v2445 = vld [vmem:[%s778 + $0x1c] sm:$0xf]
        %v2454 = vunpack.c.l.b16 %v2430
        %v2455 = vunpack.c.l.b16 %v2431
        %v2456 = vunpack.c.l.b16 %v2432
        %v2457 = vunpack.c.l.b16 %v2433
        %v2458 = vunpack.c.l.b16 %v2434
        %v2459 = vunpack.c.l.b16 %v2435
        %v2460 = vunpack.c.l.b16 %v2436
        %v2461 = vunpack.c.l.b16 %v2437
        %v2462 = vpack.c.b16 %v2455, %v2454
        %v2463 = vpack.c.b16 %v2457, %v2456
        %v2464 = vpack.c.b16 %v2459, %v2458
        %v2465 = vpack.c.b16 %v2461, %v2460
        %v2474 = vunpack.c.l.b16 %v2438
        %v2475 = vunpack.c.l.b16 %v2439
        %v2476 = vunpack.c.l.b16 %v2440
        %v2477 = vunpack.c.l.b16 %v2441
        %v2478 = vunpack.c.l.b16 %v2442
        %v2479 = vunpack.c.l.b16 %v2443
        %v2480 = vunpack.c.l.b16 %v2444
        %v2481 = vunpack.c.l.b16 %v2445
        %v2482 = vpack.c.b16 %v2475, %v2474
        %v2483 = vpack.c.b16 %v2477, %v2476
        %v2484 = vpack.c.b16 %v2479, %v2478
        %v2485 = vpack.c.b16 %v2481, %v2480
        %v2491 = vsel %vm423, %v2462, 0
        %v2494 = vsel %vm423, %v2463, 0
        %v2497 = vsel %vm423, %v2464, 0
        %v2500 = vsel %vm423, %v2465, 0
        %2502 = vmatprep.subr.bf16.mxu0 0
        %2503 = vmatpush1.bf16.msra.mxu0 %v2482
        %2504 = vmatprep.subr.bf16.mxu0 0
        %2505 = vmatpush1.bf16.msra.mxu0 %v2483
        %2506 = vmatprep.subr.bf16.mxu0 0
        %2507 = vmatpush1.bf16.msra.mxu0 %v2484
        %2508 = vmatprep.subr.bf16.mxu0 0
        %2509 = vmatpush1.bf16.msra.mxu0 %v2485
        %2510 = vmatprep.subr.bf16.mxu0 0
        %2511 = vmatpush1.bf16.msra.mxu0 0
        %2512 = vmatprep.subr.bf16.mxu0 0
        %2513 = vmatpush1.bf16.msra.mxu0 0
        %2514 = vmatprep.subr.bf16.mxu0 0
        %2515 = vmatpush1.bf16.msra.mxu0 0
        %2516 = vmatprep.subr.bf16.mxu0 0
        %2517 = vmatpush1.bf16.msra.mxu0 0
        %2518 = vmatprep.subr.bf16.mxu0 0
        %2519 = vmatpush1.bf16.msra.mxu0 0
        %2520 = vmatprep.subr.bf16.mxu0 0
        %2521 = vmatpush1.bf16.msra.mxu0 0
        %2522 = vmatprep.subr.bf16.mxu0 0
        %2523 = vmatpush1.bf16.msra.mxu0 0
        %2524 = vmatprep.subr.bf16.mxu0 0
        %2525 = vmatpush1.bf16.msra.mxu0 0
        %2526 = vmatprep.subr.bf16.mxu0 0
        %2527 = vmatpush1.bf16.msra.mxu0 0
        %2528 = vmatprep.subr.bf16.mxu0 0
        %2529 = vmatpush1.bf16.msra.mxu0 0
        %2530 = vmatprep.subr.bf16.mxu0 0
        %2531 = vmatpush1.bf16.msra.mxu0 0
        %2532 = vmatprep.subr.bf16.mxu0 0
        %2533 = vmatpush1.bf16.msra.mxu0 0
        %2534 = vmatprep.mubr.bf16.mxu0 0
        %2535 = vmatmul.mubr.bf16.gmra.mrb[0].mxu0 %v2491
        %v2536 = vpop.f32.mrb[0].mxu0
        %v2537 = vadd.f32 0.0, %v2536
        %v2538 = vpop.f32.mrb[0].mxu0
        %v2539 = vpop.f32.mrb[0].mxu0
        %v2540 = vadd.f32 0.0, %v2539
        %v2541 = vpop.f32.mrb[0].mxu0
        %2542 = vmatprep.mubr.bf16.mxu0 0
        %2543 = vmatmul.mubr.bf16.gmra.mrb[0].mxu0 %v2494
        %v2544 = vpop.f32.mrb[0].mxu0
        %v2545 = vadd.f32 0.0, %v2544
        %v2546 = vpop.f32.mrb[0].mxu0
        %v2547 = vpop.f32.mrb[0].mxu0
        %v2548 = vadd.f32 0.0, %v2547
        %v2549 = vpop.f32.mrb[0].mxu0
        %2550 = vmatprep.mubr.bf16.mxu0 0
        %2551 = vmatmul.mubr.bf16.gmra.mrb[0].mxu0 %v2497
        %v2552 = vpop.f32.mrb[0].mxu0
        %v2553 = vadd.f32 0.0, %v2552
        %v2554 = vpop.f32.mrb[0].mxu0
        %v2555 = vpop.f32.mrb[0].mxu0
        %v2556 = vadd.f32 0.0, %v2555
        %v2557 = vpop.f32.mrb[0].mxu0
        %2558 = vmatprep.mubr.bf16.mxu0 0
        %2559 = vmatmul.mubr.bf16.gmra.mrb[0].mxu0 %v2500
        %v2560 = vpop.f32.mrb[0].mxu0
        %v2561 = vadd.f32 0.0, %v2560
        %v2562 = vpop.f32.mrb[0].mxu0
        %v2563 = vpop.f32.mrb[0].mxu0
        %v2564 = vadd.f32 0.0, %v2563
        %v2565 = vpop.f32.mrb[0].mxu0
        %2566 = vdwg.mxu0
        %v2567 = vadd.f32 %v2422, %v2537
        %v2568 = vadd.f32 %v2423, %v2540
        %v2569 = vadd.f32 %v2424, %v2545
        %v2570 = vadd.f32 %v2425, %v2548
        %v2571 = vadd.f32 %v2426, %v2553
        %v2572 = vadd.f32 %v2427, %v2556
        %v2573 = vadd.f32 %v2428, %v2561
        %v2574 = vadd.f32 %v2429, %v2564
        %s2575 = scalar_lea.vmem %s290, 192 [#allocation4]
        %v2576 = vld [vmem:[%s2575] sm:$0xf]
        %v2577 = vld [vmem:[%s2575 + $0x4] sm:$0xf]
        %v2578 = vld [vmem:[%s2575 + $0x8] sm:$0xf]
        %v2579 = vld [vmem:[%s2575 + $0xc] sm:$0xf]
        %v2580 = vld [vmem:[%s2575 + $0x10] sm:$0xf]
        %v2581 = vld [vmem:[%s2575 + $0x14] sm:$0xf]
        %v2582 = vld [vmem:[%s2575 + $0x18] sm:$0xf]
        %v2583 = vld [vmem:[%s2575 + $0x1c] sm:$0xf]
        %v2584 = vld [vmem:[%s925] sm:$0xf]
        %v2585 = vld [vmem:[%s925 + $0x4] sm:$0xf]
        %v2586 = vld [vmem:[%s925 + $0x8] sm:$0xf]
        %v2587 = vld [vmem:[%s925 + $0xc] sm:$0xf]
        %v2588 = vld [vmem:[%s925 + $0x10] sm:$0xf]
        %v2589 = vld [vmem:[%s925 + $0x14] sm:$0xf]
        %v2590 = vld [vmem:[%s925 + $0x18] sm:$0xf]
        %v2591 = vld [vmem:[%s925 + $0x1c] sm:$0xf]
        %v2600 = vunpack.c.l.b16 %v2576
        %v2601 = vunpack.c.l.b16 %v2577
        %v2602 = vunpack.c.l.b16 %v2578
        %v2603 = vunpack.c.l.b16 %v2579
        %v2604 = vunpack.c.l.b16 %v2580
        %v2605 = vunpack.c.l.b16 %v2581
        %v2606 = vunpack.c.l.b16 %v2582
        %v2607 = vunpack.c.l.b16 %v2583
        %v2608 = vpack.c.b16 %v2601, %v2600
        %v2609 = vpack.c.b16 %v2603, %v2602
        %v2610 = vpack.c.b16 %v2605, %v2604
        %v2611 = vpack.c.b16 %v2607, %v2606
        %v2620 = vunpack.c.l.b16 %v2584
        %v2621 = vunpack.c.l.b16 %v2585
        %v2622 = vunpack.c.l.b16 %v2586
        %v2623 = vunpack.c.l.b16 %v2587
        %v2624 = vunpack.c.l.b16 %v2588
        %v2625 = vunpack.c.l.b16 %v2589
        %v2626 = vunpack.c.l.b16 %v2590
        %v2627 = vunpack.c.l.b16 %v2591
        %v2628 = vpack.c.b16 %v2621, %v2620
        %v2629 = vpack.c.b16 %v2623, %v2622
        %v2630 = vpack.c.b16 %v2625, %v2624
        %v2631 = vpack.c.b16 %v2627, %v2626
        %v2637 = vsel %vm423, %v2608, 0
        %v2640 = vsel %vm423, %v2609, 0
        %v2643 = vsel %vm423, %v2610, 0
        %v2646 = vsel %vm423, %v2611, 0
        %2648 = vmatprep.subr.bf16.mxu0 0
        %2649 = vmatpush1.bf16.msra.mxu0 %v2628
        %2650 = vmatprep.subr.bf16.mxu0 0
        %2651 = vmatpush1.bf16.msra.mxu0 %v2629
        %2652 = vmatprep.subr.bf16.mxu0 0
        %2653 = vmatpush1.bf16.msra.mxu0 %v2630
        %2654 = vmatprep.subr.bf16.mxu0 0
        %2655 = vmatpush1.bf16.msra.mxu0 %v2631
        %2656 = vmatprep.subr.bf16.mxu0 0
        %2657 = vmatpush1.bf16.msra.mxu0 0
        %2658 = vmatprep.subr.bf16.mxu0 0
        %2659 = vmatpush1.bf16.msra.mxu0 0
        %2660 = vmatprep.subr.bf16.mxu0 0
        %2661 = vmatpush1.bf16.msra.mxu0 0
        %2662 = vmatprep.subr.bf16.mxu0 0
        %2663 = vmatpush1.bf16.msra.mxu0 0
        %2664 = vmatprep.subr.bf16.mxu0 0
        %2665 = vmatpush1.bf16.msra.mxu0 0
        %2666 = vmatprep.subr.bf16.mxu0 0
        %2667 = vmatpush1.bf16.msra.mxu0 0
        %2668 = vmatprep.subr.bf16.mxu0 0
        %2669 = vmatpush1.bf16.msra.mxu0 0
        %2670 = vmatprep.subr.bf16.mxu0 0
        %2671 = vmatpush1.bf16.msra.mxu0 0
        %2672 = vmatprep.subr.bf16.mxu0 0
        %2673 = vmatpush1.bf16.msra.mxu0 0
        %2674 = vmatprep.subr.bf16.mxu0 0
        %2675 = vmatpush1.bf16.msra.mxu0 0
        %2676 = vmatprep.subr.bf16.mxu0 0
        %2677 = vmatpush1.bf16.msra.mxu0 0
        %2678 = vmatprep.subr.bf16.mxu0 0
        %2679 = vmatpush1.bf16.msra.mxu0 0
        %2680 = vmatprep.mubr.bf16.mxu0 0
        %2681 = vmatmul.mubr.bf16.gmra.mrb[0].mxu0 %v2637
        %v2682 = vpop.f32.mrb[0].mxu0
        %v2683 = vadd.f32 0.0, %v2682
        %v2684 = vpop.f32.mrb[0].mxu0
        %v2685 = vpop.f32.mrb[0].mxu0
        %v2686 = vadd.f32 0.0, %v2685
        %v2687 = vpop.f32.mrb[0].mxu0
        %2688 = vmatprep.mubr.bf16.mxu0 0
        %2689 = vmatmul.mubr.bf16.gmra.mrb[0].mxu0 %v2640
        %v2690 = vpop.f32.mrb[0].mxu0
        %v2691 = vadd.f32 0.0, %v2690
        %v2692 = vpop.f32.mrb[0].mxu0
        %v2693 = vpop.f32.mrb[0].mxu0
        %v2694 = vadd.f32 0.0, %v2693
        %v2695 = vpop.f32.mrb[0].mxu0
        %2696 = vmatprep.mubr.bf16.mxu0 0
        %2697 = vmatmul.mubr.bf16.gmra.mrb[0].mxu0 %v2643
        %v2698 = vpop.f32.mrb[0].mxu0
        %v2699 = vadd.f32 0.0, %v2698
        %v2700 = vpop.f32.mrb[0].mxu0
        %v2701 = vpop.f32.mrb[0].mxu0
        %v2702 = vadd.f32 0.0, %v2701
        %v2703 = vpop.f32.mrb[0].mxu0
        %2704 = vmatprep.mubr.bf16.mxu0 0
        %2705 = vmatmul.mubr.bf16.gmra.mrb[0].mxu0 %v2646
        %v2706 = vpop.f32.mrb[0].mxu0
        %v2707 = vadd.f32 0.0, %v2706
        %v2708 = vpop.f32.mrb[0].mxu0
        %v2709 = vpop.f32.mrb[0].mxu0
        %v2710 = vadd.f32 0.0, %v2709
        %v2711 = vpop.f32.mrb[0].mxu0
        %2712 = vdwg.mxu0
        %v2713 = vadd.f32 %v2567, %v2683
        %v2714 = vadd.f32 %v2568, %v2686
        %v2715 = vadd.f32 %v2569, %v2691
        %v2716 = vadd.f32 %v2570, %v2694
        %v2717 = vadd.f32 %v2571, %v2699
        %v2718 = vadd.f32 %v2572, %v2702
        %v2719 = vadd.f32 %v2573, %v2707
        %v2720 = vadd.f32 %v2574, %v2710
        %v2721 = vadd.f32 %v2713, %v1067
        %v2722 = vadd.f32 %v2714, %v1067
        %v2723 = vadd.f32 %v2715, %v1067
        %v2724 = vadd.f32 %v2716, %v1067
        %v2725 = vadd.f32 %v2717, %v1067
        %v2726 = vadd.f32 %v2718, %v1067
        %v2727 = vadd.f32 %v2719, %v1067
        %v2728 = vadd.f32 %v2720, %v1067
        %v2729 = vmax.f32 %v2721, 0.0
        %v2730 = vmax.f32 %v2722, 0.0
        %v2731 = vmax.f32 %v2723, 0.0
        %v2732 = vmax.f32 %v2724, 0.0
        %v2733 = vmax.f32 %v2725, 0.0
        %v2734 = vmax.f32 %v2726, 0.0
        %v2735 = vmax.f32 %v2727, 0.0
        %v2736 = vmax.f32 %v2728, 0.0
        %2737 = vst.msk [vmem:[#allocation2] sm:$0xff] %vm1085, %v2729
        %2738 = vst.msk [vmem:[#allocation2 + $0x8] sm:$0xff] %vm1085, %v2730
        %2739 = vst.msk [vmem:[#allocation2 + $0x10] sm:$0xff] %vm1085, %v2731
        %2740 = vst.msk [vmem:[#allocation2 + $0x18] sm:$0xff] %vm1085, %v2732
        %2741 = vst.msk [vmem:[#allocation2 + $0x20] sm:$0xff] %vm1085, %v2733
        %2742 = vst.msk [vmem:[#allocation2 + $0x28] sm:$0xff] %vm1085, %v2734
        %2743 = vst.msk [vmem:[#allocation2 + $0x30] sm:$0xff] %vm1085, %v2735
        %2744 = vst.msk [vmem:[#allocation2 + $0x38] sm:$0xff] %vm1085, %v2736
        %v2745 = vld [vmem:[#allocation2] ss:$2 sm:$0xff]
        %v2746 = vld [vmem:[%s1095] ss:$2 sm:$0xff]
        %v2747 = vld [vmem:[%s1097] ss:$2 sm:$0xff]
        %v2748 = vld [vmem:[%s1099] ss:$2 sm:$0xff]
        %v2749 = vld [vmem:[%s1101] ss:$2 sm:$0xff]
        %v2750 = vld [vmem:[%s1103] ss:$2 sm:$0xff]
        %v2751 = vld [vmem:[%s1105] ss:$2 sm:$0xff]
        %v2752 = vld [vmem:[%s1107] ss:$2 sm:$0xff]
        %v2753 = vmax.f32 %v2745, %v2749
        %v2754 = vmax.f32 %v2746, %v2750
        %v2755 = vmax.f32 %v2747, %v2751
        %v2756 = vmax.f32 %v2748, %v2752
        %v2761 = vrot.slane %v2749, 7
        %v2762 = vrot.slane %v2750, 7
        %v2763 = vsel %vm1117, %v2761, %v2762
        %v2764 = vrot.slane %v2751, 7
        %v2765 = vsel %vm1117, %v2762, %v2764
        %v2766 = vrot.slane %v2752, 7
        %v2767 = vsel %vm1117, %v2764, %v2766
        %v2772 = vsel %vm1117, 0.0, %v2761
        %v2773 = vmul.f32 %v2772, %v341
        %v2774 = vmul.f32 %v2763, %v342
        %v2775 = vmul.f32 %v2765, %v343
        %v2776 = vmul.f32 %v2767, %v344
        %v2777 = vmax.f32 %v2753, %v2773
        %v2778 = vmax.f32 %v2754, %v2774
        %v2779 = vmax.f32 %v2755, %v2775
        %v2780 = vmax.f32 %v2756, %v2776
        %2781 = vst.msk [vmem:[#allocation3] sm:$0xff] %vm1085, %v2777
        %2782 = vst.msk [vmem:[#allocation3 + $0x8] sm:$0xff] %vm1085, %v2778
        %2783 = vst.msk [vmem:[#allocation3 + $0x10] sm:$0xff] %vm1085, %v2779
        %2784 = vst.msk [vmem:[#allocation3 + $0x18] sm:$0xff] %vm1085, %v2780
        %v2785 = vld [vmem:[#allocation3] sm:$0xf]
        %v2786 = vld [vmem:[#allocation3 + $0x4] sm:$0xf]
        %v2787 = vmax.f32 %v2785, %v2786
        %v2788 = vsel %vm1145, %v2787, 0.0
        %v2789 = vrot.slane %v2788, 4
        %v2790 = vadd.f32 %v2788, %v2789
        %v2791 = vrot.slane %v2790, 2
        %v2792 = vadd.f32 %v2790, %v2791
        %v2793 = vrot.slane %v2792, 1
        %v2794 = vadd.f32 %v2792, %v2793
        %v2795 = vadd.f32 %v2794, 0.0
        %v2796 = vld [vmem:[#allocation3 + $0x8] sm:$0xf]
        %v2797 = vld [vmem:[#allocation3 + $0xc] sm:$0xf]
        %v2798 = vmax.f32 %v2796, %v2797
        %v2799 = vmax.f32 %v2798, %v2786
        %v2800 = vsel %vm1145, %v2799, 0.0
        %v2801 = vrot.slane %v2800, 4
        %v2802 = vadd.f32 %v2800, %v2801
        %v2803 = vrot.slane %v2802, 2
        %v2804 = vadd.f32 %v2802, %v2803
        %v2805 = vrot.slane %v2804, 1
        %v2806 = vadd.f32 %v2804, %v2805
        %v2807 = vadd.f32 %v2795, %v2806
        %v2808 = vld [vmem:[#allocation3 + $0x10] sm:$0xf]
        %v2809 = vld [vmem:[#allocation3 + $0x14] sm:$0xf]
        %v2810 = vmax.f32 %v2808, %v2809
        %v2811 = vmax.f32 %v2810, %v2797
        %v2812 = vsel %vm1145, %v2811, 0.0
        %v2813 = vrot.slane %v2812, 4
        %v2814 = vadd.f32 %v2812, %v2813
        %v2815 = vrot.slane %v2814, 2
        %v2816 = vadd.f32 %v2814, %v2815
        %v2817 = vrot.slane %v2816, 1
        %v2818 = vadd.f32 %v2816, %v2817
        %v2819 = vadd.f32 %v2807, %v2818
        %v2820 = vld [vmem:[#allocation3 + $0x18] sm:$0xf]
        %v2821 = vld [vmem:[#allocation3 + $0x1c] sm:$0xf]
        %v2822 = vmax.f32 %v2820, %v2821
        %v2823 = vmax.f32 %v2822, %v2809
        %v2824 = vsel %vm1145, %v2823, 0.0
        %v2825 = vrot.slane %v2824, 4
        %v2826 = vadd.f32 %v2824, %v2825
        %v2827 = vrot.slane %v2826, 2
        %v2828 = vadd.f32 %v2826, %v2827
        %v2829 = vrot.slane %v2828, 1
        %v2830 = vadd.f32 %v2828, %v2829
        %v2831 = vadd.f32 %v2819, %v2830
        %v2832 = vld [vmem:[%s769] sm:$0xf]
        %v2833 = vld [vmem:[%s769 + $0x4] sm:$0xf]
        %v2834 = vld [vmem:[%s769 + $0x8] sm:$0xf]
        %v2835 = vld [vmem:[%s769 + $0xc] sm:$0xf]
        %v2836 = vld [vmem:[%s769 + $0x10] sm:$0xf]
        %v2837 = vld [vmem:[%s769 + $0x14] sm:$0xf]
        %v2838 = vld [vmem:[%s769 + $0x18] sm:$0xf]
        %v2839 = vld [vmem:[%s769 + $0x1c] sm:$0xf]
        %v2840 = vld [vmem:[#allocation7] sm:$0xf]
        %v2841 = vld [vmem:[#allocation7 + $0x4] sm:$0xf]
        %v2842 = vld [vmem:[#allocation7 + $0x8] sm:$0xf]
        %v2843 = vld [vmem:[#allocation7 + $0xc] sm:$0xf]
        %v2844 = vld [vmem:[#allocation7 + $0x10] sm:$0xf]
        %v2845 = vld [vmem:[#allocation7 + $0x14] sm:$0xf]
        %v2846 = vld [vmem:[#allocation7 + $0x18] sm:$0xf]
        %v2847 = vld [vmem:[#allocation7 + $0x1c] sm:$0xf]
        %v2848 = vld [vmem:[%s916] sm:$0xf]
        %v2849 = vld [vmem:[%s916 + $0x4] sm:$0xf]
        %v2850 = vld [vmem:[%s916 + $0x8] sm:$0xf]
        %v2851 = vld [vmem:[%s916 + $0xc] sm:$0xf]
        %v2852 = vld [vmem:[%s916 + $0x10] sm:$0xf]
        %v2853 = vld [vmem:[%s916 + $0x14] sm:$0xf]
        %v2854 = vld [vmem:[%s916 + $0x18] sm:$0xf]
        %v2855 = vld [vmem:[%s916 + $0x1c] sm:$0xf]
        %v2856 = vld [vmem:[%s370] sm:$0xf]
        %v2857 = vld [vmem:[%s370 + $0x4] sm:$0xf]
        %v2858 = vld [vmem:[%s370 + $0x8] sm:$0xf]
        %v2859 = vld [vmem:[%s370 + $0xc] sm:$0xf]
        %v2860 = vld [vmem:[%s370 + $0x10] sm:$0xf]
        %v2861 = vld [vmem:[%s370 + $0x14] sm:$0xf]
        %v2862 = vld [vmem:[%s370 + $0x18] sm:$0xf]
        %v2863 = vld [vmem:[%s370 + $0x1c] sm:$0xf]
        %v2872 = vunpack.c.l.b16 %v2848
        %v2873 = vunpack.c.l.b16 %v2849
        %v2874 = vunpack.c.l.b16 %v2850
        %v2875 = vunpack.c.l.b16 %v2851
        %v2876 = vunpack.c.l.b16 %v2852
        %v2877 = vunpack.c.l.b16 %v2853
        %v2878 = vunpack.c.l.b16 %v2854
        %v2879 = vunpack.c.l.b16 %v2855
        %v2880 = vpack.c.b16 %v2873, %v2872
        %v2881 = vpack.c.b16 %v2875, %v2874
        %v2882 = vpack.c.b16 %v2877, %v2876
        %v2883 = vpack.c.b16 %v2879, %v2878
        %v2892 = vunpack.c.l.b16 %v2856
        %v2893 = vunpack.c.l.b16 %v2857
        %v2894 = vunpack.c.l.b16 %v2858
        %v2895 = vunpack.c.l.b16 %v2859
        %v2896 = vunpack.c.l.b16 %v2860
        %v2897 = vunpack.c.l.b16 %v2861
        %v2898 = vunpack.c.l.b16 %v2862
        %v2899 = vunpack.c.l.b16 %v2863
        %v2900 = vpack.c.b16 %v2893, %v2892
        %v2901 = vpack.c.b16 %v2895, %v2894
        %v2902 = vpack.c.b16 %v2897, %v2896
        %v2903 = vpack.c.b16 %v2899, %v2898
        %v2909 = vsel %vm423, %v2880, 0
        %v2912 = vsel %vm423, %v2881, 0
        %v2915 = vsel %vm423, %v2882, 0
        %v2918 = vsel %vm423, %v2883, 0
        %2920 = vmatprep.subr.bf16.mxu0 0
        %2921 = vmatpush1.bf16.msra.mxu0 %v2900
        %2922 = vmatprep.subr.bf16.mxu0 0
        %2923 = vmatpush1.bf16.msra.mxu0 %v2901
        %2924 = vmatprep.subr.bf16.mxu0 0
        %2925 = vmatpush1.bf16.msra.mxu0 %v2902
        %2926 = vmatprep.subr.bf16.mxu0 0
        %2927 = vmatpush1.bf16.msra.mxu0 %v2903
        %2928 = vmatprep.subr.bf16.mxu0 0
        %2929 = vmatpush1.bf16.msra.mxu0 0
        %2930 = vmatprep.subr.bf16.mxu0 0
        %2931 = vmatpush1.bf16.msra.mxu0 0
        %2932 = vmatprep.subr.bf16.mxu0 0
        %2933 = vmatpush1.bf16.msra.mxu0 0
        %2934 = vmatprep.subr.bf16.mxu0 0
        %2935 = vmatpush1.bf16.msra.mxu0 0
        %2936 = vmatprep.subr.bf16.mxu0 0
        %2937 = vmatpush1.bf16.msra.mxu0 0
        %2938 = vmatprep.subr.bf16.mxu0 0
        %2939 = vmatpush1.bf16.msra.mxu0 0
        %2940 = vmatprep.subr.bf16.mxu0 0
        %2941 = vmatpush1.bf16.msra.mxu0 0
        %2942 = vmatprep.subr.bf16.mxu0 0
        %2943 = vmatpush1.bf16.msra.mxu0 0
        %2944 = vmatprep.subr.bf16.mxu0 0
        %2945 = vmatpush1.bf16.msra.mxu0 0
        %2946 = vmatprep.subr.bf16.mxu0 0
        %2947 = vmatpush1.bf16.msra.mxu0 0
        %2948 = vmatprep.subr.bf16.mxu0 0
        %2949 = vmatpush1.bf16.msra.mxu0 0
        %2950 = vmatprep.subr.bf16.mxu0 0
        %2951 = vmatpush1.bf16.msra.mxu0 0
        %2952 = vmatprep.mubr.bf16.mxu0 0
        %2953 = vmatmul.mubr.bf16.gmra.mrb[0].mxu0 %v2909
        %v2954 = vpop.f32.mrb[0].mxu0
        %v2955 = vadd.f32 0.0, %v2954
        %v2956 = vpop.f32.mrb[0].mxu0
        %v2957 = vpop.f32.mrb[0].mxu0
        %v2958 = vadd.f32 0.0, %v2957
        %v2959 = vpop.f32.mrb[0].mxu0
        %2960 = vmatprep.mubr.bf16.mxu0 0
        %2961 = vmatmul.mubr.bf16.gmra.mrb[0].mxu0 %v2912
        %v2962 = vpop.f32.mrb[0].mxu0
        %v2963 = vadd.f32 0.0, %v2962
        %v2964 = vpop.f32.mrb[0].mxu0
        %v2965 = vpop.f32.mrb[0].mxu0
        %v2966 = vadd.f32 0.0, %v2965
        %v2967 = vpop.f32.mrb[0].mxu0
        %2968 = vmatprep.mubr.bf16.mxu0 0
        %2969 = vmatmul.mubr.bf16.gmra.mrb[0].mxu0 %v2915
        %v2970 = vpop.f32.mrb[0].mxu0
        %v2971 = vadd.f32 0.0, %v2970
        %v2972 = vpop.f32.mrb[0].mxu0
        %v2973 = vpop.f32.mrb[0].mxu0
        %v2974 = vadd.f32 0.0, %v2973
        %v2975 = vpop.f32.mrb[0].mxu0
        %2976 = vmatprep.mubr.bf16.mxu0 0
        %2977 = vmatmul.mubr.bf16.gmra.mrb[0].mxu0 %v2918
        %v2978 = vpop.f32.mrb[0].mxu0
        %v2979 = vadd.f32 0.0, %v2978
        %v2980 = vpop.f32.mrb[0].mxu0
        %v2981 = vpop.f32.mrb[0].mxu0
        %v2982 = vadd.f32 0.0, %v2981
        %v2983 = vpop.f32.mrb[0].mxu0
        %2984 = vdwg.mxu0
        %v2993 = vunpack.c.l.b16 %v2832
        %v2994 = vunpack.c.l.b16 %v2833
        %v2995 = vunpack.c.l.b16 %v2834
        %v2996 = vunpack.c.l.b16 %v2835
        %v2997 = vunpack.c.l.b16 %v2836
        %v2998 = vunpack.c.l.b16 %v2837
        %v2999 = vunpack.c.l.b16 %v2838
        %v3000 = vunpack.c.l.b16 %v2839
        %v3001 = vpack.c.b16 %v2994, %v2993
        %v3002 = vpack.c.b16 %v2996, %v2995
        %v3003 = vpack.c.b16 %v2998, %v2997
        %v3004 = vpack.c.b16 %v3000, %v2999
        %v3013 = vunpack.c.l.b16 %v2840
        %v3014 = vunpack.c.l.b16 %v2841
        %v3015 = vunpack.c.l.b16 %v2842
        %v3016 = vunpack.c.l.b16 %v2843
        %v3017 = vunpack.c.l.b16 %v2844
        %v3018 = vunpack.c.l.b16 %v2845
        %v3019 = vunpack.c.l.b16 %v2846
        %v3020 = vunpack.c.l.b16 %v2847
        %v3021 = vpack.c.b16 %v3014, %v3013
        %v3022 = vpack.c.b16 %v3016, %v3015
        %v3023 = vpack.c.b16 %v3018, %v3017
        %v3024 = vpack.c.b16 %v3020, %v3019
        %v3030 = vsel %vm423, %v3001, 0
        %v3033 = vsel %vm423, %v3002, 0
        %v3036 = vsel %vm423, %v3003, 0
        %v3039 = vsel %vm423, %v3004, 0
        %3041 = vmatprep.subr.bf16.mxu0 0
        %3042 = vmatpush1.bf16.msra.mxu0 %v3021
        %3043 = vmatprep.subr.bf16.mxu0 0
        %3044 = vmatpush1.bf16.msra.mxu0 %v3022
        %3045 = vmatprep.subr.bf16.mxu0 0
        %3046 = vmatpush1.bf16.msra.mxu0 %v3023
        %3047 = vmatprep.subr.bf16.mxu0 0
        %3048 = vmatpush1.bf16.msra.mxu0 %v3024
        %3049 = vmatprep.subr.bf16.mxu0 0
        %3050 = vmatpush1.bf16.msra.mxu0 0
        %3051 = vmatprep.subr.bf16.mxu0 0
        %3052 = vmatpush1.bf16.msra.mxu0 0
        %3053 = vmatprep.subr.bf16.mxu0 0
        %3054 = vmatpush1.bf16.msra.mxu0 0
        %3055 = vmatprep.subr.bf16.mxu0 0
        %3056 = vmatpush1.bf16.msra.mxu0 0
        %3057 = vmatprep.subr.bf16.mxu0 0
        %3058 = vmatpush1.bf16.msra.mxu0 0
        %3059 = vmatprep.subr.bf16.mxu0 0
        %3060 = vmatpush1.bf16.msra.mxu0 0
        %3061 = vmatprep.subr.bf16.mxu0 0
        %3062 = vmatpush1.bf16.msra.mxu0 0
        %3063 = vmatprep.subr.bf16.mxu0 0
        %3064 = vmatpush1.bf16.msra.mxu0 0
        %3065 = vmatprep.subr.bf16.mxu0 0
        %3066 = vmatpush1.bf16.msra.mxu0 0
        %3067 = vmatprep.subr.bf16.mxu0 0
        %3068 = vmatpush1.bf16.msra.mxu0 0
        %3069 = vmatprep.subr.bf16.mxu0 0
        %3070 = vmatpush1.bf16.msra.mxu0 0
        %3071 = vmatprep.subr.bf16.mxu0 0
        %3072 = vmatpush1.bf16.msra.mxu0 0
        %3073 = vmatprep.mubr.bf16.mxu0 0
        %3074 = vmatmul.mubr.bf16.gmra.mrb[0].mxu0 %v3030
        %v3075 = vpop.f32.mrb[0].mxu0
        %v3076 = vadd.f32 %v2955, %v3075
        %v3077 = vpop.f32.mrb[0].mxu0
        %v3078 = vpop.f32.mrb[0].mxu0
        %v3079 = vadd.f32 %v2958, %v3078
        %v3080 = vpop.f32.mrb[0].mxu0
        %3081 = vmatprep.mubr.bf16.mxu0 0
        %3082 = vmatmul.mubr.bf16.gmra.mrb[0].mxu0 %v3033
        %v3083 = vpop.f32.mrb[0].mxu0
        %v3084 = vadd.f32 %v2963, %v3083
        %v3085 = vpop.f32.mrb[0].mxu0
        %v3086 = vpop.f32.mrb[0].mxu0
        %v3087 = vadd.f32 %v2966, %v3086
        %v3088 = vpop.f32.mrb[0].mxu0
        %3089 = vmatprep.mubr.bf16.mxu0 0
        %3090 = vmatmul.mubr.bf16.gmra.mrb[0].mxu0 %v3036
        %v3091 = vpop.f32.mrb[0].mxu0
        %v3092 = vadd.f32 %v2971, %v3091
        %v3093 = vpop.f32.mrb[0].mxu0
        %v3094 = vpop.f32.mrb[0].mxu0
        %v3095 = vadd.f32 %v2974, %v3094
        %v3096 = vpop.f32.mrb[0].mxu0
        %3097 = vmatprep.mubr.bf16.mxu0 0
        %3098 = vmatmul.mubr.bf16.gmra.mrb[0].mxu0 %v3039
        %v3099 = vpop.f32.mrb[0].mxu0
        %v3100 = vadd.f32 %v2979, %v3099
        %v3101 = vpop.f32.mrb[0].mxu0
        %v3102 = vpop.f32.mrb[0].mxu0
        %v3103 = vadd.f32 %v2982, %v3102
        %v3104 = vpop.f32.mrb[0].mxu0
        %3105 = vdwg.mxu0
        %v3106 = vld [vmem:[%s1754] sm:$0xf]
        %v3107 = vld [vmem:[%s1754 + $0x4] sm:$0xf]
        %v3108 = vld [vmem:[%s1754 + $0x8] sm:$0xf]
        %v3109 = vld [vmem:[%s1754 + $0xc] sm:$0xf]
        %v3110 = vld [vmem:[%s1754 + $0x10] sm:$0xf]
        %v3111 = vld [vmem:[%s1754 + $0x14] sm:$0xf]
        %v3112 = vld [vmem:[%s1754 + $0x18] sm:$0xf]
        %v3113 = vld [vmem:[%s1754 + $0x1c] sm:$0xf]
        %v3114 = vld [vmem:[%s631] sm:$0xf]
        %v3115 = vld [vmem:[%s631 + $0x4] sm:$0xf]
        %v3116 = vld [vmem:[%s631 + $0x8] sm:$0xf]
        %v3117 = vld [vmem:[%s631 + $0xc] sm:$0xf]
        %v3118 = vld [vmem:[%s631 + $0x10] sm:$0xf]
        %v3119 = vld [vmem:[%s631 + $0x14] sm:$0xf]
        %v3120 = vld [vmem:[%s631 + $0x18] sm:$0xf]
        %v3121 = vld [vmem:[%s631 + $0x1c] sm:$0xf]
        %v3130 = vunpack.c.l.b16 %v3106
        %v3131 = vunpack.c.l.b16 %v3107
        %v3132 = vunpack.c.l.b16 %v3108
        %v3133 = vunpack.c.l.b16 %v3109
        %v3134 = vunpack.c.l.b16 %v3110
        %v3135 = vunpack.c.l.b16 %v3111
        %v3136 = vunpack.c.l.b16 %v3112
        %v3137 = vunpack.c.l.b16 %v3113
        %v3138 = vpack.c.b16 %v3131, %v3130
        %v3139 = vpack.c.b16 %v3133, %v3132
        %v3140 = vpack.c.b16 %v3135, %v3134
        %v3141 = vpack.c.b16 %v3137, %v3136
        %v3150 = vunpack.c.l.b16 %v3114
        %v3151 = vunpack.c.l.b16 %v3115
        %v3152 = vunpack.c.l.b16 %v3116
        %v3153 = vunpack.c.l.b16 %v3117
        %v3154 = vunpack.c.l.b16 %v3118
        %v3155 = vunpack.c.l.b16 %v3119
        %v3156 = vunpack.c.l.b16 %v3120
        %v3157 = vunpack.c.l.b16 %v3121
        %v3158 = vpack.c.b16 %v3151, %v3150
        %v3159 = vpack.c.b16 %v3153, %v3152
        %v3160 = vpack.c.b16 %v3155, %v3154
        %v3161 = vpack.c.b16 %v3157, %v3156
        %v3167 = vsel %vm423, %v3138, 0
        %v3170 = vsel %vm423, %v3139, 0
        %v3173 = vsel %vm423, %v3140, 0
        %v3176 = vsel %vm423, %v3141, 0
        %3178 = vmatprep.subr.bf16.mxu0 0
        %3179 = vmatpush1.bf16.msra.mxu0 %v3158
        %3180 = vmatprep.subr.bf16.mxu0 0
        %3181 = vmatpush1.bf16.msra.mxu0 %v3159
        %3182 = vmatprep.subr.bf16.mxu0 0
        %3183 = vmatpush1.bf16.msra.mxu0 %v3160
        %3184 = vmatprep.subr.bf16.mxu0 0
        %3185 = vmatpush1.bf16.msra.mxu0 %v3161
        %3186 = vmatprep.subr.bf16.mxu0 0
        %3187 = vmatpush1.bf16.msra.mxu0 0
        %3188 = vmatprep.subr.bf16.mxu0 0
        %3189 = vmatpush1.bf16.msra.mxu0 0
        %3190 = vmatprep.subr.bf16.mxu0 0
        %3191 = vmatpush1.bf16.msra.mxu0 0
        %3192 = vmatprep.subr.bf16.mxu0 0
        %3193 = vmatpush1.bf16.msra.mxu0 0
        %3194 = vmatprep.subr.bf16.mxu0 0
        %3195 = vmatpush1.bf16.msra.mxu0 0
        %3196 = vmatprep.subr.bf16.mxu0 0
        %3197 = vmatpush1.bf16.msra.mxu0 0
        %3198 = vmatprep.subr.bf16.mxu0 0
        %3199 = vmatpush1.bf16.msra.mxu0 0
        %3200 = vmatprep.subr.bf16.mxu0 0
        %3201 = vmatpush1.bf16.msra.mxu0 0
        %3202 = vmatprep.subr.bf16.mxu0 0
        %3203 = vmatpush1.bf16.msra.mxu0 0
        %3204 = vmatprep.subr.bf16.mxu0 0
        %3205 = vmatpush1.bf16.msra.mxu0 0
        %3206 = vmatprep.subr.bf16.mxu0 0
        %3207 = vmatpush1.bf16.msra.mxu0 0
        %3208 = vmatprep.subr.bf16.mxu0 0
        %3209 = vmatpush1.bf16.msra.mxu0 0
        %3210 = vmatprep.mubr.bf16.mxu0 0
        %3211 = vmatmul.mubr.bf16.gmra.mrb[0].mxu0 %v3167
        %v3212 = vpop.f32.mrb[0].mxu0
        %v3213 = vadd.f32 0.0, %v3212
        %v3214 = vpop.f32.mrb[0].mxu0
        %v3215 = vpop.f32.mrb[0].mxu0
        %v3216 = vadd.f32 0.0, %v3215
        %v3217 = vpop.f32.mrb[0].mxu0
        %3218 = vmatprep.mubr.bf16.mxu0 0
        %3219 = vmatmul.mubr.bf16.gmra.mrb[0].mxu0 %v3170
        %v3220 = vpop.f32.mrb[0].mxu0
        %v3221 = vadd.f32 0.0, %v3220
        %v3222 = vpop.f32.mrb[0].mxu0
        %v3223 = vpop.f32.mrb[0].mxu0
        %v3224 = vadd.f32 0.0, %v3223
        %v3225 = vpop.f32.mrb[0].mxu0
        %3226 = vmatprep.mubr.bf16.mxu0 0
        %3227 = vmatmul.mubr.bf16.gmra.mrb[0].mxu0 %v3173
        %v3228 = vpop.f32.mrb[0].mxu0
        %v3229 = vadd.f32 0.0, %v3228
        %v3230 = vpop.f32.mrb[0].mxu0
        %v3231 = vpop.f32.mrb[0].mxu0
        %v3232 = vadd.f32 0.0, %v3231
        %v3233 = vpop.f32.mrb[0].mxu0
        %3234 = vmatprep.mubr.bf16.mxu0 0
        %3235 = vmatmul.mubr.bf16.gmra.mrb[0].mxu0 %v3176
        %v3236 = vpop.f32.mrb[0].mxu0
        %v3237 = vadd.f32 0.0, %v3236
        %v3238 = vpop.f32.mrb[0].mxu0
        %v3239 = vpop.f32.mrb[0].mxu0
        %v3240 = vadd.f32 0.0, %v3239
        %v3241 = vpop.f32.mrb[0].mxu0
        %3242 = vdwg.mxu0
        %v3243 = vadd.f32 %v3076, %v3213
        %v3244 = vadd.f32 %v3079, %v3216
        %v3245 = vadd.f32 %v3084, %v3221
        %v3246 = vadd.f32 %v3087, %v3224
        %v3247 = vadd.f32 %v3092, %v3229
        %v3248 = vadd.f32 %v3095, %v3232
        %v3249 = vadd.f32 %v3100, %v3237
        %v3250 = vadd.f32 %v3103, %v3240
        %v3251 = vld [vmem:[%s2575] sm:$0xf]
        %v3252 = vld [vmem:[%s2575 + $0x4] sm:$0xf]
        %v3253 = vld [vmem:[%s2575 + $0x8] sm:$0xf]
        %v3254 = vld [vmem:[%s2575 + $0xc] sm:$0xf]
        %v3255 = vld [vmem:[%s2575 + $0x10] sm:$0xf]
        %v3256 = vld [vmem:[%s2575 + $0x14] sm:$0xf]
        %v3257 = vld [vmem:[%s2575 + $0x18] sm:$0xf]
        %v3258 = vld [vmem:[%s2575 + $0x1c] sm:$0xf]
        %v3259 = vld [vmem:[%s778] sm:$0xf]
        %v3260 = vld [vmem:[%s778 + $0x4] sm:$0xf]
        %v3261 = vld [vmem:[%s778 + $0x8] sm:$0xf]
        %v3262 = vld [vmem:[%s778 + $0xc] sm:$0xf]
        %v3263 = vld [vmem:[%s778 + $0x10] sm:$0xf]
        %v3264 = vld [vmem:[%s778 + $0x14] sm:$0xf]
        %v3265 = vld [vmem:[%s778 + $0x18] sm:$0xf]
        %v3266 = vld [vmem:[%s778 + $0x1c] sm:$0xf]
        %v3275 = vunpack.c.l.b16 %v3251
        %v3276 = vunpack.c.l.b16 %v3252
        %v3277 = vunpack.c.l.b16 %v3253
        %v3278 = vunpack.c.l.b16 %v3254
        %v3279 = vunpack.c.l.b16 %v3255
        %v3280 = vunpack.c.l.b16 %v3256
        %v3281 = vunpack.c.l.b16 %v3257
        %v3282 = vunpack.c.l.b16 %v3258
        %v3283 = vpack.c.b16 %v3276, %v3275
        %v3284 = vpack.c.b16 %v3278, %v3277
        %v3285 = vpack.c.b16 %v3280, %v3279
        %v3286 = vpack.c.b16 %v3282, %v3281
        %v3295 = vunpack.c.l.b16 %v3259
        %v3296 = vunpack.c.l.b16 %v3260
        %v3297 = vunpack.c.l.b16 %v3261
        %v3298 = vunpack.c.l.b16 %v3262
        %v3299 = vunpack.c.l.b16 %v3263
        %v3300 = vunpack.c.l.b16 %v3264
        %v3301 = vunpack.c.l.b16 %v3265
        %v3302 = vunpack.c.l.b16 %v3266
        %v3303 = vpack.c.b16 %v3296, %v3295
        %v3304 = vpack.c.b16 %v3298, %v3297
        %v3305 = vpack.c.b16 %v3300, %v3299
        %v3306 = vpack.c.b16 %v3302, %v3301
        %v3312 = vsel %vm423, %v3283, 0
        %v3315 = vsel %vm423, %v3284, 0
        %v3318 = vsel %vm423, %v3285, 0
        %v3321 = vsel %vm423, %v3286, 0
        %3323 = vmatprep.subr.bf16.mxu0 0
        %3324 = vmatpush1.bf16.msra.mxu0 %v3303
        %3325 = vmatprep.subr.bf16.mxu0 0
        %3326 = vmatpush1.bf16.msra.mxu0 %v3304
        %3327 = vmatprep.subr.bf16.mxu0 0
        %3328 = vmatpush1.bf16.msra.mxu0 %v3305
        %3329 = vmatprep.subr.bf16.mxu0 0
        %3330 = vmatpush1.bf16.msra.mxu0 %v3306
        %3331 = vmatprep.subr.bf16.mxu0 0
        %3332 = vmatpush1.bf16.msra.mxu0 0
        %3333 = vmatprep.subr.bf16.mxu0 0
        %3334 = vmatpush1.bf16.msra.mxu0 0
        %3335 = vmatprep.subr.bf16.mxu0 0
        %3336 = vmatpush1.bf16.msra.mxu0 0
        %3337 = vmatprep.subr.bf16.mxu0 0
        %3338 = vmatpush1.bf16.msra.mxu0 0
        %3339 = vmatprep.subr.bf16.mxu0 0
        %3340 = vmatpush1.bf16.msra.mxu0 0
        %3341 = vmatprep.subr.bf16.mxu0 0
        %3342 = vmatpush1.bf16.msra.mxu0 0
        %3343 = vmatprep.subr.bf16.mxu0 0
        %3344 = vmatpush1.bf16.msra.mxu0 0
        %3345 = vmatprep.subr.bf16.mxu0 0
        %3346 = vmatpush1.bf16.msra.mxu0 0
        %3347 = vmatprep.subr.bf16.mxu0 0
        %3348 = vmatpush1.bf16.msra.mxu0 0
        %3349 = vmatprep.subr.bf16.mxu0 0
        %3350 = vmatpush1.bf16.msra.mxu0 0
        %3351 = vmatprep.subr.bf16.mxu0 0
        %3352 = vmatpush1.bf16.msra.mxu0 0
        %3353 = vmatprep.subr.bf16.mxu0 0
        %3354 = vmatpush1.bf16.msra.mxu0 0
        %3355 = vmatprep.mubr.bf16.mxu0 0
        %3356 = vmatmul.mubr.bf16.gmra.mrb[0].mxu0 %v3312
        %v3357 = vpop.f32.mrb[0].mxu0
        %v3358 = vadd.f32 0.0, %v3357
        %v3359 = vpop.f32.mrb[0].mxu0
        %v3360 = vpop.f32.mrb[0].mxu0
        %v3361 = vadd.f32 0.0, %v3360
        %v3362 = vpop.f32.mrb[0].mxu0
        %3363 = vmatprep.mubr.bf16.mxu0 0
        %3364 = vmatmul.mubr.bf16.gmra.mrb[0].mxu0 %v3315
        %v3365 = vpop.f32.mrb[0].mxu0
        %v3366 = vadd.f32 0.0, %v3365
        %v3367 = vpop.f32.mrb[0].mxu0
        %v3368 = vpop.f32.mrb[0].mxu0
        %v3369 = vadd.f32 0.0, %v3368
        %v3370 = vpop.f32.mrb[0].mxu0
        %3371 = vmatprep.mubr.bf16.mxu0 0
        %3372 = vmatmul.mubr.bf16.gmra.mrb[0].mxu0 %v3318
        %v3373 = vpop.f32.mrb[0].mxu0
        %v3374 = vadd.f32 0.0, %v3373
        %v3375 = vpop.f32.mrb[0].mxu0
        %v3376 = vpop.f32.mrb[0].mxu0
        %v3377 = vadd.f32 0.0, %v3376
        %v3378 = vpop.f32.mrb[0].mxu0
        %3379 = vmatprep.mubr.bf16.mxu0 0
        %3380 = vmatmul.mubr.bf16.gmra.mrb[0].mxu0 %v3321
        %v3381 = vpop.f32.mrb[0].mxu0
        %v3382 = vadd.f32 0.0, %v3381
        %v3383 = vpop.f32.mrb[0].mxu0
        %v3384 = vpop.f32.mrb[0].mxu0
        %v3385 = vadd.f32 0.0, %v3384
        %v3386 = vpop.f32.mrb[0].mxu0
        %3387 = vdwg.mxu0
        %v3388 = vadd.f32 %v3243, %v3358
        %v3389 = vadd.f32 %v3244, %v3361
        %v3390 = vadd.f32 %v3245, %v3366
        %v3391 = vadd.f32 %v3246, %v3369
        %v3392 = vadd.f32 %v3247, %v3374
        %v3393 = vadd.f32 %v3248, %v3377
        %v3394 = vadd.f32 %v3249, %v3382
        %v3395 = vadd.f32 %v3250, %v3385
        %s3396 = scalar_lea.vmem %s290, 224 [#allocation4]
        %v3397 = vld [vmem:[%s3396] sm:$0xf]
        %v3398 = vld [vmem:[%s3396 + $0x4] sm:$0xf]
        %v3399 = vld [vmem:[%s3396 + $0x8] sm:$0xf]
        %v3400 = vld [vmem:[%s3396 + $0xc] sm:$0xf]
        %v3401 = vld [vmem:[%s3396 + $0x10] sm:$0xf]
        %v3402 = vld [vmem:[%s3396 + $0x14] sm:$0xf]
        %v3403 = vld [vmem:[%s3396 + $0x18] sm:$0xf]
        %v3404 = vld [vmem:[%s3396 + $0x1c] sm:$0xf]
        %v3405 = vld [vmem:[%s925] sm:$0xf]
        %v3406 = vld [vmem:[%s925 + $0x4] sm:$0xf]
        %v3407 = vld [vmem:[%s925 + $0x8] sm:$0xf]
        %v3408 = vld [vmem:[%s925 + $0xc] sm:$0xf]
        %v3409 = vld [vmem:[%s925 + $0x10] sm:$0xf]
        %v3410 = vld [vmem:[%s925 + $0x14] sm:$0xf]
        %v3411 = vld [vmem:[%s925 + $0x18] sm:$0xf]
        %v3412 = vld [vmem:[%s925 + $0x1c] sm:$0xf]
        %v3421 = vunpack.c.l.b16 %v3397
        %v3422 = vunpack.c.l.b16 %v3398
        %v3423 = vunpack.c.l.b16 %v3399
        %v3424 = vunpack.c.l.b16 %v3400
        %v3425 = vunpack.c.l.b16 %v3401
        %v3426 = vunpack.c.l.b16 %v3402
        %v3427 = vunpack.c.l.b16 %v3403
        %v3428 = vunpack.c.l.b16 %v3404
        %v3429 = vpack.c.b16 %v3422, %v3421
        %v3430 = vpack.c.b16 %v3424, %v3423
        %v3431 = vpack.c.b16 %v3426, %v3425
        %v3432 = vpack.c.b16 %v3428, %v3427
        %v3441 = vunpack.c.l.b16 %v3405
        %v3442 = vunpack.c.l.b16 %v3406
        %v3443 = vunpack.c.l.b16 %v3407
        %v3444 = vunpack.c.l.b16 %v3408
        %v3445 = vunpack.c.l.b16 %v3409
        %v3446 = vunpack.c.l.b16 %v3410
        %v3447 = vunpack.c.l.b16 %v3411
        %v3448 = vunpack.c.l.b16 %v3412
        %v3449 = vpack.c.b16 %v3442, %v3441
        %v3450 = vpack.c.b16 %v3444, %v3443
        %v3451 = vpack.c.b16 %v3446, %v3445
        %v3452 = vpack.c.b16 %v3448, %v3447
        %v3458 = vsel %vm423, %v3429, 0
        %v3461 = vsel %vm423, %v3430, 0
        %v3464 = vsel %vm423, %v3431, 0
        %v3467 = vsel %vm423, %v3432, 0
        %3469 = vmatprep.subr.bf16.mxu0 0
        %3470 = vmatpush1.bf16.msra.mxu0 %v3449
        %3471 = vmatprep.subr.bf16.mxu0 0
        %3472 = vmatpush1.bf16.msra.mxu0 %v3450
        %3473 = vmatprep.subr.bf16.mxu0 0
        %3474 = vmatpush1.bf16.msra.mxu0 %v3451
        %3475 = vmatprep.subr.bf16.mxu0 0
        %3476 = vmatpush1.bf16.msra.mxu0 %v3452
        %3477 = vmatprep.subr.bf16.mxu0 0
        %3478 = vmatpush1.bf16.msra.mxu0 0
        %3479 = vmatprep.subr.bf16.mxu0 0
        %3480 = vmatpush1.bf16.msra.mxu0 0
        %3481 = vmatprep.subr.bf16.mxu0 0
        %3482 = vmatpush1.bf16.msra.mxu0 0
        %3483 = vmatprep.subr.bf16.mxu0 0
        %3484 = vmatpush1.bf16.msra.mxu0 0
        %3485 = vmatprep.subr.bf16.mxu0 0
        %3486 = vmatpush1.bf16.msra.mxu0 0
        %3487 = vmatprep.subr.bf16.mxu0 0
        %3488 = vmatpush1.bf16.msra.mxu0 0
        %3489 = vmatprep.subr.bf16.mxu0 0
        %3490 = vmatpush1.bf16.msra.mxu0 0
        %3491 = vmatprep.subr.bf16.mxu0 0
        %3492 = vmatpush1.bf16.msra.mxu0 0
        %3493 = vmatprep.subr.bf16.mxu0 0
        %3494 = vmatpush1.bf16.msra.mxu0 0
        %3495 = vmatprep.subr.bf16.mxu0 0
        %3496 = vmatpush1.bf16.msra.mxu0 0
        %3497 = vmatprep.subr.bf16.mxu0 0
        %3498 = vmatpush1.bf16.msra.mxu0 0
        %3499 = vmatprep.subr.bf16.mxu0 0
        %3500 = vmatpush1.bf16.msra.mxu0 0
        %3501 = vmatprep.mubr.bf16.mxu0 0
        %3502 = vmatmul.mubr.bf16.gmra.mrb[0].mxu0 %v3458
        %v3503 = vpop.f32.mrb[0].mxu0
        %v3504 = vadd.f32 0.0, %v3503
        %v3505 = vpop.f32.mrb[0].mxu0
        %v3506 = vpop.f32.mrb[0].mxu0
        %v3507 = vadd.f32 0.0, %v3506
        %v3508 = vpop.f32.mrb[0].mxu0
        %3509 = vmatprep.mubr.bf16.mxu0 0
        %3510 = vmatmul.mubr.bf16.gmra.mrb[0].mxu0 %v3461
        %v3511 = vpop.f32.mrb[0].mxu0
        %v3512 = vadd.f32 0.0, %v3511
        %v3513 = vpop.f32.mrb[0].mxu0
        %v3514 = vpop.f32.mrb[0].mxu0
        %v3515 = vadd.f32 0.0, %v3514
        %v3516 = vpop.f32.mrb[0].mxu0
        %3517 = vmatprep.mubr.bf16.mxu0 0
        %3518 = vmatmul.mubr.bf16.gmra.mrb[0].mxu0 %v3464
        %v3519 = vpop.f32.mrb[0].mxu0
        %v3520 = vadd.f32 0.0, %v3519
        %v3521 = vpop.f32.mrb[0].mxu0
        %v3522 = vpop.f32.mrb[0].mxu0
        %v3523 = vadd.f32 0.0, %v3522
        %v3524 = vpop.f32.mrb[0].mxu0
        %3525 = vmatprep.mubr.bf16.mxu0 0
        %3526 = vmatmul.mubr.bf16.gmra.mrb[0].mxu0 %v3467
        %v3527 = vpop.f32.mrb[0].mxu0
        %v3528 = vadd.f32 0.0, %v3527
        %v3529 = vpop.f32.mrb[0].mxu0
        %v3530 = vpop.f32.mrb[0].mxu0
        %v3531 = vadd.f32 0.0, %v3530
        %v3532 = vpop.f32.mrb[0].mxu0
        %3533 = vdwg.mxu0
        %v3534 = vadd.f32 %v3388, %v3504
        %v3535 = vadd.f32 %v3389, %v3507
        %v3536 = vadd.f32 %v3390, %v3512
        %v3537 = vadd.f32 %v3391, %v3515
        %v3538 = vadd.f32 %v3392, %v3520
        %v3539 = vadd.f32 %v3393, %v3523
        %v3540 = vadd.f32 %v3394, %v3528
        %v3541 = vadd.f32 %v3395, %v3531
        %v3542 = vadd.f32 %v3534, %v1067
        %v3543 = vadd.f32 %v3535, %v1067
        %v3544 = vadd.f32 %v3536, %v1067
        %v3545 = vadd.f32 %v3537, %v1067
        %v3546 = vadd.f32 %v3538, %v1067
        %v3547 = vadd.f32 %v3539, %v1067
        %v3548 = vadd.f32 %v3540, %v1067
        %v3549 = vadd.f32 %v3541, %v1067
        %v3550 = vmax.f32 %v3542, 0.0
        %v3551 = vmax.f32 %v3543, 0.0
        %v3552 = vmax.f32 %v3544, 0.0
        %v3553 = vmax.f32 %v3545, 0.0
        %v3554 = vmax.f32 %v3546, 0.0
        %v3555 = vmax.f32 %v3547, 0.0
        %v3556 = vmax.f32 %v3548, 0.0
        %v3557 = vmax.f32 %v3549, 0.0
        %3558 = vst.msk [vmem:[#allocation2] sm:$0xff] %vm1085, %v3550
        %3559 = vst.msk [vmem:[#allocation2 + $0x8] sm:$0xff] %vm1085, %v3551
        %3560 = vst.msk [vmem:[#allocation2 + $0x10] sm:$0xff] %vm1085, %v3552
        %3561 = vst.msk [vmem:[#allocation2 + $0x18] sm:$0xff] %vm1085, %v3553
        %3562 = vst.msk [vmem:[#allocation2 + $0x20] sm:$0xff] %vm1085, %v3554
        %3563 = vst.msk [vmem:[#allocation2 + $0x28] sm:$0xff] %vm1085, %v3555
        %3564 = vst.msk [vmem:[#allocation2 + $0x30] sm:$0xff] %vm1085, %v3556
        %3565 = vst.msk [vmem:[#allocation2 + $0x38] sm:$0xff] %vm1085, %v3557
        %v3566 = vld [vmem:[#allocation2] ss:$2 sm:$0xff]
        %v3567 = vld [vmem:[%s1095] ss:$2 sm:$0xff]
        %v3568 = vld [vmem:[%s1097] ss:$2 sm:$0xff]
        %v3569 = vld [vmem:[%s1099] ss:$2 sm:$0xff]
        %v3570 = vld [vmem:[%s1101] ss:$2 sm:$0xff]
        %v3571 = vld [vmem:[%s1103] ss:$2 sm:$0xff]
        %v3572 = vld [vmem:[%s1105] ss:$2 sm:$0xff]
        %v3573 = vld [vmem:[%s1107] ss:$2 sm:$0xff]
        %v3574 = vmax.f32 %v3566, %v3570
        %v3575 = vmax.f32 %v3567, %v3571
        %v3576 = vmax.f32 %v3568, %v3572
        %v3577 = vmax.f32 %v3569, %v3573
        %v3582 = vrot.slane %v3570, 7
        %v3583 = vrot.slane %v3571, 7
        %v3584 = vsel %vm1117, %v3582, %v3583
        %v3585 = vrot.slane %v3572, 7
        %v3586 = vsel %vm1117, %v3583, %v3585
        %v3587 = vrot.slane %v3573, 7
        %v3588 = vsel %vm1117, %v3585, %v3587
        %v3593 = vsel %vm1117, 0.0, %v3582
        %v3594 = vmul.f32 %v3593, %v341
        %v3595 = vmul.f32 %v3584, %v342
        %v3596 = vmul.f32 %v3586, %v343
        %v3597 = vmul.f32 %v3588, %v344
        %v3598 = vmax.f32 %v3574, %v3594
        %v3599 = vmax.f32 %v3575, %v3595
        %v3600 = vmax.f32 %v3576, %v3596
        %v3601 = vmax.f32 %v3577, %v3597
        %3602 = vst.msk [vmem:[#allocation3] sm:$0xff] %vm1085, %v3598
        %3603 = vst.msk [vmem:[#allocation3 + $0x8] sm:$0xff] %vm1085, %v3599
        %3604 = vst.msk [vmem:[#allocation3 + $0x10] sm:$0xff] %vm1085, %v3600
        %3605 = vst.msk [vmem:[#allocation3 + $0x18] sm:$0xff] %vm1085, %v3601
        %v3606 = vld [vmem:[#allocation3] sm:$0xf]
        %v3607 = vld [vmem:[#allocation3 + $0x4] sm:$0xf]
        %v3608 = vmax.f32 %v3606, %v3607
        %v3609 = vsel %vm1145, %v3608, 0.0
        %v3610 = vrot.slane %v3609, 4
        %v3611 = vadd.f32 %v3609, %v3610
        %v3612 = vrot.slane %v3611, 2
        %v3613 = vadd.f32 %v3611, %v3612
        %v3614 = vrot.slane %v3613, 1
        %v3615 = vadd.f32 %v3613, %v3614
        %v3616 = vadd.f32 %v3615, 0.0
        %v3617 = vld [vmem:[#allocation3 + $0x8] sm:$0xf]
        %v3618 = vld [vmem:[#allocation3 + $0xc] sm:$0xf]
        %v3619 = vmax.f32 %v3617, %v3618
        %v3620 = vmax.f32 %v3619, %v3607
        %v3621 = vsel %vm1145, %v3620, 0.0
        %v3622 = vrot.slane %v3621, 4
        %v3623 = vadd.f32 %v3621, %v3622
        %v3624 = vrot.slane %v3623, 2
        %v3625 = vadd.f32 %v3623, %v3624
        %v3626 = vrot.slane %v3625, 1
        %v3627 = vadd.f32 %v3625, %v3626
        %v3628 = vadd.f32 %v3616, %v3627
        %v3629 = vld [vmem:[#allocation3 + $0x10] sm:$0xf]
        %v3630 = vld [vmem:[#allocation3 + $0x14] sm:$0xf]
        %v3631 = vmax.f32 %v3629, %v3630
        %v3632 = vmax.f32 %v3631, %v3618
        %v3633 = vsel %vm1145, %v3632, 0.0
        %v3634 = vrot.slane %v3633, 4
        %v3635 = vadd.f32 %v3633, %v3634
        %v3636 = vrot.slane %v3635, 2
        %v3637 = vadd.f32 %v3635, %v3636
        %v3638 = vrot.slane %v3637, 1
        %v3639 = vadd.f32 %v3637, %v3638
        %v3640 = vadd.f32 %v3628, %v3639
        %v3641 = vld [vmem:[#allocation3 + $0x18] sm:$0xf]
        %v3642 = vld [vmem:[#allocation3 + $0x1c] sm:$0xf]
        %v3643 = vmax.f32 %v3641, %v3642
        %v3644 = vmax.f32 %v3643, %v3630
        %v3645 = vsel %vm1145, %v3644, 0.0
        %v3646 = vrot.slane %v3645, 4
        %v3647 = vadd.f32 %v3645, %v3646
        %v3648 = vrot.slane %v3647, 2
        %v3649 = vadd.f32 %v3647, %v3648
        %v3650 = vrot.slane %v3649, 1
        %v3651 = vadd.f32 %v3649, %v3650
        %v3652 = vadd.f32 %v3640, %v3651
        %v3653 = vld [vmem:[%s916] sm:$0xf]
        %v3654 = vld [vmem:[%s916 + $0x4] sm:$0xf]
        %v3655 = vld [vmem:[%s916 + $0x8] sm:$0xf]
        %v3656 = vld [vmem:[%s916 + $0xc] sm:$0xf]
        %v3657 = vld [vmem:[%s916 + $0x10] sm:$0xf]
        %v3658 = vld [vmem:[%s916 + $0x14] sm:$0xf]
        %v3659 = vld [vmem:[%s916 + $0x18] sm:$0xf]
        %v3660 = vld [vmem:[%s916 + $0x1c] sm:$0xf]
        %v3661 = vld [vmem:[#allocation7] sm:$0xf]
        %v3662 = vld [vmem:[#allocation7 + $0x4] sm:$0xf]
        %v3663 = vld [vmem:[#allocation7 + $0x8] sm:$0xf]
        %v3664 = vld [vmem:[#allocation7 + $0xc] sm:$0xf]
        %v3665 = vld [vmem:[#allocation7 + $0x10] sm:$0xf]
        %v3666 = vld [vmem:[#allocation7 + $0x14] sm:$0xf]
        %v3667 = vld [vmem:[#allocation7 + $0x18] sm:$0xf]
        %v3668 = vld [vmem:[#allocation7 + $0x1c] sm:$0xf]
        %v3669 = vld [vmem:[%s1754] sm:$0xf]
        %v3670 = vld [vmem:[%s1754 + $0x4] sm:$0xf]
        %v3671 = vld [vmem:[%s1754 + $0x8] sm:$0xf]
        %v3672 = vld [vmem:[%s1754 + $0xc] sm:$0xf]
        %v3673 = vld [vmem:[%s1754 + $0x10] sm:$0xf]
        %v3674 = vld [vmem:[%s1754 + $0x14] sm:$0xf]
        %v3675 = vld [vmem:[%s1754 + $0x18] sm:$0xf]
        %v3676 = vld [vmem:[%s1754 + $0x1c] sm:$0xf]
        %v3677 = vld [vmem:[%s370] sm:$0xf]
        %v3678 = vld [vmem:[%s370 + $0x4] sm:$0xf]
        %v3679 = vld [vmem:[%s370 + $0x8] sm:$0xf]
        %v3680 = vld [vmem:[%s370 + $0xc] sm:$0xf]
        %v3681 = vld [vmem:[%s370 + $0x10] sm:$0xf]
        %v3682 = vld [vmem:[%s370 + $0x14] sm:$0xf]
        %v3683 = vld [vmem:[%s370 + $0x18] sm:$0xf]
        %v3684 = vld [vmem:[%s370 + $0x1c] sm:$0xf]
        %v3693 = vunpack.c.l.b16 %v3669
        %v3694 = vunpack.c.l.b16 %v3670
        %v3695 = vunpack.c.l.b16 %v3671
        %v3696 = vunpack.c.l.b16 %v3672
        %v3697 = vunpack.c.l.b16 %v3673
        %v3698 = vunpack.c.l.b16 %v3674
        %v3699 = vunpack.c.l.b16 %v3675
        %v3700 = vunpack.c.l.b16 %v3676
        %v3701 = vpack.c.b16 %v3694, %v3693
        %v3702 = vpack.c.b16 %v3696, %v3695
        %v3703 = vpack.c.b16 %v3698, %v3697
        %v3704 = vpack.c.b16 %v3700, %v3699
        %v3713 = vunpack.c.l.b16 %v3677
        %v3714 = vunpack.c.l.b16 %v3678
        %v3715 = vunpack.c.l.b16 %v3679
        %v3716 = vunpack.c.l.b16 %v3680
        %v3717 = vunpack.c.l.b16 %v3681
        %v3718 = vunpack.c.l.b16 %v3682
        %v3719 = vunpack.c.l.b16 %v3683
        %v3720 = vunpack.c.l.b16 %v3684
        %v3721 = vpack.c.b16 %v3714, %v3713
        %v3722 = vpack.c.b16 %v3716, %v3715
        %v3723 = vpack.c.b16 %v3718, %v3717
        %v3724 = vpack.c.b16 %v3720, %v3719
        %v3730 = vsel %vm423, %v3701, 0
        %v3733 = vsel %vm423, %v3702, 0
        %v3736 = vsel %vm423, %v3703, 0
        %v3739 = vsel %vm423, %v3704, 0
        %3741 = vmatprep.subr.bf16.mxu0 0
        %3742 = vmatpush1.bf16.msra.mxu0 %v3721
        %3743 = vmatprep.subr.bf16.mxu0 0
        %3744 = vmatpush1.bf16.msra.mxu0 %v3722
        %3745 = vmatprep.subr.bf16.mxu0 0
        %3746 = vmatpush1.bf16.msra.mxu0 %v3723
        %3747 = vmatprep.subr.bf16.mxu0 0
        %3748 = vmatpush1.bf16.msra.mxu0 %v3724
        %3749 = vmatprep.subr.bf16.mxu0 0
        %3750 = vmatpush1.bf16.msra.mxu0 0
        %3751 = vmatprep.subr.bf16.mxu0 0
        %3752 = vmatpush1.bf16.msra.mxu0 0
        %3753 = vmatprep.subr.bf16.mxu0 0
        %3754 = vmatpush1.bf16.msra.mxu0 0
        %3755 = vmatprep.subr.bf16.mxu0 0
        %3756 = vmatpush1.bf16.msra.mxu0 0
        %3757 = vmatprep.subr.bf16.mxu0 0
        %3758 = vmatpush1.bf16.msra.mxu0 0
        %3759 = vmatprep.subr.bf16.mxu0 0
        %3760 = vmatpush1.bf16.msra.mxu0 0
        %3761 = vmatprep.subr.bf16.mxu0 0
        %3762 = vmatpush1.bf16.msra.mxu0 0
        %3763 = vmatprep.subr.bf16.mxu0 0
        %3764 = vmatpush1.bf16.msra.mxu0 0
        %3765 = vmatprep.subr.bf16.mxu0 0
        %3766 = vmatpush1.bf16.msra.mxu0 0
        %3767 = vmatprep.subr.bf16.mxu0 0
        %3768 = vmatpush1.bf16.msra.mxu0 0
        %3769 = vmatprep.subr.bf16.mxu0 0
        %3770 = vmatpush1.bf16.msra.mxu0 0
        %3771 = vmatprep.subr.bf16.mxu0 0
        %3772 = vmatpush1.bf16.msra.mxu0 0
        %3773 = vmatprep.mubr.bf16.mxu0 0
        %3774 = vmatmul.mubr.bf16.gmra.mrb[0].mxu0 %v3730
        %v3775 = vpop.f32.mrb[0].mxu0
        %v3776 = vadd.f32 0.0, %v3775
        %v3777 = vpop.f32.mrb[0].mxu0
        %v3778 = vpop.f32.mrb[0].mxu0
        %v3779 = vadd.f32 0.0, %v3778
        %v3780 = vpop.f32.mrb[0].mxu0
        %3781 = vmatprep.mubr.bf16.mxu0 0
        %3782 = vmatmul.mubr.bf16.gmra.mrb[0].mxu0 %v3733
        %v3783 = vpop.f32.mrb[0].mxu0
        %v3784 = vadd.f32 0.0, %v3783
        %v3785 = vpop.f32.mrb[0].mxu0
        %v3786 = vpop.f32.mrb[0].mxu0
        %v3787 = vadd.f32 0.0, %v3786
        %v3788 = vpop.f32.mrb[0].mxu0
        %3789 = vmatprep.mubr.bf16.mxu0 0
        %3790 = vmatmul.mubr.bf16.gmra.mrb[0].mxu0 %v3736
        %v3791 = vpop.f32.mrb[0].mxu0
        %v3792 = vadd.f32 0.0, %v3791
        %v3793 = vpop.f32.mrb[0].mxu0
        %v3794 = vpop.f32.mrb[0].mxu0
        %v3795 = vadd.f32 0.0, %v3794
        %v3796 = vpop.f32.mrb[0].mxu0
        %3797 = vmatprep.mubr.bf16.mxu0 0
        %3798 = vmatmul.mubr.bf16.gmra.mrb[0].mxu0 %v3739
        %v3799 = vpop.f32.mrb[0].mxu0
        %v3800 = vadd.f32 0.0, %v3799
        %v3801 = vpop.f32.mrb[0].mxu0
        %v3802 = vpop.f32.mrb[0].mxu0
        %v3803 = vadd.f32 0.0, %v3802
        %v3804 = vpop.f32.mrb[0].mxu0
        %3805 = vdwg.mxu0
        %v3814 = vunpack.c.l.b16 %v3653
        %v3815 = vunpack.c.l.b16 %v3654
        %v3816 = vunpack.c.l.b16 %v3655
        %v3817 = vunpack.c.l.b16 %v3656
        %v3818 = vunpack.c.l.b16 %v3657
        %v3819 = vunpack.c.l.b16 %v3658
        %v3820 = vunpack.c.l.b16 %v3659
        %v3821 = vunpack.c.l.b16 %v3660
        %v3822 = vpack.c.b16 %v3815, %v3814
        %v3823 = vpack.c.b16 %v3817, %v3816
        %v3824 = vpack.c.b16 %v3819, %v3818
        %v3825 = vpack.c.b16 %v3821, %v3820
        %v3834 = vunpack.c.l.b16 %v3661
        %v3835 = vunpack.c.l.b16 %v3662
        %v3836 = vunpack.c.l.b16 %v3663
        %v3837 = vunpack.c.l.b16 %v3664
        %v3838 = vunpack.c.l.b16 %v3665
        %v3839 = vunpack.c.l.b16 %v3666
        %v3840 = vunpack.c.l.b16 %v3667
        %v3841 = vunpack.c.l.b16 %v3668
        %v3842 = vpack.c.b16 %v3835, %v3834
        %v3843 = vpack.c.b16 %v3837, %v3836
        %v3844 = vpack.c.b16 %v3839, %v3838
        %v3845 = vpack.c.b16 %v3841, %v3840
        %v3851 = vsel %vm423, %v3822, 0
        %v3854 = vsel %vm423, %v3823, 0
        %v3857 = vsel %vm423, %v3824, 0
        %v3860 = vsel %vm423, %v3825, 0
        %3862 = vmatprep.subr.bf16.mxu0 0
        %3863 = vmatpush1.bf16.msra.mxu0 %v3842
        %3864 = vmatprep.subr.bf16.mxu0 0
        %3865 = vmatpush1.bf16.msra.mxu0 %v3843
        %3866 = vmatprep.subr.bf16.mxu0 0
        %3867 = vmatpush1.bf16.msra.mxu0 %v3844
        %3868 = vmatprep.subr.bf16.mxu0 0
        %3869 = vmatpush1.bf16.msra.mxu0 %v3845
        %3870 = vmatprep.subr.bf16.mxu0 0
        %3871 = vmatpush1.bf16.msra.mxu0 0
        %3872 = vmatprep.subr.bf16.mxu0 0
        %3873 = vmatpush1.bf16.msra.mxu0 0
        %3874 = vmatprep.subr.bf16.mxu0 0
        %3875 = vmatpush1.bf16.msra.mxu0 0
        %3876 = vmatprep.subr.bf16.mxu0 0
        %3877 = vmatpush1.bf16.msra.mxu0 0
        %3878 = vmatprep.subr.bf16.mxu0 0
        %3879 = vmatpush1.bf16.msra.mxu0 0
        %3880 = vmatprep.subr.bf16.mxu0 0
        %3881 = vmatpush1.bf16.msra.mxu0 0
        %3882 = vmatprep.subr.bf16.mxu0 0
        %3883 = vmatpush1.bf16.msra.mxu0 0
        %3884 = vmatprep.subr.bf16.mxu0 0
        %3885 = vmatpush1.bf16.msra.mxu0 0
        %3886 = vmatprep.subr.bf16.mxu0 0
        %3887 = vmatpush1.bf16.msra.mxu0 0
        %3888 = vmatprep.subr.bf16.mxu0 0
        %3889 = vmatpush1.bf16.msra.mxu0 0
        %3890 = vmatprep.subr.bf16.mxu0 0
        %3891 = vmatpush1.bf16.msra.mxu0 0
        %3892 = vmatprep.subr.bf16.mxu0 0
        %3893 = vmatpush1.bf16.msra.mxu0 0
        %3894 = vmatprep.mubr.bf16.mxu0 0
        %3895 = vmatmul.mubr.bf16.gmra.mrb[0].mxu0 %v3851
        %v3896 = vpop.f32.mrb[0].mxu0
        %v3897 = vadd.f32 %v3776, %v3896
        %v3898 = vpop.f32.mrb[0].mxu0
        %v3899 = vpop.f32.mrb[0].mxu0
        %v3900 = vadd.f32 %v3779, %v3899
        %v3901 = vpop.f32.mrb[0].mxu0
        %3902 = vmatprep.mubr.bf16.mxu0 0
        %3903 = vmatmul.mubr.bf16.gmra.mrb[0].mxu0 %v3854
        %v3904 = vpop.f32.mrb[0].mxu0
        %v3905 = vadd.f32 %v3784, %v3904
        %v3906 = vpop.f32.mrb[0].mxu0
        %v3907 = vpop.f32.mrb[0].mxu0
        %v3908 = vadd.f32 %v3787, %v3907
        %v3909 = vpop.f32.mrb[0].mxu0
        %3910 = vmatprep.mubr.bf16.mxu0 0
        %3911 = vmatmul.mubr.bf16.gmra.mrb[0].mxu0 %v3857
        %v3912 = vpop.f32.mrb[0].mxu0
        %v3913 = vadd.f32 %v3792, %v3912
        %v3914 = vpop.f32.mrb[0].mxu0
        %v3915 = vpop.f32.mrb[0].mxu0
        %v3916 = vadd.f32 %v3795, %v3915
        %v3917 = vpop.f32.mrb[0].mxu0
        %3918 = vmatprep.mubr.bf16.mxu0 0
        %3919 = vmatmul.mubr.bf16.gmra.mrb[0].mxu0 %v3860
        %v3920 = vpop.f32.mrb[0].mxu0
        %v3921 = vadd.f32 %v3800, %v3920
        %v3922 = vpop.f32.mrb[0].mxu0
        %v3923 = vpop.f32.mrb[0].mxu0
        %v3924 = vadd.f32 %v3803, %v3923
        %v3925 = vpop.f32.mrb[0].mxu0
        %3926 = vdwg.mxu0
        %v3927 = vld [vmem:[%s2575] sm:$0xf]
        %v3928 = vld [vmem:[%s2575 + $0x4] sm:$0xf]
        %v3929 = vld [vmem:[%s2575 + $0x8] sm:$0xf]
        %v3930 = vld [vmem:[%s2575 + $0xc] sm:$0xf]
        %v3931 = vld [vmem:[%s2575 + $0x10] sm:$0xf]
        %v3932 = vld [vmem:[%s2575 + $0x14] sm:$0xf]
        %v3933 = vld [vmem:[%s2575 + $0x18] sm:$0xf]
        %v3934 = vld [vmem:[%s2575 + $0x1c] sm:$0xf]
        %v3935 = vld [vmem:[%s631] sm:$0xf]
        %v3936 = vld [vmem:[%s631 + $0x4] sm:$0xf]
        %v3937 = vld [vmem:[%s631 + $0x8] sm:$0xf]
        %v3938 = vld [vmem:[%s631 + $0xc] sm:$0xf]
        %v3939 = vld [vmem:[%s631 + $0x10] sm:$0xf]
        %v3940 = vld [vmem:[%s631 + $0x14] sm:$0xf]
        %v3941 = vld [vmem:[%s631 + $0x18] sm:$0xf]
        %v3942 = vld [vmem:[%s631 + $0x1c] sm:$0xf]
        %v3951 = vunpack.c.l.b16 %v3927
        %v3952 = vunpack.c.l.b16 %v3928
        %v3953 = vunpack.c.l.b16 %v3929
        %v3954 = vunpack.c.l.b16 %v3930
        %v3955 = vunpack.c.l.b16 %v3931
        %v3956 = vunpack.c.l.b16 %v3932
        %v3957 = vunpack.c.l.b16 %v3933
        %v3958 = vunpack.c.l.b16 %v3934
        %v3959 = vpack.c.b16 %v3952, %v3951
        %v3960 = vpack.c.b16 %v3954, %v3953
        %v3961 = vpack.c.b16 %v3956, %v3955
        %v3962 = vpack.c.b16 %v3958, %v3957
        %v3971 = vunpack.c.l.b16 %v3935
        %v3972 = vunpack.c.l.b16 %v3936
        %v3973 = vunpack.c.l.b16 %v3937
        %v3974 = vunpack.c.l.b16 %v3938
        %v3975 = vunpack.c.l.b16 %v3939
        %v3976 = vunpack.c.l.b16 %v3940
        %v3977 = vunpack.c.l.b16 %v3941
        %v3978 = vunpack.c.l.b16 %v3942
        %v3979 = vpack.c.b16 %v3972, %v3971
        %v3980 = vpack.c.b16 %v3974, %v3973
        %v3981 = vpack.c.b16 %v3976, %v3975
        %v3982 = vpack.c.b16 %v3978, %v3977
        %v3988 = vsel %vm423, %v3959, 0
        %v3991 = vsel %vm423, %v3960, 0
        %v3994 = vsel %vm423, %v3961, 0
        %v3997 = vsel %vm423, %v3962, 0
        %3999 = vmatprep.subr.bf16.mxu0 0
        %4000 = vmatpush1.bf16.msra.mxu0 %v3979
        %4001 = vmatprep.subr.bf16.mxu0 0
        %4002 = vmatpush1.bf16.msra.mxu0 %v3980
        %4003 = vmatprep.subr.bf16.mxu0 0
        %4004 = vmatpush1.bf16.msra.mxu0 %v3981
        %4005 = vmatprep.subr.bf16.mxu0 0
        %4006 = vmatpush1.bf16.msra.mxu0 %v3982
        %4007 = vmatprep.subr.bf16.mxu0 0
        %4008 = vmatpush1.bf16.msra.mxu0 0
        %4009 = vmatprep.subr.bf16.mxu0 0
        %4010 = vmatpush1.bf16.msra.mxu0 0
        %4011 = vmatprep.subr.bf16.mxu0 0
        %4012 = vmatpush1.bf16.msra.mxu0 0
        %4013 = vmatprep.subr.bf16.mxu0 0
        %4014 = vmatpush1.bf16.msra.mxu0 0
        %4015 = vmatprep.subr.bf16.mxu0 0
        %4016 = vmatpush1.bf16.msra.mxu0 0
        %4017 = vmatprep.subr.bf16.mxu0 0
        %4018 = vmatpush1.bf16.msra.mxu0 0
        %4019 = vmatprep.subr.bf16.mxu0 0
        %4020 = vmatpush1.bf16.msra.mxu0 0
        %4021 = vmatprep.subr.bf16.mxu0 0
        %4022 = vmatpush1.bf16.msra.mxu0 0
        %4023 = vmatprep.subr.bf16.mxu0 0
        %4024 = vmatpush1.bf16.msra.mxu0 0
        %4025 = vmatprep.subr.bf16.mxu0 0
        %4026 = vmatpush1.bf16.msra.mxu0 0
        %4027 = vmatprep.subr.bf16.mxu0 0
        %4028 = vmatpush1.bf16.msra.mxu0 0
        %4029 = vmatprep.subr.bf16.mxu0 0
        %4030 = vmatpush1.bf16.msra.mxu0 0
        %4031 = vmatprep.mubr.bf16.mxu0 0
        %4032 = vmatmul.mubr.bf16.gmra.mrb[0].mxu0 %v3988
        %v4033 = vpop.f32.mrb[0].mxu0
        %v4034 = vadd.f32 0.0, %v4033
        %v4035 = vpop.f32.mrb[0].mxu0
        %v4036 = vpop.f32.mrb[0].mxu0
        %v4037 = vadd.f32 0.0, %v4036
        %v4038 = vpop.f32.mrb[0].mxu0
        %4039 = vmatprep.mubr.bf16.mxu0 0
        %4040 = vmatmul.mubr.bf16.gmra.mrb[0].mxu0 %v3991
        %v4041 = vpop.f32.mrb[0].mxu0
        %v4042 = vadd.f32 0.0, %v4041
        %v4043 = vpop.f32.mrb[0].mxu0
        %v4044 = vpop.f32.mrb[0].mxu0
        %v4045 = vadd.f32 0.0, %v4044
        %v4046 = vpop.f32.mrb[0].mxu0
        %4047 = vmatprep.mubr.bf16.mxu0 0
        %4048 = vmatmul.mubr.bf16.gmra.mrb[0].mxu0 %v3994
        %v4049 = vpop.f32.mrb[0].mxu0
        %v4050 = vadd.f32 0.0, %v4049
        %v4051 = vpop.f32.mrb[0].mxu0
        %v4052 = vpop.f32.mrb[0].mxu0
        %v4053 = vadd.f32 0.0, %v4052
        %v4054 = vpop.f32.mrb[0].mxu0
        %4055 = vmatprep.mubr.bf16.mxu0 0
        %4056 = vmatmul.mubr.bf16.gmra.mrb[0].mxu0 %v3997
        %v4057 = vpop.f32.mrb[0].mxu0
        %v4058 = vadd.f32 0.0, %v4057
        %v4059 = vpop.f32.mrb[0].mxu0
        %v4060 = vpop.f32.mrb[0].mxu0
        %v4061 = vadd.f32 0.0, %v4060
        %v4062 = vpop.f32.mrb[0].mxu0
        %4063 = vdwg.mxu0
        %v4064 = vadd.f32 %v3897, %v4034
        %v4065 = vadd.f32 %v3900, %v4037
        %v4066 = vadd.f32 %v3905, %v4042
        %v4067 = vadd.f32 %v3908, %v4045
        %v4068 = vadd.f32 %v3913, %v4050
        %v4069 = vadd.f32 %v3916, %v4053
        %v4070 = vadd.f32 %v3921, %v4058
        %v4071 = vadd.f32 %v3924, %v4061
        %v4072 = vld [vmem:[%s3396] sm:$0xf]
        %v4073 = vld [vmem:[%s3396 + $0x4] sm:$0xf]
        %v4074 = vld [vmem:[%s3396 + $0x8] sm:$0xf]
        %v4075 = vld [vmem:[%s3396 + $0xc] sm:$0xf]
        %v4076 = vld [vmem:[%s3396 + $0x10] sm:$0xf]
        %v4077 = vld [vmem:[%s3396 + $0x14] sm:$0xf]
        %v4078 = vld [vmem:[%s3396 + $0x18] sm:$0xf]
        %v4079 = vld [vmem:[%s3396 + $0x1c] sm:$0xf]
        %v4080 = vld [vmem:[%s778] sm:$0xf]
        %v4081 = vld [vmem:[%s778 + $0x4] sm:$0xf]
        %v4082 = vld [vmem:[%s778 + $0x8] sm:$0xf]
        %v4083 = vld [vmem:[%s778 + $0xc] sm:$0xf]
        %v4084 = vld [vmem:[%s778 + $0x10] sm:$0xf]
        %v4085 = vld [vmem:[%s778 + $0x14] sm:$0xf]
        %v4086 = vld [vmem:[%s778 + $0x18] sm:$0xf]
        %v4087 = vld [vmem:[%s778 + $0x1c] sm:$0xf]
        %v4096 = vunpack.c.l.b16 %v4072
        %v4097 = vunpack.c.l.b16 %v4073
        %v4098 = vunpack.c.l.b16 %v4074
        %v4099 = vunpack.c.l.b16 %v4075
        %v4100 = vunpack.c.l.b16 %v4076
        %v4101 = vunpack.c.l.b16 %v4077
        %v4102 = vunpack.c.l.b16 %v4078
        %v4103 = vunpack.c.l.b16 %v4079
        %v4104 = vpack.c.b16 %v4097, %v4096
        %v4105 = vpack.c.b16 %v4099, %v4098
        %v4106 = vpack.c.b16 %v4101, %v4100
        %v4107 = vpack.c.b16 %v4103, %v4102
        %v4116 = vunpack.c.l.b16 %v4080
        %v4117 = vunpack.c.l.b16 %v4081
        %v4118 = vunpack.c.l.b16 %v4082
        %v4119 = vunpack.c.l.b16 %v4083
        %v4120 = vunpack.c.l.b16 %v4084
        %v4121 = vunpack.c.l.b16 %v4085
        %v4122 = vunpack.c.l.b16 %v4086
        %v4123 = vunpack.c.l.b16 %v4087
        %v4124 = vpack.c.b16 %v4117, %v4116
        %v4125 = vpack.c.b16 %v4119, %v4118
        %v4126 = vpack.c.b16 %v4121, %v4120
        %v4127 = vpack.c.b16 %v4123, %v4122
        %v4133 = vsel %vm423, %v4104, 0
        %v4136 = vsel %vm423, %v4105, 0
        %v4139 = vsel %vm423, %v4106, 0
        %v4142 = vsel %vm423, %v4107, 0
        %4144 = vmatprep.subr.bf16.mxu0 0
        %4145 = vmatpush1.bf16.msra.mxu0 %v4124
        %4146 = vmatprep.subr.bf16.mxu0 0
        %4147 = vmatpush1.bf16.msra.mxu0 %v4125
        %4148 = vmatprep.subr.bf16.mxu0 0
        %4149 = vmatpush1.bf16.msra.mxu0 %v4126
        %4150 = vmatprep.subr.bf16.mxu0 0
        %4151 = vmatpush1.bf16.msra.mxu0 %v4127
        %4152 = vmatprep.subr.bf16.mxu0 0
        %4153 = vmatpush1.bf16.msra.mxu0 0
        %4154 = vmatprep.subr.bf16.mxu0 0
        %4155 = vmatpush1.bf16.msra.mxu0 0
        %4156 = vmatprep.subr.bf16.mxu0 0
        %4157 = vmatpush1.bf16.msra.mxu0 0
        %4158 = vmatprep.subr.bf16.mxu0 0
        %4159 = vmatpush1.bf16.msra.mxu0 0
        %4160 = vmatprep.subr.bf16.mxu0 0
        %4161 = vmatpush1.bf16.msra.mxu0 0
        %4162 = vmatprep.subr.bf16.mxu0 0
        %4163 = vmatpush1.bf16.msra.mxu0 0
        %4164 = vmatprep.subr.bf16.mxu0 0
        %4165 = vmatpush1.bf16.msra.mxu0 0
        %4166 = vmatprep.subr.bf16.mxu0 0
        %4167 = vmatpush1.bf16.msra.mxu0 0
        %4168 = vmatprep.subr.bf16.mxu0 0
        %4169 = vmatpush1.bf16.msra.mxu0 0
        %4170 = vmatprep.subr.bf16.mxu0 0
        %4171 = vmatpush1.bf16.msra.mxu0 0
        %4172 = vmatprep.subr.bf16.mxu0 0
        %4173 = vmatpush1.bf16.msra.mxu0 0
        %4174 = vmatprep.subr.bf16.mxu0 0
        %4175 = vmatpush1.bf16.msra.mxu0 0
        %4176 = vmatprep.mubr.bf16.mxu0 0
        %4177 = vmatmul.mubr.bf16.gmra.mrb[0].mxu0 %v4133
        %v4178 = vpop.f32.mrb[0].mxu0
        %v4179 = vadd.f32 0.0, %v4178
        %v4180 = vpop.f32.mrb[0].mxu0
        %v4181 = vpop.f32.mrb[0].mxu0
        %v4182 = vadd.f32 0.0, %v4181
        %v4183 = vpop.f32.mrb[0].mxu0
        %4184 = vmatprep.mubr.bf16.mxu0 0
        %4185 = vmatmul.mubr.bf16.gmra.mrb[0].mxu0 %v4136
        %v4186 = vpop.f32.mrb[0].mxu0
        %v4187 = vadd.f32 0.0, %v4186
        %v4188 = vpop.f32.mrb[0].mxu0
        %v4189 = vpop.f32.mrb[0].mxu0
        %v4190 = vadd.f32 0.0, %v4189
        %v4191 = vpop.f32.mrb[0].mxu0
        %4192 = vmatprep.mubr.bf16.mxu0 0
        %4193 = vmatmul.mubr.bf16.gmra.mrb[0].mxu0 %v4139
        %v4194 = vpop.f32.mrb[0].mxu0
        %v4195 = vadd.f32 0.0, %v4194
        %v4196 = vpop.f32.mrb[0].mxu0
        %v4197 = vpop.f32.mrb[0].mxu0
        %v4198 = vadd.f32 0.0, %v4197
        %v4199 = vpop.f32.mrb[0].mxu0
        %4200 = vmatprep.mubr.bf16.mxu0 0
        %4201 = vmatmul.mubr.bf16.gmra.mrb[0].mxu0 %v4142
        %v4202 = vpop.f32.mrb[0].mxu0
        %v4203 = vadd.f32 0.0, %v4202
        %v4204 = vpop.f32.mrb[0].mxu0
        %v4205 = vpop.f32.mrb[0].mxu0
        %v4206 = vadd.f32 0.0, %v4205
        %v4207 = vpop.f32.mrb[0].mxu0
        %4208 = vdwg.mxu0
        %v4209 = vadd.f32 %v4064, %v4179
        %v4210 = vadd.f32 %v4065, %v4182
        %v4211 = vadd.f32 %v4066, %v4187
        %v4212 = vadd.f32 %v4067, %v4190
        %v4213 = vadd.f32 %v4068, %v4195
        %v4214 = vadd.f32 %v4069, %v4198
        %v4215 = vadd.f32 %v4070, %v4203
        %v4216 = vadd.f32 %v4071, %v4206
        %s4217 = scalar_lea.vmem %s290, 256 [#allocation4]
        %v4218 = vld [vmem:[%s4217] sm:$0xf]
        %v4219 = vld [vmem:[%s4217 + $0x4] sm:$0xf]
        %v4220 = vld [vmem:[%s4217 + $0x8] sm:$0xf]
        %v4221 = vld [vmem:[%s4217 + $0xc] sm:$0xf]
        %v4222 = vld [vmem:[%s4217 + $0x10] sm:$0xf]
        %v4223 = vld [vmem:[%s4217 + $0x14] sm:$0xf]
        %v4224 = vld [vmem:[%s4217 + $0x18] sm:$0xf]
        %v4225 = vld [vmem:[%s4217 + $0x1c] sm:$0xf]
        %v4226 = vld [vmem:[%s925] sm:$0xf]
        %v4227 = vld [vmem:[%s925 + $0x4] sm:$0xf]
        %v4228 = vld [vmem:[%s925 + $0x8] sm:$0xf]
        %v4229 = vld [vmem:[%s925 + $0xc] sm:$0xf]
        %v4230 = vld [vmem:[%s925 + $0x10] sm:$0xf]
        %v4231 = vld [vmem:[%s925 + $0x14] sm:$0xf]
        %v4232 = vld [vmem:[%s925 + $0x18] sm:$0xf]
        %v4233 = vld [vmem:[%s925 + $0x1c] sm:$0xf]
        %v4242 = vunpack.c.l.b16 %v4218
        %v4243 = vunpack.c.l.b16 %v4219
        %v4244 = vunpack.c.l.b16 %v4220
        %v4245 = vunpack.c.l.b16 %v4221
        %v4246 = vunpack.c.l.b16 %v4222
        %v4247 = vunpack.c.l.b16 %v4223
        %v4248 = vunpack.c.l.b16 %v4224
        %v4249 = vunpack.c.l.b16 %v4225
        %v4250 = vpack.c.b16 %v4243, %v4242
        %v4251 = vpack.c.b16 %v4245, %v4244
        %v4252 = vpack.c.b16 %v4247, %v4246
        %v4253 = vpack.c.b16 %v4249, %v4248
        %v4262 = vunpack.c.l.b16 %v4226
        %v4263 = vunpack.c.l.b16 %v4227
        %v4264 = vunpack.c.l.b16 %v4228
        %v4265 = vunpack.c.l.b16 %v4229
        %v4266 = vunpack.c.l.b16 %v4230
        %v4267 = vunpack.c.l.b16 %v4231
        %v4268 = vunpack.c.l.b16 %v4232
        %v4269 = vunpack.c.l.b16 %v4233
        %v4270 = vpack.c.b16 %v4263, %v4262
        %v4271 = vpack.c.b16 %v4265, %v4264
        %v4272 = vpack.c.b16 %v4267, %v4266
        %v4273 = vpack.c.b16 %v4269, %v4268
        %v4279 = vsel %vm423, %v4250, 0
        %v4282 = vsel %vm423, %v4251, 0
        %v4285 = vsel %vm423, %v4252, 0
        %v4288 = vsel %vm423, %v4253, 0
        %4290 = vmatprep.subr.bf16.mxu0 0
        %4291 = vmatpush1.bf16.msra.mxu0 %v4270
        %4292 = vmatprep.subr.bf16.mxu0 0
        %4293 = vmatpush1.bf16.msra.mxu0 %v4271
        %4294 = vmatprep.subr.bf16.mxu0 0
        %4295 = vmatpush1.bf16.msra.mxu0 %v4272
        %4296 = vmatprep.subr.bf16.mxu0 0
        %4297 = vmatpush1.bf16.msra.mxu0 %v4273
        %4298 = vmatprep.subr.bf16.mxu0 0
        %4299 = vmatpush1.bf16.msra.mxu0 0
        %4300 = vmatprep.subr.bf16.mxu0 0
        %4301 = vmatpush1.bf16.msra.mxu0 0
        %4302 = vmatprep.subr.bf16.mxu0 0
        %4303 = vmatpush1.bf16.msra.mxu0 0
        %4304 = vmatprep.subr.bf16.mxu0 0
        %4305 = vmatpush1.bf16.msra.mxu0 0
        %4306 = vmatprep.subr.bf16.mxu0 0
        %4307 = vmatpush1.bf16.msra.mxu0 0
        %4308 = vmatprep.subr.bf16.mxu0 0
        %4309 = vmatpush1.bf16.msra.mxu0 0
        %4310 = vmatprep.subr.bf16.mxu0 0
        %4311 = vmatpush1.bf16.msra.mxu0 0
        %4312 = vmatprep.subr.bf16.mxu0 0
        %4313 = vmatpush1.bf16.msra.mxu0 0
        %4314 = vmatprep.subr.bf16.mxu0 0
        %4315 = vmatpush1.bf16.msra.mxu0 0
        %4316 = vmatprep.subr.bf16.mxu0 0
        %4317 = vmatpush1.bf16.msra.mxu0 0
        %4318 = vmatprep.subr.bf16.mxu0 0
        %4319 = vmatpush1.bf16.msra.mxu0 0
        %4320 = vmatprep.subr.bf16.mxu0 0
        %4321 = vmatpush1.bf16.msra.mxu0 0
        %4322 = vmatprep.mubr.bf16.mxu0 0
        %4323 = vmatmul.mubr.bf16.gmra.mrb[0].mxu0 %v4279
        %v4324 = vpop.f32.mrb[0].mxu0
        %v4325 = vadd.f32 0.0, %v4324
        %v4326 = vpop.f32.mrb[0].mxu0
        %v4327 = vpop.f32.mrb[0].mxu0
        %v4328 = vadd.f32 0.0, %v4327
        %v4329 = vpop.f32.mrb[0].mxu0
        %4330 = vmatprep.mubr.bf16.mxu0 0
        %4331 = vmatmul.mubr.bf16.gmra.mrb[0].mxu0 %v4282
        %v4332 = vpop.f32.mrb[0].mxu0
        %v4333 = vadd.f32 0.0, %v4332
        %v4334 = vpop.f32.mrb[0].mxu0
        %v4335 = vpop.f32.mrb[0].mxu0
        %v4336 = vadd.f32 0.0, %v4335
        %v4337 = vpop.f32.mrb[0].mxu0
        %4338 = vmatprep.mubr.bf16.mxu0 0
        %4339 = vmatmul.mubr.bf16.gmra.mrb[0].mxu0 %v4285
        %v4340 = vpop.f32.mrb[0].mxu0
        %v4341 = vadd.f32 0.0, %v4340
        %v4342 = vpop.f32.mrb[0].mxu0
        %v4343 = vpop.f32.mrb[0].mxu0
        %v4344 = vadd.f32 0.0, %v4343
        %v4345 = vpop.f32.mrb[0].mxu0
        %4346 = vmatprep.mubr.bf16.mxu0 0
        %4347 = vmatmul.mubr.bf16.gmra.mrb[0].mxu0 %v4288
        %v4348 = vpop.f32.mrb[0].mxu0
        %v4349 = vadd.f32 0.0, %v4348
        %v4350 = vpop.f32.mrb[0].mxu0
        %v4351 = vpop.f32.mrb[0].mxu0
        %v4352 = vadd.f32 0.0, %v4351
        %v4353 = vpop.f32.mrb[0].mxu0
        %4354 = vdwg.mxu0
        %v4355 = vadd.f32 %v4209, %v4325
        %v4356 = vadd.f32 %v4210, %v4328
        %v4357 = vadd.f32 %v4211, %v4333
        %v4358 = vadd.f32 %v4212, %v4336
        %v4359 = vadd.f32 %v4213, %v4341
        %v4360 = vadd.f32 %v4214, %v4344
        %v4361 = vadd.f32 %v4215, %v4349
        %v4362 = vadd.f32 %v4216, %v4352
        %v4363 = vadd.f32 %v4355, %v1067
        %v4364 = vadd.f32 %v4356, %v1067
        %v4365 = vadd.f32 %v4357, %v1067
        %v4366 = vadd.f32 %v4358, %v1067
        %v4367 = vadd.f32 %v4359, %v1067
        %v4368 = vadd.f32 %v4360, %v1067
        %v4369 = vadd.f32 %v4361, %v1067
        %v4370 = vadd.f32 %v4362, %v1067
        %v4371 = vmax.f32 %v4363, 0.0
        %v4372 = vmax.f32 %v4364, 0.0
        %v4373 = vmax.f32 %v4365, 0.0
        %v4374 = vmax.f32 %v4366, 0.0
        %v4375 = vmax.f32 %v4367, 0.0
        %v4376 = vmax.f32 %v4368, 0.0
        %v4377 = vmax.f32 %v4369, 0.0
        %v4378 = vmax.f32 %v4370, 0.0
        %4379 = vst.msk [vmem:[#allocation2] sm:$0xff] %vm1085, %v4371
        %4380 = vst.msk [vmem:[#allocation2 + $0x8] sm:$0xff] %vm1085, %v4372
        %4381 = vst.msk [vmem:[#allocation2 + $0x10] sm:$0xff] %vm1085, %v4373
        %4382 = vst.msk [vmem:[#allocation2 + $0x18] sm:$0xff] %vm1085, %v4374
        %4383 = vst.msk [vmem:[#allocation2 + $0x20] sm:$0xff] %vm1085, %v4375
        %4384 = vst.msk [vmem:[#allocation2 + $0x28] sm:$0xff] %vm1085, %v4376
        %4385 = vst.msk [vmem:[#allocation2 + $0x30] sm:$0xff] %vm1085, %v4377
        %4386 = vst.msk [vmem:[#allocation2 + $0x38] sm:$0xff] %vm1085, %v4378
        %v4387 = vld [vmem:[#allocation2] ss:$2 sm:$0xff]
        %v4388 = vld [vmem:[%s1095] ss:$2 sm:$0xff]
        %v4389 = vld [vmem:[%s1097] ss:$2 sm:$0xff]
        %v4390 = vld [vmem:[%s1099] ss:$2 sm:$0xff]
        %v4391 = vld [vmem:[%s1101] ss:$2 sm:$0xff]
        %v4392 = vld [vmem:[%s1103] ss:$2 sm:$0xff]
        %v4393 = vld [vmem:[%s1105] ss:$2 sm:$0xff]
        %v4394 = vld [vmem:[%s1107] ss:$2 sm:$0xff]
        %v4395 = vmax.f32 %v4387, %v4391
        %v4396 = vmax.f32 %v4388, %v4392
        %v4397 = vmax.f32 %v4389, %v4393
        %v4398 = vmax.f32 %v4390, %v4394
        %v4403 = vrot.slane %v4391, 7
        %v4404 = vrot.slane %v4392, 7
        %v4405 = vsel %vm1117, %v4403, %v4404
        %v4406 = vrot.slane %v4393, 7
        %v4407 = vsel %vm1117, %v4404, %v4406
        %v4408 = vrot.slane %v4394, 7
        %v4409 = vsel %vm1117, %v4406, %v4408
        %v4414 = vsel %vm1117, 0.0, %v4403
        %v4415 = vmul.f32 %v4414, %v341
        %v4416 = vmul.f32 %v4405, %v342
        %v4417 = vmul.f32 %v4407, %v343
        %v4418 = vmul.f32 %v4409, %v344
        %v4419 = vmax.f32 %v4395, %v4415
        %v4420 = vmax.f32 %v4396, %v4416
        %v4421 = vmax.f32 %v4397, %v4417
        %v4422 = vmax.f32 %v4398, %v4418
        %4423 = vst.msk [vmem:[#allocation3] sm:$0xff] %vm1085, %v4419
        %4424 = vst.msk [vmem:[#allocation3 + $0x8] sm:$0xff] %vm1085, %v4420
        %4425 = vst.msk [vmem:[#allocation3 + $0x10] sm:$0xff] %vm1085, %v4421
        %4426 = vst.msk [vmem:[#allocation3 + $0x18] sm:$0xff] %vm1085, %v4422
        %v4427 = vld [vmem:[#allocation3] sm:$0xf]
        %v4428 = vld [vmem:[#allocation3 + $0x4] sm:$0xf]
        %v4429 = vmax.f32 %v4427, %v4428
        %v4430 = vsel %vm1145, %v4429, 0.0
        %v4431 = vrot.slane %v4430, 4
        %v4432 = vadd.f32 %v4430, %v4431
        %v4433 = vrot.slane %v4432, 2
        %v4434 = vadd.f32 %v4432, %v4433
        %v4435 = vrot.slane %v4434, 1
        %v4436 = vadd.f32 %v4434, %v4435
        %v4437 = vadd.f32 %v4436, 0.0
        %v4438 = vld [vmem:[#allocation3 + $0x8] sm:$0xf]
        %v4439 = vld [vmem:[#allocation3 + $0xc] sm:$0xf]
        %v4440 = vmax.f32 %v4438, %v4439
        %v4441 = vmax.f32 %v4440, %v4428
        %v4442 = vsel %vm1145, %v4441, 0.0
        %v4443 = vrot.slane %v4442, 4
        %v4444 = vadd.f32 %v4442, %v4443
        %v4445 = vrot.slane %v4444, 2
        %v4446 = vadd.f32 %v4444, %v4445
        %v4447 = vrot.slane %v4446, 1
        %v4448 = vadd.f32 %v4446, %v4447
        %v4449 = vadd.f32 %v4437, %v4448
        %v4450 = vld [vmem:[#allocation3 + $0x10] sm:$0xf]
        %v4451 = vld [vmem:[#allocation3 + $0x14] sm:$0xf]
        %v4452 = vmax.f32 %v4450, %v4451
        %v4453 = vmax.f32 %v4452, %v4439
        %v4454 = vsel %vm1145, %v4453, 0.0
        %v4455 = vrot.slane %v4454, 4
        %v4456 = vadd.f32 %v4454, %v4455
        %v4457 = vrot.slane %v4456, 2
        %v4458 = vadd.f32 %v4456, %v4457
        %v4459 = vrot.slane %v4458, 1
        %v4460 = vadd.f32 %v4458, %v4459
        %v4461 = vadd.f32 %v4449, %v4460
        %v4462 = vld [vmem:[#allocation3 + $0x18] sm:$0xf]
        %v4463 = vld [vmem:[#allocation3 + $0x1c] sm:$0xf]
        %v4464 = vmax.f32 %v4462, %v4463
        %v4465 = vmax.f32 %v4464, %v4451
        %v4466 = vsel %vm1145, %v4465, 0.0
        %v4467 = vrot.slane %v4466, 4
        %v4468 = vadd.f32 %v4466, %v4467
        %v4469 = vrot.slane %v4468, 2
        %v4470 = vadd.f32 %v4468, %v4469
        %v4471 = vrot.slane %v4470, 1
        %v4472 = vadd.f32 %v4470, %v4471
        %v4473 = vadd.f32 %v4461, %v4472
        %v4474 = vld [vmem:[%s1754] sm:$0xf]
        %v4475 = vld [vmem:[%s1754 + $0x4] sm:$0xf]
        %v4476 = vld [vmem:[%s1754 + $0x8] sm:$0xf]
        %v4477 = vld [vmem:[%s1754 + $0xc] sm:$0xf]
        %v4478 = vld [vmem:[%s1754 + $0x10] sm:$0xf]
        %v4479 = vld [vmem:[%s1754 + $0x14] sm:$0xf]
        %v4480 = vld [vmem:[%s1754 + $0x18] sm:$0xf]
        %v4481 = vld [vmem:[%s1754 + $0x1c] sm:$0xf]
        %v4482 = vld [vmem:[#allocation7] sm:$0xf]
        %v4483 = vld [vmem:[#allocation7 + $0x4] sm:$0xf]
        %v4484 = vld [vmem:[#allocation7 + $0x8] sm:$0xf]
        %v4485 = vld [vmem:[#allocation7 + $0xc] sm:$0xf]
        %v4486 = vld [vmem:[#allocation7 + $0x10] sm:$0xf]
        %v4487 = vld [vmem:[#allocation7 + $0x14] sm:$0xf]
        %v4488 = vld [vmem:[#allocation7 + $0x18] sm:$0xf]
        %v4489 = vld [vmem:[#allocation7 + $0x1c] sm:$0xf]
        %v4490 = vld [vmem:[%s2575] sm:$0xf]
        %v4491 = vld [vmem:[%s2575 + $0x4] sm:$0xf]
        %v4492 = vld [vmem:[%s2575 + $0x8] sm:$0xf]
        %v4493 = vld [vmem:[%s2575 + $0xc] sm:$0xf]
        %v4494 = vld [vmem:[%s2575 + $0x10] sm:$0xf]
        %v4495 = vld [vmem:[%s2575 + $0x14] sm:$0xf]
        %v4496 = vld [vmem:[%s2575 + $0x18] sm:$0xf]
        %v4497 = vld [vmem:[%s2575 + $0x1c] sm:$0xf]
        %v4498 = vld [vmem:[%s370] sm:$0xf]
        %v4499 = vld [vmem:[%s370 + $0x4] sm:$0xf]
        %v4500 = vld [vmem:[%s370 + $0x8] sm:$0xf]
        %v4501 = vld [vmem:[%s370 + $0xc] sm:$0xf]
        %v4502 = vld [vmem:[%s370 + $0x10] sm:$0xf]
        %v4503 = vld [vmem:[%s370 + $0x14] sm:$0xf]
        %v4504 = vld [vmem:[%s370 + $0x18] sm:$0xf]
        %v4505 = vld [vmem:[%s370 + $0x1c] sm:$0xf]
        %v4514 = vunpack.c.l.b16 %v4490
        %v4515 = vunpack.c.l.b16 %v4491
        %v4516 = vunpack.c.l.b16 %v4492
        %v4517 = vunpack.c.l.b16 %v4493
        %v4518 = vunpack.c.l.b16 %v4494
        %v4519 = vunpack.c.l.b16 %v4495
        %v4520 = vunpack.c.l.b16 %v4496
        %v4521 = vunpack.c.l.b16 %v4497
        %v4522 = vpack.c.b16 %v4515, %v4514
        %v4523 = vpack.c.b16 %v4517, %v4516
        %v4524 = vpack.c.b16 %v4519, %v4518
        %v4525 = vpack.c.b16 %v4521, %v4520
        %v4534 = vunpack.c.l.b16 %v4498
        %v4535 = vunpack.c.l.b16 %v4499
        %v4536 = vunpack.c.l.b16 %v4500
        %v4537 = vunpack.c.l.b16 %v4501
        %v4538 = vunpack.c.l.b16 %v4502
        %v4539 = vunpack.c.l.b16 %v4503
        %v4540 = vunpack.c.l.b16 %v4504
        %v4541 = vunpack.c.l.b16 %v4505
        %v4542 = vpack.c.b16 %v4535, %v4534
        %v4543 = vpack.c.b16 %v4537, %v4536
        %v4544 = vpack.c.b16 %v4539, %v4538
        %v4545 = vpack.c.b16 %v4541, %v4540
        %v4551 = vsel %vm423, %v4522, 0
        %v4554 = vsel %vm423, %v4523, 0
        %v4557 = vsel %vm423, %v4524, 0
        %v4560 = vsel %vm423, %v4525, 0
        %4562 = vmatprep.subr.bf16.mxu0 0
        %4563 = vmatpush1.bf16.msra.mxu0 %v4542
        %4564 = vmatprep.subr.bf16.mxu0 0
        %4565 = vmatpush1.bf16.msra.mxu0 %v4543
        %4566 = vmatprep.subr.bf16.mxu0 0
        %4567 = vmatpush1.bf16.msra.mxu0 %v4544
        %4568 = vmatprep.subr.bf16.mxu0 0
        %4569 = vmatpush1.bf16.msra.mxu0 %v4545
        %4570 = vmatprep.subr.bf16.mxu0 0
        %4571 = vmatpush1.bf16.msra.mxu0 0
        %4572 = vmatprep.subr.bf16.mxu0 0
        %4573 = vmatpush1.bf16.msra.mxu0 0
        %4574 = vmatprep.subr.bf16.mxu0 0
        %4575 = vmatpush1.bf16.msra.mxu0 0
        %4576 = vmatprep.subr.bf16.mxu0 0
        %4577 = vmatpush1.bf16.msra.mxu0 0
        %4578 = vmatprep.subr.bf16.mxu0 0
        %4579 = vmatpush1.bf16.msra.mxu0 0
        %4580 = vmatprep.subr.bf16.mxu0 0
        %4581 = vmatpush1.bf16.msra.mxu0 0
        %4582 = vmatprep.subr.bf16.mxu0 0
        %4583 = vmatpush1.bf16.msra.mxu0 0
        %4584 = vmatprep.subr.bf16.mxu0 0
        %4585 = vmatpush1.bf16.msra.mxu0 0
        %4586 = vmatprep.subr.bf16.mxu0 0
        %4587 = vmatpush1.bf16.msra.mxu0 0
        %4588 = vmatprep.subr.bf16.mxu0 0
        %4589 = vmatpush1.bf16.msra.mxu0 0
        %4590 = vmatprep.subr.bf16.mxu0 0
        %4591 = vmatpush1.bf16.msra.mxu0 0
        %4592 = vmatprep.subr.bf16.mxu0 0
        %4593 = vmatpush1.bf16.msra.mxu0 0
        %4594 = vmatprep.mubr.bf16.mxu0 0
        %4595 = vmatmul.mubr.bf16.gmra.mrb[0].mxu0 %v4551
        %v4596 = vpop.f32.mrb[0].mxu0
        %v4597 = vadd.f32 0.0, %v4596
        %v4598 = vpop.f32.mrb[0].mxu0
        %v4599 = vpop.f32.mrb[0].mxu0
        %v4600 = vadd.f32 0.0, %v4599
        %v4601 = vpop.f32.mrb[0].mxu0
        %4602 = vmatprep.mubr.bf16.mxu0 0
        %4603 = vmatmul.mubr.bf16.gmra.mrb[0].mxu0 %v4554
        %v4604 = vpop.f32.mrb[0].mxu0
        %v4605 = vadd.f32 0.0, %v4604
        %v4606 = vpop.f32.mrb[0].mxu0
        %v4607 = vpop.f32.mrb[0].mxu0
        %v4608 = vadd.f32 0.0, %v4607
        %v4609 = vpop.f32.mrb[0].mxu0
        %4610 = vmatprep.mubr.bf16.mxu0 0
        %4611 = vmatmul.mubr.bf16.gmra.mrb[0].mxu0 %v4557
        %v4612 = vpop.f32.mrb[0].mxu0
        %v4613 = vadd.f32 0.0, %v4612
        %v4614 = vpop.f32.mrb[0].mxu0
        %v4615 = vpop.f32.mrb[0].mxu0
        %v4616 = vadd.f32 0.0, %v4615
        %v4617 = vpop.f32.mrb[0].mxu0
        %4618 = vmatprep.mubr.bf16.mxu0 0
        %4619 = vmatmul.mubr.bf16.gmra.mrb[0].mxu0 %v4560
        %v4620 = vpop.f32.mrb[0].mxu0
        %v4621 = vadd.f32 0.0, %v4620
        %v4622 = vpop.f32.mrb[0].mxu0
        %v4623 = vpop.f32.mrb[0].mxu0
        %v4624 = vadd.f32 0.0, %v4623
        %v4625 = vpop.f32.mrb[0].mxu0
        %4626 = vdwg.mxu0
        %v4635 = vunpack.c.l.b16 %v4474
        %v4636 = vunpack.c.l.b16 %v4475
        %v4637 = vunpack.c.l.b16 %v4476
        %v4638 = vunpack.c.l.b16 %v4477
        %v4639 = vunpack.c.l.b16 %v4478
        %v4640 = vunpack.c.l.b16 %v4479
        %v4641 = vunpack.c.l.b16 %v4480
        %v4642 = vunpack.c.l.b16 %v4481
        %v4643 = vpack.c.b16 %v4636, %v4635
        %v4644 = vpack.c.b16 %v4638, %v4637
        %v4645 = vpack.c.b16 %v4640, %v4639
        %v4646 = vpack.c.b16 %v4642, %v4641
        %v4655 = vunpack.c.l.b16 %v4482
        %v4656 = vunpack.c.l.b16 %v4483
        %v4657 = vunpack.c.l.b16 %v4484
        %v4658 = vunpack.c.l.b16 %v4485
        %v4659 = vunpack.c.l.b16 %v4486
        %v4660 = vunpack.c.l.b16 %v4487
        %v4661 = vunpack.c.l.b16 %v4488
        %v4662 = vunpack.c.l.b16 %v4489
        %v4663 = vpack.c.b16 %v4656, %v4655
        %v4664 = vpack.c.b16 %v4658, %v4657
        %v4665 = vpack.c.b16 %v4660, %v4659
        %v4666 = vpack.c.b16 %v4662, %v4661
        %v4672 = vsel %vm423, %v4643, 0
        %v4675 = vsel %vm423, %v4644, 0
        %v4678 = vsel %vm423, %v4645, 0
        %v4681 = vsel %vm423, %v4646, 0
        %4683 = vmatprep.subr.bf16.mxu0 0
        %4684 = vmatpush1.bf16.msra.mxu0 %v4663
        %4685 = vmatprep.subr.bf16.mxu0 0
        %4686 = vmatpush1.bf16.msra.mxu0 %v4664
        %4687 = vmatprep.subr.bf16.mxu0 0
        %4688 = vmatpush1.bf16.msra.mxu0 %v4665
        %4689 = vmatprep.subr.bf16.mxu0 0
        %4690 = vmatpush1.bf16.msra.mxu0 %v4666
        %4691 = vmatprep.subr.bf16.mxu0 0
        %4692 = vmatpush1.bf16.msra.mxu0 0
        %4693 = vmatprep.subr.bf16.mxu0 0
        %4694 = vmatpush1.bf16.msra.mxu0 0
        %4695 = vmatprep.subr.bf16.mxu0 0
        %4696 = vmatpush1.bf16.msra.mxu0 0
        %4697 = vmatprep.subr.bf16.mxu0 0
        %4698 = vmatpush1.bf16.msra.mxu0 0
        %4699 = vmatprep.subr.bf16.mxu0 0
        %4700 = vmatpush1.bf16.msra.mxu0 0
        %4701 = vmatprep.subr.bf16.mxu0 0
        %4702 = vmatpush1.bf16.msra.mxu0 0
        %4703 = vmatprep.subr.bf16.mxu0 0
        %4704 = vmatpush1.bf16.msra.mxu0 0
        %4705 = vmatprep.subr.bf16.mxu0 0
        %4706 = vmatpush1.bf16.msra.mxu0 0
        %4707 = vmatprep.subr.bf16.mxu0 0
        %4708 = vmatpush1.bf16.msra.mxu0 0
        %4709 = vmatprep.subr.bf16.mxu0 0
        %4710 = vmatpush1.bf16.msra.mxu0 0
        %4711 = vmatprep.subr.bf16.mxu0 0
        %4712 = vmatpush1.bf16.msra.mxu0 0
        %4713 = vmatprep.subr.bf16.mxu0 0
        %4714 = vmatpush1.bf16.msra.mxu0 0
        %4715 = vmatprep.mubr.bf16.mxu0 0
        %4716 = vmatmul.mubr.bf16.gmra.mrb[0].mxu0 %v4672
        %v4717 = vpop.f32.mrb[0].mxu0
        %v4718 = vadd.f32 %v4597, %v4717
        %v4719 = vpop.f32.mrb[0].mxu0
        %v4720 = vpop.f32.mrb[0].mxu0
        %v4721 = vadd.f32 %v4600, %v4720
        %v4722 = vpop.f32.mrb[0].mxu0
        %4723 = vmatprep.mubr.bf16.mxu0 0
        %4724 = vmatmul.mubr.bf16.gmra.mrb[0].mxu0 %v4675
        %v4725 = vpop.f32.mrb[0].mxu0
        %v4726 = vadd.f32 %v4605, %v4725
        %v4727 = vpop.f32.mrb[0].mxu0
        %v4728 = vpop.f32.mrb[0].mxu0
        %v4729 = vadd.f32 %v4608, %v4728
        %v4730 = vpop.f32.mrb[0].mxu0
        %4731 = vmatprep.mubr.bf16.mxu0 0
        %4732 = vmatmul.mubr.bf16.gmra.mrb[0].mxu0 %v4678
        %v4733 = vpop.f32.mrb[0].mxu0
        %v4734 = vadd.f32 %v4613, %v4733
        %v4735 = vpop.f32.mrb[0].mxu0
        %v4736 = vpop.f32.mrb[0].mxu0
        %v4737 = vadd.f32 %v4616, %v4736
        %v4738 = vpop.f32.mrb[0].mxu0
        %4739 = vmatprep.mubr.bf16.mxu0 0
        %4740 = vmatmul.mubr.bf16.gmra.mrb[0].mxu0 %v4681
        %v4741 = vpop.f32.mrb[0].mxu0
        %v4742 = vadd.f32 %v4621, %v4741
        %v4743 = vpop.f32.mrb[0].mxu0
        %v4744 = vpop.f32.mrb[0].mxu0
        %v4745 = vadd.f32 %v4624, %v4744
        %v4746 = vpop.f32.mrb[0].mxu0
        %4747 = vdwg.mxu0
        %v4748 = vld [vmem:[%s3396] sm:$0xf]
        %v4749 = vld [vmem:[%s3396 + $0x4] sm:$0xf]
        %v4750 = vld [vmem:[%s3396 + $0x8] sm:$0xf]
        %v4751 = vld [vmem:[%s3396 + $0xc] sm:$0xf]
        %v4752 = vld [vmem:[%s3396 + $0x10] sm:$0xf]
        %v4753 = vld [vmem:[%s3396 + $0x14] sm:$0xf]
        %v4754 = vld [vmem:[%s3396 + $0x18] sm:$0xf]
        %v4755 = vld [vmem:[%s3396 + $0x1c] sm:$0xf]
        %v4756 = vld [vmem:[%s631] sm:$0xf]
        %v4757 = vld [vmem:[%s631 + $0x4] sm:$0xf]
        %v4758 = vld [vmem:[%s631 + $0x8] sm:$0xf]
        %v4759 = vld [vmem:[%s631 + $0xc] sm:$0xf]
        %v4760 = vld [vmem:[%s631 + $0x10] sm:$0xf]
        %v4761 = vld [vmem:[%s631 + $0x14] sm:$0xf]
        %v4762 = vld [vmem:[%s631 + $0x18] sm:$0xf]
        %v4763 = vld [vmem:[%s631 + $0x1c] sm:$0xf]
        %v4772 = vunpack.c.l.b16 %v4748
        %v4773 = vunpack.c.l.b16 %v4749
        %v4774 = vunpack.c.l.b16 %v4750
        %v4775 = vunpack.c.l.b16 %v4751
        %v4776 = vunpack.c.l.b16 %v4752
        %v4777 = vunpack.c.l.b16 %v4753
        %v4778 = vunpack.c.l.b16 %v4754
        %v4779 = vunpack.c.l.b16 %v4755
        %v4780 = vpack.c.b16 %v4773, %v4772
        %v4781 = vpack.c.b16 %v4775, %v4774
        %v4782 = vpack.c.b16 %v4777, %v4776
        %v4783 = vpack.c.b16 %v4779, %v4778
        %v4792 = vunpack.c.l.b16 %v4756
        %v4793 = vunpack.c.l.b16 %v4757
        %v4794 = vunpack.c.l.b16 %v4758
        %v4795 = vunpack.c.l.b16 %v4759
        %v4796 = vunpack.c.l.b16 %v4760
        %v4797 = vunpack.c.l.b16 %v4761
        %v4798 = vunpack.c.l.b16 %v4762
        %v4799 = vunpack.c.l.b16 %v4763
        %v4800 = vpack.c.b16 %v4793, %v4792
        %v4801 = vpack.c.b16 %v4795, %v4794
        %v4802 = vpack.c.b16 %v4797, %v4796
        %v4803 = vpack.c.b16 %v4799, %v4798
        %v4809 = vsel %vm423, %v4780, 0
        %v4812 = vsel %vm423, %v4781, 0
        %v4815 = vsel %vm423, %v4782, 0
        %v4818 = vsel %vm423, %v4783, 0
        %4820 = vmatprep.subr.bf16.mxu0 0
        %4821 = vmatpush1.bf16.msra.mxu0 %v4800
        %4822 = vmatprep.subr.bf16.mxu0 0
        %4823 = vmatpush1.bf16.msra.mxu0 %v4801
        %4824 = vmatprep.subr.bf16.mxu0 0
        %4825 = vmatpush1.bf16.msra.mxu0 %v4802
        %4826 = vmatprep.subr.bf16.mxu0 0
        %4827 = vmatpush1.bf16.msra.mxu0 %v4803
        %4828 = vmatprep.subr.bf16.mxu0 0
        %4829 = vmatpush1.bf16.msra.mxu0 0
        %4830 = vmatprep.subr.bf16.mxu0 0
        %4831 = vmatpush1.bf16.msra.mxu0 0
        %4832 = vmatprep.subr.bf16.mxu0 0
        %4833 = vmatpush1.bf16.msra.mxu0 0
        %4834 = vmatprep.subr.bf16.mxu0 0
        %4835 = vmatpush1.bf16.msra.mxu0 0
        %4836 = vmatprep.subr.bf16.mxu0 0
        %4837 = vmatpush1.bf16.msra.mxu0 0
        %4838 = vmatprep.subr.bf16.mxu0 0
        %4839 = vmatpush1.bf16.msra.mxu0 0
        %4840 = vmatprep.subr.bf16.mxu0 0
        %4841 = vmatpush1.bf16.msra.mxu0 0
        %4842 = vmatprep.subr.bf16.mxu0 0
        %4843 = vmatpush1.bf16.msra.mxu0 0
        %4844 = vmatprep.subr.bf16.mxu0 0
        %4845 = vmatpush1.bf16.msra.mxu0 0
        %4846 = vmatprep.subr.bf16.mxu0 0
        %4847 = vmatpush1.bf16.msra.mxu0 0
        %4848 = vmatprep.subr.bf16.mxu0 0
        %4849 = vmatpush1.bf16.msra.mxu0 0
        %4850 = vmatprep.subr.bf16.mxu0 0
        %4851 = vmatpush1.bf16.msra.mxu0 0
        %4852 = vmatprep.mubr.bf16.mxu0 0
        %4853 = vmatmul.mubr.bf16.gmra.mrb[0].mxu0 %v4809
        %v4854 = vpop.f32.mrb[0].mxu0
        %v4855 = vadd.f32 0.0, %v4854
        %v4856 = vpop.f32.mrb[0].mxu0
        %v4857 = vpop.f32.mrb[0].mxu0
        %v4858 = vadd.f32 0.0, %v4857
        %v4859 = vpop.f32.mrb[0].mxu0
        %4860 = vmatprep.mubr.bf16.mxu0 0
        %4861 = vmatmul.mubr.bf16.gmra.mrb[0].mxu0 %v4812
        %v4862 = vpop.f32.mrb[0].mxu0
        %v4863 = vadd.f32 0.0, %v4862
        %v4864 = vpop.f32.mrb[0].mxu0
        %v4865 = vpop.f32.mrb[0].mxu0
        %v4866 = vadd.f32 0.0, %v4865
        %v4867 = vpop.f32.mrb[0].mxu0
        %4868 = vmatprep.mubr.bf16.mxu0 0
        %4869 = vmatmul.mubr.bf16.gmra.mrb[0].mxu0 %v4815
        %v4870 = vpop.f32.mrb[0].mxu0
        %v4871 = vadd.f32 0.0, %v4870
        %v4872 = vpop.f32.mrb[0].mxu0
        %v4873 = vpop.f32.mrb[0].mxu0
        %v4874 = vadd.f32 0.0, %v4873
        %v4875 = vpop.f32.mrb[0].mxu0
        %4876 = vmatprep.mubr.bf16.mxu0 0
        %4877 = vmatmul.mubr.bf16.gmra.mrb[0].mxu0 %v4818
        %v4878 = vpop.f32.mrb[0].mxu0
        %v4879 = vadd.f32 0.0, %v4878
        %v4880 = vpop.f32.mrb[0].mxu0
        %v4881 = vpop.f32.mrb[0].mxu0
        %v4882 = vadd.f32 0.0, %v4881
        %v4883 = vpop.f32.mrb[0].mxu0
        %4884 = vdwg.mxu0
        %v4885 = vadd.f32 %v4718, %v4855
        %v4886 = vadd.f32 %v4721, %v4858
        %v4887 = vadd.f32 %v4726, %v4863
        %v4888 = vadd.f32 %v4729, %v4866
        %v4889 = vadd.f32 %v4734, %v4871
        %v4890 = vadd.f32 %v4737, %v4874
        %v4891 = vadd.f32 %v4742, %v4879
        %v4892 = vadd.f32 %v4745, %v4882
        %v4893 = vld [vmem:[%s4217] sm:$0xf]
        %v4894 = vld [vmem:[%s4217 + $0x4] sm:$0xf]
        %v4895 = vld [vmem:[%s4217 + $0x8] sm:$0xf]
        %v4896 = vld [vmem:[%s4217 + $0xc] sm:$0xf]
        %v4897 = vld [vmem:[%s4217 + $0x10] sm:$0xf]
        %v4898 = vld [vmem:[%s4217 + $0x14] sm:$0xf]
        %v4899 = vld [vmem:[%s4217 + $0x18] sm:$0xf]
        %v4900 = vld [vmem:[%s4217 + $0x1c] sm:$0xf]
        %v4901 = vld [vmem:[%s778] sm:$0xf]
        %v4902 = vld [vmem:[%s778 + $0x4] sm:$0xf]
        %v4903 = vld [vmem:[%s778 + $0x8] sm:$0xf]
        %v4904 = vld [vmem:[%s778 + $0xc] sm:$0xf]
        %v4905 = vld [vmem:[%s778 + $0x10] sm:$0xf]
        %v4906 = vld [vmem:[%s778 + $0x14] sm:$0xf]
        %v4907 = vld [vmem:[%s778 + $0x18] sm:$0xf]
        %v4908 = vld [vmem:[%s778 + $0x1c] sm:$0xf]
        %v4917 = vunpack.c.l.b16 %v4893
        %v4918 = vunpack.c.l.b16 %v4894
        %v4919 = vunpack.c.l.b16 %v4895
        %v4920 = vunpack.c.l.b16 %v4896
        %v4921 = vunpack.c.l.b16 %v4897
        %v4922 = vunpack.c.l.b16 %v4898
        %v4923 = vunpack.c.l.b16 %v4899
        %v4924 = vunpack.c.l.b16 %v4900
        %v4925 = vpack.c.b16 %v4918, %v4917
        %v4926 = vpack.c.b16 %v4920, %v4919
        %v4927 = vpack.c.b16 %v4922, %v4921
        %v4928 = vpack.c.b16 %v4924, %v4923
        %v4937 = vunpack.c.l.b16 %v4901
        %v4938 = vunpack.c.l.b16 %v4902
        %v4939 = vunpack.c.l.b16 %v4903
        %v4940 = vunpack.c.l.b16 %v4904
        %v4941 = vunpack.c.l.b16 %v4905
        %v4942 = vunpack.c.l.b16 %v4906
        %v4943 = vunpack.c.l.b16 %v4907
        %v4944 = vunpack.c.l.b16 %v4908
        %v4945 = vpack.c.b16 %v4938, %v4937
        %v4946 = vpack.c.b16 %v4940, %v4939
        %v4947 = vpack.c.b16 %v4942, %v4941
        %v4948 = vpack.c.b16 %v4944, %v4943
        %v4954 = vsel %vm423, %v4925, 0
        %v4957 = vsel %vm423, %v4926, 0
        %v4960 = vsel %vm423, %v4927, 0
        %v4963 = vsel %vm423, %v4928, 0
        %4965 = vmatprep.subr.bf16.mxu0 0
        %4966 = vmatpush1.bf16.msra.mxu0 %v4945
        %4967 = vmatprep.subr.bf16.mxu0 0
        %4968 = vmatpush1.bf16.msra.mxu0 %v4946
        %4969 = vmatprep.subr.bf16.mxu0 0
        %4970 = vmatpush1.bf16.msra.mxu0 %v4947
        %4971 = vmatprep.subr.bf16.mxu0 0
        %4972 = vmatpush1.bf16.msra.mxu0 %v4948
        %4973 = vmatprep.subr.bf16.mxu0 0
        %4974 = vmatpush1.bf16.msra.mxu0 0
        %4975 = vmatprep.subr.bf16.mxu0 0
        %4976 = vmatpush1.bf16.msra.mxu0 0
        %4977 = vmatprep.subr.bf16.mxu0 0
        %4978 = vmatpush1.bf16.msra.mxu0 0
        %4979 = vmatprep.subr.bf16.mxu0 0
        %4980 = vmatpush1.bf16.msra.mxu0 0
        %4981 = vmatprep.subr.bf16.mxu0 0
        %4982 = vmatpush1.bf16.msra.mxu0 0
        %4983 = vmatprep.subr.bf16.mxu0 0
        %4984 = vmatpush1.bf16.msra.mxu0 0
        %4985 = vmatprep.subr.bf16.mxu0 0
        %4986 = vmatpush1.bf16.msra.mxu0 0
        %4987 = vmatprep.subr.bf16.mxu0 0
        %4988 = vmatpush1.bf16.msra.mxu0 0
        %4989 = vmatprep.subr.bf16.mxu0 0
        %4990 = vmatpush1.bf16.msra.mxu0 0
        %4991 = vmatprep.subr.bf16.mxu0 0
        %4992 = vmatpush1.bf16.msra.mxu0 0
        %4993 = vmatprep.subr.bf16.mxu0 0
        %4994 = vmatpush1.bf16.msra.mxu0 0
        %4995 = vmatprep.subr.bf16.mxu0 0
        %4996 = vmatpush1.bf16.msra.mxu0 0
        %4997 = vmatprep.mubr.bf16.mxu0 0
        %4998 = vmatmul.mubr.bf16.gmra.mrb[0].mxu0 %v4954
        %v4999 = vpop.f32.mrb[0].mxu0
        %v5000 = vadd.f32 0.0, %v4999
        %v5001 = vpop.f32.mrb[0].mxu0
        %v5002 = vpop.f32.mrb[0].mxu0
        %v5003 = vadd.f32 0.0, %v5002
        %v5004 = vpop.f32.mrb[0].mxu0
        %5005 = vmatprep.mubr.bf16.mxu0 0
        %5006 = vmatmul.mubr.bf16.gmra.mrb[0].mxu0 %v4957
        %v5007 = vpop.f32.mrb[0].mxu0
        %v5008 = vadd.f32 0.0, %v5007
        %v5009 = vpop.f32.mrb[0].mxu0
        %v5010 = vpop.f32.mrb[0].mxu0
        %v5011 = vadd.f32 0.0, %v5010
        %v5012 = vpop.f32.mrb[0].mxu0
        %5013 = vmatprep.mubr.bf16.mxu0 0
        %5014 = vmatmul.mubr.bf16.gmra.mrb[0].mxu0 %v4960
        %v5015 = vpop.f32.mrb[0].mxu0
        %v5016 = vadd.f32 0.0, %v5015
        %v5017 = vpop.f32.mrb[0].mxu0
        %v5018 = vpop.f32.mrb[0].mxu0
        %v5019 = vadd.f32 0.0, %v5018
        %v5020 = vpop.f32.mrb[0].mxu0
        %5021 = vmatprep.mubr.bf16.mxu0 0
        %5022 = vmatmul.mubr.bf16.gmra.mrb[0].mxu0 %v4963
        %v5023 = vpop.f32.mrb[0].mxu0
        %v5024 = vadd.f32 0.0, %v5023
        %v5025 = vpop.f32.mrb[0].mxu0
        %v5026 = vpop.f32.mrb[0].mxu0
        %v5027 = vadd.f32 0.0, %v5026
        %v5028 = vpop.f32.mrb[0].mxu0
        %5029 = vdwg.mxu0
        %v5030 = vadd.f32 %v4885, %v5000
        %v5031 = vadd.f32 %v4886, %v5003
        %v5032 = vadd.f32 %v4887, %v5008
        %v5033 = vadd.f32 %v4888, %v5011
        %v5034 = vadd.f32 %v4889, %v5016
        %v5035 = vadd.f32 %v4890, %v5019
        %v5036 = vadd.f32 %v4891, %v5024
        %v5037 = vadd.f32 %v4892, %v5027
        %s5038 = scalar_lea.vmem %s290, 288 [#allocation4]
        %v5039 = vld [vmem:[%s5038] sm:$0xf]
        %v5040 = vld [vmem:[%s5038 + $0x4] sm:$0xf]
        %v5041 = vld [vmem:[%s5038 + $0x8] sm:$0xf]
        %v5042 = vld [vmem:[%s5038 + $0xc] sm:$0xf]
        %v5043 = vld [vmem:[%s5038 + $0x10] sm:$0xf]
        %v5044 = vld [vmem:[%s5038 + $0x14] sm:$0xf]
        %v5045 = vld [vmem:[%s5038 + $0x18] sm:$0xf]
        %v5046 = vld [vmem:[%s5038 + $0x1c] sm:$0xf]
        %v5047 = vld [vmem:[%s925] sm:$0xf]
        %v5048 = vld [vmem:[%s925 + $0x4] sm:$0xf]
        %v5049 = vld [vmem:[%s925 + $0x8] sm:$0xf]
        %v5050 = vld [vmem:[%s925 + $0xc] sm:$0xf]
        %v5051 = vld [vmem:[%s925 + $0x10] sm:$0xf]
        %v5052 = vld [vmem:[%s925 + $0x14] sm:$0xf]
        %v5053 = vld [vmem:[%s925 + $0x18] sm:$0xf]
        %v5054 = vld [vmem:[%s925 + $0x1c] sm:$0xf]
        %v5063 = vunpack.c.l.b16 %v5039
        %v5064 = vunpack.c.l.b16 %v5040
        %v5065 = vunpack.c.l.b16 %v5041
        %v5066 = vunpack.c.l.b16 %v5042
        %v5067 = vunpack.c.l.b16 %v5043
        %v5068 = vunpack.c.l.b16 %v5044
        %v5069 = vunpack.c.l.b16 %v5045
        %v5070 = vunpack.c.l.b16 %v5046
        %v5071 = vpack.c.b16 %v5064, %v5063
        %v5072 = vpack.c.b16 %v5066, %v5065
        %v5073 = vpack.c.b16 %v5068, %v5067
        %v5074 = vpack.c.b16 %v5070, %v5069
        %v5083 = vunpack.c.l.b16 %v5047
        %v5084 = vunpack.c.l.b16 %v5048
        %v5085 = vunpack.c.l.b16 %v5049
        %v5086 = vunpack.c.l.b16 %v5050
        %v5087 = vunpack.c.l.b16 %v5051
        %v5088 = vunpack.c.l.b16 %v5052
        %v5089 = vunpack.c.l.b16 %v5053
        %v5090 = vunpack.c.l.b16 %v5054
        %v5091 = vpack.c.b16 %v5084, %v5083
        %v5092 = vpack.c.b16 %v5086, %v5085
        %v5093 = vpack.c.b16 %v5088, %v5087
        %v5094 = vpack.c.b16 %v5090, %v5089
        %v5100 = vsel %vm423, %v5071, 0
        %v5103 = vsel %vm423, %v5072, 0
        %v5106 = vsel %vm423, %v5073, 0
        %v5109 = vsel %vm423, %v5074, 0
        %5111 = vmatprep.subr.bf16.mxu0 0
        %5112 = vmatpush1.bf16.msra.mxu0 %v5091
        %5113 = vmatprep.subr.bf16.mxu0 0
        %5114 = vmatpush1.bf16.msra.mxu0 %v5092
        %5115 = vmatprep.subr.bf16.mxu0 0
        %5116 = vmatpush1.bf16.msra.mxu0 %v5093
        %5117 = vmatprep.subr.bf16.mxu0 0
        %5118 = vmatpush1.bf16.msra.mxu0 %v5094
        %5119 = vmatprep.subr.bf16.mxu0 0
        %5120 = vmatpush1.bf16.msra.mxu0 0
        %5121 = vmatprep.subr.bf16.mxu0 0
        %5122 = vmatpush1.bf16.msra.mxu0 0
        %5123 = vmatprep.subr.bf16.mxu0 0
        %5124 = vmatpush1.bf16.msra.mxu0 0
        %5125 = vmatprep.subr.bf16.mxu0 0
        %5126 = vmatpush1.bf16.msra.mxu0 0
        %5127 = vmatprep.subr.bf16.mxu0 0
        %5128 = vmatpush1.bf16.msra.mxu0 0
        %5129 = vmatprep.subr.bf16.mxu0 0
        %5130 = vmatpush1.bf16.msra.mxu0 0
        %5131 = vmatprep.subr.bf16.mxu0 0
        %5132 = vmatpush1.bf16.msra.mxu0 0
        %5133 = vmatprep.subr.bf16.mxu0 0
        %5134 = vmatpush1.bf16.msra.mxu0 0
        %5135 = vmatprep.subr.bf16.mxu0 0
        %5136 = vmatpush1.bf16.msra.mxu0 0
        %5137 = vmatprep.subr.bf16.mxu0 0
        %5138 = vmatpush1.bf16.msra.mxu0 0
        %5139 = vmatprep.subr.bf16.mxu0 0
        %5140 = vmatpush1.bf16.msra.mxu0 0
        %5141 = vmatprep.subr.bf16.mxu0 0
        %5142 = vmatpush1.bf16.msra.mxu0 0
        %5143 = vmatprep.mubr.bf16.mxu0 0
        %5144 = vmatmul.mubr.bf16.gmra.mrb[0].mxu0 %v5100
        %v5145 = vpop.f32.mrb[0].mxu0
        %v5146 = vadd.f32 0.0, %v5145
        %v5147 = vpop.f32.mrb[0].mxu0
        %v5148 = vpop.f32.mrb[0].mxu0
        %v5149 = vadd.f32 0.0, %v5148
        %v5150 = vpop.f32.mrb[0].mxu0
        %5151 = vmatprep.mubr.bf16.mxu0 0
        %5152 = vmatmul.mubr.bf16.gmra.mrb[0].mxu0 %v5103
        %v5153 = vpop.f32.mrb[0].mxu0
        %v5154 = vadd.f32 0.0, %v5153
        %v5155 = vpop.f32.mrb[0].mxu0
        %v5156 = vpop.f32.mrb[0].mxu0
        %v5157 = vadd.f32 0.0, %v5156
        %v5158 = vpop.f32.mrb[0].mxu0
        %5159 = vmatprep.mubr.bf16.mxu0 0
        %5160 = vmatmul.mubr.bf16.gmra.mrb[0].mxu0 %v5106
        %v5161 = vpop.f32.mrb[0].mxu0
        %v5162 = vadd.f32 0.0, %v5161
        %v5163 = vpop.f32.mrb[0].mxu0
        %v5164 = vpop.f32.mrb[0].mxu0
        %v5165 = vadd.f32 0.0, %v5164
        %v5166 = vpop.f32.mrb[0].mxu0
        %5167 = vmatprep.mubr.bf16.mxu0 0
        %5168 = vmatmul.mubr.bf16.gmra.mrb[0].mxu0 %v5109
        %v5169 = vpop.f32.mrb[0].mxu0
        %v5170 = vadd.f32 0.0, %v5169
        %v5171 = vpop.f32.mrb[0].mxu0
        %v5172 = vpop.f32.mrb[0].mxu0
        %v5173 = vadd.f32 0.0, %v5172
        %v5174 = vpop.f32.mrb[0].mxu0
        %5175 = vdwg.mxu0
        %v5176 = vadd.f32 %v5030, %v5146
        %v5177 = vadd.f32 %v5031, %v5149
        %v5178 = vadd.f32 %v5032, %v5154
        %v5179 = vadd.f32 %v5033, %v5157
        %v5180 = vadd.f32 %v5034, %v5162
        %v5181 = vadd.f32 %v5035, %v5165
        %v5182 = vadd.f32 %v5036, %v5170
        %v5183 = vadd.f32 %v5037, %v5173
        %v5184 = vadd.f32 %v5176, %v1067
        %v5185 = vadd.f32 %v5177, %v1067
        %v5186 = vadd.f32 %v5178, %v1067
        %v5187 = vadd.f32 %v5179, %v1067
        %v5188 = vadd.f32 %v5180, %v1067
        %v5189 = vadd.f32 %v5181, %v1067
        %v5190 = vadd.f32 %v5182, %v1067
        %v5191 = vadd.f32 %v5183, %v1067
        %v5192 = vmax.f32 %v5184, 0.0
        %v5193 = vmax.f32 %v5185, 0.0
        %v5194 = vmax.f32 %v5186, 0.0
        %v5195 = vmax.f32 %v5187, 0.0
        %v5196 = vmax.f32 %v5188, 0.0
        %v5197 = vmax.f32 %v5189, 0.0
        %v5198 = vmax.f32 %v5190, 0.0
        %v5199 = vmax.f32 %v5191, 0.0
        %5200 = vst.msk [vmem:[#allocation2] sm:$0xff] %vm1085, %v5192
        %5201 = vst.msk [vmem:[#allocation2 + $0x8] sm:$0xff] %vm1085, %v5193
        %5202 = vst.msk [vmem:[#allocation2 + $0x10] sm:$0xff] %vm1085, %v5194
        %5203 = vst.msk [vmem:[#allocation2 + $0x18] sm:$0xff] %vm1085, %v5195
        %5204 = vst.msk [vmem:[#allocation2 + $0x20] sm:$0xff] %vm1085, %v5196
        %5205 = vst.msk [vmem:[#allocation2 + $0x28] sm:$0xff] %vm1085, %v5197
        %5206 = vst.msk [vmem:[#allocation2 + $0x30] sm:$0xff] %vm1085, %v5198
        %5207 = vst.msk [vmem:[#allocation2 + $0x38] sm:$0xff] %vm1085, %v5199
        %v5208 = vld [vmem:[#allocation2] ss:$2 sm:$0xff]
        %v5209 = vld [vmem:[%s1095] ss:$2 sm:$0xff]
        %v5210 = vld [vmem:[%s1097] ss:$2 sm:$0xff]
        %v5211 = vld [vmem:[%s1099] ss:$2 sm:$0xff]
        %v5212 = vld [vmem:[%s1101] ss:$2 sm:$0xff]
        %v5213 = vld [vmem:[%s1103] ss:$2 sm:$0xff]
        %v5214 = vld [vmem:[%s1105] ss:$2 sm:$0xff]
        %v5215 = vld [vmem:[%s1107] ss:$2 sm:$0xff]
        %v5216 = vmax.f32 %v5208, %v5212
        %v5217 = vmax.f32 %v5209, %v5213
        %v5218 = vmax.f32 %v5210, %v5214
        %v5219 = vmax.f32 %v5211, %v5215
        %v5224 = vrot.slane %v5212, 7
        %v5225 = vrot.slane %v5213, 7
        %v5226 = vsel %vm1117, %v5224, %v5225
        %v5227 = vrot.slane %v5214, 7
        %v5228 = vsel %vm1117, %v5225, %v5227
        %v5229 = vrot.slane %v5215, 7
        %v5230 = vsel %vm1117, %v5227, %v5229
        %v5235 = vsel %vm1117, 0.0, %v5224
        %v5236 = vmul.f32 %v5235, %v341
        %v5237 = vmul.f32 %v5226, %v342
        %v5238 = vmul.f32 %v5228, %v343
        %v5239 = vmul.f32 %v5230, %v344
        %v5240 = vmax.f32 %v5216, %v5236
        %v5241 = vmax.f32 %v5217, %v5237
        %v5242 = vmax.f32 %v5218, %v5238
        %v5243 = vmax.f32 %v5219, %v5239
        %5244 = vst.msk [vmem:[#allocation3] sm:$0xff] %vm1085, %v5240
        %5245 = vst.msk [vmem:[#allocation3 + $0x8] sm:$0xff] %vm1085, %v5241
        %5246 = vst.msk [vmem:[#allocation3 + $0x10] sm:$0xff] %vm1085, %v5242
        %5247 = vst.msk [vmem:[#allocation3 + $0x18] sm:$0xff] %vm1085, %v5243
        %v5248 = vld [vmem:[#allocation3] sm:$0xf]
        %v5249 = vld [vmem:[#allocation3 + $0x4] sm:$0xf]
        %v5250 = vmax.f32 %v5248, %v5249
        %v5251 = vsel %vm1145, %v5250, 0.0
        %v5252 = vrot.slane %v5251, 4
        %v5253 = vadd.f32 %v5251, %v5252
        %v5254 = vrot.slane %v5253, 2
        %v5255 = vadd.f32 %v5253, %v5254
        %v5256 = vrot.slane %v5255, 1
        %v5257 = vadd.f32 %v5255, %v5256
        %v5258 = vadd.f32 %v5257, 0.0
        %v5259 = vld [vmem:[#allocation3 + $0x8] sm:$0xf]
        %v5260 = vld [vmem:[#allocation3 + $0xc] sm:$0xf]
        %v5261 = vmax.f32 %v5259, %v5260
        %v5262 = vmax.f32 %v5261, %v5249
        %v5263 = vsel %vm1145, %v5262, 0.0
        %v5264 = vrot.slane %v5263, 4
        %v5265 = vadd.f32 %v5263, %v5264
        %v5266 = vrot.slane %v5265, 2
        %v5267 = vadd.f32 %v5265, %v5266
        %v5268 = vrot.slane %v5267, 1
        %v5269 = vadd.f32 %v5267, %v5268
        %v5270 = vadd.f32 %v5258, %v5269
        %v5271 = vld [vmem:[#allocation3 + $0x10] sm:$0xf]
        %v5272 = vld [vmem:[#allocation3 + $0x14] sm:$0xf]
        %v5273 = vmax.f32 %v5271, %v5272
        %v5274 = vmax.f32 %v5273, %v5260
        %v5275 = vsel %vm1145, %v5274, 0.0
        %v5276 = vrot.slane %v5275, 4
        %v5277 = vadd.f32 %v5275, %v5276
        %v5278 = vrot.slane %v5277, 2
        %v5279 = vadd.f32 %v5277, %v5278
        %v5280 = vrot.slane %v5279, 1
        %v5281 = vadd.f32 %v5279, %v5280
        %v5282 = vadd.f32 %v5270, %v5281
        %v5283 = vld [vmem:[#allocation3 + $0x18] sm:$0xf]
        %v5284 = vld [vmem:[#allocation3 + $0x1c] sm:$0xf]
        %v5285 = vmax.f32 %v5283, %v5284
        %v5286 = vmax.f32 %v5285, %v5272
        %v5287 = vsel %vm1145, %v5286, 0.0
        %v5288 = vrot.slane %v5287, 4
        %v5289 = vadd.f32 %v5287, %v5288
        %v5290 = vrot.slane %v5289, 2
        %v5291 = vadd.f32 %v5289, %v5290
        %v5292 = vrot.slane %v5291, 1
        %v5293 = vadd.f32 %v5291, %v5292
        %v5294 = vadd.f32 %v5282, %v5293
        %v5295 = vld [vmem:[%s2575] sm:$0xf]
        %v5296 = vld [vmem:[%s2575 + $0x4] sm:$0xf]
        %v5297 = vld [vmem:[%s2575 + $0x8] sm:$0xf]
        %v5298 = vld [vmem:[%s2575 + $0xc] sm:$0xf]
        %v5299 = vld [vmem:[%s2575 + $0x10] sm:$0xf]
        %v5300 = vld [vmem:[%s2575 + $0x14] sm:$0xf]
        %v5301 = vld [vmem:[%s2575 + $0x18] sm:$0xf]
        %v5302 = vld [vmem:[%s2575 + $0x1c] sm:$0xf]
        %v5303 = vld [vmem:[#allocation7] sm:$0xf]
        %v5304 = vld [vmem:[#allocation7 + $0x4] sm:$0xf]
        %v5305 = vld [vmem:[#allocation7 + $0x8] sm:$0xf]
        %v5306 = vld [vmem:[#allocation7 + $0xc] sm:$0xf]
        %v5307 = vld [vmem:[#allocation7 + $0x10] sm:$0xf]
        %v5308 = vld [vmem:[#allocation7 + $0x14] sm:$0xf]
        %v5309 = vld [vmem:[#allocation7 + $0x18] sm:$0xf]
        %v5310 = vld [vmem:[#allocation7 + $0x1c] sm:$0xf]
        %v5311 = vld [vmem:[%s3396] sm:$0xf]
        %v5312 = vld [vmem:[%s3396 + $0x4] sm:$0xf]
        %v5313 = vld [vmem:[%s3396 + $0x8] sm:$0xf]
        %v5314 = vld [vmem:[%s3396 + $0xc] sm:$0xf]
        %v5315 = vld [vmem:[%s3396 + $0x10] sm:$0xf]
        %v5316 = vld [vmem:[%s3396 + $0x14] sm:$0xf]
        %v5317 = vld [vmem:[%s3396 + $0x18] sm:$0xf]
        %v5318 = vld [vmem:[%s3396 + $0x1c] sm:$0xf]
        %v5319 = vld [vmem:[%s370] sm:$0xf]
        %v5320 = vld [vmem:[%s370 + $0x4] sm:$0xf]
        %v5321 = vld [vmem:[%s370 + $0x8] sm:$0xf]
        %v5322 = vld [vmem:[%s370 + $0xc] sm:$0xf]
        %v5323 = vld [vmem:[%s370 + $0x10] sm:$0xf]
        %v5324 = vld [vmem:[%s370 + $0x14] sm:$0xf]
        %v5325 = vld [vmem:[%s370 + $0x18] sm:$0xf]
        %v5326 = vld [vmem:[%s370 + $0x1c] sm:$0xf]
        %v5335 = vunpack.c.l.b16 %v5311
        %v5336 = vunpack.c.l.b16 %v5312
        %v5337 = vunpack.c.l.b16 %v5313
        %v5338 = vunpack.c.l.b16 %v5314
        %v5339 = vunpack.c.l.b16 %v5315
        %v5340 = vunpack.c.l.b16 %v5316
        %v5341 = vunpack.c.l.b16 %v5317
        %v5342 = vunpack.c.l.b16 %v5318
        %v5343 = vpack.c.b16 %v5336, %v5335
        %v5344 = vpack.c.b16 %v5338, %v5337
        %v5345 = vpack.c.b16 %v5340, %v5339
        %v5346 = vpack.c.b16 %v5342, %v5341
        %v5355 = vunpack.c.l.b16 %v5319
        %v5356 = vunpack.c.l.b16 %v5320
        %v5357 = vunpack.c.l.b16 %v5321
        %v5358 = vunpack.c.l.b16 %v5322
        %v5359 = vunpack.c.l.b16 %v5323
        %v5360 = vunpack.c.l.b16 %v5324
        %v5361 = vunpack.c.l.b16 %v5325
        %v5362 = vunpack.c.l.b16 %v5326
        %v5363 = vpack.c.b16 %v5356, %v5355
        %v5364 = vpack.c.b16 %v5358, %v5357
        %v5365 = vpack.c.b16 %v5360, %v5359
        %v5366 = vpack.c.b16 %v5362, %v5361
        %v5372 = vsel %vm423, %v5343, 0
        %v5375 = vsel %vm423, %v5344, 0
        %v5378 = vsel %vm423, %v5345, 0
        %v5381 = vsel %vm423, %v5346, 0
        %5383 = vmatprep.subr.bf16.mxu0 0
        %5384 = vmatpush1.bf16.msra.mxu0 %v5363
        %5385 = vmatprep.subr.bf16.mxu0 0
        %5386 = vmatpush1.bf16.msra.mxu0 %v5364
        %5387 = vmatprep.subr.bf16.mxu0 0
        %5388 = vmatpush1.bf16.msra.mxu0 %v5365
        %5389 = vmatprep.subr.bf16.mxu0 0
        %5390 = vmatpush1.bf16.msra.mxu0 %v5366
        %5391 = vmatprep.subr.bf16.mxu0 0
        %5392 = vmatpush1.bf16.msra.mxu0 0
        %5393 = vmatprep.subr.bf16.mxu0 0
        %5394 = vmatpush1.bf16.msra.mxu0 0
        %5395 = vmatprep.subr.bf16.mxu0 0
        %5396 = vmatpush1.bf16.msra.mxu0 0
        %5397 = vmatprep.subr.bf16.mxu0 0
        %5398 = vmatpush1.bf16.msra.mxu0 0
        %5399 = vmatprep.subr.bf16.mxu0 0
        %5400 = vmatpush1.bf16.msra.mxu0 0
        %5401 = vmatprep.subr.bf16.mxu0 0
        %5402 = vmatpush1.bf16.msra.mxu0 0
        %5403 = vmatprep.subr.bf16.mxu0 0
        %5404 = vmatpush1.bf16.msra.mxu0 0
        %5405 = vmatprep.subr.bf16.mxu0 0
        %5406 = vmatpush1.bf16.msra.mxu0 0
        %5407 = vmatprep.subr.bf16.mxu0 0
        %5408 = vmatpush1.bf16.msra.mxu0 0
        %5409 = vmatprep.subr.bf16.mxu0 0
        %5410 = vmatpush1.bf16.msra.mxu0 0
        %5411 = vmatprep.subr.bf16.mxu0 0
        %5412 = vmatpush1.bf16.msra.mxu0 0
        %5413 = vmatprep.subr.bf16.mxu0 0
        %5414 = vmatpush1.bf16.msra.mxu0 0
        %5415 = vmatprep.mubr.bf16.mxu0 0
        %5416 = vmatmul.mubr.bf16.gmra.mrb[0].mxu0 %v5372
        %v5417 = vpop.f32.mrb[0].mxu0
        %v5418 = vadd.f32 0.0, %v5417
        %v5419 = vpop.f32.mrb[0].mxu0
        %v5420 = vpop.f32.mrb[0].mxu0
        %v5421 = vadd.f32 0.0, %v5420
        %v5422 = vpop.f32.mrb[0].mxu0
        %5423 = vmatprep.mubr.bf16.mxu0 0
        %5424 = vmatmul.mubr.bf16.gmra.mrb[0].mxu0 %v5375
        %v5425 = vpop.f32.mrb[0].mxu0
        %v5426 = vadd.f32 0.0, %v5425
        %v5427 = vpop.f32.mrb[0].mxu0
        %v5428 = vpop.f32.mrb[0].mxu0
        %v5429 = vadd.f32 0.0, %v5428
        %v5430 = vpop.f32.mrb[0].mxu0
        %5431 = vmatprep.mubr.bf16.mxu0 0
        %5432 = vmatmul.mubr.bf16.gmra.mrb[0].mxu0 %v5378
        %v5433 = vpop.f32.mrb[0].mxu0
        %v5434 = vadd.f32 0.0, %v5433
        %v5435 = vpop.f32.mrb[0].mxu0
        %v5436 = vpop.f32.mrb[0].mxu0
        %v5437 = vadd.f32 0.0, %v5436
        %v5438 = vpop.f32.mrb[0].mxu0
        %5439 = vmatprep.mubr.bf16.mxu0 0
        %5440 = vmatmul.mubr.bf16.gmra.mrb[0].mxu0 %v5381
        %v5441 = vpop.f32.mrb[0].mxu0
        %v5442 = vadd.f32 0.0, %v5441
        %v5443 = vpop.f32.mrb[0].mxu0
        %v5444 = vpop.f32.mrb[0].mxu0
        %v5445 = vadd.f32 0.0, %v5444
        %v5446 = vpop.f32.mrb[0].mxu0
        %5447 = vdwg.mxu0
        %v5456 = vunpack.c.l.b16 %v5295
        %v5457 = vunpack.c.l.b16 %v5296
        %v5458 = vunpack.c.l.b16 %v5297
        %v5459 = vunpack.c.l.b16 %v5298
        %v5460 = vunpack.c.l.b16 %v5299
        %v5461 = vunpack.c.l.b16 %v5300
        %v5462 = vunpack.c.l.b16 %v5301
        %v5463 = vunpack.c.l.b16 %v5302
        %v5464 = vpack.c.b16 %v5457, %v5456
        %v5465 = vpack.c.b16 %v5459, %v5458
        %v5466 = vpack.c.b16 %v5461, %v5460
        %v5467 = vpack.c.b16 %v5463, %v5462
        %v5476 = vunpack.c.l.b16 %v5303
        %v5477 = vunpack.c.l.b16 %v5304
        %v5478 = vunpack.c.l.b16 %v5305
        %v5479 = vunpack.c.l.b16 %v5306
        %v5480 = vunpack.c.l.b16 %v5307
        %v5481 = vunpack.c.l.b16 %v5308
        %v5482 = vunpack.c.l.b16 %v5309
        %v5483 = vunpack.c.l.b16 %v5310
        %v5484 = vpack.c.b16 %v5477, %v5476
        %v5485 = vpack.c.b16 %v5479, %v5478
        %v5486 = vpack.c.b16 %v5481, %v5480
        %v5487 = vpack.c.b16 %v5483, %v5482
        %v5493 = vsel %vm423, %v5464, 0
        %v5496 = vsel %vm423, %v5465, 0
        %v5499 = vsel %vm423, %v5466, 0
        %v5502 = vsel %vm423, %v5467, 0
        %5504 = vmatprep.subr.bf16.mxu0 0
        %5505 = vmatpush1.bf16.msra.mxu0 %v5484
        %5506 = vmatprep.subr.bf16.mxu0 0
        %5507 = vmatpush1.bf16.msra.mxu0 %v5485
        %5508 = vmatprep.subr.bf16.mxu0 0
        %5509 = vmatpush1.bf16.msra.mxu0 %v5486
        %5510 = vmatprep.subr.bf16.mxu0 0
        %5511 = vmatpush1.bf16.msra.mxu0 %v5487
        %5512 = vmatprep.subr.bf16.mxu0 0
        %5513 = vmatpush1.bf16.msra.mxu0 0
        %5514 = vmatprep.subr.bf16.mxu0 0
        %5515 = vmatpush1.bf16.msra.mxu0 0
        %5516 = vmatprep.subr.bf16.mxu0 0
        %5517 = vmatpush1.bf16.msra.mxu0 0
        %5518 = vmatprep.subr.bf16.mxu0 0
        %5519 = vmatpush1.bf16.msra.mxu0 0
        %5520 = vmatprep.subr.bf16.mxu0 0
        %5521 = vmatpush1.bf16.msra.mxu0 0
        %5522 = vmatprep.subr.bf16.mxu0 0
        %5523 = vmatpush1.bf16.msra.mxu0 0
        %5524 = vmatprep.subr.bf16.mxu0 0
        %5525 = vmatpush1.bf16.msra.mxu0 0
        %5526 = vmatprep.subr.bf16.mxu0 0
        %5527 = vmatpush1.bf16.msra.mxu0 0
        %5528 = vmatprep.subr.bf16.mxu0 0
        %5529 = vmatpush1.bf16.msra.mxu0 0
        %5530 = vmatprep.subr.bf16.mxu0 0
        %5531 = vmatpush1.bf16.msra.mxu0 0
        %5532 = vmatprep.subr.bf16.mxu0 0
        %5533 = vmatpush1.bf16.msra.mxu0 0
        %5534 = vmatprep.subr.bf16.mxu0 0
        %5535 = vmatpush1.bf16.msra.mxu0 0
        %5536 = vmatprep.mubr.bf16.mxu0 0
        %5537 = vmatmul.mubr.bf16.gmra.mrb[0].mxu0 %v5493
        %v5538 = vpop.f32.mrb[0].mxu0
        %v5539 = vadd.f32 %v5418, %v5538
        %v5540 = vpop.f32.mrb[0].mxu0
        %v5541 = vpop.f32.mrb[0].mxu0
        %v5542 = vadd.f32 %v5421, %v5541
        %v5543 = vpop.f32.mrb[0].mxu0
        %5544 = vmatprep.mubr.bf16.mxu0 0
        %5545 = vmatmul.mubr.bf16.gmra.mrb[0].mxu0 %v5496
        %v5546 = vpop.f32.mrb[0].mxu0
        %v5547 = vadd.f32 %v5426, %v5546
        %v5548 = vpop.f32.mrb[0].mxu0
        %v5549 = vpop.f32.mrb[0].mxu0
        %v5550 = vadd.f32 %v5429, %v5549
        %v5551 = vpop.f32.mrb[0].mxu0
        %5552 = vmatprep.mubr.bf16.mxu0 0
        %5553 = vmatmul.mubr.bf16.gmra.mrb[0].mxu0 %v5499
        %v5554 = vpop.f32.mrb[0].mxu0
        %v5555 = vadd.f32 %v5434, %v5554
        %v5556 = vpop.f32.mrb[0].mxu0
        %v5557 = vpop.f32.mrb[0].mxu0
        %v5558 = vadd.f32 %v5437, %v5557
        %v5559 = vpop.f32.mrb[0].mxu0
        %5560 = vmatprep.mubr.bf16.mxu0 0
        %5561 = vmatmul.mubr.bf16.gmra.mrb[0].mxu0 %v5502
        %v5562 = vpop.f32.mrb[0].mxu0
        %v5563 = vadd.f32 %v5442, %v5562
        %v5564 = vpop.f32.mrb[0].mxu0
        %v5565 = vpop.f32.mrb[0].mxu0
        %v5566 = vadd.f32 %v5445, %v5565
        %v5567 = vpop.f32.mrb[0].mxu0
        %5568 = vdwg.mxu0
        %v5569 = vld [vmem:[%s4217] sm:$0xf]
        %v5570 = vld [vmem:[%s4217 + $0x4] sm:$0xf]
        %v5571 = vld [vmem:[%s4217 + $0x8] sm:$0xf]
        %v5572 = vld [vmem:[%s4217 + $0xc] sm:$0xf]
        %v5573 = vld [vmem:[%s4217 + $0x10] sm:$0xf]
        %v5574 = vld [vmem:[%s4217 + $0x14] sm:$0xf]
        %v5575 = vld [vmem:[%s4217 + $0x18] sm:$0xf]
        %v5576 = vld [vmem:[%s4217 + $0x1c] sm:$0xf]
        %v5577 = vld [vmem:[%s631] sm:$0xf]
        %v5578 = vld [vmem:[%s631 + $0x4] sm:$0xf]
        %v5579 = vld [vmem:[%s631 + $0x8] sm:$0xf]
        %v5580 = vld [vmem:[%s631 + $0xc] sm:$0xf]
        %v5581 = vld [vmem:[%s631 + $0x10] sm:$0xf]
        %v5582 = vld [vmem:[%s631 + $0x14] sm:$0xf]
        %v5583 = vld [vmem:[%s631 + $0x18] sm:$0xf]
        %v5584 = vld [vmem:[%s631 + $0x1c] sm:$0xf]
        %v5593 = vunpack.c.l.b16 %v5569
        %v5594 = vunpack.c.l.b16 %v5570
        %v5595 = vunpack.c.l.b16 %v5571
        %v5596 = vunpack.c.l.b16 %v5572
        %v5597 = vunpack.c.l.b16 %v5573
        %v5598 = vunpack.c.l.b16 %v5574
        %v5599 = vunpack.c.l.b16 %v5575
        %v5600 = vunpack.c.l.b16 %v5576
        %v5601 = vpack.c.b16 %v5594, %v5593
        %v5602 = vpack.c.b16 %v5596, %v5595
        %v5603 = vpack.c.b16 %v5598, %v5597
        %v5604 = vpack.c.b16 %v5600, %v5599
        %v5613 = vunpack.c.l.b16 %v5577
        %v5614 = vunpack.c.l.b16 %v5578
        %v5615 = vunpack.c.l.b16 %v5579
        %v5616 = vunpack.c.l.b16 %v5580
        %v5617 = vunpack.c.l.b16 %v5581
        %v5618 = vunpack.c.l.b16 %v5582
        %v5619 = vunpack.c.l.b16 %v5583
        %v5620 = vunpack.c.l.b16 %v5584
        %v5621 = vpack.c.b16 %v5614, %v5613
        %v5622 = vpack.c.b16 %v5616, %v5615
        %v5623 = vpack.c.b16 %v5618, %v5617
        %v5624 = vpack.c.b16 %v5620, %v5619
        %v5630 = vsel %vm423, %v5601, 0
        %v5633 = vsel %vm423, %v5602, 0
        %v5636 = vsel %vm423, %v5603, 0
        %v5639 = vsel %vm423, %v5604, 0
        %5641 = vmatprep.subr.bf16.mxu0 0
        %5642 = vmatpush1.bf16.msra.mxu0 %v5621
        %5643 = vmatprep.subr.bf16.mxu0 0
        %5644 = vmatpush1.bf16.msra.mxu0 %v5622
        %5645 = vmatprep.subr.bf16.mxu0 0
        %5646 = vmatpush1.bf16.msra.mxu0 %v5623
        %5647 = vmatprep.subr.bf16.mxu0 0
        %5648 = vmatpush1.bf16.msra.mxu0 %v5624
        %5649 = vmatprep.subr.bf16.mxu0 0
        %5650 = vmatpush1.bf16.msra.mxu0 0
        %5651 = vmatprep.subr.bf16.mxu0 0
        %5652 = vmatpush1.bf16.msra.mxu0 0
        %5653 = vmatprep.subr.bf16.mxu0 0
        %5654 = vmatpush1.bf16.msra.mxu0 0
        %5655 = vmatprep.subr.bf16.mxu0 0
        %5656 = vmatpush1.bf16.msra.mxu0 0
        %5657 = vmatprep.subr.bf16.mxu0 0
        %5658 = vmatpush1.bf16.msra.mxu0 0
        %5659 = vmatprep.subr.bf16.mxu0 0
        %5660 = vmatpush1.bf16.msra.mxu0 0
        %5661 = vmatprep.subr.bf16.mxu0 0
        %5662 = vmatpush1.bf16.msra.mxu0 0
        %5663 = vmatprep.subr.bf16.mxu0 0
        %5664 = vmatpush1.bf16.msra.mxu0 0
        %5665 = vmatprep.subr.bf16.mxu0 0
        %5666 = vmatpush1.bf16.msra.mxu0 0
        %5667 = vmatprep.subr.bf16.mxu0 0
        %5668 = vmatpush1.bf16.msra.mxu0 0
        %5669 = vmatprep.subr.bf16.mxu0 0
        %5670 = vmatpush1.bf16.msra.mxu0 0
        %5671 = vmatprep.subr.bf16.mxu0 0
        %5672 = vmatpush1.bf16.msra.mxu0 0
        %5673 = vmatprep.mubr.bf16.mxu0 0
        %5674 = vmatmul.mubr.bf16.gmra.mrb[0].mxu0 %v5630
        %v5675 = vpop.f32.mrb[0].mxu0
        %v5676 = vadd.f32 0.0, %v5675
        %v5677 = vpop.f32.mrb[0].mxu0
        %v5678 = vpop.f32.mrb[0].mxu0
        %v5679 = vadd.f32 0.0, %v5678
        %v5680 = vpop.f32.mrb[0].mxu0
        %5681 = vmatprep.mubr.bf16.mxu0 0
        %5682 = vmatmul.mubr.bf16.gmra.mrb[0].mxu0 %v5633
        %v5683 = vpop.f32.mrb[0].mxu0
        %v5684 = vadd.f32 0.0, %v5683
        %v5685 = vpop.f32.mrb[0].mxu0
        %v5686 = vpop.f32.mrb[0].mxu0
        %v5687 = vadd.f32 0.0, %v5686
        %v5688 = vpop.f32.mrb[0].mxu0
        %5689 = vmatprep.mubr.bf16.mxu0 0
        %5690 = vmatmul.mubr.bf16.gmra.mrb[0].mxu0 %v5636
        %v5691 = vpop.f32.mrb[0].mxu0
        %v5692 = vadd.f32 0.0, %v5691
        %v5693 = vpop.f32.mrb[0].mxu0
        %v5694 = vpop.f32.mrb[0].mxu0
        %v5695 = vadd.f32 0.0, %v5694
        %v5696 = vpop.f32.mrb[0].mxu0
        %5697 = vmatprep.mubr.bf16.mxu0 0
        %5698 = vmatmul.mubr.bf16.gmra.mrb[0].mxu0 %v5639
        %v5699 = vpop.f32.mrb[0].mxu0
        %v5700 = vadd.f32 0.0, %v5699
        %v5701 = vpop.f32.mrb[0].mxu0
        %v5702 = vpop.f32.mrb[0].mxu0
        %v5703 = vadd.f32 0.0, %v5702
        %v5704 = vpop.f32.mrb[0].mxu0
        %5705 = vdwg.mxu0
        %v5706 = vadd.f32 %v5539, %v5676
        %v5707 = vadd.f32 %v5542, %v5679
        %v5708 = vadd.f32 %v5547, %v5684
        %v5709 = vadd.f32 %v5550, %v5687
        %v5710 = vadd.f32 %v5555, %v5692
        %v5711 = vadd.f32 %v5558, %v5695
        %v5712 = vadd.f32 %v5563, %v5700
        %v5713 = vadd.f32 %v5566, %v5703
        %v5714 = vld [vmem:[%s5038] sm:$0xf]
        %v5715 = vld [vmem:[%s5038 + $0x4] sm:$0xf]
        %v5716 = vld [vmem:[%s5038 + $0x8] sm:$0xf]
        %v5717 = vld [vmem:[%s5038 + $0xc] sm:$0xf]
        %v5718 = vld [vmem:[%s5038 + $0x10] sm:$0xf]
        %v5719 = vld [vmem:[%s5038 + $0x14] sm:$0xf]
        %v5720 = vld [vmem:[%s5038 + $0x18] sm:$0xf]
        %v5721 = vld [vmem:[%s5038 + $0x1c] sm:$0xf]
        %v5722 = vld [vmem:[%s778] sm:$0xf]
        %v5723 = vld [vmem:[%s778 + $0x4] sm:$0xf]
        %v5724 = vld [vmem:[%s778 + $0x8] sm:$0xf]
        %v5725 = vld [vmem:[%s778 + $0xc] sm:$0xf]
        %v5726 = vld [vmem:[%s778 + $0x10] sm:$0xf]
        %v5727 = vld [vmem:[%s778 + $0x14] sm:$0xf]
        %v5728 = vld [vmem:[%s778 + $0x18] sm:$0xf]
        %v5729 = vld [vmem:[%s778 + $0x1c] sm:$0xf]
        %v5738 = vunpack.c.l.b16 %v5714
        %v5739 = vunpack.c.l.b16 %v5715
        %v5740 = vunpack.c.l.b16 %v5716
        %v5741 = vunpack.c.l.b16 %v5717
        %v5742 = vunpack.c.l.b16 %v5718
        %v5743 = vunpack.c.l.b16 %v5719
        %v5744 = vunpack.c.l.b16 %v5720
        %v5745 = vunpack.c.l.b16 %v5721
        %v5746 = vpack.c.b16 %v5739, %v5738
        %v5747 = vpack.c.b16 %v5741, %v5740
        %v5748 = vpack.c.b16 %v5743, %v5742
        %v5749 = vpack.c.b16 %v5745, %v5744
        %v5758 = vunpack.c.l.b16 %v5722
        %v5759 = vunpack.c.l.b16 %v5723
        %v5760 = vunpack.c.l.b16 %v5724
        %v5761 = vunpack.c.l.b16 %v5725
        %v5762 = vunpack.c.l.b16 %v5726
        %v5763 = vunpack.c.l.b16 %v5727
        %v5764 = vunpack.c.l.b16 %v5728
        %v5765 = vunpack.c.l.b16 %v5729
        %v5766 = vpack.c.b16 %v5759, %v5758
        %v5767 = vpack.c.b16 %v5761, %v5760
        %v5768 = vpack.c.b16 %v5763, %v5762
        %v5769 = vpack.c.b16 %v5765, %v5764
        %v5775 = vsel %vm423, %v5746, 0
        %v5778 = vsel %vm423, %v5747, 0
        %v5781 = vsel %vm423, %v5748, 0
        %v5784 = vsel %vm423, %v5749, 0
        %5786 = vmatprep.subr.bf16.mxu0 0
        %5787 = vmatpush1.bf16.msra.mxu0 %v5766
        %5788 = vmatprep.subr.bf16.mxu0 0
        %5789 = vmatpush1.bf16.msra.mxu0 %v5767
        %5790 = vmatprep.subr.bf16.mxu0 0
        %5791 = vmatpush1.bf16.msra.mxu0 %v5768
        %5792 = vmatprep.subr.bf16.mxu0 0
        %5793 = vmatpush1.bf16.msra.mxu0 %v5769
        %5794 = vmatprep.subr.bf16.mxu0 0
        %5795 = vmatpush1.bf16.msra.mxu0 0
        %5796 = vmatprep.subr.bf16.mxu0 0
        %5797 = vmatpush1.bf16.msra.mxu0 0
        %5798 = vmatprep.subr.bf16.mxu0 0
        %5799 = vmatpush1.bf16.msra.mxu0 0
        %5800 = vmatprep.subr.bf16.mxu0 0
        %5801 = vmatpush1.bf16.msra.mxu0 0
        %5802 = vmatprep.subr.bf16.mxu0 0
        %5803 = vmatpush1.bf16.msra.mxu0 0
        %5804 = vmatprep.subr.bf16.mxu0 0
        %5805 = vmatpush1.bf16.msra.mxu0 0
        %5806 = vmatprep.subr.bf16.mxu0 0
        %5807 = vmatpush1.bf16.msra.mxu0 0
        %5808 = vmatprep.subr.bf16.mxu0 0
        %5809 = vmatpush1.bf16.msra.mxu0 0
        %5810 = vmatprep.subr.bf16.mxu0 0
        %5811 = vmatpush1.bf16.msra.mxu0 0
        %5812 = vmatprep.subr.bf16.mxu0 0
        %5813 = vmatpush1.bf16.msra.mxu0 0
        %5814 = vmatprep.subr.bf16.mxu0 0
        %5815 = vmatpush1.bf16.msra.mxu0 0
        %5816 = vmatprep.subr.bf16.mxu0 0
        %5817 = vmatpush1.bf16.msra.mxu0 0
        %5818 = vmatprep.mubr.bf16.mxu0 0
        %5819 = vmatmul.mubr.bf16.gmra.mrb[0].mxu0 %v5775
        %v5820 = vpop.f32.mrb[0].mxu0
        %v5821 = vadd.f32 0.0, %v5820
        %v5822 = vpop.f32.mrb[0].mxu0
        %v5823 = vpop.f32.mrb[0].mxu0
        %v5824 = vadd.f32 0.0, %v5823
        %v5825 = vpop.f32.mrb[0].mxu0
        %5826 = vmatprep.mubr.bf16.mxu0 0
        %5827 = vmatmul.mubr.bf16.gmra.mrb[0].mxu0 %v5778
        %v5828 = vpop.f32.mrb[0].mxu0
        %v5829 = vadd.f32 0.0, %v5828
        %v5830 = vpop.f32.mrb[0].mxu0
        %v5831 = vpop.f32.mrb[0].mxu0
        %v5832 = vadd.f32 0.0, %v5831
        %v5833 = vpop.f32.mrb[0].mxu0
        %5834 = vmatprep.mubr.bf16.mxu0 0
        %5835 = vmatmul.mubr.bf16.gmra.mrb[0].mxu0 %v5781
        %v5836 = vpop.f32.mrb[0].mxu0
        %v5837 = vadd.f32 0.0, %v5836
        %v5838 = vpop.f32.mrb[0].mxu0
        %v5839 = vpop.f32.mrb[0].mxu0
        %v5840 = vadd.f32 0.0, %v5839
        %v5841 = vpop.f32.mrb[0].mxu0
        %5842 = vmatprep.mubr.bf16.mxu0 0
        %5843 = vmatmul.mubr.bf16.gmra.mrb[0].mxu0 %v5784
        %v5844 = vpop.f32.mrb[0].mxu0
        %v5845 = vadd.f32 0.0, %v5844
        %v5846 = vpop.f32.mrb[0].mxu0
        %v5847 = vpop.f32.mrb[0].mxu0
        %v5848 = vadd.f32 0.0, %v5847
        %v5849 = vpop.f32.mrb[0].mxu0
        %5850 = vdwg.mxu0
        %v5851 = vadd.f32 %v5706, %v5821
        %v5852 = vadd.f32 %v5707, %v5824
        %v5853 = vadd.f32 %v5708, %v5829
        %v5854 = vadd.f32 %v5709, %v5832
        %v5855 = vadd.f32 %v5710, %v5837
        %v5856 = vadd.f32 %v5711, %v5840
        %v5857 = vadd.f32 %v5712, %v5845
        %v5858 = vadd.f32 %v5713, %v5848
        %s5859 = scalar_lea.vmem %s290, 320 [#allocation4]
        %v5860 = vld [vmem:[%s5859] sm:$0xf]
        %v5861 = vld [vmem:[%s5859 + $0x4] sm:$0xf]
        %v5862 = vld [vmem:[%s5859 + $0x8] sm:$0xf]
        %v5863 = vld [vmem:[%s5859 + $0xc] sm:$0xf]
        %v5864 = vld [vmem:[%s5859 + $0x10] sm:$0xf]
        %v5865 = vld [vmem:[%s5859 + $0x14] sm:$0xf]
        %v5866 = vld [vmem:[%s5859 + $0x18] sm:$0xf]
        %v5867 = vld [vmem:[%s5859 + $0x1c] sm:$0xf]
        %v5868 = vld [vmem:[%s925] sm:$0xf]
        %v5869 = vld [vmem:[%s925 + $0x4] sm:$0xf]
        %v5870 = vld [vmem:[%s925 + $0x8] sm:$0xf]
        %v5871 = vld [vmem:[%s925 + $0xc] sm:$0xf]
        %v5872 = vld [vmem:[%s925 + $0x10] sm:$0xf]
        %v5873 = vld [vmem:[%s925 + $0x14] sm:$0xf]
        %v5874 = vld [vmem:[%s925 + $0x18] sm:$0xf]
        %v5875 = vld [vmem:[%s925 + $0x1c] sm:$0xf]
        %v5884 = vunpack.c.l.b16 %v5860
        %v5885 = vunpack.c.l.b16 %v5861
        %v5886 = vunpack.c.l.b16 %v5862
        %v5887 = vunpack.c.l.b16 %v5863
        %v5888 = vunpack.c.l.b16 %v5864
        %v5889 = vunpack.c.l.b16 %v5865
        %v5890 = vunpack.c.l.b16 %v5866
        %v5891 = vunpack.c.l.b16 %v5867
        %v5892 = vpack.c.b16 %v5885, %v5884
        %v5893 = vpack.c.b16 %v5887, %v5886
        %v5894 = vpack.c.b16 %v5889, %v5888
        %v5895 = vpack.c.b16 %v5891, %v5890
        %v5904 = vunpack.c.l.b16 %v5868
        %v5905 = vunpack.c.l.b16 %v5869
        %v5906 = vunpack.c.l.b16 %v5870
        %v5907 = vunpack.c.l.b16 %v5871
        %v5908 = vunpack.c.l.b16 %v5872
        %v5909 = vunpack.c.l.b16 %v5873
        %v5910 = vunpack.c.l.b16 %v5874
        %v5911 = vunpack.c.l.b16 %v5875
        %v5912 = vpack.c.b16 %v5905, %v5904
        %v5913 = vpack.c.b16 %v5907, %v5906
        %v5914 = vpack.c.b16 %v5909, %v5908
        %v5915 = vpack.c.b16 %v5911, %v5910
        %v5921 = vsel %vm423, %v5892, 0
        %v5924 = vsel %vm423, %v5893, 0
        %v5927 = vsel %vm423, %v5894, 0
        %v5930 = vsel %vm423, %v5895, 0
        %5932 = vmatprep.subr.bf16.mxu0 0
        %5933 = vmatpush1.bf16.msra.mxu0 %v5912
        %5934 = vmatprep.subr.bf16.mxu0 0
        %5935 = vmatpush1.bf16.msra.mxu0 %v5913
        %5936 = vmatprep.subr.bf16.mxu0 0
        %5937 = vmatpush1.bf16.msra.mxu0 %v5914
        %5938 = vmatprep.subr.bf16.mxu0 0
        %5939 = vmatpush1.bf16.msra.mxu0 %v5915
        %5940 = vmatprep.subr.bf16.mxu0 0
        %5941 = vmatpush1.bf16.msra.mxu0 0
        %5942 = vmatprep.subr.bf16.mxu0 0
        %5943 = vmatpush1.bf16.msra.mxu0 0
        %5944 = vmatprep.subr.bf16.mxu0 0
        %5945 = vmatpush1.bf16.msra.mxu0 0
        %5946 = vmatprep.subr.bf16.mxu0 0
        %5947 = vmatpush1.bf16.msra.mxu0 0
        %5948 = vmatprep.subr.bf16.mxu0 0
        %5949 = vmatpush1.bf16.msra.mxu0 0
        %5950 = vmatprep.subr.bf16.mxu0 0
        %5951 = vmatpush1.bf16.msra.mxu0 0
        %5952 = vmatprep.subr.bf16.mxu0 0
        %5953 = vmatpush1.bf16.msra.mxu0 0
        %5954 = vmatprep.subr.bf16.mxu0 0
        %5955 = vmatpush1.bf16.msra.mxu0 0
        %5956 = vmatprep.subr.bf16.mxu0 0
        %5957 = vmatpush1.bf16.msra.mxu0 0
        %5958 = vmatprep.subr.bf16.mxu0 0
        %5959 = vmatpush1.bf16.msra.mxu0 0
        %5960 = vmatprep.subr.bf16.mxu0 0
        %5961 = vmatpush1.bf16.msra.mxu0 0
        %5962 = vmatprep.subr.bf16.mxu0 0
        %5963 = vmatpush1.bf16.msra.mxu0 0
        %5964 = vmatprep.mubr.bf16.mxu0 0
        %5965 = vmatmul.mubr.bf16.gmra.mrb[0].mxu0 %v5921
        %v5966 = vpop.f32.mrb[0].mxu0
        %v5967 = vadd.f32 0.0, %v5966
        %v5968 = vpop.f32.mrb[0].mxu0
        %v5969 = vpop.f32.mrb[0].mxu0
        %v5970 = vadd.f32 0.0, %v5969
        %v5971 = vpop.f32.mrb[0].mxu0
        %5972 = vmatprep.mubr.bf16.mxu0 0
        %5973 = vmatmul.mubr.bf16.gmra.mrb[0].mxu0 %v5924
        %v5974 = vpop.f32.mrb[0].mxu0
        %v5975 = vadd.f32 0.0, %v5974
        %v5976 = vpop.f32.mrb[0].mxu0
        %v5977 = vpop.f32.mrb[0].mxu0
        %v5978 = vadd.f32 0.0, %v5977
        %v5979 = vpop.f32.mrb[0].mxu0
        %5980 = vmatprep.mubr.bf16.mxu0 0
        %5981 = vmatmul.mubr.bf16.gmra.mrb[0].mxu0 %v5927
        %v5982 = vpop.f32.mrb[0].mxu0
        %v5983 = vadd.f32 0.0, %v5982
        %v5984 = vpop.f32.mrb[0].mxu0
        %v5985 = vpop.f32.mrb[0].mxu0
        %v5986 = vadd.f32 0.0, %v5985
        %v5987 = vpop.f32.mrb[0].mxu0
        %5988 = vmatprep.mubr.bf16.mxu0 0
        %5989 = vmatmul.mubr.bf16.gmra.mrb[0].mxu0 %v5930
        %v5990 = vpop.f32.mrb[0].mxu0
        %v5991 = vadd.f32 0.0, %v5990
        %v5992 = vpop.f32.mrb[0].mxu0
        %v5993 = vpop.f32.mrb[0].mxu0
        %v5994 = vadd.f32 0.0, %v5993
        %v5995 = vpop.f32.mrb[0].mxu0
        %5996 = vdwg.mxu0
        %v5997 = vadd.f32 %v5851, %v5967
        %v5998 = vadd.f32 %v5852, %v5970
        %v5999 = vadd.f32 %v5853, %v5975
        %v6000 = vadd.f32 %v5854, %v5978
        %v6001 = vadd.f32 %v5855, %v5983
        %v6002 = vadd.f32 %v5856, %v5986
        %v6003 = vadd.f32 %v5857, %v5991
        %v6004 = vadd.f32 %v5858, %v5994
        %v6005 = vadd.f32 %v5997, %v1067
        %v6006 = vadd.f32 %v5998, %v1067
        %v6007 = vadd.f32 %v5999, %v1067
        %v6008 = vadd.f32 %v6000, %v1067
        %v6009 = vadd.f32 %v6001, %v1067
        %v6010 = vadd.f32 %v6002, %v1067
        %v6011 = vadd.f32 %v6003, %v1067
        %v6012 = vadd.f32 %v6004, %v1067
        %v6013 = vmax.f32 %v6005, 0.0
        %v6014 = vmax.f32 %v6006, 0.0
        %v6015 = vmax.f32 %v6007, 0.0
        %v6016 = vmax.f32 %v6008, 0.0
        %v6017 = vmax.f32 %v6009, 0.0
        %v6018 = vmax.f32 %v6010, 0.0
        %v6019 = vmax.f32 %v6011, 0.0
        %v6020 = vmax.f32 %v6012, 0.0
        %6021 = vst.msk [vmem:[#allocation2] sm:$0xff] %vm1085, %v6013
        %6022 = vst.msk [vmem:[#allocation2 + $0x8] sm:$0xff] %vm1085, %v6014
        %6023 = vst.msk [vmem:[#allocation2 + $0x10] sm:$0xff] %vm1085, %v6015
        %6024 = vst.msk [vmem:[#allocation2 + $0x18] sm:$0xff] %vm1085, %v6016
        %6025 = vst.msk [vmem:[#allocation2 + $0x20] sm:$0xff] %vm1085, %v6017
        %6026 = vst.msk [vmem:[#allocation2 + $0x28] sm:$0xff] %vm1085, %v6018
        %6027 = vst.msk [vmem:[#allocation2 + $0x30] sm:$0xff] %vm1085, %v6019
        %6028 = vst.msk [vmem:[#allocation2 + $0x38] sm:$0xff] %vm1085, %v6020
        %v6029 = vld [vmem:[#allocation2] ss:$2 sm:$0xff]
        %v6030 = vld [vmem:[%s1095] ss:$2 sm:$0xff]
        %v6031 = vld [vmem:[%s1097] ss:$2 sm:$0xff]
        %v6032 = vld [vmem:[%s1099] ss:$2 sm:$0xff]
        %v6033 = vld [vmem:[%s1101] ss:$2 sm:$0xff]
        %v6034 = vld [vmem:[%s1103] ss:$2 sm:$0xff]
        %v6035 = vld [vmem:[%s1105] ss:$2 sm:$0xff]
        %v6036 = vld [vmem:[%s1107] ss:$2 sm:$0xff]
        %v6037 = vmax.f32 %v6029, %v6033
        %v6038 = vmax.f32 %v6030, %v6034
        %v6039 = vmax.f32 %v6031, %v6035
        %v6040 = vmax.f32 %v6032, %v6036
        %v6045 = vrot.slane %v6033, 7
        %v6046 = vrot.slane %v6034, 7
        %v6047 = vsel %vm1117, %v6045, %v6046
        %v6048 = vrot.slane %v6035, 7
        %v6049 = vsel %vm1117, %v6046, %v6048
        %v6050 = vrot.slane %v6036, 7
        %v6051 = vsel %vm1117, %v6048, %v6050
        %v6056 = vsel %vm1117, 0.0, %v6045
        %v6057 = vmul.f32 %v6056, %v341
        %v6058 = vmul.f32 %v6047, %v342
        %v6059 = vmul.f32 %v6049, %v343
        %v6060 = vmul.f32 %v6051, %v344
        %v6061 = vmax.f32 %v6037, %v6057
        %v6062 = vmax.f32 %v6038, %v6058
        %v6063 = vmax.f32 %v6039, %v6059
        %v6064 = vmax.f32 %v6040, %v6060
        %6065 = vst.msk [vmem:[#allocation3] sm:$0xff] %vm1085, %v6061
        %6066 = vst.msk [vmem:[#allocation3 + $0x8] sm:$0xff] %vm1085, %v6062
        %6067 = vst.msk [vmem:[#allocation3 + $0x10] sm:$0xff] %vm1085, %v6063
        %6068 = vst.msk [vmem:[#allocation3 + $0x18] sm:$0xff] %vm1085, %v6064
        %v6069 = vld [vmem:[#allocation3] sm:$0xf]
        %v6070 = vld [vmem:[#allocation3 + $0x4] sm:$0xf]
        %v6071 = vmax.f32 %v6069, %v6070
        %v6072 = vsel %vm1145, %v6071, 0.0
        %v6073 = vrot.slane %v6072, 4
        %v6074 = vadd.f32 %v6072, %v6073
        %v6075 = vrot.slane %v6074, 2
        %v6076 = vadd.f32 %v6074, %v6075
        %v6077 = vrot.slane %v6076, 1
        %v6078 = vadd.f32 %v6076, %v6077
        %v6079 = vadd.f32 %v6078, 0.0
        %v6080 = vld [vmem:[#allocation3 + $0x8] sm:$0xf]
        %v6081 = vld [vmem:[#allocation3 + $0xc] sm:$0xf]
        %v6082 = vmax.f32 %v6080, %v6081
        %v6083 = vmax.f32 %v6082, %v6070
        %v6084 = vsel %vm1145, %v6083, 0.0
        %v6085 = vrot.slane %v6084, 4
        %v6086 = vadd.f32 %v6084, %v6085
        %v6087 = vrot.slane %v6086, 2
        %v6088 = vadd.f32 %v6086, %v6087
        %v6089 = vrot.slane %v6088, 1
        %v6090 = vadd.f32 %v6088, %v6089
        %v6091 = vadd.f32 %v6079, %v6090
        %v6092 = vld [vmem:[#allocation3 + $0x10] sm:$0xf]
        %v6093 = vld [vmem:[#allocation3 + $0x14] sm:$0xf]
        %v6094 = vmax.f32 %v6092, %v6093
        %v6095 = vmax.f32 %v6094, %v6081
        %v6096 = vsel %vm1145, %v6095, 0.0
        %v6097 = vrot.slane %v6096, 4
        %v6098 = vadd.f32 %v6096, %v6097
        %v6099 = vrot.slane %v6098, 2
        %v6100 = vadd.f32 %v6098, %v6099
        %v6101 = vrot.slane %v6100, 1
        %v6102 = vadd.f32 %v6100, %v6101
        %v6103 = vadd.f32 %v6091, %v6102
        %v6104 = vld [vmem:[#allocation3 + $0x18] sm:$0xf]
        %v6105 = vld [vmem:[#allocation3 + $0x1c] sm:$0xf]
        %v6106 = vmax.f32 %v6104, %v6105
        %v6107 = vmax.f32 %v6106, %v6093
        %v6108 = vsel %vm1145, %v6107, 0.0
        %v6109 = vrot.slane %v6108, 4
        %v6110 = vadd.f32 %v6108, %v6109
        %v6111 = vrot.slane %v6110, 2
        %v6112 = vadd.f32 %v6110, %v6111
        %v6113 = vrot.slane %v6112, 1
        %v6114 = vadd.f32 %v6112, %v6113
        %v6115 = vadd.f32 %v6103, %v6114
        %v6116 = vld [vmem:[%s3396] sm:$0xf]
        %v6117 = vld [vmem:[%s3396 + $0x4] sm:$0xf]
        %v6118 = vld [vmem:[%s3396 + $0x8] sm:$0xf]
        %v6119 = vld [vmem:[%s3396 + $0xc] sm:$0xf]
        %v6120 = vld [vmem:[%s3396 + $0x10] sm:$0xf]
        %v6121 = vld [vmem:[%s3396 + $0x14] sm:$0xf]
        %v6122 = vld [vmem:[%s3396 + $0x18] sm:$0xf]
        %v6123 = vld [vmem:[%s3396 + $0x1c] sm:$0xf]
        %v6124 = vld [vmem:[#allocation7] sm:$0xf]
        %v6125 = vld [vmem:[#allocation7 + $0x4] sm:$0xf]
        %v6126 = vld [vmem:[#allocation7 + $0x8] sm:$0xf]
        %v6127 = vld [vmem:[#allocation7 + $0xc] sm:$0xf]
        %v6128 = vld [vmem:[#allocation7 + $0x10] sm:$0xf]
        %v6129 = vld [vmem:[#allocation7 + $0x14] sm:$0xf]
        %v6130 = vld [vmem:[#allocation7 + $0x18] sm:$0xf]
        %v6131 = vld [vmem:[#allocation7 + $0x1c] sm:$0xf]
        %v6132 = vld [vmem:[%s4217] sm:$0xf]
        %v6133 = vld [vmem:[%s4217 + $0x4] sm:$0xf]
        %v6134 = vld [vmem:[%s4217 + $0x8] sm:$0xf]
        %v6135 = vld [vmem:[%s4217 + $0xc] sm:$0xf]
        %v6136 = vld [vmem:[%s4217 + $0x10] sm:$0xf]
        %v6137 = vld [vmem:[%s4217 + $0x14] sm:$0xf]
        %v6138 = vld [vmem:[%s4217 + $0x18] sm:$0xf]
        %v6139 = vld [vmem:[%s4217 + $0x1c] sm:$0xf]
        %v6140 = vld [vmem:[%s370] sm:$0xf]
        %v6141 = vld [vmem:[%s370 + $0x4] sm:$0xf]
        %v6142 = vld [vmem:[%s370 + $0x8] sm:$0xf]
        %v6143 = vld [vmem:[%s370 + $0xc] sm:$0xf]
        %v6144 = vld [vmem:[%s370 + $0x10] sm:$0xf]
        %v6145 = vld [vmem:[%s370 + $0x14] sm:$0xf]
        %v6146 = vld [vmem:[%s370 + $0x18] sm:$0xf]
        %v6147 = vld [vmem:[%s370 + $0x1c] sm:$0xf]
        %v6156 = vunpack.c.l.b16 %v6132
        %v6157 = vunpack.c.l.b16 %v6133
        %v6158 = vunpack.c.l.b16 %v6134
        %v6159 = vunpack.c.l.b16 %v6135
        %v6160 = vunpack.c.l.b16 %v6136
        %v6161 = vunpack.c.l.b16 %v6137
        %v6162 = vunpack.c.l.b16 %v6138
        %v6163 = vunpack.c.l.b16 %v6139
        %v6164 = vpack.c.b16 %v6157, %v6156
        %v6165 = vpack.c.b16 %v6159, %v6158
        %v6166 = vpack.c.b16 %v6161, %v6160
        %v6167 = vpack.c.b16 %v6163, %v6162
        %v6176 = vunpack.c.l.b16 %v6140
        %v6177 = vunpack.c.l.b16 %v6141
        %v6178 = vunpack.c.l.b16 %v6142
        %v6179 = vunpack.c.l.b16 %v6143
        %v6180 = vunpack.c.l.b16 %v6144
        %v6181 = vunpack.c.l.b16 %v6145
        %v6182 = vunpack.c.l.b16 %v6146
        %v6183 = vunpack.c.l.b16 %v6147
        %v6184 = vpack.c.b16 %v6177, %v6176
        %v6185 = vpack.c.b16 %v6179, %v6178
        %v6186 = vpack.c.b16 %v6181, %v6180
        %v6187 = vpack.c.b16 %v6183, %v6182
        %v6193 = vsel %vm423, %v6164, 0
        %v6196 = vsel %vm423, %v6165, 0
        %v6199 = vsel %vm423, %v6166, 0
        %v6202 = vsel %vm423, %v6167, 0
        %6204 = vmatprep.subr.bf16.mxu0 0
        %6205 = vmatpush1.bf16.msra.mxu0 %v6184
        %6206 = vmatprep.subr.bf16.mxu0 0
        %6207 = vmatpush1.bf16.msra.mxu0 %v6185
        %6208 = vmatprep.subr.bf16.mxu0 0
        %6209 = vmatpush1.bf16.msra.mxu0 %v6186
        %6210 = vmatprep.subr.bf16.mxu0 0
        %6211 = vmatpush1.bf16.msra.mxu0 %v6187
        %6212 = vmatprep.subr.bf16.mxu0 0
        %6213 = vmatpush1.bf16.msra.mxu0 0
        %6214 = vmatprep.subr.bf16.mxu0 0
        %6215 = vmatpush1.bf16.msra.mxu0 0
        %6216 = vmatprep.subr.bf16.mxu0 0
        %6217 = vmatpush1.bf16.msra.mxu0 0
        %6218 = vmatprep.subr.bf16.mxu0 0
        %6219 = vmatpush1.bf16.msra.mxu0 0
        %6220 = vmatprep.subr.bf16.mxu0 0
        %6221 = vmatpush1.bf16.msra.mxu0 0
        %6222 = vmatprep.subr.bf16.mxu0 0
        %6223 = vmatpush1.bf16.msra.mxu0 0
        %6224 = vmatprep.subr.bf16.mxu0 0
        %6225 = vmatpush1.bf16.msra.mxu0 0
        %6226 = vmatprep.subr.bf16.mxu0 0
        %6227 = vmatpush1.bf16.msra.mxu0 0
        %6228 = vmatprep.subr.bf16.mxu0 0
        %6229 = vmatpush1.bf16.msra.mxu0 0
        %6230 = vmatprep.subr.bf16.mxu0 0
        %6231 = vmatpush1.bf16.msra.mxu0 0
        %6232 = vmatprep.subr.bf16.mxu0 0
        %6233 = vmatpush1.bf16.msra.mxu0 0
        %6234 = vmatprep.subr.bf16.mxu0 0
        %6235 = vmatpush1.bf16.msra.mxu0 0
        %6236 = vmatprep.mubr.bf16.mxu0 0
        %6237 = vmatmul.mubr.bf16.gmra.mrb[0].mxu0 %v6193
        %v6238 = vpop.f32.mrb[0].mxu0
        %v6239 = vadd.f32 0.0, %v6238
        %v6240 = vpop.f32.mrb[0].mxu0
        %v6241 = vpop.f32.mrb[0].mxu0
        %v6242 = vadd.f32 0.0, %v6241
        %v6243 = vpop.f32.mrb[0].mxu0
        %6244 = vmatprep.mubr.bf16.mxu0 0
        %6245 = vmatmul.mubr.bf16.gmra.mrb[0].mxu0 %v6196
        %v6246 = vpop.f32.mrb[0].mxu0
        %v6247 = vadd.f32 0.0, %v6246
        %v6248 = vpop.f32.mrb[0].mxu0
        %v6249 = vpop.f32.mrb[0].mxu0
        %v6250 = vadd.f32 0.0, %v6249
        %v6251 = vpop.f32.mrb[0].mxu0
        %6252 = vmatprep.mubr.bf16.mxu0 0
        %6253 = vmatmul.mubr.bf16.gmra.mrb[0].mxu0 %v6199
        %v6254 = vpop.f32.mrb[0].mxu0
        %v6255 = vadd.f32 0.0, %v6254
        %v6256 = vpop.f32.mrb[0].mxu0
        %v6257 = vpop.f32.mrb[0].mxu0
        %v6258 = vadd.f32 0.0, %v6257
        %v6259 = vpop.f32.mrb[0].mxu0
        %6260 = vmatprep.mubr.bf16.mxu0 0
        %6261 = vmatmul.mubr.bf16.gmra.mrb[0].mxu0 %v6202
        %v6262 = vpop.f32.mrb[0].mxu0
        %v6263 = vadd.f32 0.0, %v6262
        %v6264 = vpop.f32.mrb[0].mxu0
        %v6265 = vpop.f32.mrb[0].mxu0
        %v6266 = vadd.f32 0.0, %v6265
        %v6267 = vpop.f32.mrb[0].mxu0
        %6268 = vdwg.mxu0
        %v6277 = vunpack.c.l.b16 %v6116
        %v6278 = vunpack.c.l.b16 %v6117
        %v6279 = vunpack.c.l.b16 %v6118
        %v6280 = vunpack.c.l.b16 %v6119
        %v6281 = vunpack.c.l.b16 %v6120
        %v6282 = vunpack.c.l.b16 %v6121
        %v6283 = vunpack.c.l.b16 %v6122
        %v6284 = vunpack.c.l.b16 %v6123
        %v6285 = vpack.c.b16 %v6278, %v6277
        %v6286 = vpack.c.b16 %v6280, %v6279
        %v6287 = vpack.c.b16 %v6282, %v6281
        %v6288 = vpack.c.b16 %v6284, %v6283
        %v6297 = vunpack.c.l.b16 %v6124
        %v6298 = vunpack.c.l.b16 %v6125
        %v6299 = vunpack.c.l.b16 %v6126
        %v6300 = vunpack.c.l.b16 %v6127
        %v6301 = vunpack.c.l.b16 %v6128
        %v6302 = vunpack.c.l.b16 %v6129
        %v6303 = vunpack.c.l.b16 %v6130
        %v6304 = vunpack.c.l.b16 %v6131
        %v6305 = vpack.c.b16 %v6298, %v6297
        %v6306 = vpack.c.b16 %v6300, %v6299
        %v6307 = vpack.c.b16 %v6302, %v6301
        %v6308 = vpack.c.b16 %v6304, %v6303
        %v6314 = vsel %vm423, %v6285, 0
        %v6317 = vsel %vm423, %v6286, 0
        %v6320 = vsel %vm423, %v6287, 0
        %v6323 = vsel %vm423, %v6288, 0
        %6325 = vmatprep.subr.bf16.mxu0 0
        %6326 = vmatpush1.bf16.msra.mxu0 %v6305
        %6327 = vmatprep.subr.bf16.mxu0 0
        %6328 = vmatpush1.bf16.msra.mxu0 %v6306
        %6329 = vmatprep.subr.bf16.mxu0 0
        %6330 = vmatpush1.bf16.msra.mxu0 %v6307
        %6331 = vmatprep.subr.bf16.mxu0 0
        %6332 = vmatpush1.bf16.msra.mxu0 %v6308
        %6333 = vmatprep.subr.bf16.mxu0 0
        %6334 = vmatpush1.bf16.msra.mxu0 0
        %6335 = vmatprep.subr.bf16.mxu0 0
        %6336 = vmatpush1.bf16.msra.mxu0 0
        %6337 = vmatprep.subr.bf16.mxu0 0
        %6338 = vmatpush1.bf16.msra.mxu0 0
        %6339 = vmatprep.subr.bf16.mxu0 0
        %6340 = vmatpush1.bf16.msra.mxu0 0
        %6341 = vmatprep.subr.bf16.mxu0 0
        %6342 = vmatpush1.bf16.msra.mxu0 0
        %6343 = vmatprep.subr.bf16.mxu0 0
        %6344 = vmatpush1.bf16.msra.mxu0 0
        %6345 = vmatprep.subr.bf16.mxu0 0
        %6346 = vmatpush1.bf16.msra.mxu0 0
        %6347 = vmatprep.subr.bf16.mxu0 0
        %6348 = vmatpush1.bf16.msra.mxu0 0
        %6349 = vmatprep.subr.bf16.mxu0 0
        %6350 = vmatpush1.bf16.msra.mxu0 0
        %6351 = vmatprep.subr.bf16.mxu0 0
        %6352 = vmatpush1.bf16.msra.mxu0 0
        %6353 = vmatprep.subr.bf16.mxu0 0
        %6354 = vmatpush1.bf16.msra.mxu0 0
        %6355 = vmatprep.subr.bf16.mxu0 0
        %6356 = vmatpush1.bf16.msra.mxu0 0
        %6357 = vmatprep.mubr.bf16.mxu0 0
        %6358 = vmatmul.mubr.bf16.gmra.mrb[0].mxu0 %v6314
        %v6359 = vpop.f32.mrb[0].mxu0
        %v6360 = vadd.f32 %v6239, %v6359
        %v6361 = vpop.f32.mrb[0].mxu0
        %v6362 = vpop.f32.mrb[0].mxu0
        %v6363 = vadd.f32 %v6242, %v6362
        %v6364 = vpop.f32.mrb[0].mxu0
        %6365 = vmatprep.mubr.bf16.mxu0 0
        %6366 = vmatmul.mubr.bf16.gmra.mrb[0].mxu0 %v6317
        %v6367 = vpop.f32.mrb[0].mxu0
        %v6368 = vadd.f32 %v6247, %v6367
        %v6369 = vpop.f32.mrb[0].mxu0
        %v6370 = vpop.f32.mrb[0].mxu0
        %v6371 = vadd.f32 %v6250, %v6370
        %v6372 = vpop.f32.mrb[0].mxu0
        %6373 = vmatprep.mubr.bf16.mxu0 0
        %6374 = vmatmul.mubr.bf16.gmra.mrb[0].mxu0 %v6320
        %v6375 = vpop.f32.mrb[0].mxu0
        %v6376 = vadd.f32 %v6255, %v6375
        %v6377 = vpop.f32.mrb[0].mxu0
        %v6378 = vpop.f32.mrb[0].mxu0
        %v6379 = vadd.f32 %v6258, %v6378
        %v6380 = vpop.f32.mrb[0].mxu0
        %6381 = vmatprep.mubr.bf16.mxu0 0
        %6382 = vmatmul.mubr.bf16.gmra.mrb[0].mxu0 %v6323
        %v6383 = vpop.f32.mrb[0].mxu0
        %v6384 = vadd.f32 %v6263, %v6383
        %v6385 = vpop.f32.mrb[0].mxu0
        %v6386 = vpop.f32.mrb[0].mxu0
        %v6387 = vadd.f32 %v6266, %v6386
        %v6388 = vpop.f32.mrb[0].mxu0
        %6389 = vdwg.mxu0
        %v6390 = vld [vmem:[%s5038] sm:$0xf]
        %v6391 = vld [vmem:[%s5038 + $0x4] sm:$0xf]
        %v6392 = vld [vmem:[%s5038 + $0x8] sm:$0xf]
        %v6393 = vld [vmem:[%s5038 + $0xc] sm:$0xf]
        %v6394 = vld [vmem:[%s5038 + $0x10] sm:$0xf]
        %v6395 = vld [vmem:[%s5038 + $0x14] sm:$0xf]
        %v6396 = vld [vmem:[%s5038 + $0x18] sm:$0xf]
        %v6397 = vld [vmem:[%s5038 + $0x1c] sm:$0xf]
        %v6398 = vld [vmem:[%s631] sm:$0xf]
        %v6399 = vld [vmem:[%s631 + $0x4] sm:$0xf]
        %v6400 = vld [vmem:[%s631 + $0x8] sm:$0xf]
        %v6401 = vld [vmem:[%s631 + $0xc] sm:$0xf]
        %v6402 = vld [vmem:[%s631 + $0x10] sm:$0xf]
        %v6403 = vld [vmem:[%s631 + $0x14] sm:$0xf]
        %v6404 = vld [vmem:[%s631 + $0x18] sm:$0xf]
        %v6405 = vld [vmem:[%s631 + $0x1c] sm:$0xf]
        %v6414 = vunpack.c.l.b16 %v6390
        %v6415 = vunpack.c.l.b16 %v6391
        %v6416 = vunpack.c.l.b16 %v6392
        %v6417 = vunpack.c.l.b16 %v6393
        %v6418 = vunpack.c.l.b16 %v6394
        %v6419 = vunpack.c.l.b16 %v6395
        %v6420 = vunpack.c.l.b16 %v6396
        %v6421 = vunpack.c.l.b16 %v6397
        %v6422 = vpack.c.b16 %v6415, %v6414
        %v6423 = vpack.c.b16 %v6417, %v6416
        %v6424 = vpack.c.b16 %v6419, %v6418
        %v6425 = vpack.c.b16 %v6421, %v6420
        %v6434 = vunpack.c.l.b16 %v6398
        %v6435 = vunpack.c.l.b16 %v6399
        %v6436 = vunpack.c.l.b16 %v6400
        %v6437 = vunpack.c.l.b16 %v6401
        %v6438 = vunpack.c.l.b16 %v6402
        %v6439 = vunpack.c.l.b16 %v6403
        %v6440 = vunpack.c.l.b16 %v6404
        %v6441 = vunpack.c.l.b16 %v6405
        %v6442 = vpack.c.b16 %v6435, %v6434
        %v6443 = vpack.c.b16 %v6437, %v6436
        %v6444 = vpack.c.b16 %v6439, %v6438
        %v6445 = vpack.c.b16 %v6441, %v6440
        %v6451 = vsel %vm423, %v6422, 0
        %v6454 = vsel %vm423, %v6423, 0
        %v6457 = vsel %vm423, %v6424, 0
        %v6460 = vsel %vm423, %v6425, 0
        %6462 = vmatprep.subr.bf16.mxu0 0
        %6463 = vmatpush1.bf16.msra.mxu0 %v6442
        %6464 = vmatprep.subr.bf16.mxu0 0
        %6465 = vmatpush1.bf16.msra.mxu0 %v6443
        %6466 = vmatprep.subr.bf16.mxu0 0
        %6467 = vmatpush1.bf16.msra.mxu0 %v6444
        %6468 = vmatprep.subr.bf16.mxu0 0
        %6469 = vmatpush1.bf16.msra.mxu0 %v6445
        %6470 = vmatprep.subr.bf16.mxu0 0
        %6471 = vmatpush1.bf16.msra.mxu0 0
        %6472 = vmatprep.subr.bf16.mxu0 0
        %6473 = vmatpush1.bf16.msra.mxu0 0
        %6474 = vmatprep.subr.bf16.mxu0 0
        %6475 = vmatpush1.bf16.msra.mxu0 0
        %6476 = vmatprep.subr.bf16.mxu0 0
        %6477 = vmatpush1.bf16.msra.mxu0 0
        %6478 = vmatprep.subr.bf16.mxu0 0
        %6479 = vmatpush1.bf16.msra.mxu0 0
        %6480 = vmatprep.subr.bf16.mxu0 0
        %6481 = vmatpush1.bf16.msra.mxu0 0
        %6482 = vmatprep.subr.bf16.mxu0 0
        %6483 = vmatpush1.bf16.msra.mxu0 0
        %6484 = vmatprep.subr.bf16.mxu0 0
        %6485 = vmatpush1.bf16.msra.mxu0 0
        %6486 = vmatprep.subr.bf16.mxu0 0
        %6487 = vmatpush1.bf16.msra.mxu0 0
        %6488 = vmatprep.subr.bf16.mxu0 0
        %6489 = vmatpush1.bf16.msra.mxu0 0
        %6490 = vmatprep.subr.bf16.mxu0 0
        %6491 = vmatpush1.bf16.msra.mxu0 0
        %6492 = vmatprep.subr.bf16.mxu0 0
        %6493 = vmatpush1.bf16.msra.mxu0 0
        %6494 = vmatprep.mubr.bf16.mxu0 0
        %6495 = vmatmul.mubr.bf16.gmra.mrb[0].mxu0 %v6451
        %v6496 = vpop.f32.mrb[0].mxu0
        %v6497 = vadd.f32 0.0, %v6496
        %v6498 = vpop.f32.mrb[0].mxu0
        %v6499 = vpop.f32.mrb[0].mxu0
        %v6500 = vadd.f32 0.0, %v6499
        %v6501 = vpop.f32.mrb[0].mxu0
        %6502 = vmatprep.mubr.bf16.mxu0 0
        %6503 = vmatmul.mubr.bf16.gmra.mrb[0].mxu0 %v6454
        %v6504 = vpop.f32.mrb[0].mxu0
        %v6505 = vadd.f32 0.0, %v6504
        %v6506 = vpop.f32.mrb[0].mxu0
        %v6507 = vpop.f32.mrb[0].mxu0
        %v6508 = vadd.f32 0.0, %v6507
        %v6509 = vpop.f32.mrb[0].mxu0
        %6510 = vmatprep.mubr.bf16.mxu0 0
        %6511 = vmatmul.mubr.bf16.gmra.mrb[0].mxu0 %v6457
        %v6512 = vpop.f32.mrb[0].mxu0
        %v6513 = vadd.f32 0.0, %v6512
        %v6514 = vpop.f32.mrb[0].mxu0
        %v6515 = vpop.f32.mrb[0].mxu0
        %v6516 = vadd.f32 0.0, %v6515
        %v6517 = vpop.f32.mrb[0].mxu0
        %6518 = vmatprep.mubr.bf16.mxu0 0
        %6519 = vmatmul.mubr.bf16.gmra.mrb[0].mxu0 %v6460
        %v6520 = vpop.f32.mrb[0].mxu0
        %v6521 = vadd.f32 0.0, %v6520
        %v6522 = vpop.f32.mrb[0].mxu0
        %v6523 = vpop.f32.mrb[0].mxu0
        %v6524 = vadd.f32 0.0, %v6523
        %v6525 = vpop.f32.mrb[0].mxu0
        %6526 = vdwg.mxu0
        %v6527 = vadd.f32 %v6360, %v6497
        %v6528 = vadd.f32 %v6363, %v6500
        %v6529 = vadd.f32 %v6368, %v6505
        %v6530 = vadd.f32 %v6371, %v6508
        %v6531 = vadd.f32 %v6376, %v6513
        %v6532 = vadd.f32 %v6379, %v6516
        %v6533 = vadd.f32 %v6384, %v6521
        %v6534 = vadd.f32 %v6387, %v6524
        %v6535 = vld [vmem:[%s5859] sm:$0xf]
        %v6536 = vld [vmem:[%s5859 + $0x4] sm:$0xf]
        %v6537 = vld [vmem:[%s5859 + $0x8] sm:$0xf]
        %v6538 = vld [vmem:[%s5859 + $0xc] sm:$0xf]
        %v6539 = vld [vmem:[%s5859 + $0x10] sm:$0xf]
        %v6540 = vld [vmem:[%s5859 + $0x14] sm:$0xf]
        %v6541 = vld [vmem:[%s5859 + $0x18] sm:$0xf]
        %v6542 = vld [vmem:[%s5859 + $0x1c] sm:$0xf]
        %v6543 = vld [vmem:[%s778] sm:$0xf]
        %v6544 = vld [vmem:[%s778 + $0x4] sm:$0xf]
        %v6545 = vld [vmem:[%s778 + $0x8] sm:$0xf]
        %v6546 = vld [vmem:[%s778 + $0xc] sm:$0xf]
        %v6547 = vld [vmem:[%s778 + $0x10] sm:$0xf]
        %v6548 = vld [vmem:[%s778 + $0x14] sm:$0xf]
        %v6549 = vld [vmem:[%s778 + $0x18] sm:$0xf]
        %v6550 = vld [vmem:[%s778 + $0x1c] sm:$0xf]
        %v6559 = vunpack.c.l.b16 %v6535
        %v6560 = vunpack.c.l.b16 %v6536
        %v6561 = vunpack.c.l.b16 %v6537
        %v6562 = vunpack.c.l.b16 %v6538
        %v6563 = vunpack.c.l.b16 %v6539
        %v6564 = vunpack.c.l.b16 %v6540
        %v6565 = vunpack.c.l.b16 %v6541
        %v6566 = vunpack.c.l.b16 %v6542
        %v6567 = vpack.c.b16 %v6560, %v6559
        %v6568 = vpack.c.b16 %v6562, %v6561
        %v6569 = vpack.c.b16 %v6564, %v6563
        %v6570 = vpack.c.b16 %v6566, %v6565
        %v6579 = vunpack.c.l.b16 %v6543
        %v6580 = vunpack.c.l.b16 %v6544
        %v6581 = vunpack.c.l.b16 %v6545
        %v6582 = vunpack.c.l.b16 %v6546
        %v6583 = vunpack.c.l.b16 %v6547
        %v6584 = vunpack.c.l.b16 %v6548
        %v6585 = vunpack.c.l.b16 %v6549
        %v6586 = vunpack.c.l.b16 %v6550
        %v6587 = vpack.c.b16 %v6580, %v6579
        %v6588 = vpack.c.b16 %v6582, %v6581
        %v6589 = vpack.c.b16 %v6584, %v6583
        %v6590 = vpack.c.b16 %v6586, %v6585
        %v6596 = vsel %vm423, %v6567, 0
        %v6599 = vsel %vm423, %v6568, 0
        %v6602 = vsel %vm423, %v6569, 0
        %v6605 = vsel %vm423, %v6570, 0
        %6607 = vmatprep.subr.bf16.mxu0 0
        %6608 = vmatpush1.bf16.msra.mxu0 %v6587
        %6609 = vmatprep.subr.bf16.mxu0 0
        %6610 = vmatpush1.bf16.msra.mxu0 %v6588
        %6611 = vmatprep.subr.bf16.mxu0 0
        %6612 = vmatpush1.bf16.msra.mxu0 %v6589
        %6613 = vmatprep.subr.bf16.mxu0 0
        %6614 = vmatpush1.bf16.msra.mxu0 %v6590
        %6615 = vmatprep.subr.bf16.mxu0 0
        %6616 = vmatpush1.bf16.msra.mxu0 0
        %6617 = vmatprep.subr.bf16.mxu0 0
        %6618 = vmatpush1.bf16.msra.mxu0 0
        %6619 = vmatprep.subr.bf16.mxu0 0
        %6620 = vmatpush1.bf16.msra.mxu0 0
        %6621 = vmatprep.subr.bf16.mxu0 0
        %6622 = vmatpush1.bf16.msra.mxu0 0
        %6623 = vmatprep.subr.bf16.mxu0 0
        %6624 = vmatpush1.bf16.msra.mxu0 0
        %6625 = vmatprep.subr.bf16.mxu0 0
        %6626 = vmatpush1.bf16.msra.mxu0 0
        %6627 = vmatprep.subr.bf16.mxu0 0
        %6628 = vmatpush1.bf16.msra.mxu0 0
        %6629 = vmatprep.subr.bf16.mxu0 0
        %6630 = vmatpush1.bf16.msra.mxu0 0
        %6631 = vmatprep.subr.bf16.mxu0 0
        %6632 = vmatpush1.bf16.msra.mxu0 0
        %6633 = vmatprep.subr.bf16.mxu0 0
        %6634 = vmatpush1.bf16.msra.mxu0 0
        %6635 = vmatprep.subr.bf16.mxu0 0
        %6636 = vmatpush1.bf16.msra.mxu0 0
        %6637 = vmatprep.subr.bf16.mxu0 0
        %6638 = vmatpush1.bf16.msra.mxu0 0
        %6639 = vmatprep.mubr.bf16.mxu0 0
        %6640 = vmatmul.mubr.bf16.gmra.mrb[0].mxu0 %v6596
        %v6641 = vpop.f32.mrb[0].mxu0
        %v6642 = vadd.f32 0.0, %v6641
        %v6643 = vpop.f32.mrb[0].mxu0
        %v6644 = vpop.f32.mrb[0].mxu0
        %v6645 = vadd.f32 0.0, %v6644
        %v6646 = vpop.f32.mrb[0].mxu0
        %6647 = vmatprep.mubr.bf16.mxu0 0
        %6648 = vmatmul.mubr.bf16.gmra.mrb[0].mxu0 %v6599
        %v6649 = vpop.f32.mrb[0].mxu0
        %v6650 = vadd.f32 0.0, %v6649
        %v6651 = vpop.f32.mrb[0].mxu0
        %v6652 = vpop.f32.mrb[0].mxu0
        %v6653 = vadd.f32 0.0, %v6652
        %v6654 = vpop.f32.mrb[0].mxu0
        %6655 = vmatprep.mubr.bf16.mxu0 0
        %6656 = vmatmul.mubr.bf16.gmra.mrb[0].mxu0 %v6602
        %v6657 = vpop.f32.mrb[0].mxu0
        %v6658 = vadd.f32 0.0, %v6657
        %v6659 = vpop.f32.mrb[0].mxu0
        %v6660 = vpop.f32.mrb[0].mxu0
        %v6661 = vadd.f32 0.0, %v6660
        %v6662 = vpop.f32.mrb[0].mxu0
        %6663 = vmatprep.mubr.bf16.mxu0 0
        %6664 = vmatmul.mubr.bf16.gmra.mrb[0].mxu0 %v6605
        %v6665 = vpop.f32.mrb[0].mxu0
        %v6666 = vadd.f32 0.0, %v6665
        %v6667 = vpop.f32.mrb[0].mxu0
        %v6668 = vpop.f32.mrb[0].mxu0
        %v6669 = vadd.f32 0.0, %v6668
        %v6670 = vpop.f32.mrb[0].mxu0
        %6671 = vdwg.mxu0
        %v6672 = vadd.f32 %v6527, %v6642
        %v6673 = vadd.f32 %v6528, %v6645
        %v6674 = vadd.f32 %v6529, %v6650
        %v6675 = vadd.f32 %v6530, %v6653
        %v6676 = vadd.f32 %v6531, %v6658
        %v6677 = vadd.f32 %v6532, %v6661
        %v6678 = vadd.f32 %v6533, %v6666
        %v6679 = vadd.f32 %v6534, %v6669
        %s6680 = scalar_lea.vmem %s290, 352 [#allocation4]
        %v6681 = vld [vmem:[%s6680] sm:$0xf]
        %v6682 = vld [vmem:[%s6680 + $0x4] sm:$0xf]
        %v6683 = vld [vmem:[%s6680 + $0x8] sm:$0xf]
        %v6684 = vld [vmem:[%s6680 + $0xc] sm:$0xf]
        %v6685 = vld [vmem:[%s6680 + $0x10] sm:$0xf]
        %v6686 = vld [vmem:[%s6680 + $0x14] sm:$0xf]
        %v6687 = vld [vmem:[%s6680 + $0x18] sm:$0xf]
        %v6688 = vld [vmem:[%s6680 + $0x1c] sm:$0xf]
        %v6689 = vld [vmem:[%s925] sm:$0xf]
        %v6690 = vld [vmem:[%s925 + $0x4] sm:$0xf]
        %v6691 = vld [vmem:[%s925 + $0x8] sm:$0xf]
        %v6692 = vld [vmem:[%s925 + $0xc] sm:$0xf]
        %v6693 = vld [vmem:[%s925 + $0x10] sm:$0xf]
        %v6694 = vld [vmem:[%s925 + $0x14] sm:$0xf]
        %v6695 = vld [vmem:[%s925 + $0x18] sm:$0xf]
        %v6696 = vld [vmem:[%s925 + $0x1c] sm:$0xf]
        %v6705 = vunpack.c.l.b16 %v6681
        %v6706 = vunpack.c.l.b16 %v6682
        %v6707 = vunpack.c.l.b16 %v6683
        %v6708 = vunpack.c.l.b16 %v6684
        %v6709 = vunpack.c.l.b16 %v6685
        %v6710 = vunpack.c.l.b16 %v6686
        %v6711 = vunpack.c.l.b16 %v6687
        %v6712 = vunpack.c.l.b16 %v6688
        %v6713 = vpack.c.b16 %v6706, %v6705
        %v6714 = vpack.c.b16 %v6708, %v6707
        %v6715 = vpack.c.b16 %v6710, %v6709
        %v6716 = vpack.c.b16 %v6712, %v6711
        %v6725 = vunpack.c.l.b16 %v6689
        %v6726 = vunpack.c.l.b16 %v6690
        %v6727 = vunpack.c.l.b16 %v6691
        %v6728 = vunpack.c.l.b16 %v6692
        %v6729 = vunpack.c.l.b16 %v6693
        %v6730 = vunpack.c.l.b16 %v6694
        %v6731 = vunpack.c.l.b16 %v6695
        %v6732 = vunpack.c.l.b16 %v6696
        %v6733 = vpack.c.b16 %v6726, %v6725
        %v6734 = vpack.c.b16 %v6728, %v6727
        %v6735 = vpack.c.b16 %v6730, %v6729
        %v6736 = vpack.c.b16 %v6732, %v6731
        %v6742 = vsel %vm423, %v6713, 0
        %v6745 = vsel %vm423, %v6714, 0
        %v6748 = vsel %vm423, %v6715, 0
        %v6751 = vsel %vm423, %v6716, 0
        %6753 = vmatprep.subr.bf16.mxu0 0
        %6754 = vmatpush1.bf16.msra.mxu0 %v6733
        %6755 = vmatprep.subr.bf16.mxu0 0
        %6756 = vmatpush1.bf16.msra.mxu0 %v6734
        %6757 = vmatprep.subr.bf16.mxu0 0
        %6758 = vmatpush1.bf16.msra.mxu0 %v6735
        %6759 = vmatprep.subr.bf16.mxu0 0
        %6760 = vmatpush1.bf16.msra.mxu0 %v6736
        %6761 = vmatprep.subr.bf16.mxu0 0
        %6762 = vmatpush1.bf16.msra.mxu0 0
        %6763 = vmatprep.subr.bf16.mxu0 0
        %6764 = vmatpush1.bf16.msra.mxu0 0
        %6765 = vmatprep.subr.bf16.mxu0 0
        %6766 = vmatpush1.bf16.msra.mxu0 0
        %6767 = vmatprep.subr.bf16.mxu0 0
        %6768 = vmatpush1.bf16.msra.mxu0 0
        %6769 = vmatprep.subr.bf16.mxu0 0
        %6770 = vmatpush1.bf16.msra.mxu0 0
        %6771 = vmatprep.subr.bf16.mxu0 0
        %6772 = vmatpush1.bf16.msra.mxu0 0
        %6773 = vmatprep.subr.bf16.mxu0 0
        %6774 = vmatpush1.bf16.msra.mxu0 0
        %6775 = vmatprep.subr.bf16.mxu0 0
        %6776 = vmatpush1.bf16.msra.mxu0 0
        %6777 = vmatprep.subr.bf16.mxu0 0
        %6778 = vmatpush1.bf16.msra.mxu0 0
        %6779 = vmatprep.subr.bf16.mxu0 0
        %6780 = vmatpush1.bf16.msra.mxu0 0
        %6781 = vmatprep.subr.bf16.mxu0 0
        %6782 = vmatpush1.bf16.msra.mxu0 0
        %6783 = vmatprep.subr.bf16.mxu0 0
        %6784 = vmatpush1.bf16.msra.mxu0 0
        %6785 = vmatprep.mubr.bf16.mxu0 0
        %6786 = vmatmul.mubr.bf16.gmra.mrb[0].mxu0 %v6742
        %v6787 = vpop.f32.mrb[0].mxu0
        %v6788 = vadd.f32 0.0, %v6787
        %v6789 = vpop.f32.mrb[0].mxu0
        %v6790 = vpop.f32.mrb[0].mxu0
        %v6791 = vadd.f32 0.0, %v6790
        %v6792 = vpop.f32.mrb[0].mxu0
        %6793 = vmatprep.mubr.bf16.mxu0 0
        %6794 = vmatmul.mubr.bf16.gmra.mrb[0].mxu0 %v6745
        %v6795 = vpop.f32.mrb[0].mxu0
        %v6796 = vadd.f32 0.0, %v6795
        %v6797 = vpop.f32.mrb[0].mxu0
        %v6798 = vpop.f32.mrb[0].mxu0
        %v6799 = vadd.f32 0.0, %v6798
        %v6800 = vpop.f32.mrb[0].mxu0
        %6801 = vmatprep.mubr.bf16.mxu0 0
        %6802 = vmatmul.mubr.bf16.gmra.mrb[0].mxu0 %v6748
        %v6803 = vpop.f32.mrb[0].mxu0
        %v6804 = vadd.f32 0.0, %v6803
        %v6805 = vpop.f32.mrb[0].mxu0
        %v6806 = vpop.f32.mrb[0].mxu0
        %v6807 = vadd.f32 0.0, %v6806
        %v6808 = vpop.f32.mrb[0].mxu0
        %6809 = vmatprep.mubr.bf16.mxu0 0
        %6810 = vmatmul.mubr.bf16.gmra.mrb[0].mxu0 %v6751
        %v6811 = vpop.f32.mrb[0].mxu0
        %v6812 = vadd.f32 0.0, %v6811
        %v6813 = vpop.f32.mrb[0].mxu0
        %v6814 = vpop.f32.mrb[0].mxu0
        %v6815 = vadd.f32 0.0, %v6814
        %v6816 = vpop.f32.mrb[0].mxu0
        %6817 = vdwg.mxu0
        %v6818 = vadd.f32 %v6672, %v6788
        %v6819 = vadd.f32 %v6673, %v6791
        %v6820 = vadd.f32 %v6674, %v6796
        %v6821 = vadd.f32 %v6675, %v6799
        %v6822 = vadd.f32 %v6676, %v6804
        %v6823 = vadd.f32 %v6677, %v6807
        %v6824 = vadd.f32 %v6678, %v6812
        %v6825 = vadd.f32 %v6679, %v6815
        %v6826 = vadd.f32 %v6818, %v1067
        %v6827 = vadd.f32 %v6819, %v1067
        %v6828 = vadd.f32 %v6820, %v1067
        %v6829 = vadd.f32 %v6821, %v1067
        %v6830 = vadd.f32 %v6822, %v1067
        %v6831 = vadd.f32 %v6823, %v1067
        %v6832 = vadd.f32 %v6824, %v1067
        %v6833 = vadd.f32 %v6825, %v1067
        %v6834 = vmax.f32 %v6826, 0.0
        %v6835 = vmax.f32 %v6827, 0.0
        %v6836 = vmax.f32 %v6828, 0.0
        %v6837 = vmax.f32 %v6829, 0.0
        %v6838 = vmax.f32 %v6830, 0.0
        %v6839 = vmax.f32 %v6831, 0.0
        %v6840 = vmax.f32 %v6832, 0.0
        %v6841 = vmax.f32 %v6833, 0.0
        %6842 = vst.msk [vmem:[#allocation2] sm:$0xff] %vm1085, %v6834
        %6843 = vst.msk [vmem:[#allocation2 + $0x8] sm:$0xff] %vm1085, %v6835
        %6844 = vst.msk [vmem:[#allocation2 + $0x10] sm:$0xff] %vm1085, %v6836
        %6845 = vst.msk [vmem:[#allocation2 + $0x18] sm:$0xff] %vm1085, %v6837
        %6846 = vst.msk [vmem:[#allocation2 + $0x20] sm:$0xff] %vm1085, %v6838
        %6847 = vst.msk [vmem:[#allocation2 + $0x28] sm:$0xff] %vm1085, %v6839
        %6848 = vst.msk [vmem:[#allocation2 + $0x30] sm:$0xff] %vm1085, %v6840
        %6849 = vst.msk [vmem:[#allocation2 + $0x38] sm:$0xff] %vm1085, %v6841
        %v6850 = vld [vmem:[#allocation2] ss:$2 sm:$0xff]
        %v6851 = vld [vmem:[%s1095] ss:$2 sm:$0xff]
        %v6852 = vld [vmem:[%s1097] ss:$2 sm:$0xff]
        %v6853 = vld [vmem:[%s1099] ss:$2 sm:$0xff]
        %v6854 = vld [vmem:[%s1101] ss:$2 sm:$0xff]
        %v6855 = vld [vmem:[%s1103] ss:$2 sm:$0xff]
        %v6856 = vld [vmem:[%s1105] ss:$2 sm:$0xff]
        %v6857 = vld [vmem:[%s1107] ss:$2 sm:$0xff]
        %v6858 = vmax.f32 %v6850, %v6854
        %v6859 = vmax.f32 %v6851, %v6855
        %v6860 = vmax.f32 %v6852, %v6856
        %v6861 = vmax.f32 %v6853, %v6857
        %v6866 = vrot.slane %v6854, 7
        %v6867 = vrot.slane %v6855, 7
        %v6868 = vsel %vm1117, %v6866, %v6867
        %v6869 = vrot.slane %v6856, 7
        %v6870 = vsel %vm1117, %v6867, %v6869
        %v6871 = vrot.slane %v6857, 7
        %v6872 = vsel %vm1117, %v6869, %v6871
        %v6877 = vsel %vm1117, 0.0, %v6866
        %v6878 = vmul.f32 %v6877, %v341
        %v6879 = vmul.f32 %v6868, %v342
        %v6880 = vmul.f32 %v6870, %v343
        %v6881 = vmul.f32 %v6872, %v344
        %v6882 = vmax.f32 %v6858, %v6878
        %v6883 = vmax.f32 %v6859, %v6879
        %v6884 = vmax.f32 %v6860, %v6880
        %v6885 = vmax.f32 %v6861, %v6881
        %6886 = vst.msk [vmem:[#allocation3] sm:$0xff] %vm1085, %v6882
        %6887 = vst.msk [vmem:[#allocation3 + $0x8] sm:$0xff] %vm1085, %v6883
        %6888 = vst.msk [vmem:[#allocation3 + $0x10] sm:$0xff] %vm1085, %v6884
        %6889 = vst.msk [vmem:[#allocation3 + $0x18] sm:$0xff] %vm1085, %v6885
        %v6890 = vld [vmem:[#allocation3] sm:$0xf]
        %v6891 = vld [vmem:[#allocation3 + $0x4] sm:$0xf]
        %v6892 = vmax.f32 %v6890, %v6891
        %v6893 = vsel %vm1145, %v6892, 0.0
        %v6894 = vrot.slane %v6893, 4
        %v6895 = vadd.f32 %v6893, %v6894
        %v6896 = vrot.slane %v6895, 2
        %v6897 = vadd.f32 %v6895, %v6896
        %v6898 = vrot.slane %v6897, 1
        %v6899 = vadd.f32 %v6897, %v6898
        %v6900 = vadd.f32 %v6899, 0.0
        %v6901 = vld [vmem:[#allocation3 + $0x8] sm:$0xf]
        %v6902 = vld [vmem:[#allocation3 + $0xc] sm:$0xf]
        %v6903 = vmax.f32 %v6901, %v6902
        %v6904 = vmax.f32 %v6903, %v6891
        %v6905 = vsel %vm1145, %v6904, 0.0
        %v6906 = vrot.slane %v6905, 4
        %v6907 = vadd.f32 %v6905, %v6906
        %v6908 = vrot.slane %v6907, 2
        %v6909 = vadd.f32 %v6907, %v6908
        %v6910 = vrot.slane %v6909, 1
        %v6911 = vadd.f32 %v6909, %v6910
        %v6912 = vadd.f32 %v6900, %v6911
        %v6913 = vld [vmem:[#allocation3 + $0x10] sm:$0xf]
        %v6914 = vld [vmem:[#allocation3 + $0x14] sm:$0xf]
        %v6915 = vmax.f32 %v6913, %v6914
        %v6916 = vmax.f32 %v6915, %v6902
        %v6917 = vsel %vm1145, %v6916, 0.0
        %v6918 = vrot.slane %v6917, 4
        %v6919 = vadd.f32 %v6917, %v6918
        %v6920 = vrot.slane %v6919, 2
        %v6921 = vadd.f32 %v6919, %v6920
        %v6922 = vrot.slane %v6921, 1
        %v6923 = vadd.f32 %v6921, %v6922
        %v6924 = vadd.f32 %v6912, %v6923
        %v6925 = vld [vmem:[#allocation3 + $0x18] sm:$0xf]
        %v6926 = vld [vmem:[#allocation3 + $0x1c] sm:$0xf]
        %v6927 = vmax.f32 %v6925, %v6926
        %v6928 = vmax.f32 %v6927, %v6914
        %v6929 = vsel %vm1145, %v6928, 0.0
        %v6930 = vrot.slane %v6929, 4
        %v6931 = vadd.f32 %v6929, %v6930
        %v6932 = vrot.slane %v6931, 2
        %v6933 = vadd.f32 %v6931, %v6932
        %v6934 = vrot.slane %v6933, 1
        %v6935 = vadd.f32 %v6933, %v6934
        %v6936 = vadd.f32 %v6924, %v6935
        %v6937 = vsel %vm1117, %v1189, %v2010
        %vm6938 = vcmask 1041408
        %v6939 = vsel %vm6938, %v6937, %v2831
        %vm6940 = vcmask 1042432
        %v6941 = vsel %vm6940, %v6939, %v3652
        %vm6942 = vcmask 1043456
        %v6943 = vsel %vm6942, %v6941, %v4473
        %vm6944 = vcmask 1044480
        %v6945 = vsel %vm6944, %v6943, %v5294
        %vm6946 = vcmask 1045504
        %v6947 = vsel %vm6946, %v6945, %v6115
        %vm6948 = vcmask 1046528
        %v6949 = vsel %vm6948, %v6947, %v6936
        %v6950 = vpack.c.bf16 %v6949, %v6949
        %v6951 = vld [vmem:[#allocation12] sm:$0xf]
        %v6952 = vld [vmem:[#allocation12 + $0x4] sm:$0xf]
        %v6953 = vld [vmem:[#allocation12 + $0x8] sm:$0xf]
        %v6954 = vld [vmem:[#allocation12 + $0xc] sm:$0xf]
        %v6955 = vld [vmem:[#allocation13] sm:$0x1]
        %v6957 = vlaneseq
        %v6958 = vshrl.u32 %v6957, 7
        %v6959 = vsub.s32 0, %v6958
        %v6960 = vrot.slane %v6955, %v6959
        %v6966 = vunpack.c.l.b16 %v6951
        %v6967 = vunpack.c.l.b16 %v6952
        %v6968 = vunpack.c.l.b16 %v6953
        %v6969 = vunpack.c.l.b16 %v6954
        %v6970 = vpack.c.b16 %v6967, %v6966
        %v6971 = vpack.c.b16 %v6969, %v6968
        %v6975 = vsel %vm1085, %v6950, 0
        %6977 = vmatprep.subr.bf16.mxu0 0
        %6978 = vmatpush1.bf16.msra.mxu0 %v6970
        %6979 = vmatprep.subr.bf16.mxu0 0
        %6980 = vmatpush1.bf16.msra.mxu0 %v6971
        %6981 = vmatprep.subr.bf16.mxu0 0
        %6982 = vmatpush1.bf16.msra.mxu0 0
        %6983 = vmatprep.subr.bf16.mxu0 0
        %6984 = vmatpush1.bf16.msra.mxu0 0
        %6985 = vmatprep.subr.bf16.mxu0 0
        %6986 = vmatpush1.bf16.msra.mxu0 0
        %6987 = vmatprep.subr.bf16.mxu0 0
        %6988 = vmatpush1.bf16.msra.mxu0 0
        %6989 = vmatprep.subr.bf16.mxu0 0
        %6990 = vmatpush1.bf16.msra.mxu0 0
        %6991 = vmatprep.subr.bf16.mxu0 0
        %6992 = vmatpush1.bf16.msra.mxu0 0
        %6993 = vmatprep.subr.bf16.mxu0 0
        %6994 = vmatpush1.bf16.msra.mxu0 0
        %6995 = vmatprep.subr.bf16.mxu0 0
        %6996 = vmatpush1.bf16.msra.mxu0 0
        %6997 = vmatprep.subr.bf16.mxu0 0
        %6998 = vmatpush1.bf16.msra.mxu0 0
        %6999 = vmatprep.subr.bf16.mxu0 0
        %7000 = vmatpush1.bf16.msra.mxu0 0
        %7001 = vmatprep.subr.bf16.mxu0 0
        %7002 = vmatpush1.bf16.msra.mxu0 0
        %7003 = vmatprep.subr.bf16.mxu0 0
        %7004 = vmatpush1.bf16.msra.mxu0 0
        %7005 = vmatprep.subr.bf16.mxu0 0
        %7006 = vmatpush1.bf16.msra.mxu0 0
        %7007 = vmatprep.subr.bf16.mxu0 0
        %7008 = vmatpush1.bf16.msra.mxu0 0
        %7009 = vmatprep.mubr.bf16.mxu0 0
        %7010 = vmatmul.mubr.bf16.gmra.mrb[0].mxu0 %v6975
        %v7011 = vpop.f32.mrb[0].mxu0
        %v7012 = vadd.f32 %v6960, %v7011
        %v7013 = vpop.f32.mrb[0].mxu0
        %v7014 = vpop.f32.mrb[0].mxu0
        %v7015 = vpop.f32.mrb[0].mxu0
        %7016 = vdwg.mxu0
        %v7017 = vmax.f32 %v7012, 0.0
        %7018 = vst.msk [vmem:[%s338] sm:$0xff] %vm423, %v7017
        %s7019 = sand.u32 %s165, 1
        %s7020 = scalar_lea.sflag [#allocation6], %s7019
        %s7021 = sand.u32 %s165, 1
        %s7022 = smul.addr %s7021, 8
        %s7023 = scalar_lea.vmem [#allocation15], %s7022
        // Predicated region
        $region69: #{lipreader_forward.2} parent=43 // pred_check
          %p7024 = pneg %p175
        $region70: #{lipreader_forward.2} parent=43 // pred_check_branch
          %7026 = sbr.rel (%p7024) target = $region72
        $region71: #{lipreader_forward.2} parent=43 // pred_region
          %s7028 = ssub.s32 128, 128
          %7029 = vsyncadd %s7020, %s7028
          %s7030 = smul.addr %s26, 128
          %s7031 = scalar_lea.hbm %s6, %s7030
          %s7033 = sshll.u32 %s7023, 4
          %s7034 = int_to_ptr.vmem [resolvable:$true] %s7033
          %7036 = dma.vmem_to_hbm [thread:$0]  %s7034, 128, %s7031, %s7020
        $region72: #{lipreader_forward.2} parent=43 // pred_fallthru
          _
      $region44: #{lipreader_forward.2} parent=5 // pred_fallthru
        _
      %p7037 = scmp.le.s32.totalorder 2, %s21
      // Predicated region
      $region73: #{lipreader_forward.2} parent=5 // pred_check
        %p7038 = pneg %p7037
      $region74: #{lipreader_forward.2} parent=5 // pred_check_branch
        %7040 = sbr.rel (%p7038) target = $region76
      $region75: #{lipreader_forward.2} parent=5 // pred_region
        %s7041 = ssub.s32 %s21, 2
        // Predicated region
        $region77: #{lipreader_forward.2} parent=75 // pred_check
          %p7042 = pneg %p181
        $region78: #{lipreader_forward.2} parent=75 // pred_check_branch
          %7044 = sbr.rel (%p7042) target = $region80
        $region79: #{lipreader_forward.2} parent=75 // pred_region
          %s7045 = sand.u32 %s166, 1
          %s7046 = scalar_lea.sflag [#allocation6], %s7045
          %s7047 = sand.u32 %s166, 1
          %s7048 = smul.addr %s7047, 8
          %s7049 = scalar_lea.vmem [#allocation15], %s7048
          %7050 = dma.done %s7046, 128
        $region80: #{lipreader_forward.2} parent=75 // pred_fallthru
          _
      $region76: #{lipreader_forward.2} parent=5 // pred_fallthru
        _
    $region6: #{lipreader_forward.2} parent=1 // loop_footer
      %s25 = sadd.s32 1, %s21
    $region7: #{lipreader_forward.2} parent=1 // loop_footer_branch
      %20 = sbr.rel target = $region3
    $region8: #{lipreader_forward.2} parent=1 // loop_exit
      _
    %7051 = vsyncpa [#allocation5], 1
    %s7052 = scalar_lea.sflag [#allocation5], 1
    %7053 = vsyncpa %s7052, 1
    %7054 = vsyncpa [#allocation8], 1
    %7055 = vsyncpa [#allocation11], 1
    %7056 = vsyncpa [#allocation14], 1
    %7057 = vsyncpa [#allocation6], 1
    %s7058 = scalar_lea.sflag [#allocation6], 1
    %7059 = vsyncpa %s7058, 1

</llo_original>
